<compile_context>
chip_gen: v7x
topology: tpu7x:2x2x1
jax: 0.10.0
libtpu: 0.0.40
codegen_flags: <defaults>
</compile_context>

<pallas_src>
import functools

import jax
import jax.numpy as jnp
from jax import lax
from jax.experimental import pallas as pl
from jax.experimental.pallas import tpu as pltpu


NEG_SLOPE = 0.01  # PyTorch nn.LeakyReLU default


def _down_feature_kernel(x_ref, wa_ref, ba_ref, wb_ref, bb_ref, wc_ref, bc_ref,
                         o_ref,
                         pad_a, col_a, pad_b, col_b, pad_c, col_c,
                         *, H, W, C1, C2, Cout):
    """One batch element: (H, W, Cin) input -> (H, W, Cout) output, all in VMEM."""
    HW = H * W

    def conv_stage(x_hwc, pad_ref, col_ref, w_ref, b_ref, KH, KW, leaky):
        cin = x_hwc.shape[-1]
        ph, pw = KH // 2, KW // 2
        # In-kernel 'same' padding: zero the halo, store the interior.
        pad_ref[...] = jnp.zeros_like(pad_ref)
        pad_ref[ph:ph + H, pw:pw + W, :] = x_hwc
        # im2col: stage each (kh, kw) tap once into the column buffer
        # (reshape only collapses leading dims; channel/lane dim untouched).
        for kh in range(KH):
            for kw in range(KW):
                t = kh * KW + kw
                col_ref[:, t * cin:(t + 1) * cin] = (
                    pad_ref[kh:kh + H, kw:kw + W, :].reshape(HW, cin))
        # Single MXU matmul per stage: (H*W, KH*KW*cin) @ (KH*KW*cin, Cout).
        acc = jnp.dot(col_ref[...], w_ref[...],
                      preferred_element_type=jnp.float32)
        acc = acc + b_ref[...]                      # (1, Cout) broadcast
        if leaky:
            acc = jnp.where(acc >= 0, acc, acc * NEG_SLOPE)
        return acc                                  # (H*W, Cout) f32

    x0 = x_ref[...].astype(jnp.float32)                               # (H, W, Cin)
    a = conv_stage(x0, pad_a, col_a, wa_ref, ba_ref, 5, 5, True)      # conv0∘conv1 + LeakyReLU
    b = conv_stage(a.reshape(H, W, C1), pad_b, col_b, wb_ref, bb_ref,
                   3, 3, True)                                        # conv3∘conv4 + LeakyReLU
    c = conv_stage(b.reshape(H, W, C2), pad_c, col_c, wc_ref, bc_ref,
                   3, 3, False)                                       # conv6
    o_ref[...] = c.reshape(H, W, Cout).astype(o_ref.dtype)


def _fold_params(params):
    """Fold the activation-free 1x1 convs into their preceding convs (HWIO)."""
    (w1, b1), (w2, b2), (w3, b3), (w4, b4), (w5, b5) = params

    def fold(w_big, b_big, w_1x1, b_1x1):
        m = w_1x1[0, 0]                                   # (Cmid, Cout)
        w = jnp.einsum('hwim,mo->hwio', w_big, m)
        b = b_big @ m + b_1x1
        return w, b

    wa, ba = fold(w1, b1, w2, b2)     # 5x5: Cin -> 20
    wb, bb = fold(w3, b3, w4, b4)     # 3x3: 20 -> 40
    wc, bc = w5, b5                   # 3x3: 40 -> out_ch

    def mat(w):  # (KH, KW, Cin, Cout) -> (KH*KW*Cin, Cout), matches tap order
        kh, kw, ci, co = w.shape
        return w.reshape(kh * kw * ci, co)

    return (mat(wa), ba.reshape(1, -1),
            mat(wb), bb.reshape(1, -1),
            mat(wc), bc.reshape(1, -1))


@jax.jit
def down_feature_forward(x_nchw, params):
    """Forward pass equivalent to down_feature.forward (NCHW in / NCHW out)."""
    N, Cin, H, W = x_nchw.shape
    wa, ba, wb, bb, wc, bc = _fold_params(params)
    C1 = wa.shape[1]       # 20
    C2 = wb.shape[1]       # 40
    Cout = wc.shape[1]     # out_ch

    x = jnp.transpose(x_nchw, (0, 2, 3, 1))  # NCHW -> NHWC (tiny, one-time)

    kernel = functools.partial(_down_feature_kernel, H=H, W=W,
                               C1=C1, C2=C2, Cout=Cout)

    out_nhwc = pl.pallas_call(
        kernel,
        out_shape=jax.ShapeDtypeStruct((N, H, W, Cout), x.dtype),
        grid=(N,),
        in_specs=[
            pl.BlockSpec((None, H, W, Cin), lambda n: (n, 0, 0, 0)),
            pl.BlockSpec(wa.shape, lambda n: (0, 0)),
            pl.BlockSpec(ba.shape, lambda n: (0, 0)),
            pl.BlockSpec(wb.shape, lambda n: (0, 0)),
            pl.BlockSpec(bb.shape, lambda n: (0, 0)),
            pl.BlockSpec(wc.shape, lambda n: (0, 0)),
            pl.BlockSpec(bc.shape, lambda n: (0, 0)),
        ],
        out_specs=pl.BlockSpec((None, H, W, Cout), lambda n: (n, 0, 0, 0)),
        scratch_shapes=[
            pltpu.VMEM((H + 4, W + 4, Cin), jnp.float32),   # pad for 5x5 stage
            pltpu.VMEM((H * W, 25 * Cin), jnp.float32),     # im2col, stage A
            pltpu.VMEM((H + 2, W + 2, C1), jnp.float32),    # pad for 3x3 stage
            pltpu.VMEM((H * W, 9 * C1), jnp.float32),       # im2col, stage B
            pltpu.VMEM((H + 2, W + 2, C2), jnp.float32),    # pad for 3x3 stage
            pltpu.VMEM((H * W, 9 * C2), jnp.float32),       # im2col, stage C
        ],
        compiler_params=pltpu.CompilerParams(
            dimension_semantics=("parallel",)),
    )(x, wa, ba, wb, bb, wc, bc)

    return jnp.transpose(out_nhwc, (0, 3, 1, 2))  # NHWC -> NCHW


def init_params(key, in_ch, out_ch):
    """Deterministic synthetic parameters matching the module's layer shapes (HWIO)."""
    shapes = [
        (5, 5, in_ch, 20),   # conv[0]
        (1, 1, 20, 20),      # conv[1]
        (3, 3, 20, 20),      # conv[3]
        (1, 1, 20, 40),      # conv[4]
        (3, 3, 40, out_ch),  # conv[6]
    ]
    params = []
    for i, s in enumerate(shapes):
        kw_, kb = jax.random.split(jax.random.fold_in(key, i))
        w = jax.random.normal(kw_, s, jnp.float32) * 0.1
        b = jax.random.normal(kb, (s[-1],), jnp.float32) * 0.05
        params.append((w, b))
    return params


def _reference_forward(x_nchw, params):
    """Pure-JAX reference (lax.conv, unfolded layers) for correctness checking."""
    x = jnp.transpose(x_nchw, (0, 2, 3, 1))
    dn = ("NHWC", "HWIO", "NHWC")

    def conv(x, w, b):
        y = lax.conv_general_dilated(x, w, (1, 1), "SAME",
                                     dimension_numbers=dn)
        return y + b[None, None, None, :]

    (w1, b1), (w2, b2), (w3, b3), (w4, b4), (w5, b5) = params
    x = conv(x, w1, b1)
    x = conv(x, w2, b2)
    x = jnp.where(x >= 0, x, x * NEG_SLOPE)
    x = conv(x, w3, b3)
    x = conv(x, w4, b4)
    x = jnp.where(x >= 0, x, x * NEG_SLOPE)
    x = conv(x, w5, b5)
    return jnp.transpose(x, (0, 3, 1, 2))


if __name__ == "__main__":
    key = jax.random.PRNGKey(0)
    in_ch, out_ch = 4, 8
    N, H, W = 2, 16, 16

    kx, kp = jax.random.split(key)
    x = jax.random.normal(kx, (N, in_ch, H, W), jnp.float32)
    params = init_params(kp, in_ch, out_ch)

    out = jax.block_until_ready(down_feature_forward(x, params))
    assert out.shape == (N, out_ch, H, W), out.shape

    ref = jax.block_until_ready(_reference_forward(x, params))
    if not jnp.allclose(out, ref, atol=1e-3, rtol=1e-3):
        err = jnp.max(jnp.abs(out - ref))
        raise AssertionError(f"Pallas output does not match JAX reference (max err {err})")

    print("KERNEL_OK")
</pallas_src>

<mosaic_0001>
module attributes {stable_mosaic.version = 11 : i64} {
  func.func @_down_feature_kernel(%arg0: i32, %arg1: memref<1x16x16x4xf32, #tpu.memory_space<vmem>>, %arg2: memref<100x20xf32, #tpu.memory_space<vmem>>, %arg3: memref<1x20xf32, #tpu.memory_space<vmem>>, %arg4: memref<180x40xf32, #tpu.memory_space<vmem>>, %arg5: memref<1x40xf32, #tpu.memory_space<vmem>>, %arg6: memref<360x8xf32, #tpu.memory_space<vmem>>, %arg7: memref<1x8xf32, #tpu.memory_space<vmem>>, %arg8: memref<1x16x16x8xf32, #tpu.memory_space<vmem>>, %arg9: memref<20x20x4xf32, #tpu.memory_space<vmem>>, %arg10: memref<256x100xf32, #tpu.memory_space<vmem>>, %arg11: memref<18x18x20xf32, #tpu.memory_space<vmem>>, %arg12: memref<256x180xf32, #tpu.memory_space<vmem>>, %arg13: memref<18x18x40xf32, #tpu.memory_space<vmem>>, %arg14: memref<256x360xf32, #tpu.memory_space<vmem>>) attributes {dimension_semantics = [#tpu.dimension_semantics<parallel>], iteration_bounds = array<i64: 2>, scalar_prefetch = 0 : i64, scratch_operands = 6 : i64, tpu.core_type = #tpu.core_type<tc>, window_params = [{transform_indices = @transform_0, window_bounds = array<i64: 1, 16, 16, 4>}, {pipeline_mode = #tpu.pipeline_mode<synchronous>, transform_indices = @transform_1, window_bounds = array<i64: 100, 20>}, {pipeline_mode = #tpu.pipeline_mode<synchronous>, transform_indices = @transform_2, window_bounds = array<i64: 1, 20>}, {pipeline_mode = #tpu.pipeline_mode<synchronous>, transform_indices = @transform_3, window_bounds = array<i64: 180, 40>}, {pipeline_mode = #tpu.pipeline_mode<synchronous>, transform_indices = @transform_4, window_bounds = array<i64: 1, 40>}, {pipeline_mode = #tpu.pipeline_mode<synchronous>, transform_indices = @transform_5, window_bounds = array<i64: 360, 8>}, {pipeline_mode = #tpu.pipeline_mode<synchronous>, transform_indices = @transform_6, window_bounds = array<i64: 1, 8>}, {transform_indices = @transform_7, window_bounds = array<i64: 1, 16, 16, 8>}]} {
    %c0 = arith.constant 0 : index
    %c0_0 = arith.constant 0 : index
    %c0_1 = arith.constant 0 : index
    %c0_2 = arith.constant 0 : index
    %0 = vector.load %arg1[%c0, %c0_0, %c0_1, %c0_2] : memref<1x16x16x4xf32, #tpu.memory_space<vmem>>, vector<1x16x16x4xf32>
    %1 = vector.shape_cast %0 : vector<1x16x16x4xf32> to vector<16x16x4xf32>
    %cst = arith.constant 0.000000e+00 : f32
    %2 = vector.broadcast %cst : f32 to vector<20x20x4xf32>
    %c0_3 = arith.constant 0 : index
    %c0_4 = arith.constant 0 : index
    %c0_5 = arith.constant 0 : index
    %3 = vector.load %arg9[%c0_3, %c0_4, %c0_5] : memref<20x20x4xf32, #tpu.memory_space<vmem>>, vector<20x20x4xf32>
    tpu.vector_store %arg9[%c0_3, %c0_4, %c0_5], %2 {strides = array<i32>} : memref<20x20x4xf32, #tpu.memory_space<vmem>>, vector<20x20x4xf32>,
    %c2 = arith.constant 2 : index
    %c2_6 = arith.constant 2 : index
    %c0_7 = arith.constant 0 : index
    %4 = vector.load %arg9[%c2, %c2_6, %c0_7] : memref<20x20x4xf32, #tpu.memory_space<vmem>>, vector<16x16x4xf32>
    tpu.vector_store %arg9[%c2, %c2_6, %c0_7], %1 {strides = array<i32>} : memref<20x20x4xf32, #tpu.memory_space<vmem>>, vector<16x16x4xf32>,
    %c0_8 = arith.constant 0 : index
    %c0_9 = arith.constant 0 : index
    %c0_10 = arith.constant 0 : index
    %5 = vector.load %arg9[%c0_8, %c0_9, %c0_10] : memref<20x20x4xf32, #tpu.memory_space<vmem>>, vector<16x16x4xf32>
    %6 = vector.shape_cast %5 : vector<16x16x4xf32> to vector<256x4xf32>
    %c0_11 = arith.constant 0 : index
    %c0_12 = arith.constant 0 : index
    %7 = vector.load %arg10[%c0_11, %c0_12] : memref<256x100xf32, #tpu.memory_space<vmem>>, vector<256x4xf32>
    tpu.vector_store %arg10[%c0_11, %c0_12], %6 {strides = array<i32>} : memref<256x100xf32, #tpu.memory_space<vmem>>, vector<256x4xf32>,
    %c0_13 = arith.constant 0 : index
    %c1 = arith.constant 1 : index
    %c0_14 = arith.constant 0 : index
    %8 = vector.load %arg9[%c0_13, %c1, %c0_14] : memref<20x20x4xf32, #tpu.memory_space<vmem>>, vector<16x16x4xf32>
    %9 = vector.shape_cast %8 : vector<16x16x4xf32> to vector<256x4xf32>
    %c0_15 = arith.constant 0 : index
    %c4 = arith.constant 4 : index
    %10 = vector.load %arg10[%c0_15, %c4] : memref<256x100xf32, #tpu.memory_space<vmem>>, vector<256x4xf32>
    tpu.vector_store %arg10[%c0_15, %c4], %9 {strides = array<i32>} : memref<256x100xf32, #tpu.memory_space<vmem>>, vector<256x4xf32>,
    %c0_16 = arith.constant 0 : index
    %c2_17 = arith.constant 2 : index
    %c0_18 = arith.constant 0 : index
    %11 = vector.load %arg9[%c0_16, %c2_17, %c0_18] : memref<20x20x4xf32, #tpu.memory_space<vmem>>, vector<16x16x4xf32>
    %12 = vector.shape_cast %11 : vector<16x16x4xf32> to vector<256x4xf32>
    %c0_19 = arith.constant 0 : index
    %c8 = arith.constant 8 : index
    %13 = vector.load %arg10[%c0_19, %c8] : memref<256x100xf32, #tpu.memory_space<vmem>>, vector<256x4xf32>
    tpu.vector_store %arg10[%c0_19, %c8], %12 {strides = array<i32>} : memref<256x100xf32, #tpu.memory_space<vmem>>, vector<256x4xf32>,
    %c0_20 = arith.constant 0 : index
    %c3 = arith.constant 3 : index
    %c0_21 = arith.constant 0 : index
    %14 = vector.load %arg9[%c0_20, %c3, %c0_21] : memref<20x20x4xf32, #tpu.memory_space<vmem>>, vector<16x16x4xf32>
    %15 = vector.shape_cast %14 : vector<16x16x4xf32> to vector<256x4xf32>
    %c0_22 = arith.constant 0 : index
    %c12 = arith.constant 12 : index
    %16 = vector.load %arg10[%c0_22, %c12] : memref<256x100xf32, #tpu.memory_space<vmem>>, vector<256x4xf32>
    tpu.vector_store %arg10[%c0_22, %c12], %15 {strides = array<i32>} : memref<256x100xf32, #tpu.memory_space<vmem>>, vector<256x4xf32>,
    %c0_23 = arith.constant 0 : index
    %c4_24 = arith.constant 4 : index
    %c0_25 = arith.constant 0 : index
    %17 = vector.load %arg9[%c0_23, %c4_24, %c0_25] : memref<20x20x4xf32, #tpu.memory_space<vmem>>, vector<16x16x4xf32>
    %18 = vector.shape_cast %17 : vector<16x16x4xf32> to vector<256x4xf32>
    %c0_26 = arith.constant 0 : index
    %c16 = arith.constant 16 : index
    %19 = vector.load %arg10[%c0_26, %c16] : memref<256x100xf32, #tpu.memory_space<vmem>>, vector<256x4xf32>
    tpu.vector_store %arg10[%c0_26, %c16], %18 {strides = array<i32>} : memref<256x100xf32, #tpu.memory_space<vmem>>, vector<256x4xf32>,
    %c1_27 = arith.constant 1 : index
    %c0_28 = arith.constant 0 : index
    %c0_29 = arith.constant 0 : index
    %20 = vector.load %arg9[%c1_27, %c0_28, %c0_29] : memref<20x20x4xf32, #tpu.memory_space<vmem>>, vector<16x16x4xf32>
    %21 = vector.shape_cast %20 : vector<16x16x4xf32> to vector<256x4xf32>
    %c0_30 = arith.constant 0 : index
    %c20 = arith.constant 20 : index
    %22 = vector.load %arg10[%c0_30, %c20] : memref<256x100xf32, #tpu.memory_space<vmem>>, vector<256x4xf32>
    tpu.vector_store %arg10[%c0_30, %c20], %21 {strides = array<i32>} : memref<256x100xf32, #tpu.memory_space<vmem>>, vector<256x4xf32>,
    %c1_31 = arith.constant 1 : index
    %c1_32 = arith.constant 1 : index
    %c0_33 = arith.constant 0 : index
    %23 = vector.load %arg9[%c1_31, %c1_32, %c0_33] : memref<20x20x4xf32, #tpu.memory_space<vmem>>, vector<16x16x4xf32>
    %24 = vector.shape_cast %23 : vector<16x16x4xf32> to vector<256x4xf32>
    %c0_34 = arith.constant 0 : index
    %c24 = arith.constant 24 : index
    %25 = vector.load %arg10[%c0_34, %c24] : memref<256x100xf32, #tpu.memory_space<vmem>>, vector<256x4xf32>
    tpu.vector_store %arg10[%c0_34, %c24], %24 {strides = array<i32>} : memref<256x100xf32, #tpu.memory_space<vmem>>, vector<256x4xf32>,
    %c1_35 = arith.constant 1 : index
    %c2_36 = arith.constant 2 : index
    %c0_37 = arith.constant 0 : index
    %26 = vector.load %arg9[%c1_35, %c2_36, %c0_37] : memref<20x20x4xf32, #tpu.memory_space<vmem>>, vector<16x16x4xf32>
    %27 = vector.shape_cast %26 : vector<16x16x4xf32> to vector<256x4xf32>
    %c0_38 = arith.constant 0 : index
    %c28 = arith.constant 28 : index
    %28 = vector.load %arg10[%c0_38, %c28] : memref<256x100xf32, #tpu.memory_space<vmem>>, vector<256x4xf32>
    tpu.vector_store %arg10[%c0_38, %c28], %27 {strides = array<i32>} : memref<256x100xf32, #tpu.memory_space<vmem>>, vector<256x4xf32>,
    %c1_39 = arith.constant 1 : index
    %c3_40 = arith.constant 3 : index
    %c0_41 = arith.constant 0 : index
    %29 = vector.load %arg9[%c1_39, %c3_40, %c0_41] : memref<20x20x4xf32, #tpu.memory_space<vmem>>, vector<16x16x4xf32>
    %30 = vector.shape_cast %29 : vector<16x16x4xf32> to vector<256x4xf32>
    %c0_42 = arith.constant 0 : index
    %c32 = arith.constant 32 : index
    %31 = vector.load %arg10[%c0_42, %c32] : memref<256x100xf32, #tpu.memory_space<vmem>>, vector<256x4xf32>
    tpu.vector_store %arg10[%c0_42, %c32], %30 {strides = array<i32>} : memref<256x100xf32, #tpu.memory_space<vmem>>, vector<256x4xf32>,
    %c1_43 = arith.constant 1 : index
    %c4_44 = arith.constant 4 : index
    %c0_45 = arith.constant 0 : index
    %32 = vector.load %arg9[%c1_43, %c4_44, %c0_45] : memref<20x20x4xf32, #tpu.memory_space<vmem>>, vector<16x16x4xf32>
    %33 = vector.shape_cast %32 : vector<16x16x4xf32> to vector<256x4xf32>
    %c0_46 = arith.constant 0 : index
    %c36 = arith.constant 36 : index
    %34 = vector.load %arg10[%c0_46, %c36] : memref<256x100xf32, #tpu.memory_space<vmem>>, vector<256x4xf32>
    tpu.vector_store %arg10[%c0_46, %c36], %33 {strides = array<i32>} : memref<256x100xf32, #tpu.memory_space<vmem>>, vector<256x4xf32>,
    %c2_47 = arith.constant 2 : index
    %c0_48 = arith.constant 0 : index
    %c0_49 = arith.constant 0 : index
    %35 = vector.load %arg9[%c2_47, %c0_48, %c0_49] : memref<20x20x4xf32, #tpu.memory_space<vmem>>, vector<16x16x4xf32>
    %36 = vector.shape_cast %35 : vector<16x16x4xf32> to vector<256x4xf32>
    %c0_50 = arith.constant 0 : index
    %c40 = arith.constant 40 : index
    %37 = vector.load %arg10[%c0_50, %c40] : memref<256x100xf32, #tpu.memory_space<vmem>>, vector<256x4xf32>
    tpu.vector_store %arg10[%c0_50, %c40], %36 {strides = array<i32>} : memref<256x100xf32, #tpu.memory_space<vmem>>, vector<256x4xf32>,
    %c2_51 = arith.constant 2 : index
    %c1_52 = arith.constant 1 : index
    %c0_53 = arith.constant 0 : index
    %38 = vector.load %arg9[%c2_51, %c1_52, %c0_53] : memref<20x20x4xf32, #tpu.memory_space<vmem>>, vector<16x16x4xf32>
    %39 = vector.shape_cast %38 : vector<16x16x4xf32> to vector<256x4xf32>
    %c0_54 = arith.constant 0 : index
    %c44 = arith.constant 44 : index
    %40 = vector.load %arg10[%c0_54, %c44] : memref<256x100xf32, #tpu.memory_space<vmem>>, vector<256x4xf32>
    tpu.vector_store %arg10[%c0_54, %c44], %39 {strides = array<i32>} : memref<256x100xf32, #tpu.memory_space<vmem>>, vector<256x4xf32>,
    %c2_55 = arith.constant 2 : index
    %c2_56 = arith.constant 2 : index
    %c0_57 = arith.constant 0 : index
    %41 = vector.load %arg9[%c2_55, %c2_56, %c0_57] : memref<20x20x4xf32, #tpu.memory_space<vmem>>, vector<16x16x4xf32>
    %42 = vector.shape_cast %41 : vector<16x16x4xf32> to vector<256x4xf32>
    %c0_58 = arith.constant 0 : index
    %c48 = arith.constant 48 : index
    %43 = vector.load %arg10[%c0_58, %c48] : memref<256x100xf32, #tpu.memory_space<vmem>>, vector<256x4xf32>
    tpu.vector_store %arg10[%c0_58, %c48], %42 {strides = array<i32>} : memref<256x100xf32, #tpu.memory_space<vmem>>, vector<256x4xf32>,
    %c2_59 = arith.constant 2 : index
    %c3_60 = arith.constant 3 : index
    %c0_61 = arith.constant 0 : index
    %44 = vector.load %arg9[%c2_59, %c3_60, %c0_61] : memref<20x20x4xf32, #tpu.memory_space<vmem>>, vector<16x16x4xf32>
    %45 = vector.shape_cast %44 : vector<16x16x4xf32> to vector<256x4xf32>
    %c0_62 = arith.constant 0 : index
    %c52 = arith.constant 52 : index
    %46 = vector.load %arg10[%c0_62, %c52] : memref<256x100xf32, #tpu.memory_space<vmem>>, vector<256x4xf32>
    tpu.vector_store %arg10[%c0_62, %c52], %45 {strides = array<i32>} : memref<256x100xf32, #tpu.memory_space<vmem>>, vector<256x4xf32>,
    %c2_63 = arith.constant 2 : index
    %c4_64 = arith.constant 4 : index
    %c0_65 = arith.constant 0 : index
    %47 = vector.load %arg9[%c2_63, %c4_64, %c0_65] : memref<20x20x4xf32, #tpu.memory_space<vmem>>, vector<16x16x4xf32>
    %48 = vector.shape_cast %47 : vector<16x16x4xf32> to vector<256x4xf32>
    %c0_66 = arith.constant 0 : index
    %c56 = arith.constant 56 : index
    %49 = vector.load %arg10[%c0_66, %c56] : memref<256x100xf32, #tpu.memory_space<vmem>>, vector<256x4xf32>
    tpu.vector_store %arg10[%c0_66, %c56], %48 {strides = array<i32>} : memref<256x100xf32, #tpu.memory_space<vmem>>, vector<256x4xf32>,
    %c3_67 = arith.constant 3 : index
    %c0_68 = arith.constant 0 : index
    %c0_69 = arith.constant 0 : index
    %50 = vector.load %arg9[%c3_67, %c0_68, %c0_69] : memref<20x20x4xf32, #tpu.memory_space<vmem>>, vector<16x16x4xf32>
    %51 = vector.shape_cast %50 : vector<16x16x4xf32> to vector<256x4xf32>
    %c0_70 = arith.constant 0 : index
    %c60 = arith.constant 60 : index
    %52 = vector.load %arg10[%c0_70, %c60] : memref<256x100xf32, #tpu.memory_space<vmem>>, vector<256x4xf32>
    tpu.vector_store %arg10[%c0_70, %c60], %51 {strides = array<i32>} : memref<256x100xf32, #tpu.memory_space<vmem>>, vector<256x4xf32>,
    %c3_71 = arith.constant 3 : index
    %c1_72 = arith.constant 1 : index
    %c0_73 = arith.constant 0 : index
    %53 = vector.load %arg9[%c3_71, %c1_72, %c0_73] : memref<20x20x4xf32, #tpu.memory_space<vmem>>, vector<16x16x4xf32>
    %54 = vector.shape_cast %53 : vector<16x16x4xf32> to vector<256x4xf32>
    %c0_74 = arith.constant 0 : index
    %c64 = arith.constant 64 : index
    %55 = vector.load %arg10[%c0_74, %c64] : memref<256x100xf32, #tpu.memory_space<vmem>>, vector<256x4xf32>
    tpu.vector_store %arg10[%c0_74, %c64], %54 {strides = array<i32>} : memref<256x100xf32, #tpu.memory_space<vmem>>, vector<256x4xf32>,
    %c3_75 = arith.constant 3 : index
    %c2_76 = arith.constant 2 : index
    %c0_77 = arith.constant 0 : index
    %56 = vector.load %arg9[%c3_75, %c2_76, %c0_77] : memref<20x20x4xf32, #tpu.memory_space<vmem>>, vector<16x16x4xf32>
    %57 = vector.shape_cast %56 : vector<16x16x4xf32> to vector<256x4xf32>
    %c0_78 = arith.constant 0 : index
    %c68 = arith.constant 68 : index
    %58 = vector.load %arg10[%c0_78, %c68] : memref<256x100xf32, #tpu.memory_space<vmem>>, vector<256x4xf32>
    tpu.vector_store %arg10[%c0_78, %c68], %57 {strides = array<i32>} : memref<256x100xf32, #tpu.memory_space<vmem>>, vector<256x4xf32>,
    %c3_79 = arith.constant 3 : index
    %c3_80 = arith.constant 3 : index
    %c0_81 = arith.constant 0 : index
    %59 = vector.load %arg9[%c3_79, %c3_80, %c0_81] : memref<20x20x4xf32, #tpu.memory_space<vmem>>, vector<16x16x4xf32>
    %60 = vector.shape_cast %59 : vector<16x16x4xf32> to vector<256x4xf32>
    %c0_82 = arith.constant 0 : index
    %c72 = arith.constant 72 : index
    %61 = vector.load %arg10[%c0_82, %c72] : memref<256x100xf32, #tpu.memory_space<vmem>>, vector<256x4xf32>
    tpu.vector_store %arg10[%c0_82, %c72], %60 {strides = array<i32>} : memref<256x100xf32, #tpu.memory_space<vmem>>, vector<256x4xf32>,
    %c3_83 = arith.constant 3 : index
    %c4_84 = arith.constant 4 : index
    %c0_85 = arith.constant 0 : index
    %62 = vector.load %arg9[%c3_83, %c4_84, %c0_85] : memref<20x20x4xf32, #tpu.memory_space<vmem>>, vector<16x16x4xf32>
    %63 = vector.shape_cast %62 : vector<16x16x4xf32> to vector<256x4xf32>
    %c0_86 = arith.constant 0 : index
    %c76 = arith.constant 76 : index
    %64 = vector.load %arg10[%c0_86, %c76] : memref<256x100xf32, #tpu.memory_space<vmem>>, vector<256x4xf32>
    tpu.vector_store %arg10[%c0_86, %c76], %63 {strides = array<i32>} : memref<256x100xf32, #tpu.memory_space<vmem>>, vector<256x4xf32>,
    %c4_87 = arith.constant 4 : index
    %c0_88 = arith.constant 0 : index
    %c0_89 = arith.constant 0 : index
    %65 = vector.load %arg9[%c4_87, %c0_88, %c0_89] : memref<20x20x4xf32, #tpu.memory_space<vmem>>, vector<16x16x4xf32>
    %66 = vector.shape_cast %65 : vector<16x16x4xf32> to vector<256x4xf32>
    %c0_90 = arith.constant 0 : index
    %c80 = arith.constant 80 : index
    %67 = vector.load %arg10[%c0_90, %c80] : memref<256x100xf32, #tpu.memory_space<vmem>>, vector<256x4xf32>
    tpu.vector_store %arg10[%c0_90, %c80], %66 {strides = array<i32>} : memref<256x100xf32, #tpu.memory_space<vmem>>, vector<256x4xf32>,
    %c4_91 = arith.constant 4 : index
    %c1_92 = arith.constant 1 : index
    %c0_93 = arith.constant 0 : index
    %68 = vector.load %arg9[%c4_91, %c1_92, %c0_93] : memref<20x20x4xf32, #tpu.memory_space<vmem>>, vector<16x16x4xf32>
    %69 = vector.shape_cast %68 : vector<16x16x4xf32> to vector<256x4xf32>
    %c0_94 = arith.constant 0 : index
    %c84 = arith.constant 84 : index
    %70 = vector.load %arg10[%c0_94, %c84] : memref<256x100xf32, #tpu.memory_space<vmem>>, vector<256x4xf32>
    tpu.vector_store %arg10[%c0_94, %c84], %69 {strides = array<i32>} : memref<256x100xf32, #tpu.memory_space<vmem>>, vector<256x4xf32>,
    %c4_95 = arith.constant 4 : index
    %c2_96 = arith.constant 2 : index
    %c0_97 = arith.constant 0 : index
    %71 = vector.load %arg9[%c4_95, %c2_96, %c0_97] : memref<20x20x4xf32, #tpu.memory_space<vmem>>, vector<16x16x4xf32>
    %72 = vector.shape_cast %71 : vector<16x16x4xf32> to vector<256x4xf32>
    %c0_98 = arith.constant 0 : index
    %c88 = arith.constant 88 : index
    %73 = vector.load %arg10[%c0_98, %c88] : memref<256x100xf32, #tpu.memory_space<vmem>>, vector<256x4xf32>
    tpu.vector_store %arg10[%c0_98, %c88], %72 {strides = array<i32>} : memref<256x100xf32, #tpu.memory_space<vmem>>, vector<256x4xf32>,
    %c4_99 = arith.constant 4 : index
    %c3_100 = arith.constant 3 : index
    %c0_101 = arith.constant 0 : index
    %74 = vector.load %arg9[%c4_99, %c3_100, %c0_101] : memref<20x20x4xf32, #tpu.memory_space<vmem>>, vector<16x16x4xf32>
    %75 = vector.shape_cast %74 : vector<16x16x4xf32> to vector<256x4xf32>
    %c0_102 = arith.constant 0 : index
    %c92 = arith.constant 92 : index
    %76 = vector.load %arg10[%c0_102, %c92] : memref<256x100xf32, #tpu.memory_space<vmem>>, vector<256x4xf32>
    tpu.vector_store %arg10[%c0_102, %c92], %75 {strides = array<i32>} : memref<256x100xf32, #tpu.memory_space<vmem>>, vector<256x4xf32>,
    %c4_103 = arith.constant 4 : index
    %c4_104 = arith.constant 4 : index
    %c0_105 = arith.constant 0 : index
    %77 = vector.load %arg9[%c4_103, %c4_104, %c0_105] : memref<20x20x4xf32, #tpu.memory_space<vmem>>, vector<16x16x4xf32>
    %78 = vector.shape_cast %77 : vector<16x16x4xf32> to vector<256x4xf32>
    %c0_106 = arith.constant 0 : index
    %c96 = arith.constant 96 : index
    %79 = vector.load %arg10[%c0_106, %c96] : memref<256x100xf32, #tpu.memory_space<vmem>>, vector<256x4xf32>
    tpu.vector_store %arg10[%c0_106, %c96], %78 {strides = array<i32>} : memref<256x100xf32, #tpu.memory_space<vmem>>, vector<256x4xf32>,
    %c0_107 = arith.constant 0 : index
    %c0_108 = arith.constant 0 : index
    %80 = vector.load %arg10[%c0_107, %c0_108] : memref<256x100xf32, #tpu.memory_space<vmem>>, vector<256x100xf32>
    %c0_109 = arith.constant 0 : index
    %c0_110 = arith.constant 0 : index
    %81 = vector.load %arg2[%c0_109, %c0_110] : memref<100x20xf32, #tpu.memory_space<vmem>>, vector<100x20xf32>
    %cst_111 = arith.constant dense<0.000000e+00> : vector<256x20xf32>
    %82 = tpu.matmul %80, %81, %cst_111 {dimension_numbers = #tpu.dot_dimension_numbers<[1], [0], [0], [1], [0, 0, 1, 1], [], []>} : vector<256x100xf32>, vector<100x20xf32>, vector<256x20xf32> -> vector<256x20xf32>
    %c0_112 = arith.constant 0 : index
    %c0_113 = arith.constant 0 : index
    %83 = vector.load %arg3[%c0_112, %c0_113] : memref<1x20xf32, #tpu.memory_space<vmem>>, vector<1x20xf32>
    %84 = vector.broadcast %83 : vector<1x20xf32> to vector<256x20xf32>
    %85 = arith.addf %82, %84 : vector<256x20xf32>
    %cst_114 = arith.constant 0.000000e+00 : f32
    %86 = vector.broadcast %cst_114 : f32 to vector<256x20xf32>
    %87 = arith.cmpf oge, %85, %86 : vector<256x20xf32>
    %cst_115 = arith.constant 0.00999999977 : f32
    %88 = vector.broadcast %cst_115 : f32 to vector<256x20xf32>
    %89 = arith.mulf %85, %88 : vector<256x20xf32>
    %90 = arith.select %87, %85, %89 : vector<256x20xi1>, vector<256x20xf32>
    %91 = vector.shape_cast %90 : vector<256x20xf32> to vector<16x16x20xf32>
    %cst_116 = arith.constant 0.000000e+00 : f32
    %92 = vector.broadcast %cst_116 : f32 to vector<18x18x20xf32>
    %c0_117 = arith.constant 0 : index
    %c0_118 = arith.constant 0 : index
    %c0_119 = arith.constant 0 : index
    %93 = vector.load %arg11[%c0_117, %c0_118, %c0_119] : memref<18x18x20xf32, #tpu.memory_space<vmem>>, vector<18x18x20xf32>
    tpu.vector_store %arg11[%c0_117, %c0_118, %c0_119], %92 {strides = array<i32>} : memref<18x18x20xf32, #tpu.memory_space<vmem>>, vector<18x18x20xf32>,
    %c1_120 = arith.constant 1 : index
    %c1_121 = arith.constant 1 : index
    %c0_122 = arith.constant 0 : index
    %94 = vector.load %arg11[%c1_120, %c1_121, %c0_122] : memref<18x18x20xf32, #tpu.memory_space<vmem>>, vector<16x16x20xf32>
    tpu.vector_store %arg11[%c1_120, %c1_121, %c0_122], %91 {strides = array<i32>} : memref<18x18x20xf32, #tpu.memory_space<vmem>>, vector<16x16x20xf32>,
    %c0_123 = arith.constant 0 : index
    %c0_124 = arith.constant 0 : index
    %c0_125 = arith.constant 0 : index
    %95 = vector.load %arg11[%c0_123, %c0_124, %c0_125] : memref<18x18x20xf32, #tpu.memory_space<vmem>>, vector<16x16x20xf32>
    %96 = vector.shape_cast %95 : vector<16x16x20xf32> to vector<256x20xf32>
    %c0_126 = arith.constant 0 : index
    %c0_127 = arith.constant 0 : index
    %97 = vector.load %arg12[%c0_126, %c0_127] : memref<256x180xf32, #tpu.memory_space<vmem>>, vector<256x20xf32>
    tpu.vector_store %arg12[%c0_126, %c0_127], %96 {strides = array<i32>} : memref<256x180xf32, #tpu.memory_space<vmem>>, vector<256x20xf32>,
    %c0_128 = arith.constant 0 : index
    %c1_129 = arith.constant 1 : index
    %c0_130 = arith.constant 0 : index
    %98 = vector.load %arg11[%c0_128, %c1_129, %c0_130] : memref<18x18x20xf32, #tpu.memory_space<vmem>>, vector<16x16x20xf32>
    %99 = vector.shape_cast %98 : vector<16x16x20xf32> to vector<256x20xf32>
    %c0_131 = arith.constant 0 : index
    %c20_132 = arith.constant 20 : index
    %100 = vector.load %arg12[%c0_131, %c20_132] : memref<256x180xf32, #tpu.memory_space<vmem>>, vector<256x20xf32>
    tpu.vector_store %arg12[%c0_131, %c20_132], %99 {strides = array<i32>} : memref<256x180xf32, #tpu.memory_space<vmem>>, vector<256x20xf32>,
    %c0_133 = arith.constant 0 : index
    %c2_134 = arith.constant 2 : index
    %c0_135 = arith.constant 0 : index
    %101 = vector.load %arg11[%c0_133, %c2_134, %c0_135] : memref<18x18x20xf32, #tpu.memory_space<vmem>>, vector<16x16x20xf32>
    %102 = vector.shape_cast %101 : vector<16x16x20xf32> to vector<256x20xf32>
    %c0_136 = arith.constant 0 : index
    %c40_137 = arith.constant 40 : index
    %103 = vector.load %arg12[%c0_136, %c40_137] : memref<256x180xf32, #tpu.memory_space<vmem>>, vector<256x20xf32>
    tpu.vector_store %arg12[%c0_136, %c40_137], %102 {strides = array<i32>} : memref<256x180xf32, #tpu.memory_space<vmem>>, vector<256x20xf32>,
    %c1_138 = arith.constant 1 : index
    %c0_139 = arith.constant 0 : index
    %c0_140 = arith.constant 0 : index
    %104 = vector.load %arg11[%c1_138, %c0_139, %c0_140] : memref<18x18x20xf32, #tpu.memory_space<vmem>>, vector<16x16x20xf32>
    %105 = vector.shape_cast %104 : vector<16x16x20xf32> to vector<256x20xf32>
    %c0_141 = arith.constant 0 : index
    %c60_142 = arith.constant 60 : index
    %106 = vector.load %arg12[%c0_141, %c60_142] : memref<256x180xf32, #tpu.memory_space<vmem>>, vector<256x20xf32>
    tpu.vector_store %arg12[%c0_141, %c60_142], %105 {strides = array<i32>} : memref<256x180xf32, #tpu.memory_space<vmem>>, vector<256x20xf32>,
    %c1_143 = arith.constant 1 : index
    %c1_144 = arith.constant 1 : index
    %c0_145 = arith.constant 0 : index
    %107 = vector.load %arg11[%c1_143, %c1_144, %c0_145] : memref<18x18x20xf32, #tpu.memory_space<vmem>>, vector<16x16x20xf32>
    %108 = vector.shape_cast %107 : vector<16x16x20xf32> to vector<256x20xf32>
    %c0_146 = arith.constant 0 : index
    %c80_147 = arith.constant 80 : index
    %109 = vector.load %arg12[%c0_146, %c80_147] : memref<256x180xf32, #tpu.memory_space<vmem>>, vector<256x20xf32>
    tpu.vector_store %arg12[%c0_146, %c80_147], %108 {strides = array<i32>} : memref<256x180xf32, #tpu.memory_space<vmem>>, vector<256x20xf32>,
    %c1_148 = arith.constant 1 : index
    %c2_149 = arith.constant 2 : index
    %c0_150 = arith.constant 0 : index
    %110 = vector.load %arg11[%c1_148, %c2_149, %c0_150] : memref<18x18x20xf32, #tpu.memory_space<vmem>>, vector<16x16x20xf32>
    %111 = vector.shape_cast %110 : vector<16x16x20xf32> to vector<256x20xf32>
    %c0_151 = arith.constant 0 : index
    %c100 = arith.constant 100 : index
    %112 = vector.load %arg12[%c0_151, %c100] : memref<256x180xf32, #tpu.memory_space<vmem>>, vector<256x20xf32>
    tpu.vector_store %arg12[%c0_151, %c100], %111 {strides = array<i32>} : memref<256x180xf32, #tpu.memory_space<vmem>>, vector<256x20xf32>,
    %c2_152 = arith.constant 2 : index
    %c0_153 = arith.constant 0 : index
    %c0_154 = arith.constant 0 : index
    %113 = vector.load %arg11[%c2_152, %c0_153, %c0_154] : memref<18x18x20xf32, #tpu.memory_space<vmem>>, vector<16x16x20xf32>
    %114 = vector.shape_cast %113 : vector<16x16x20xf32> to vector<256x20xf32>
    %c0_155 = arith.constant 0 : index
    %c120 = arith.constant 120 : index
    %115 = vector.load %arg12[%c0_155, %c120] : memref<256x180xf32, #tpu.memory_space<vmem>>, vector<256x20xf32>
    tpu.vector_store %arg12[%c0_155, %c120], %114 {strides = array<i32>} : memref<256x180xf32, #tpu.memory_space<vmem>>, vector<256x20xf32>,
    %c2_156 = arith.constant 2 : index
    %c1_157 = arith.constant 1 : index
    %c0_158 = arith.constant 0 : index
    %116 = vector.load %arg11[%c2_156, %c1_157, %c0_158] : memref<18x18x20xf32, #tpu.memory_space<vmem>>, vector<16x16x20xf32>
    %117 = vector.shape_cast %116 : vector<16x16x20xf32> to vector<256x20xf32>
    %c0_159 = arith.constant 0 : index
    %c140 = arith.constant 140 : index
    %118 = vector.load %arg12[%c0_159, %c140] : memref<256x180xf32, #tpu.memory_space<vmem>>, vector<256x20xf32>
    tpu.vector_store %arg12[%c0_159, %c140], %117 {strides = array<i32>} : memref<256x180xf32, #tpu.memory_space<vmem>>, vector<256x20xf32>,
    %c2_160 = arith.constant 2 : index
    %c2_161 = arith.constant 2 : index
    %c0_162 = arith.constant 0 : index
    %119 = vector.load %arg11[%c2_160, %c2_161, %c0_162] : memref<18x18x20xf32, #tpu.memory_space<vmem>>, vector<16x16x20xf32>
    %120 = vector.shape_cast %119 : vector<16x16x20xf32> to vector<256x20xf32>
    %c0_163 = arith.constant 0 : index
    %c160 = arith.constant 160 : index
    %121 = vector.load %arg12[%c0_163, %c160] : memref<256x180xf32, #tpu.memory_space<vmem>>, vector<256x20xf32>
    tpu.vector_store %arg12[%c0_163, %c160], %120 {strides = array<i32>} : memref<256x180xf32, #tpu.memory_space<vmem>>, vector<256x20xf32>,
    %c0_164 = arith.constant 0 : index
    %c0_165 = arith.constant 0 : index
    %122 = vector.load %arg12[%c0_164, %c0_165] : memref<256x180xf32, #tpu.memory_space<vmem>>, vector<256x180xf32>
    %c0_166 = arith.constant 0 : index
    %c0_167 = arith.constant 0 : index
    %123 = vector.load %arg4[%c0_166, %c0_167] : memref<180x40xf32, #tpu.memory_space<vmem>>, vector<180x40xf32>
    %cst_168 = arith.constant dense<0.000000e+00> : vector<256x40xf32>
    %124 = tpu.matmul %122, %123, %cst_168 {dimension_numbers = #tpu.dot_dimension_numbers<[1], [0], [0], [1], [0, 0, 1, 1], [], []>} : vector<256x180xf32>, vector<180x40xf32>, vector<256x40xf32> -> vector<256x40xf32>
    %c0_169 = arith.constant 0 : index
    %c0_170 = arith.constant 0 : index
    %125 = vector.load %arg5[%c0_169, %c0_170] : memref<1x40xf32, #tpu.memory_space<vmem>>, vector<1x40xf32>
    %126 = vector.broadcast %125 : vector<1x40xf32> to vector<256x40xf32>
    %127 = arith.addf %124, %126 : vector<256x40xf32>
    %cst_171 = arith.constant 0.000000e+00 : f32
    %128 = vector.broadcast %cst_171 : f32 to vector<256x40xf32>
    %129 = arith.cmpf oge, %127, %128 : vector<256x40xf32>
    %cst_172 = arith.constant 0.00999999977 : f32
    %130 = vector.broadcast %cst_172 : f32 to vector<256x40xf32>
    %131 = arith.mulf %127, %130 : vector<256x40xf32>
    %132 = arith.select %129, %127, %131 : vector<256x40xi1>, vector<256x40xf32>
    %133 = vector.shape_cast %132 : vector<256x40xf32> to vector<16x16x40xf32>
    %cst_173 = arith.constant 0.000000e+00 : f32
    %134 = vector.broadcast %cst_173 : f32 to vector<18x18x40xf32>
    %c0_174 = arith.constant 0 : index
    %c0_175 = arith.constant 0 : index
    %c0_176 = arith.constant 0 : index
    %135 = vector.load %arg13[%c0_174, %c0_175, %c0_176] : memref<18x18x40xf32, #tpu.memory_space<vmem>>, vector<18x18x40xf32>
    tpu.vector_store %arg13[%c0_174, %c0_175, %c0_176], %134 {strides = array<i32>} : memref<18x18x40xf32, #tpu.memory_space<vmem>>, vector<18x18x40xf32>,
    %c1_177 = arith.constant 1 : index
    %c1_178 = arith.constant 1 : index
    %c0_179 = arith.constant 0 : index
    %136 = vector.load %arg13[%c1_177, %c1_178, %c0_179] : memref<18x18x40xf32, #tpu.memory_space<vmem>>, vector<16x16x40xf32>
    tpu.vector_store %arg13[%c1_177, %c1_178, %c0_179], %133 {strides = array<i32>} : memref<18x18x40xf32, #tpu.memory_space<vmem>>, vector<16x16x40xf32>,
    %c0_180 = arith.constant 0 : index
    %c0_181 = arith.constant 0 : index
    %c0_182 = arith.constant 0 : index
    %137 = vector.load %arg13[%c0_180, %c0_181, %c0_182] : memref<18x18x40xf32, #tpu.memory_space<vmem>>, vector<16x16x40xf32>
    %138 = vector.shape_cast %137 : vector<16x16x40xf32> to vector<256x40xf32>
    %c0_183 = arith.constant 0 : index
    %c0_184 = arith.constant 0 : index
    %139 = vector.load %arg14[%c0_183, %c0_184] : memref<256x360xf32, #tpu.memory_space<vmem>>, vector<256x40xf32>
    tpu.vector_store %arg14[%c0_183, %c0_184], %138 {strides = array<i32>} : memref<256x360xf32, #tpu.memory_space<vmem>>, vector<256x40xf32>,
    %c0_185 = arith.constant 0 : index
    %c1_186 = arith.constant 1 : index
    %c0_187 = arith.constant 0 : index
    %140 = vector.load %arg13[%c0_185, %c1_186, %c0_187] : memref<18x18x40xf32, #tpu.memory_space<vmem>>, vector<16x16x40xf32>
    %141 = vector.shape_cast %140 : vector<16x16x40xf32> to vector<256x40xf32>
    %c0_188 = arith.constant 0 : index
    %c40_189 = arith.constant 40 : index
    %142 = vector.load %arg14[%c0_188, %c40_189] : memref<256x360xf32, #tpu.memory_space<vmem>>, vector<256x40xf32>
    tpu.vector_store %arg14[%c0_188, %c40_189], %141 {strides = array<i32>} : memref<256x360xf32, #tpu.memory_space<vmem>>, vector<256x40xf32>,
    %c0_190 = arith.constant 0 : index
    %c2_191 = arith.constant 2 : index
    %c0_192 = arith.constant 0 : index
    %143 = vector.load %arg13[%c0_190, %c2_191, %c0_192] : memref<18x18x40xf32, #tpu.memory_space<vmem>>, vector<16x16x40xf32>
    %144 = vector.shape_cast %143 : vector<16x16x40xf32> to vector<256x40xf32>
    %c0_193 = arith.constant 0 : index
    %c80_194 = arith.constant 80 : index
    %145 = vector.load %arg14[%c0_193, %c80_194] : memref<256x360xf32, #tpu.memory_space<vmem>>, vector<256x40xf32>
    tpu.vector_store %arg14[%c0_193, %c80_194], %144 {strides = array<i32>} : memref<256x360xf32, #tpu.memory_space<vmem>>, vector<256x40xf32>,
    %c1_195 = arith.constant 1 : index
    %c0_196 = arith.constant 0 : index
    %c0_197 = arith.constant 0 : index
    %146 = vector.load %arg13[%c1_195, %c0_196, %c0_197] : memref<18x18x40xf32, #tpu.memory_space<vmem>>, vector<16x16x40xf32>
    %147 = vector.shape_cast %146 : vector<16x16x40xf32> to vector<256x40xf32>
    %c0_198 = arith.constant 0 : index
    %c120_199 = arith.constant 120 : index
    %148 = vector.load %arg14[%c0_198, %c120_199] : memref<256x360xf32, #tpu.memory_space<vmem>>, vector<256x40xf32>
    tpu.vector_store %arg14[%c0_198, %c120_199], %147 {strides = array<i32>} : memref<256x360xf32, #tpu.memory_space<vmem>>, vector<256x40xf32>,
    %c1_200 = arith.constant 1 : index
    %c1_201 = arith.constant 1 : index
    %c0_202 = arith.constant 0 : index
    %149 = vector.load %arg13[%c1_200, %c1_201, %c0_202] : memref<18x18x40xf32, #tpu.memory_space<vmem>>, vector<16x16x40xf32>
    %150 = vector.shape_cast %149 : vector<16x16x40xf32> to vector<256x40xf32>
    %c0_203 = arith.constant 0 : index
    %c160_204 = arith.constant 160 : index
    %151 = vector.load %arg14[%c0_203, %c160_204] : memref<256x360xf32, #tpu.memory_space<vmem>>, vector<256x40xf32>
    tpu.vector_store %arg14[%c0_203, %c160_204], %150 {strides = array<i32>} : memref<256x360xf32, #tpu.memory_space<vmem>>, vector<256x40xf32>,
    %c1_205 = arith.constant 1 : index
    %c2_206 = arith.constant 2 : index
    %c0_207 = arith.constant 0 : index
    %152 = vector.load %arg13[%c1_205, %c2_206, %c0_207] : memref<18x18x40xf32, #tpu.memory_space<vmem>>, vector<16x16x40xf32>
    %153 = vector.shape_cast %152 : vector<16x16x40xf32> to vector<256x40xf32>
    %c0_208 = arith.constant 0 : index
    %c200 = arith.constant 200 : index
    %154 = vector.load %arg14[%c0_208, %c200] : memref<256x360xf32, #tpu.memory_space<vmem>>, vector<256x40xf32>
    tpu.vector_store %arg14[%c0_208, %c200], %153 {strides = array<i32>} : memref<256x360xf32, #tpu.memory_space<vmem>>, vector<256x40xf32>,
    %c2_209 = arith.constant 2 : index
    %c0_210 = arith.constant 0 : index
    %c0_211 = arith.constant 0 : index
    %155 = vector.load %arg13[%c2_209, %c0_210, %c0_211] : memref<18x18x40xf32, #tpu.memory_space<vmem>>, vector<16x16x40xf32>
    %156 = vector.shape_cast %155 : vector<16x16x40xf32> to vector<256x40xf32>
    %c0_212 = arith.constant 0 : index
    %c240 = arith.constant 240 : index
    %157 = vector.load %arg14[%c0_212, %c240] : memref<256x360xf32, #tpu.memory_space<vmem>>, vector<256x40xf32>
    tpu.vector_store %arg14[%c0_212, %c240], %156 {strides = array<i32>} : memref<256x360xf32, #tpu.memory_space<vmem>>, vector<256x40xf32>,
    %c2_213 = arith.constant 2 : index
    %c1_214 = arith.constant 1 : index
    %c0_215 = arith.constant 0 : index
    %158 = vector.load %arg13[%c2_213, %c1_214, %c0_215] : memref<18x18x40xf32, #tpu.memory_space<vmem>>, vector<16x16x40xf32>
    %159 = vector.shape_cast %158 : vector<16x16x40xf32> to vector<256x40xf32>
    %c0_216 = arith.constant 0 : index
    %c280 = arith.constant 280 : index
    %160 = vector.load %arg14[%c0_216, %c280] : memref<256x360xf32, #tpu.memory_space<vmem>>, vector<256x40xf32>
    tpu.vector_store %arg14[%c0_216, %c280], %159 {strides = array<i32>} : memref<256x360xf32, #tpu.memory_space<vmem>>, vector<256x40xf32>,
    %c2_217 = arith.constant 2 : index
    %c2_218 = arith.constant 2 : index
    %c0_219 = arith.constant 0 : index
    %161 = vector.load %arg13[%c2_217, %c2_218, %c0_219] : memref<18x18x40xf32, #tpu.memory_space<vmem>>, vector<16x16x40xf32>
    %162 = vector.shape_cast %161 : vector<16x16x40xf32> to vector<256x40xf32>
    %c0_220 = arith.constant 0 : index
    %c320 = arith.constant 320 : index
    %163 = vector.load %arg14[%c0_220, %c320] : memref<256x360xf32, #tpu.memory_space<vmem>>, vector<256x40xf32>
    tpu.vector_store %arg14[%c0_220, %c320], %162 {strides = array<i32>} : memref<256x360xf32, #tpu.memory_space<vmem>>, vector<256x40xf32>,
    %c0_221 = arith.constant 0 : index
    %c0_222 = arith.constant 0 : index
    %164 = vector.load %arg14[%c0_221, %c0_222] : memref<256x360xf32, #tpu.memory_space<vmem>>, vector<256x360xf32>
    %c0_223 = arith.constant 0 : index
    %c0_224 = arith.constant 0 : index
    %165 = vector.load %arg6[%c0_223, %c0_224] : memref<360x8xf32, #tpu.memory_space<vmem>>, vector<360x8xf32>
    %cst_225 = arith.constant dense<0.000000e+00> : vector<256x8xf32>
    %166 = tpu.matmul %164, %165, %cst_225 {dimension_numbers = #tpu.dot_dimension_numbers<[1], [0], [0], [1], [0, 0, 1, 1], [], []>} : vector<256x360xf32>, vector<360x8xf32>, vector<256x8xf32> -> vector<256x8xf32>
    %c0_226 = arith.constant 0 : index
    %c0_227 = arith.constant 0 : index
    %167 = vector.load %arg7[%c0_226, %c0_227] : memref<1x8xf32, #tpu.memory_space<vmem>>, vector<1x8xf32>
    %168 = vector.broadcast %167 : vector<1x8xf32> to vector<256x8xf32>
    %169 = arith.addf %166, %168 : vector<256x8xf32>
    %170 = vector.shape_cast %169 : vector<256x8xf32> to vector<16x16x8xf32>
    %c0_228 = arith.constant 0 : index
    %c0_229 = arith.constant 0 : index
    %c0_230 = arith.constant 0 : index
    %c0_231 = arith.constant 0 : index
    %171 = vector.load %arg8[%c0_228, %c0_229, %c0_230, %c0_231] : memref<1x16x16x8xf32, #tpu.memory_space<vmem>>, vector<1x16x16x8xf32>
    %172 = vector.shape_cast %171 : vector<1x16x16x8xf32> to vector<16x16x8xf32>
    %173 = vector.shape_cast %170 : vector<16x16x8xf32> to vector<1x16x16x8xf32>
    tpu.vector_store %arg8[%c0_228, %c0_229, %c0_230, %c0_231], %173 {strides = array<i32>} : memref<1x16x16x8xf32, #tpu.memory_space<vmem>>, vector<1x16x16x8xf32>,
    return
  }
  func.func @transform_0(%arg0: i32) -> (i32, i32, i32, i32) {
    %c0_i32 = arith.constant 0 : i32
    %c0_i32_0 = arith.constant 0 : i32
    %c0_i32_1 = arith.constant 0 : i32
    %c0_i32_2 = arith.constant 0 : i32
    return %arg0, %c0_i32, %c0_i32_0, %c0_i32_1 : i32, i32, i32, i32
  }
  func.func @transform_1(%arg0: i32) -> (i32, i32) {
    %c0_i32 = arith.constant 0 : i32
    %c0_i32_0 = arith.constant 0 : i32
    %c0_i32_1 = arith.constant 0 : i32
    return %c0_i32, %c0_i32_0 : i32, i32
  }
  func.func @transform_2(%arg0: i32) -> (i32, i32) {
    %c0_i32 = arith.constant 0 : i32
    %c0_i32_0 = arith.constant 0 : i32
    %c0_i32_1 = arith.constant 0 : i32
    return %c0_i32, %c0_i32_0 : i32, i32
  }
  func.func @transform_3(%arg0: i32) -> (i32, i32) {
    %c0_i32 = arith.constant 0 : i32
    %c0_i32_0 = arith.constant 0 : i32
    %c0_i32_1 = arith.constant 0 : i32
    return %c0_i32, %c0_i32_0 : i32, i32
  }
  func.func @transform_4(%arg0: i32) -> (i32, i32) {
    %c0_i32 = arith.constant 0 : i32
    %c0_i32_0 = arith.constant 0 : i32
    %c0_i32_1 = arith.constant 0 : i32
    return %c0_i32, %c0_i32_0 : i32, i32
  }
  func.func @transform_5(%arg0: i32) -> (i32, i32) {
    %c0_i32 = arith.constant 0 : i32
    %c0_i32_0 = arith.constant 0 : i32
    %c0_i32_1 = arith.constant 0 : i32
    return %c0_i32, %c0_i32_0 : i32, i32
  }
  func.func @transform_6(%arg0: i32) -> (i32, i32) {
    %c0_i32 = arith.constant 0 : i32
    %c0_i32_0 = arith.constant 0 : i32
    %c0_i32_1 = arith.constant 0 : i32
    return %c0_i32, %c0_i32_0 : i32, i32
  }
  func.func @transform_7(%arg0: i32) -> (i32, i32, i32, i32) {
    %c0_i32 = arith.constant 0 : i32
    %c0_i32_0 = arith.constant 0 : i32
    %c0_i32_1 = arith.constant 0 : i32
    %c0_i32_2 = arith.constant 0 : i32
    return %arg0, %c0_i32, %c0_i32_0, %c0_i32_1 : i32, i32, i32, i32
  }
}

</mosaic_0001>

<llo_original>
// kernel: down_feature_forward.1
$region0: #{down_feature_forward.1}
  #allocation0 [shape = 'u32[]', space=smem, size = 0x4, offset = 0x4, fixed_abs, tag = 'smem constant byte address 0x4 - core index']
  #allocation1 [shape = 'u32[144,128]{1,0:T(1,128)}', space=vmem, size = 0x12000, scoped, tag = 'internal scratch']
  #allocation2 [shape = 'f32[20,20,4]{2,1,0:T(8,128)}', space=vmem, size = 0x3c000, scoped, tag = 'scratch operand']
  #allocation3 [shape = 'f32[256,100]{1,0:T(8,128)}', space=vmem, size = 0x20000, scoped, tag = 'scratch operand']
  #allocation4 [shape = 'f32[18,18,20]{2,1,0:T(8,128)}', space=vmem, size = 0x36000, scoped, tag = 'scratch operand']
  #allocation5 [shape = 'f32[256,180]{1,0:T(8,128)}', space=vmem, size = 0x40000, scoped, tag = 'scratch operand']
  #allocation6 [shape = 'f32[18,18,40]{2,1,0:T(8,128)}', space=vmem, size = 0x36000, scoped, tag = 'scratch operand']
  #allocation7 [shape = 'f32[256,360]{1,0:T(8,128)}', space=vmem, size = 0x60000, scoped, tag = 'scratch operand']
  %s0 = inlined_call_operand.vmem [shape: f32[2,16,16,4], index: 0, kind: input, shape index: {}]
  %s1 = inlined_call_operand.vmem [shape: f32[100,20], index: 1, kind: input, shape index: {}]
  %s2 = inlined_call_operand.vmem [shape: f32[1,20], index: 2, kind: input, shape index: {}]
  %s3 = inlined_call_operand.vmem [shape: f32[180,40], index: 3, kind: input, shape index: {}]
  %s4 = inlined_call_operand.vmem [shape: f32[1,40], index: 4, kind: input, shape index: {}]
  %s5 = inlined_call_operand.vmem [shape: f32[360,8], index: 5, kind: input, shape index: {}]
  %s6 = inlined_call_operand.vmem [shape: f32[1,8], index: 6, kind: input, shape index: {}]
  %s7 = inlined_call_operand.vmem [shape: f32[2,16,16,8], index: 7, kind: output, shape index: {}]
  %s8 = sld [smem:[#allocation0]]
  $region61: #{down_feature_forward.1} parent=0
    _
  %s10 = ssub.s32 1, %s8
  %s11 = scalar_select 0, %s10, %s8
  loop: start=0, step=1, limit=4
  $region2: #{down_feature_forward.1} parent=0 // loop_pre_header
    _
  $region3: #{down_feature_forward.1} parent=0 // loop_header
    %s13 = sphi 0, %s17
    %p14 = scmp.ge.s32.totalorder %s13, 4
    %s23 = sphi 0, %s25
    %s26 = sphi 0, %s23
    %s27 = sphi 0, %s26
    %s43 = sphi 0, %s27
    %s47 = sphi 0, %s47
    %s49 = sphi 0, %s47
    %s50 = sphi 0, %s49
    %s64 = sphi 0, %s50
    %s68 = sphi 0, %s68
    %s70 = sphi 0, %s68
    %s71 = sphi 0, %s70
    %s85 = sphi 0, %s71
    %s89 = sphi 0, %s89
    %s91 = sphi 0, %s89
    %s92 = sphi 0, %s91
    %s106 = sphi 0, %s92
    %s110 = sphi 0, %s110
    %s112 = sphi 0, %s110
    %s113 = sphi 0, %s112
    %s127 = sphi 0, %s113
    %s131 = sphi 0, %s131
    %s133 = sphi 0, %s131
    %s134 = sphi 0, %s133
    %s148 = sphi 0, %s134
    %s152 = sphi 0, %s152
    %s154 = sphi 0, %s152
    %s155 = sphi 0, %s154
    %s169 = sphi 0, %s155
    %s175 = sphi 0, %s177
    %s178 = sphi 0, %s175
    %s179 = sphi 0, %s178
    %s195 = sphi 0, %s179
  $region4: #{down_feature_forward.1} parent=0 // loop_header_branch
    %16 = sbr.rel (%p14) target = $region8
  $region5: #{down_feature_forward.1} parent=0 // loop_body
    %s18 = ssub.s32 %s13, 1
    %s19 = ssub.s32 %s13, 2
    %s20 = sadd.s32 %s13, 1
    %s21 = ssub.s32 %s13, %s20
    %p22 = scmp.eq.s32.totalorder %s21, 0
    %s24 = sadd.s32 %s23, 1
    %s25 = scalar_select %p22, %s23, %s24
    %p28 = pneg %p22
    %p29 = scmp.eq.s32.totalorder %s13, 1
    %p30 = por %p28, %p29
    %p31 = scmp.ne.s32.totalorder %s23, %s26
    %p32 = scmp.eq.s32.totalorder %s13, 0
    %p33 = por %p31, %p32
    %p34 = scmp.ne.s32.totalorder %s23, %s26
    %p35 = scmp.eq.s32.totalorder %s18, 1
    %p36 = por %p34, %p35
    %p37 = scmp.ne.s32.totalorder %s26, %s27
    %p38 = scmp.eq.s32.totalorder %s18, 0
    %p39 = por %p37, %p38
    %p40 = scmp.ne.s32.totalorder %s26, %s27
    %p41 = scmp.eq.s32.totalorder %s19, 1
    %p42 = por %p40, %p41
    %p44 = scmp.ne.s32.totalorder %s27, %s43
    %p45 = scmp.eq.s32.totalorder %s19, 0
    %p46 = por %p44, %p45
    %s48 = sadd.s32 %s47, 1
    %p51 = scmp.eq.s32.totalorder %s13, 1
    %p52 = scmp.ne.s32.totalorder %s47, %s49
    %p53 = scmp.eq.s32.totalorder %s13, 0
    %p54 = por %p52, %p53
    %p55 = scmp.ne.s32.totalorder %s47, %s49
    %p56 = scmp.eq.s32.totalorder %s18, 1
    %p57 = por %p55, %p56
    %p58 = scmp.ne.s32.totalorder %s49, %s50
    %p59 = scmp.eq.s32.totalorder %s18, 0
    %p60 = por %p58, %p59
    %p61 = scmp.ne.s32.totalorder %s49, %s50
    %p62 = scmp.eq.s32.totalorder %s19, 1
    %p63 = por %p61, %p62
    %p65 = scmp.ne.s32.totalorder %s50, %s64
    %p66 = scmp.eq.s32.totalorder %s19, 0
    %p67 = por %p65, %p66
    %s69 = sadd.s32 %s68, 1
    %p72 = scmp.eq.s32.totalorder %s13, 1
    %p73 = scmp.ne.s32.totalorder %s68, %s70
    %p74 = scmp.eq.s32.totalorder %s13, 0
    %p75 = por %p73, %p74
    %p76 = scmp.ne.s32.totalorder %s68, %s70
    %p77 = scmp.eq.s32.totalorder %s18, 1
    %p78 = por %p76, %p77
    %p79 = scmp.ne.s32.totalorder %s70, %s71
    %p80 = scmp.eq.s32.totalorder %s18, 0
    %p81 = por %p79, %p80
    %p82 = scmp.ne.s32.totalorder %s70, %s71
    %p83 = scmp.eq.s32.totalorder %s19, 1
    %p84 = por %p82, %p83
    %p86 = scmp.ne.s32.totalorder %s71, %s85
    %p87 = scmp.eq.s32.totalorder %s19, 0
    %p88 = por %p86, %p87
    %s90 = sadd.s32 %s89, 1
    %p93 = scmp.eq.s32.totalorder %s13, 1
    %p94 = scmp.ne.s32.totalorder %s89, %s91
    %p95 = scmp.eq.s32.totalorder %s13, 0
    %p96 = por %p94, %p95
    %p97 = scmp.ne.s32.totalorder %s89, %s91
    %p98 = scmp.eq.s32.totalorder %s18, 1
    %p99 = por %p97, %p98
    %p100 = scmp.ne.s32.totalorder %s91, %s92
    %p101 = scmp.eq.s32.totalorder %s18, 0
    %p102 = por %p100, %p101
    %p103 = scmp.ne.s32.totalorder %s91, %s92
    %p104 = scmp.eq.s32.totalorder %s19, 1
    %p105 = por %p103, %p104
    %p107 = scmp.ne.s32.totalorder %s92, %s106
    %p108 = scmp.eq.s32.totalorder %s19, 0
    %p109 = por %p107, %p108
    %s111 = sadd.s32 %s110, 1
    %p114 = scmp.eq.s32.totalorder %s13, 1
    %p115 = scmp.ne.s32.totalorder %s110, %s112
    %p116 = scmp.eq.s32.totalorder %s13, 0
    %p117 = por %p115, %p116
    %p118 = scmp.ne.s32.totalorder %s110, %s112
    %p119 = scmp.eq.s32.totalorder %s18, 1
    %p120 = por %p118, %p119
    %p121 = scmp.ne.s32.totalorder %s112, %s113
    %p122 = scmp.eq.s32.totalorder %s18, 0
    %p123 = por %p121, %p122
    %p124 = scmp.ne.s32.totalorder %s112, %s113
    %p125 = scmp.eq.s32.totalorder %s19, 1
    %p126 = por %p124, %p125
    %p128 = scmp.ne.s32.totalorder %s113, %s127
    %p129 = scmp.eq.s32.totalorder %s19, 0
    %p130 = por %p128, %p129
    %s132 = sadd.s32 %s131, 1
    %p135 = scmp.eq.s32.totalorder %s13, 1
    %p136 = scmp.ne.s32.totalorder %s131, %s133
    %p137 = scmp.eq.s32.totalorder %s13, 0
    %p138 = por %p136, %p137
    %p139 = scmp.ne.s32.totalorder %s131, %s133
    %p140 = scmp.eq.s32.totalorder %s18, 1
    %p141 = por %p139, %p140
    %p142 = scmp.ne.s32.totalorder %s133, %s134
    %p143 = scmp.eq.s32.totalorder %s18, 0
    %p144 = por %p142, %p143
    %p145 = scmp.ne.s32.totalorder %s133, %s134
    %p146 = scmp.eq.s32.totalorder %s19, 1
    %p147 = por %p145, %p146
    %p149 = scmp.ne.s32.totalorder %s134, %s148
    %p150 = scmp.eq.s32.totalorder %s19, 0
    %p151 = por %p149, %p150
    %s153 = sadd.s32 %s152, 1
    %p156 = scmp.eq.s32.totalorder %s13, 1
    %p157 = scmp.ne.s32.totalorder %s152, %s154
    %p158 = scmp.eq.s32.totalorder %s13, 0
    %p159 = por %p157, %p158
    %p160 = scmp.ne.s32.totalorder %s152, %s154
    %p161 = scmp.eq.s32.totalorder %s18, 1
    %p162 = por %p160, %p161
    %p163 = scmp.ne.s32.totalorder %s154, %s155
    %p164 = scmp.eq.s32.totalorder %s18, 0
    %p165 = por %p163, %p164
    %p166 = scmp.ne.s32.totalorder %s154, %s155
    %p167 = scmp.eq.s32.totalorder %s19, 1
    %p168 = por %p166, %p167
    %p170 = scmp.ne.s32.totalorder %s155, %s169
    %p171 = scmp.eq.s32.totalorder %s19, 0
    %p172 = por %p170, %p171
    %s173 = ssub.s32 %s13, %s20
    %p174 = scmp.eq.s32.totalorder %s173, 0
    %s176 = sadd.s32 %s175, 1
    %s177 = scalar_select %p174, %s175, %s176
    %p180 = pneg %p174
    %p181 = scmp.eq.s32.totalorder %s13, 1
    %p182 = por %p180, %p181
    %p183 = scmp.ne.s32.totalorder %s175, %s178
    %p184 = scmp.eq.s32.totalorder %s13, 0
    %p185 = por %p183, %p184
    %p186 = scmp.ne.s32.totalorder %s175, %s178
    %p187 = scmp.eq.s32.totalorder %s18, 1
    %p188 = por %p186, %p187
    %p189 = scmp.ne.s32.totalorder %s178, %s179
    %p190 = scmp.eq.s32.totalorder %s18, 0
    %p191 = por %p189, %p190
    %p192 = scmp.ne.s32.totalorder %s178, %s179
    %p193 = scmp.eq.s32.totalorder %s19, 1
    %p194 = por %p192, %p193
    %p196 = scmp.ne.s32.totalorder %s179, %s195
    %p197 = scmp.eq.s32.totalorder %s19, 0
    %p198 = por %p196, %p197
    %p199 = scmp.le.s32.totalorder 1, %s13
    %p200 = scmp.lt.s32.totalorder %s13, 3
    %p201 = pnand %p199, %p200
    %p202 = pneg %p201
    // Predicated region
    $region9: #{down_feature_forward.1} parent=5 // pred_check
      _
    $region10: #{down_feature_forward.1} parent=5 // pred_check_branch
      %204 = sbr.rel (%p201) target = $region12
    $region11: #{down_feature_forward.1} parent=5 // pred_region
      %s205 = ssub.s32 %s13, 1
      // Predicated region
      $region13: #{down_feature_forward.1} parent=11 // pred_check
        %p206 = pneg %p60
      $region14: #{down_feature_forward.1} parent=11 // pred_check_branch
        %208 = sbr.rel (%p206) target = $region16
      $region15: #{down_feature_forward.1} parent=11 // pred_region
        _
      $region16: #{down_feature_forward.1} parent=11 // pred_fallthru
        _
      // Predicated region
      $region17: #{down_feature_forward.1} parent=11 // pred_check
        %p209 = pneg %p81
      $region18: #{down_feature_forward.1} parent=11 // pred_check_branch
        %211 = sbr.rel (%p209) target = $region20
      $region19: #{down_feature_forward.1} parent=11 // pred_region
        _
      $region20: #{down_feature_forward.1} parent=11 // pred_fallthru
        _
      // Predicated region
      $region21: #{down_feature_forward.1} parent=11 // pred_check
        %p212 = pneg %p102
      $region22: #{down_feature_forward.1} parent=11 // pred_check_branch
        %214 = sbr.rel (%p212) target = $region24
      $region23: #{down_feature_forward.1} parent=11 // pred_region
        _
      $region24: #{down_feature_forward.1} parent=11 // pred_fallthru
        _
      // Predicated region
      $region25: #{down_feature_forward.1} parent=11 // pred_check
        %p215 = pneg %p123
      $region26: #{down_feature_forward.1} parent=11 // pred_check_branch
        %217 = sbr.rel (%p215) target = $region28
      $region27: #{down_feature_forward.1} parent=11 // pred_region
        _
      $region28: #{down_feature_forward.1} parent=11 // pred_fallthru
        _
      // Predicated region
      $region29: #{down_feature_forward.1} parent=11 // pred_check
        %p218 = pneg %p144
      $region30: #{down_feature_forward.1} parent=11 // pred_check_branch
        %220 = sbr.rel (%p218) target = $region32
      $region31: #{down_feature_forward.1} parent=11 // pred_region
        _
      $region32: #{down_feature_forward.1} parent=11 // pred_fallthru
        _
      // Predicated region
      $region33: #{down_feature_forward.1} parent=11 // pred_check
        %p221 = pneg %p165
      $region34: #{down_feature_forward.1} parent=11 // pred_check_branch
        %223 = sbr.rel (%p221) target = $region36
      $region35: #{down_feature_forward.1} parent=11 // pred_region
        _
      $region36: #{down_feature_forward.1} parent=11 // pred_fallthru
        _
    $region12: #{down_feature_forward.1} parent=5 // pred_fallthru
      _
    %p224 = scmp.lt.s32.totalorder %s13, 2
    // Predicated region
    $region37: #{down_feature_forward.1} parent=5 // pred_check
      %p225 = pneg %p224
    $region38: #{down_feature_forward.1} parent=5 // pred_check_branch
      %227 = sbr.rel (%p225) target = $region40
    $region39: #{down_feature_forward.1} parent=5 // pred_region
      // Predicated region
      $region41: #{down_feature_forward.1} parent=39 // pred_check
        %p228 = pneg %p33
      $region42: #{down_feature_forward.1} parent=39 // pred_check_branch
        %230 = sbr.rel (%p228) target = $region44
      $region43: #{down_feature_forward.1} parent=39 // pred_region
        %p231 = scmp.lt.s32.totalorder %s13, 1
        %s232 = scalar_select %p231, %s13, 1
        %s233 = smul.addr %s232, 32
        %s234 = smul.addr %s233, 8
        %s235 = scalar_lea.vmem %s0, %s234
      $region44: #{down_feature_forward.1} parent=39 // pred_fallthru
        _
    $region40: #{down_feature_forward.1} parent=5 // pred_fallthru
      _
    %p236 = scmp.le.s32.totalorder 1, %s13
    %p237 = scmp.lt.s32.totalorder %s13, 3
    %p238 = pnand %p236, %p237
    %p239 = pneg %p238
    // Predicated region
    $region45: #{down_feature_forward.1} parent=5 // pred_check
      _
    $region46: #{down_feature_forward.1} parent=5 // pred_check_branch
      %241 = sbr.rel (%p238) target = $region48
    $region47: #{down_feature_forward.1} parent=5 // pred_region
      %s242 = ssub.s32 %s13, 1
      %p243 = scmp.lt.s32.totalorder %s18, 1
      %s244 = scalar_select %p243, %s18, 1
      %s245 = smul.addr %s244, 32
      %s246 = smul.addr %s245, 8
      %s247 = scalar_lea.vmem %s0, %s246
      %p248 = pneg %p39
      %p249 = pneg %p36
      %p250 = pneg %p60
      %p251 = pneg %p57
      %p252 = pneg %p81
      %p253 = pneg %p78
      %p254 = pneg %p102
      %p255 = pneg %p99
      %p256 = pneg %p123
      %p257 = pneg %p120
      %p258 = pneg %p144
      %p259 = pneg %p141
      %p260 = pneg %p165
      %p261 = pneg %p162
      %p262 = pneg %p191
      %p263 = pneg %p188
      %p264 = scmp.lt.s32.totalorder %s18, 1
      %s265 = scalar_select %p264, %s18, 1
      %s266 = smul.addr %s265, 32
      %s267 = smul.addr %s266, 8
      %s268 = scalar_lea.vmem %s7, %s267
      %p269 = scmp.lt.s32.totalorder %s18, 1
      %s270 = scalar_select %p269, %s18, 1
      %s271 = smul.addr %s270, 32
      %s272 = smul.addr %s271, 8
      %s273 = scalar_lea.vmem %s0, %s272
      %p274 = scmp.lt.s32.totalorder %s18, 1
      %s275 = scalar_select %p274, %s18, 1
      %s276 = smul.addr %s275, 32
      %s277 = smul.addr %s276, 8
      %s278 = scalar_lea.vmem %s7, %s277
      %v279 = vld [vmem:[%s273] sm:$0xff]
      %v280 = vld [vmem:[%s273 + $0x8] sm:$0xff]
      %v281 = vld [vmem:[%s273 + $0x10] sm:$0xff]
      %v282 = vld [vmem:[%s273 + $0x18] sm:$0xff]
      %v283 = vld [vmem:[%s273 + $0x20] sm:$0xff]
      %v284 = vld [vmem:[%s273 + $0x28] sm:$0xff]
      %v285 = vld [vmem:[%s273 + $0x30] sm:$0xff]
      %v286 = vld [vmem:[%s273 + $0x38] sm:$0xff]
      %v287 = vld [vmem:[%s273 + $0x40] sm:$0xff]
      %v288 = vld [vmem:[%s273 + $0x48] sm:$0xff]
      %v289 = vld [vmem:[%s273 + $0x50] sm:$0xff]
      %v290 = vld [vmem:[%s273 + $0x58] sm:$0xff]
      %v291 = vld [vmem:[%s273 + $0x60] sm:$0xff]
      %v292 = vld [vmem:[%s273 + $0x68] sm:$0xff]
      %v293 = vld [vmem:[%s273 + $0x70] sm:$0xff]
      %v294 = vld [vmem:[%s273 + $0x78] sm:$0xff]
      %v295 = vld [vmem:[%s273 + $0x80] sm:$0xff]
      %v296 = vld [vmem:[%s273 + $0x88] sm:$0xff]
      %v297 = vld [vmem:[%s273 + $0x90] sm:$0xff]
      %v298 = vld [vmem:[%s273 + $0x98] sm:$0xff]
      %v299 = vld [vmem:[%s273 + $0xa0] sm:$0xff]
      %v300 = vld [vmem:[%s273 + $0xa8] sm:$0xff]
      %v301 = vld [vmem:[%s273 + $0xb0] sm:$0xff]
      %v302 = vld [vmem:[%s273 + $0xb8] sm:$0xff]
      %v303 = vld [vmem:[%s273 + $0xc0] sm:$0xff]
      %v304 = vld [vmem:[%s273 + $0xc8] sm:$0xff]
      %v305 = vld [vmem:[%s273 + $0xd0] sm:$0xff]
      %v306 = vld [vmem:[%s273 + $0xd8] sm:$0xff]
      %v307 = vld [vmem:[%s273 + $0xe0] sm:$0xff]
      %v308 = vld [vmem:[%s273 + $0xe8] sm:$0xff]
      %v309 = vld [vmem:[%s273 + $0xf0] sm:$0xff]
      %v310 = vld [vmem:[%s273 + $0xf8] sm:$0xff]
      %vm311 = vcmask 31744
      %312 = vst.msk [vmem:[#allocation2] sm:$0xff] %vm311, 0.0
      %313 = vst.msk [vmem:[#allocation2 + $0x8] sm:$0xff] %vm311, 0.0
      %vm314 = vcmask 27648
      %315 = vst.msk [vmem:[#allocation2 + $0x10] sm:$0xf] %vm314, 0.0
      %316 = vst.msk [vmem:[#allocation2 + $0x18] sm:$0xff] %vm311, 0.0
      %317 = vst.msk [vmem:[#allocation2 + $0x20] sm:$0xff] %vm311, 0.0
      %318 = vst.msk [vmem:[#allocation2 + $0x28] sm:$0xf] %vm314, 0.0
      %319 = vst.msk [vmem:[#allocation2 + $0x30] sm:$0xff] %vm311, 0.0
      %320 = vst.msk [vmem:[#allocation2 + $0x38] sm:$0xff] %vm311, 0.0
      %321 = vst.msk [vmem:[#allocation2 + $0x40] sm:$0xf] %vm314, 0.0
      %322 = vst.msk [vmem:[#allocation2 + $0x48] sm:$0xff] %vm311, 0.0
      %323 = vst.msk [vmem:[#allocation2 + $0x50] sm:$0xff] %vm311, 0.0
      %324 = vst.msk [vmem:[#allocation2 + $0x58] sm:$0xf] %vm314, 0.0
      %325 = vst.msk [vmem:[#allocation2 + $0x60] sm:$0xff] %vm311, 0.0
      %326 = vst.msk [vmem:[#allocation2 + $0x68] sm:$0xff] %vm311, 0.0
      %327 = vst.msk [vmem:[#allocation2 + $0x70] sm:$0xf] %vm314, 0.0
      %328 = vst.msk [vmem:[#allocation2 + $0x78] sm:$0xff] %vm311, 0.0
      %329 = vst.msk [vmem:[#allocation2 + $0x80] sm:$0xff] %vm311, 0.0
      %330 = vst.msk [vmem:[#allocation2 + $0x88] sm:$0xf] %vm314, 0.0
      %331 = vst.msk [vmem:[#allocation2 + $0x90] sm:$0xff] %vm311, 0.0
      %332 = vst.msk [vmem:[#allocation2 + $0x98] sm:$0xff] %vm311, 0.0
      %333 = vst.msk [vmem:[#allocation2 + $0xa0] sm:$0xf] %vm314, 0.0
      %334 = vst.msk [vmem:[#allocation2 + $0xa8] sm:$0xff] %vm311, 0.0
      %335 = vst.msk [vmem:[#allocation2 + $0xb0] sm:$0xff] %vm311, 0.0
      %336 = vst.msk [vmem:[#allocation2 + $0xb8] sm:$0xf] %vm314, 0.0
      %337 = vst.msk [vmem:[#allocation2 + $0xc0] sm:$0xff] %vm311, 0.0
      %338 = vst.msk [vmem:[#allocation2 + $0xc8] sm:$0xff] %vm311, 0.0
      %339 = vst.msk [vmem:[#allocation2 + $0xd0] sm:$0xf] %vm314, 0.0
      %340 = vst.msk [vmem:[#allocation2 + $0xd8] sm:$0xff] %vm311, 0.0
      %341 = vst.msk [vmem:[#allocation2 + $0xe0] sm:$0xff] %vm311, 0.0
      %342 = vst.msk [vmem:[#allocation2 + $0xe8] sm:$0xf] %vm314, 0.0
      %343 = vst.msk [vmem:[#allocation2 + $0xf0] sm:$0xff] %vm311, 0.0
      %344 = vst.msk [vmem:[#allocation2 + $0xf8] sm:$0xff] %vm311, 0.0
      %345 = vst.msk [vmem:[#allocation2 + $0x100] sm:$0xf] %vm314, 0.0
      %346 = vst.msk [vmem:[#allocation2 + $0x108] sm:$0xff] %vm311, 0.0
      %347 = vst.msk [vmem:[#allocation2 + $0x110] sm:$0xff] %vm311, 0.0
      %348 = vst.msk [vmem:[#allocation2 + $0x118] sm:$0xf] %vm314, 0.0
      %349 = vst.msk [vmem:[#allocation2 + $0x120] sm:$0xff] %vm311, 0.0
      %350 = vst.msk [vmem:[#allocation2 + $0x128] sm:$0xff] %vm311, 0.0
      %351 = vst.msk [vmem:[#allocation2 + $0x130] sm:$0xf] %vm314, 0.0
      %352 = vst.msk [vmem:[#allocation2 + $0x138] sm:$0xff] %vm311, 0.0
      %353 = vst.msk [vmem:[#allocation2 + $0x140] sm:$0xff] %vm311, 0.0
      %354 = vst.msk [vmem:[#allocation2 + $0x148] sm:$0xf] %vm314, 0.0
      %355 = vst.msk [vmem:[#allocation2 + $0x150] sm:$0xff] %vm311, 0.0
      %356 = vst.msk [vmem:[#allocation2 + $0x158] sm:$0xff] %vm311, 0.0
      %357 = vst.msk [vmem:[#allocation2 + $0x160] sm:$0xf] %vm314, 0.0
      %358 = vst.msk [vmem:[#allocation2 + $0x168] sm:$0xff] %vm311, 0.0
      %359 = vst.msk [vmem:[#allocation2 + $0x170] sm:$0xff] %vm311, 0.0
      %360 = vst.msk [vmem:[#allocation2 + $0x178] sm:$0xf] %vm314, 0.0
      %361 = vst.msk [vmem:[#allocation2 + $0x180] sm:$0xff] %vm311, 0.0
      %362 = vst.msk [vmem:[#allocation2 + $0x188] sm:$0xff] %vm311, 0.0
      %363 = vst.msk [vmem:[#allocation2 + $0x190] sm:$0xf] %vm314, 0.0
      %364 = vst.msk [vmem:[#allocation2 + $0x198] sm:$0xff] %vm311, 0.0
      %365 = vst.msk [vmem:[#allocation2 + $0x1a0] sm:$0xff] %vm311, 0.0
      %366 = vst.msk [vmem:[#allocation2 + $0x1a8] sm:$0xf] %vm314, 0.0
      %367 = vst.msk [vmem:[#allocation2 + $0x1b0] sm:$0xff] %vm311, 0.0
      %368 = vst.msk [vmem:[#allocation2 + $0x1b8] sm:$0xff] %vm311, 0.0
      %369 = vst.msk [vmem:[#allocation2 + $0x1c0] sm:$0xf] %vm314, 0.0
      %370 = vst.msk [vmem:[#allocation2 + $0x1c8] sm:$0xff] %vm311, 0.0
      %371 = vst.msk [vmem:[#allocation2 + $0x1d0] sm:$0xff] %vm311, 0.0
      %372 = vst.msk [vmem:[#allocation2 + $0x1d8] sm:$0xf] %vm314, 0.0
      %s373 = scalar_lea.vmem [#allocation2], 48
      %374 = vst.msk [vmem:[%s373 + $0x2] sm:$0xff] %vm311, %v279
      %375 = vst.msk [vmem:[%s373 + $0xa] sm:$0xff] %vm311, %v280
      %376 = vst.msk [vmem:[%s373 + $0x1a] sm:$0xff] %vm311, %v281
      %377 = vst.msk [vmem:[%s373 + $0x22] sm:$0xff] %vm311, %v282
      %378 = vst.msk [vmem:[%s373 + $0x32] sm:$0xff] %vm311, %v283
      %379 = vst.msk [vmem:[%s373 + $0x3a] sm:$0xff] %vm311, %v284
      %380 = vst.msk [vmem:[%s373 + $0x4a] sm:$0xff] %vm311, %v285
      %381 = vst.msk [vmem:[%s373 + $0x52] sm:$0xff] %vm311, %v286
      %382 = vst.msk [vmem:[%s373 + $0x62] sm:$0xff] %vm311, %v287
      %383 = vst.msk [vmem:[%s373 + $0x6a] sm:$0xff] %vm311, %v288
      %384 = vst.msk [vmem:[%s373 + $0x7a] sm:$0xff] %vm311, %v289
      %385 = vst.msk [vmem:[%s373 + $0x82] sm:$0xff] %vm311, %v290
      %386 = vst.msk [vmem:[%s373 + $0x92] sm:$0xff] %vm311, %v291
      %387 = vst.msk [vmem:[%s373 + $0x9a] sm:$0xff] %vm311, %v292
      %388 = vst.msk [vmem:[%s373 + $0xaa] sm:$0xff] %vm311, %v293
      %389 = vst.msk [vmem:[%s373 + $0xb2] sm:$0xff] %vm311, %v294
      %390 = vst.msk [vmem:[%s373 + $0xc2] sm:$0xff] %vm311, %v295
      %391 = vst.msk [vmem:[%s373 + $0xca] sm:$0xff] %vm311, %v296
      %392 = vst.msk [vmem:[%s373 + $0xda] sm:$0xff] %vm311, %v297
      %393 = vst.msk [vmem:[%s373 + $0xe2] sm:$0xff] %vm311, %v298
      %394 = vst.msk [vmem:[%s373 + $0xf2] sm:$0xff] %vm311, %v299
      %395 = vst.msk [vmem:[%s373 + $0xfa] sm:$0xff] %vm311, %v300
      %396 = vst.msk [vmem:[%s373 + $0x10a] sm:$0xff] %vm311, %v301
      %397 = vst.msk [vmem:[%s373 + $0x112] sm:$0xff] %vm311, %v302
      %398 = vst.msk [vmem:[%s373 + $0x122] sm:$0xff] %vm311, %v303
      %399 = vst.msk [vmem:[%s373 + $0x12a] sm:$0xff] %vm311, %v304
      %400 = vst.msk [vmem:[%s373 + $0x13a] sm:$0xff] %vm311, %v305
      %401 = vst.msk [vmem:[%s373 + $0x142] sm:$0xff] %vm311, %v306
      %402 = vst.msk [vmem:[%s373 + $0x152] sm:$0xff] %vm311, %v307
      %403 = vst.msk [vmem:[%s373 + $0x15a] sm:$0xff] %vm311, %v308
      %404 = vst.msk [vmem:[%s373 + $0x16a] sm:$0xff] %vm311, %v309
      %405 = vst.msk [vmem:[%s373 + $0x172] sm:$0xff] %vm311, %v310
      %v406 = vld [vmem:[#allocation2] sm:$0xff]
      %v407 = vld [vmem:[#allocation2 + $0x8] sm:$0xff]
      %v408 = vld [vmem:[#allocation2 + $0x18] sm:$0xff]
      %v409 = vld [vmem:[#allocation2 + $0x20] sm:$0xff]
      %v410 = vld [vmem:[#allocation2 + $0x30] sm:$0xff]
      %v411 = vld [vmem:[#allocation2 + $0x38] sm:$0xff]
      %v412 = vld [vmem:[#allocation2 + $0x48] sm:$0xff]
      %v413 = vld [vmem:[#allocation2 + $0x50] sm:$0xff]
      %v414 = vld [vmem:[#allocation2 + $0x60] sm:$0xff]
      %v415 = vld [vmem:[#allocation2 + $0x68] sm:$0xff]
      %v416 = vld [vmem:[#allocation2 + $0x78] sm:$0xff]
      %v417 = vld [vmem:[#allocation2 + $0x80] sm:$0xff]
      %v418 = vld [vmem:[#allocation2 + $0x90] sm:$0xff]
      %v419 = vld [vmem:[#allocation2 + $0x98] sm:$0xff]
      %v420 = vld [vmem:[#allocation2 + $0xa8] sm:$0xff]
      %v421 = vld [vmem:[#allocation2 + $0xb0] sm:$0xff]
      %v422 = vld [vmem:[#allocation2 + $0xc0] sm:$0xff]
      %v423 = vld [vmem:[#allocation2 + $0xc8] sm:$0xff]
      %v424 = vld [vmem:[#allocation2 + $0xd8] sm:$0xff]
      %v425 = vld [vmem:[#allocation2 + $0xe0] sm:$0xff]
      %v426 = vld [vmem:[#allocation2 + $0xf0] sm:$0xff]
      %v427 = vld [vmem:[#allocation2 + $0xf8] sm:$0xff]
      %v428 = vld [vmem:[#allocation2 + $0x108] sm:$0xff]
      %v429 = vld [vmem:[#allocation2 + $0x110] sm:$0xff]
      %v430 = vld [vmem:[#allocation2 + $0x120] sm:$0xff]
      %v431 = vld [vmem:[#allocation2 + $0x128] sm:$0xff]
      %v432 = vld [vmem:[#allocation2 + $0x138] sm:$0xff]
      %v433 = vld [vmem:[#allocation2 + $0x140] sm:$0xff]
      %v434 = vld [vmem:[#allocation2 + $0x150] sm:$0xff]
      %v435 = vld [vmem:[#allocation2 + $0x158] sm:$0xff]
      %v436 = vld [vmem:[#allocation2 + $0x168] sm:$0xff]
      %v437 = vld [vmem:[#allocation2 + $0x170] sm:$0xff]
      %438 = vst.msk [vmem:[#allocation3] sm:$0xff] %vm311, %v406
      %439 = vst.msk [vmem:[#allocation3 + $0x8] sm:$0xff] %vm311, %v407
      %440 = vst.msk [vmem:[#allocation3 + $0x10] sm:$0xff] %vm311, %v408
      %441 = vst.msk [vmem:[#allocation3 + $0x18] sm:$0xff] %vm311, %v409
      %442 = vst.msk [vmem:[#allocation3 + $0x20] sm:$0xff] %vm311, %v410
      %443 = vst.msk [vmem:[#allocation3 + $0x28] sm:$0xff] %vm311, %v411
      %444 = vst.msk [vmem:[#allocation3 + $0x30] sm:$0xff] %vm311, %v412
      %445 = vst.msk [vmem:[#allocation3 + $0x38] sm:$0xff] %vm311, %v413
      %446 = vst.msk [vmem:[#allocation3 + $0x40] sm:$0xff] %vm311, %v414
      %447 = vst.msk [vmem:[#allocation3 + $0x48] sm:$0xff] %vm311, %v415
      %448 = vst.msk [vmem:[#allocation3 + $0x50] sm:$0xff] %vm311, %v416
      %449 = vst.msk [vmem:[#allocation3 + $0x58] sm:$0xff] %vm311, %v417
      %450 = vst.msk [vmem:[#allocation3 + $0x60] sm:$0xff] %vm311, %v418
      %451 = vst.msk [vmem:[#allocation3 + $0x68] sm:$0xff] %vm311, %v419
      %452 = vst.msk [vmem:[#allocation3 + $0x70] sm:$0xff] %vm311, %v420
      %453 = vst.msk [vmem:[#allocation3 + $0x78] sm:$0xff] %vm311, %v421
      %454 = vst.msk [vmem:[#allocation3 + $0x80] sm:$0xff] %vm311, %v422
      %455 = vst.msk [vmem:[#allocation3 + $0x88] sm:$0xff] %vm311, %v423
      %456 = vst.msk [vmem:[#allocation3 + $0x90] sm:$0xff] %vm311, %v424
      %457 = vst.msk [vmem:[#allocation3 + $0x98] sm:$0xff] %vm311, %v425
      %458 = vst.msk [vmem:[#allocation3 + $0xa0] sm:$0xff] %vm311, %v426
      %459 = vst.msk [vmem:[#allocation3 + $0xa8] sm:$0xff] %vm311, %v427
      %460 = vst.msk [vmem:[#allocation3 + $0xb0] sm:$0xff] %vm311, %v428
      %461 = vst.msk [vmem:[#allocation3 + $0xb8] sm:$0xff] %vm311, %v429
      %462 = vst.msk [vmem:[#allocation3 + $0xc0] sm:$0xff] %vm311, %v430
      %463 = vst.msk [vmem:[#allocation3 + $0xc8] sm:$0xff] %vm311, %v431
      %464 = vst.msk [vmem:[#allocation3 + $0xd0] sm:$0xff] %vm311, %v432
      %465 = vst.msk [vmem:[#allocation3 + $0xd8] sm:$0xff] %vm311, %v433
      %466 = vst.msk [vmem:[#allocation3 + $0xe0] sm:$0xff] %vm311, %v434
      %467 = vst.msk [vmem:[#allocation3 + $0xe8] sm:$0xff] %vm311, %v435
      %468 = vst.msk [vmem:[#allocation3 + $0xf0] sm:$0xff] %vm311, %v436
      %469 = vst.msk [vmem:[#allocation3 + $0xf8] sm:$0xff] %vm311, %v437
      %v470 = vld [vmem:[#allocation2 + $0x1] sm:$0xff]
      %v471 = vld [vmem:[#allocation2 + $0x9] sm:$0xff]
      %v472 = vld [vmem:[#allocation2 + $0x19] sm:$0xff]
      %v473 = vld [vmem:[#allocation2 + $0x21] sm:$0xff]
      %v474 = vld [vmem:[#allocation2 + $0x31] sm:$0xff]
      %v475 = vld [vmem:[#allocation2 + $0x39] sm:$0xff]
      %v476 = vld [vmem:[#allocation2 + $0x49] sm:$0xff]
      %v477 = vld [vmem:[#allocation2 + $0x51] sm:$0xff]
      %v478 = vld [vmem:[#allocation2 + $0x61] sm:$0xff]
      %v479 = vld [vmem:[#allocation2 + $0x69] sm:$0xff]
      %v480 = vld [vmem:[#allocation2 + $0x79] sm:$0xff]
      %v481 = vld [vmem:[#allocation2 + $0x81] sm:$0xff]
      %v482 = vld [vmem:[#allocation2 + $0x91] sm:$0xff]
      %v483 = vld [vmem:[#allocation2 + $0x99] sm:$0xff]
      %v484 = vld [vmem:[#allocation2 + $0xa9] sm:$0xff]
      %v485 = vld [vmem:[#allocation2 + $0xb1] sm:$0xff]
      %v486 = vld [vmem:[#allocation2 + $0xc1] sm:$0xff]
      %v487 = vld [vmem:[#allocation2 + $0xc9] sm:$0xff]
      %v488 = vld [vmem:[#allocation2 + $0xd9] sm:$0xff]
      %v489 = vld [vmem:[#allocation2 + $0xe1] sm:$0xff]
      %v490 = vld [vmem:[#allocation2 + $0xf1] sm:$0xff]
      %v491 = vld [vmem:[#allocation2 + $0xf9] sm:$0xff]
      %v492 = vld [vmem:[#allocation2 + $0x109] sm:$0xff]
      %v493 = vld [vmem:[#allocation2 + $0x111] sm:$0xff]
      %v494 = vld [vmem:[#allocation2 + $0x121] sm:$0xff]
      %v495 = vld [vmem:[#allocation2 + $0x129] sm:$0xff]
      %v496 = vld [vmem:[#allocation2 + $0x139] sm:$0xff]
      %v497 = vld [vmem:[#allocation2 + $0x141] sm:$0xff]
      %v498 = vld [vmem:[#allocation2 + $0x151] sm:$0xff]
      %v499 = vld [vmem:[#allocation2 + $0x159] sm:$0xff]
      %v500 = vld [vmem:[#allocation2 + $0x169] sm:$0xff]
      %v501 = vld [vmem:[#allocation2 + $0x171] sm:$0xff]
      %534 = vrot.lane.b32.xlu0 %v470, 4
      %v535 = vpop.permute.xlu0 %534
      %536 = vrot.lane.b32.xlu0 %v471, 4
      %v537 = vpop.permute.xlu0 %536
      %538 = vrot.lane.b32.xlu0 %v472, 4
      %v539 = vpop.permute.xlu0 %538
      %540 = vrot.lane.b32.xlu0 %v473, 4
      %v541 = vpop.permute.xlu0 %540
      %542 = vrot.lane.b32.xlu0 %v474, 4
      %v543 = vpop.permute.xlu0 %542
      %544 = vrot.lane.b32.xlu0 %v475, 4
      %v545 = vpop.permute.xlu0 %544
      %546 = vrot.lane.b32.xlu0 %v476, 4
      %v547 = vpop.permute.xlu0 %546
      %548 = vrot.lane.b32.xlu0 %v477, 4
      %v549 = vpop.permute.xlu0 %548
      %550 = vrot.lane.b32.xlu0 %v478, 4
      %v551 = vpop.permute.xlu0 %550
      %552 = vrot.lane.b32.xlu0 %v479, 4
      %v553 = vpop.permute.xlu0 %552
      %554 = vrot.lane.b32.xlu0 %v480, 4
      %v555 = vpop.permute.xlu0 %554
      %556 = vrot.lane.b32.xlu0 %v481, 4
      %v557 = vpop.permute.xlu0 %556
      %558 = vrot.lane.b32.xlu0 %v482, 4
      %v559 = vpop.permute.xlu0 %558
      %560 = vrot.lane.b32.xlu0 %v483, 4
      %v561 = vpop.permute.xlu0 %560
      %562 = vrot.lane.b32.xlu0 %v484, 4
      %v563 = vpop.permute.xlu0 %562
      %564 = vrot.lane.b32.xlu0 %v485, 4
      %v565 = vpop.permute.xlu0 %564
      %566 = vrot.lane.b32.xlu0 %v486, 4
      %v567 = vpop.permute.xlu0 %566
      %568 = vrot.lane.b32.xlu0 %v487, 4
      %v569 = vpop.permute.xlu0 %568
      %570 = vrot.lane.b32.xlu0 %v488, 4
      %v571 = vpop.permute.xlu0 %570
      %572 = vrot.lane.b32.xlu0 %v489, 4
      %v573 = vpop.permute.xlu0 %572
      %574 = vrot.lane.b32.xlu0 %v490, 4
      %v575 = vpop.permute.xlu0 %574
      %576 = vrot.lane.b32.xlu0 %v491, 4
      %v577 = vpop.permute.xlu0 %576
      %578 = vrot.lane.b32.xlu0 %v492, 4
      %v579 = vpop.permute.xlu0 %578
      %580 = vrot.lane.b32.xlu0 %v493, 4
      %v581 = vpop.permute.xlu0 %580
      %582 = vrot.lane.b32.xlu0 %v494, 4
      %v583 = vpop.permute.xlu0 %582
      %584 = vrot.lane.b32.xlu0 %v495, 4
      %v585 = vpop.permute.xlu0 %584
      %586 = vrot.lane.b32.xlu0 %v496, 4
      %v587 = vpop.permute.xlu0 %586
      %588 = vrot.lane.b32.xlu0 %v497, 4
      %v589 = vpop.permute.xlu0 %588
      %590 = vrot.lane.b32.xlu0 %v498, 4
      %v591 = vpop.permute.xlu0 %590
      %592 = vrot.lane.b32.xlu0 %v499, 4
      %v593 = vpop.permute.xlu0 %592
      %594 = vrot.lane.b32.xlu0 %v500, 4
      %v595 = vpop.permute.xlu0 %594
      %596 = vrot.lane.b32.xlu0 %v501, 4
      %v597 = vpop.permute.xlu0 %596
      %vm630 = vcmask 64544
      %631 = vst.msk [vmem:[#allocation3] sm:$0xff] %vm630, %v535
      %632 = vst.msk [vmem:[#allocation3 + $0x8] sm:$0xff] %vm630, %v537
      %633 = vst.msk [vmem:[#allocation3 + $0x10] sm:$0xff] %vm630, %v539
      %634 = vst.msk [vmem:[#allocation3 + $0x18] sm:$0xff] %vm630, %v541
      %635 = vst.msk [vmem:[#allocation3 + $0x20] sm:$0xff] %vm630, %v543
      %636 = vst.msk [vmem:[#allocation3 + $0x28] sm:$0xff] %vm630, %v545
      %637 = vst.msk [vmem:[#allocation3 + $0x30] sm:$0xff] %vm630, %v547
      %638 = vst.msk [vmem:[#allocation3 + $0x38] sm:$0xff] %vm630, %v549
      %639 = vst.msk [vmem:[#allocation3 + $0x40] sm:$0xff] %vm630, %v551
      %640 = vst.msk [vmem:[#allocation3 + $0x48] sm:$0xff] %vm630, %v553
      %641 = vst.msk [vmem:[#allocation3 + $0x50] sm:$0xff] %vm630, %v555
      %642 = vst.msk [vmem:[#allocation3 + $0x58] sm:$0xff] %vm630, %v557
      %643 = vst.msk [vmem:[#allocation3 + $0x60] sm:$0xff] %vm630, %v559
      %644 = vst.msk [vmem:[#allocation3 + $0x68] sm:$0xff] %vm630, %v561
      %645 = vst.msk [vmem:[#allocation3 + $0x70] sm:$0xff] %vm630, %v563
      %646 = vst.msk [vmem:[#allocation3 + $0x78] sm:$0xff] %vm630, %v565
      %647 = vst.msk [vmem:[#allocation3 + $0x80] sm:$0xff] %vm630, %v567
      %648 = vst.msk [vmem:[#allocation3 + $0x88] sm:$0xff] %vm630, %v569
      %649 = vst.msk [vmem:[#allocation3 + $0x90] sm:$0xff] %vm630, %v571
      %650 = vst.msk [vmem:[#allocation3 + $0x98] sm:$0xff] %vm630, %v573
      %651 = vst.msk [vmem:[#allocation3 + $0xa0] sm:$0xff] %vm630, %v575
      %652 = vst.msk [vmem:[#allocation3 + $0xa8] sm:$0xff] %vm630, %v577
      %653 = vst.msk [vmem:[#allocation3 + $0xb0] sm:$0xff] %vm630, %v579
      %654 = vst.msk [vmem:[#allocation3 + $0xb8] sm:$0xff] %vm630, %v581
      %655 = vst.msk [vmem:[#allocation3 + $0xc0] sm:$0xff] %vm630, %v583
      %656 = vst.msk [vmem:[#allocation3 + $0xc8] sm:$0xff] %vm630, %v585
      %657 = vst.msk [vmem:[#allocation3 + $0xd0] sm:$0xff] %vm630, %v587
      %658 = vst.msk [vmem:[#allocation3 + $0xd8] sm:$0xff] %vm630, %v589
      %659 = vst.msk [vmem:[#allocation3 + $0xe0] sm:$0xff] %vm630, %v591
      %660 = vst.msk [vmem:[#allocation3 + $0xe8] sm:$0xff] %vm630, %v593
      %661 = vst.msk [vmem:[#allocation3 + $0xf0] sm:$0xff] %vm630, %v595
      %662 = vst.msk [vmem:[#allocation3 + $0xf8] sm:$0xff] %vm630, %v597
      %v663 = vld [vmem:[#allocation2 + $0x2] sm:$0xff]
      %v664 = vld [vmem:[#allocation2 + $0xa] sm:$0xff]
      %v665 = vld [vmem:[#allocation2 + $0x1a] sm:$0xff]
      %v666 = vld [vmem:[#allocation2 + $0x22] sm:$0xff]
      %v667 = vld [vmem:[#allocation2 + $0x32] sm:$0xff]
      %v668 = vld [vmem:[#allocation2 + $0x3a] sm:$0xff]
      %v669 = vld [vmem:[#allocation2 + $0x4a] sm:$0xff]
      %v670 = vld [vmem:[#allocation2 + $0x52] sm:$0xff]
      %v671 = vld [vmem:[#allocation2 + $0x62] sm:$0xff]
      %v672 = vld [vmem:[#allocation2 + $0x6a] sm:$0xff]
      %v673 = vld [vmem:[#allocation2 + $0x7a] sm:$0xff]
      %v674 = vld [vmem:[#allocation2 + $0x82] sm:$0xff]
      %v675 = vld [vmem:[#allocation2 + $0x92] sm:$0xff]
      %v676 = vld [vmem:[#allocation2 + $0x9a] sm:$0xff]
      %v677 = vld [vmem:[#allocation2 + $0xaa] sm:$0xff]
      %v678 = vld [vmem:[#allocation2 + $0xb2] sm:$0xff]
      %v679 = vld [vmem:[#allocation2 + $0xc2] sm:$0xff]
      %v680 = vld [vmem:[#allocation2 + $0xca] sm:$0xff]
      %v681 = vld [vmem:[#allocation2 + $0xda] sm:$0xff]
      %v682 = vld [vmem:[#allocation2 + $0xe2] sm:$0xff]
      %v683 = vld [vmem:[#allocation2 + $0xf2] sm:$0xff]
      %v684 = vld [vmem:[#allocation2 + $0xfa] sm:$0xff]
      %v685 = vld [vmem:[#allocation2 + $0x10a] sm:$0xff]
      %v686 = vld [vmem:[#allocation2 + $0x112] sm:$0xff]
      %v687 = vld [vmem:[#allocation2 + $0x122] sm:$0xff]
      %v688 = vld [vmem:[#allocation2 + $0x12a] sm:$0xff]
      %v689 = vld [vmem:[#allocation2 + $0x13a] sm:$0xff]
      %v690 = vld [vmem:[#allocation2 + $0x142] sm:$0xff]
      %v691 = vld [vmem:[#allocation2 + $0x152] sm:$0xff]
      %v692 = vld [vmem:[#allocation2 + $0x15a] sm:$0xff]
      %v693 = vld [vmem:[#allocation2 + $0x16a] sm:$0xff]
      %v694 = vld [vmem:[#allocation2 + $0x172] sm:$0xff]
      %727 = vrot.lane.b32.xlu0 %v663, 8
      %v728 = vpop.permute.xlu0 %727
      %729 = vrot.lane.b32.xlu0 %v664, 8
      %v730 = vpop.permute.xlu0 %729
      %731 = vrot.lane.b32.xlu0 %v665, 8
      %v732 = vpop.permute.xlu0 %731
      %733 = vrot.lane.b32.xlu0 %v666, 8
      %v734 = vpop.permute.xlu0 %733
      %735 = vrot.lane.b32.xlu0 %v667, 8
      %v736 = vpop.permute.xlu0 %735
      %737 = vrot.lane.b32.xlu0 %v668, 8
      %v738 = vpop.permute.xlu0 %737
      %739 = vrot.lane.b32.xlu0 %v669, 8
      %v740 = vpop.permute.xlu0 %739
      %741 = vrot.lane.b32.xlu0 %v670, 8
      %v742 = vpop.permute.xlu0 %741
      %743 = vrot.lane.b32.xlu0 %v671, 8
      %v744 = vpop.permute.xlu0 %743
      %745 = vrot.lane.b32.xlu0 %v672, 8
      %v746 = vpop.permute.xlu0 %745
      %747 = vrot.lane.b32.xlu0 %v673, 8
      %v748 = vpop.permute.xlu0 %747
      %749 = vrot.lane.b32.xlu0 %v674, 8
      %v750 = vpop.permute.xlu0 %749
      %751 = vrot.lane.b32.xlu0 %v675, 8
      %v752 = vpop.permute.xlu0 %751
      %753 = vrot.lane.b32.xlu0 %v676, 8
      %v754 = vpop.permute.xlu0 %753
      %755 = vrot.lane.b32.xlu0 %v677, 8
      %v756 = vpop.permute.xlu0 %755
      %757 = vrot.lane.b32.xlu0 %v678, 8
      %v758 = vpop.permute.xlu0 %757
      %759 = vrot.lane.b32.xlu0 %v679, 8
      %v760 = vpop.permute.xlu0 %759
      %761 = vrot.lane.b32.xlu0 %v680, 8
      %v762 = vpop.permute.xlu0 %761
      %763 = vrot.lane.b32.xlu0 %v681, 8
      %v764 = vpop.permute.xlu0 %763
      %765 = vrot.lane.b32.xlu0 %v682, 8
      %v766 = vpop.permute.xlu0 %765
      %767 = vrot.lane.b32.xlu0 %v683, 8
      %v768 = vpop.permute.xlu0 %767
      %769 = vrot.lane.b32.xlu0 %v684, 8
      %v770 = vpop.permute.xlu0 %769
      %771 = vrot.lane.b32.xlu0 %v685, 8
      %v772 = vpop.permute.xlu0 %771
      %773 = vrot.lane.b32.xlu0 %v686, 8
      %v774 = vpop.permute.xlu0 %773
      %775 = vrot.lane.b32.xlu0 %v687, 8
      %v776 = vpop.permute.xlu0 %775
      %777 = vrot.lane.b32.xlu0 %v688, 8
      %v778 = vpop.permute.xlu0 %777
      %779 = vrot.lane.b32.xlu0 %v689, 8
      %v780 = vpop.permute.xlu0 %779
      %781 = vrot.lane.b32.xlu0 %v690, 8
      %v782 = vpop.permute.xlu0 %781
      %783 = vrot.lane.b32.xlu0 %v691, 8
      %v784 = vpop.permute.xlu0 %783
      %785 = vrot.lane.b32.xlu0 %v692, 8
      %v786 = vpop.permute.xlu0 %785
      %787 = vrot.lane.b32.xlu0 %v693, 8
      %v788 = vpop.permute.xlu0 %787
      %789 = vrot.lane.b32.xlu0 %v694, 8
      %v790 = vpop.permute.xlu0 %789
      %vm823 = vcmask 97344
      %824 = vst.msk [vmem:[#allocation3] sm:$0xff] %vm823, %v728
      %825 = vst.msk [vmem:[#allocation3 + $0x8] sm:$0xff] %vm823, %v730
      %826 = vst.msk [vmem:[#allocation3 + $0x10] sm:$0xff] %vm823, %v732
      %827 = vst.msk [vmem:[#allocation3 + $0x18] sm:$0xff] %vm823, %v734
      %828 = vst.msk [vmem:[#allocation3 + $0x20] sm:$0xff] %vm823, %v736
      %829 = vst.msk [vmem:[#allocation3 + $0x28] sm:$0xff] %vm823, %v738
      %830 = vst.msk [vmem:[#allocation3 + $0x30] sm:$0xff] %vm823, %v740
      %831 = vst.msk [vmem:[#allocation3 + $0x38] sm:$0xff] %vm823, %v742
      %832 = vst.msk [vmem:[#allocation3 + $0x40] sm:$0xff] %vm823, %v744
      %833 = vst.msk [vmem:[#allocation3 + $0x48] sm:$0xff] %vm823, %v746
      %834 = vst.msk [vmem:[#allocation3 + $0x50] sm:$0xff] %vm823, %v748
      %835 = vst.msk [vmem:[#allocation3 + $0x58] sm:$0xff] %vm823, %v750
      %836 = vst.msk [vmem:[#allocation3 + $0x60] sm:$0xff] %vm823, %v752
      %837 = vst.msk [vmem:[#allocation3 + $0x68] sm:$0xff] %vm823, %v754
      %838 = vst.msk [vmem:[#allocation3 + $0x70] sm:$0xff] %vm823, %v756
      %839 = vst.msk [vmem:[#allocation3 + $0x78] sm:$0xff] %vm823, %v758
      %840 = vst.msk [vmem:[#allocation3 + $0x80] sm:$0xff] %vm823, %v760
      %841 = vst.msk [vmem:[#allocation3 + $0x88] sm:$0xff] %vm823, %v762
      %842 = vst.msk [vmem:[#allocation3 + $0x90] sm:$0xff] %vm823, %v764
      %843 = vst.msk [vmem:[#allocation3 + $0x98] sm:$0xff] %vm823, %v766
      %844 = vst.msk [vmem:[#allocation3 + $0xa0] sm:$0xff] %vm823, %v768
      %845 = vst.msk [vmem:[#allocation3 + $0xa8] sm:$0xff] %vm823, %v770
      %846 = vst.msk [vmem:[#allocation3 + $0xb0] sm:$0xff] %vm823, %v772
      %847 = vst.msk [vmem:[#allocation3 + $0xb8] sm:$0xff] %vm823, %v774
      %848 = vst.msk [vmem:[#allocation3 + $0xc0] sm:$0xff] %vm823, %v776
      %849 = vst.msk [vmem:[#allocation3 + $0xc8] sm:$0xff] %vm823, %v778
      %850 = vst.msk [vmem:[#allocation3 + $0xd0] sm:$0xff] %vm823, %v780
      %851 = vst.msk [vmem:[#allocation3 + $0xd8] sm:$0xff] %vm823, %v782
      %852 = vst.msk [vmem:[#allocation3 + $0xe0] sm:$0xff] %vm823, %v784
      %853 = vst.msk [vmem:[#allocation3 + $0xe8] sm:$0xff] %vm823, %v786
      %854 = vst.msk [vmem:[#allocation3 + $0xf0] sm:$0xff] %vm823, %v788
      %855 = vst.msk [vmem:[#allocation3 + $0xf8] sm:$0xff] %vm823, %v790
      %v856 = vld [vmem:[#allocation2 + $0x3] sm:$0xff]
      %v857 = vld [vmem:[#allocation2 + $0xb] sm:$0xff]
      %v858 = vld [vmem:[#allocation2 + $0x1b] sm:$0xff]
      %v859 = vld [vmem:[#allocation2 + $0x23] sm:$0xff]
      %v860 = vld [vmem:[#allocation2 + $0x33] sm:$0xff]
      %v861 = vld [vmem:[#allocation2 + $0x3b] sm:$0xff]
      %v862 = vld [vmem:[#allocation2 + $0x4b] sm:$0xff]
      %v863 = vld [vmem:[#allocation2 + $0x53] sm:$0xff]
      %v864 = vld [vmem:[#allocation2 + $0x63] sm:$0xff]
      %v865 = vld [vmem:[#allocation2 + $0x6b] sm:$0xff]
      %v866 = vld [vmem:[#allocation2 + $0x7b] sm:$0xff]
      %v867 = vld [vmem:[#allocation2 + $0x83] sm:$0xff]
      %v868 = vld [vmem:[#allocation2 + $0x93] sm:$0xff]
      %v869 = vld [vmem:[#allocation2 + $0x9b] sm:$0xff]
      %v870 = vld [vmem:[#allocation2 + $0xab] sm:$0xff]
      %v871 = vld [vmem:[#allocation2 + $0xb3] sm:$0xff]
      %v872 = vld [vmem:[#allocation2 + $0xc3] sm:$0xff]
      %v873 = vld [vmem:[#allocation2 + $0xcb] sm:$0xff]
      %v874 = vld [vmem:[#allocation2 + $0xdb] sm:$0xff]
      %v875 = vld [vmem:[#allocation2 + $0xe3] sm:$0xff]
      %v876 = vld [vmem:[#allocation2 + $0xf3] sm:$0xff]
      %v877 = vld [vmem:[#allocation2 + $0xfb] sm:$0xff]
      %v878 = vld [vmem:[#allocation2 + $0x10b] sm:$0xff]
      %v879 = vld [vmem:[#allocation2 + $0x113] sm:$0xff]
      %v880 = vld [vmem:[#allocation2 + $0x123] sm:$0xff]
      %v881 = vld [vmem:[#allocation2 + $0x12b] sm:$0xff]
      %v882 = vld [vmem:[#allocation2 + $0x13b] sm:$0xff]
      %v883 = vld [vmem:[#allocation2 + $0x143] sm:$0xff]
      %v884 = vld [vmem:[#allocation2 + $0x153] sm:$0xff]
      %v885 = vld [vmem:[#allocation2 + $0x15b] sm:$0xff]
      %v886 = vld [vmem:[#allocation2 + $0x16b] sm:$0xff]
      %v887 = vld [vmem:[#allocation2 + $0x173] sm:$0xff]
      %920 = vrot.lane.b32.xlu0 %v856, 12
      %v921 = vpop.permute.xlu0 %920
      %922 = vrot.lane.b32.xlu0 %v857, 12
      %v923 = vpop.permute.xlu0 %922
      %924 = vrot.lane.b32.xlu0 %v858, 12
      %v925 = vpop.permute.xlu0 %924
      %926 = vrot.lane.b32.xlu0 %v859, 12
      %v927 = vpop.permute.xlu0 %926
      %928 = vrot.lane.b32.xlu0 %v860, 12
      %v929 = vpop.permute.xlu0 %928
      %930 = vrot.lane.b32.xlu0 %v861, 12
      %v931 = vpop.permute.xlu0 %930
      %932 = vrot.lane.b32.xlu0 %v862, 12
      %v933 = vpop.permute.xlu0 %932
      %934 = vrot.lane.b32.xlu0 %v863, 12
      %v935 = vpop.permute.xlu0 %934
      %936 = vrot.lane.b32.xlu0 %v864, 12
      %v937 = vpop.permute.xlu0 %936
      %938 = vrot.lane.b32.xlu0 %v865, 12
      %v939 = vpop.permute.xlu0 %938
      %940 = vrot.lane.b32.xlu0 %v866, 12
      %v941 = vpop.permute.xlu0 %940
      %942 = vrot.lane.b32.xlu0 %v867, 12
      %v943 = vpop.permute.xlu0 %942
      %944 = vrot.lane.b32.xlu0 %v868, 12
      %v945 = vpop.permute.xlu0 %944
      %946 = vrot.lane.b32.xlu0 %v869, 12
      %v947 = vpop.permute.xlu0 %946
      %948 = vrot.lane.b32.xlu0 %v870, 12
      %v949 = vpop.permute.xlu0 %948
      %950 = vrot.lane.b32.xlu0 %v871, 12
      %v951 = vpop.permute.xlu0 %950
      %952 = vrot.lane.b32.xlu0 %v872, 12
      %v953 = vpop.permute.xlu0 %952
      %954 = vrot.lane.b32.xlu0 %v873, 12
      %v955 = vpop.permute.xlu0 %954
      %956 = vrot.lane.b32.xlu0 %v874, 12
      %v957 = vpop.permute.xlu0 %956
      %958 = vrot.lane.b32.xlu0 %v875, 12
      %v959 = vpop.permute.xlu0 %958
      %960 = vrot.lane.b32.xlu0 %v876, 12
      %v961 = vpop.permute.xlu0 %960
      %962 = vrot.lane.b32.xlu0 %v877, 12
      %v963 = vpop.permute.xlu0 %962
      %964 = vrot.lane.b32.xlu0 %v878, 12
      %v965 = vpop.permute.xlu0 %964
      %966 = vrot.lane.b32.xlu0 %v879, 12
      %v967 = vpop.permute.xlu0 %966
      %968 = vrot.lane.b32.xlu0 %v880, 12
      %v969 = vpop.permute.xlu0 %968
      %970 = vrot.lane.b32.xlu0 %v881, 12
      %v971 = vpop.permute.xlu0 %970
      %972 = vrot.lane.b32.xlu0 %v882, 12
      %v973 = vpop.permute.xlu0 %972
      %974 = vrot.lane.b32.xlu0 %v883, 12
      %v975 = vpop.permute.xlu0 %974
      %976 = vrot.lane.b32.xlu0 %v884, 12
      %v977 = vpop.permute.xlu0 %976
      %978 = vrot.lane.b32.xlu0 %v885, 12
      %v979 = vpop.permute.xlu0 %978
      %980 = vrot.lane.b32.xlu0 %v886, 12
      %v981 = vpop.permute.xlu0 %980
      %982 = vrot.lane.b32.xlu0 %v887, 12
      %v983 = vpop.permute.xlu0 %982
      %vm1016 = vcmask 130144
      %1017 = vst.msk [vmem:[#allocation3] sm:$0xff] %vm1016, %v921
      %1018 = vst.msk [vmem:[#allocation3 + $0x8] sm:$0xff] %vm1016, %v923
      %1019 = vst.msk [vmem:[#allocation3 + $0x10] sm:$0xff] %vm1016, %v925
      %1020 = vst.msk [vmem:[#allocation3 + $0x18] sm:$0xff] %vm1016, %v927
      %1021 = vst.msk [vmem:[#allocation3 + $0x20] sm:$0xff] %vm1016, %v929
      %1022 = vst.msk [vmem:[#allocation3 + $0x28] sm:$0xff] %vm1016, %v931
      %1023 = vst.msk [vmem:[#allocation3 + $0x30] sm:$0xff] %vm1016, %v933
      %1024 = vst.msk [vmem:[#allocation3 + $0x38] sm:$0xff] %vm1016, %v935
      %1025 = vst.msk [vmem:[#allocation3 + $0x40] sm:$0xff] %vm1016, %v937
      %1026 = vst.msk [vmem:[#allocation3 + $0x48] sm:$0xff] %vm1016, %v939
      %1027 = vst.msk [vmem:[#allocation3 + $0x50] sm:$0xff] %vm1016, %v941
      %1028 = vst.msk [vmem:[#allocation3 + $0x58] sm:$0xff] %vm1016, %v943
      %1029 = vst.msk [vmem:[#allocation3 + $0x60] sm:$0xff] %vm1016, %v945
      %1030 = vst.msk [vmem:[#allocation3 + $0x68] sm:$0xff] %vm1016, %v947
      %1031 = vst.msk [vmem:[#allocation3 + $0x70] sm:$0xff] %vm1016, %v949
      %1032 = vst.msk [vmem:[#allocation3 + $0x78] sm:$0xff] %vm1016, %v951
      %1033 = vst.msk [vmem:[#allocation3 + $0x80] sm:$0xff] %vm1016, %v953
      %1034 = vst.msk [vmem:[#allocation3 + $0x88] sm:$0xff] %vm1016, %v955
      %1035 = vst.msk [vmem:[#allocation3 + $0x90] sm:$0xff] %vm1016, %v957
      %1036 = vst.msk [vmem:[#allocation3 + $0x98] sm:$0xff] %vm1016, %v959
      %1037 = vst.msk [vmem:[#allocation3 + $0xa0] sm:$0xff] %vm1016, %v961
      %1038 = vst.msk [vmem:[#allocation3 + $0xa8] sm:$0xff] %vm1016, %v963
      %1039 = vst.msk [vmem:[#allocation3 + $0xb0] sm:$0xff] %vm1016, %v965
      %1040 = vst.msk [vmem:[#allocation3 + $0xb8] sm:$0xff] %vm1016, %v967
      %1041 = vst.msk [vmem:[#allocation3 + $0xc0] sm:$0xff] %vm1016, %v969
      %1042 = vst.msk [vmem:[#allocation3 + $0xc8] sm:$0xff] %vm1016, %v971
      %1043 = vst.msk [vmem:[#allocation3 + $0xd0] sm:$0xff] %vm1016, %v973
      %1044 = vst.msk [vmem:[#allocation3 + $0xd8] sm:$0xff] %vm1016, %v975
      %1045 = vst.msk [vmem:[#allocation3 + $0xe0] sm:$0xff] %vm1016, %v977
      %1046 = vst.msk [vmem:[#allocation3 + $0xe8] sm:$0xff] %vm1016, %v979
      %1047 = vst.msk [vmem:[#allocation3 + $0xf0] sm:$0xff] %vm1016, %v981
      %1048 = vst.msk [vmem:[#allocation3 + $0xf8] sm:$0xff] %vm1016, %v983
      %v1049 = vld [vmem:[#allocation2 + $0x4] sm:$0xff]
      %v1050 = vld [vmem:[#allocation2 + $0xc] sm:$0xff]
      %v1051 = vld [vmem:[#allocation2 + $0x1c] sm:$0xff]
      %v1052 = vld [vmem:[#allocation2 + $0x24] sm:$0xff]
      %v1053 = vld [vmem:[#allocation2 + $0x34] sm:$0xff]
      %v1054 = vld [vmem:[#allocation2 + $0x3c] sm:$0xff]
      %v1055 = vld [vmem:[#allocation2 + $0x4c] sm:$0xff]
      %v1056 = vld [vmem:[#allocation2 + $0x54] sm:$0xff]
      %v1057 = vld [vmem:[#allocation2 + $0x64] sm:$0xff]
      %v1058 = vld [vmem:[#allocation2 + $0x6c] sm:$0xff]
      %v1059 = vld [vmem:[#allocation2 + $0x7c] sm:$0xff]
      %v1060 = vld [vmem:[#allocation2 + $0x84] sm:$0xff]
      %v1061 = vld [vmem:[#allocation2 + $0x94] sm:$0xff]
      %v1062 = vld [vmem:[#allocation2 + $0x9c] sm:$0xff]
      %v1063 = vld [vmem:[#allocation2 + $0xac] sm:$0xff]
      %v1064 = vld [vmem:[#allocation2 + $0xb4] sm:$0xff]
      %v1065 = vld [vmem:[#allocation2 + $0xc4] sm:$0xff]
      %v1066 = vld [vmem:[#allocation2 + $0xcc] sm:$0xff]
      %v1067 = vld [vmem:[#allocation2 + $0xdc] sm:$0xff]
      %v1068 = vld [vmem:[#allocation2 + $0xe4] sm:$0xff]
      %v1069 = vld [vmem:[#allocation2 + $0xf4] sm:$0xff]
      %v1070 = vld [vmem:[#allocation2 + $0xfc] sm:$0xff]
      %v1071 = vld [vmem:[#allocation2 + $0x10c] sm:$0xff]
      %v1072 = vld [vmem:[#allocation2 + $0x114] sm:$0xff]
      %v1073 = vld [vmem:[#allocation2 + $0x124] sm:$0xff]
      %v1074 = vld [vmem:[#allocation2 + $0x12c] sm:$0xff]
      %v1075 = vld [vmem:[#allocation2 + $0x13c] sm:$0xff]
      %v1076 = vld [vmem:[#allocation2 + $0x144] sm:$0xff]
      %v1077 = vld [vmem:[#allocation2 + $0x154] sm:$0xff]
      %v1078 = vld [vmem:[#allocation2 + $0x15c] sm:$0xff]
      %v1079 = vld [vmem:[#allocation2 + $0x16c] sm:$0xff]
      %v1080 = vld [vmem:[#allocation2 + $0x174] sm:$0xff]
      %1113 = vrot.lane.b32.xlu0 %v1049, 16
      %v1114 = vpop.permute.xlu0 %1113
      %1115 = vrot.lane.b32.xlu0 %v1050, 16
      %v1116 = vpop.permute.xlu0 %1115
      %1117 = vrot.lane.b32.xlu0 %v1051, 16
      %v1118 = vpop.permute.xlu0 %1117
      %1119 = vrot.lane.b32.xlu0 %v1052, 16
      %v1120 = vpop.permute.xlu0 %1119
      %1121 = vrot.lane.b32.xlu0 %v1053, 16
      %v1122 = vpop.permute.xlu0 %1121
      %1123 = vrot.lane.b32.xlu0 %v1054, 16
      %v1124 = vpop.permute.xlu0 %1123
      %1125 = vrot.lane.b32.xlu0 %v1055, 16
      %v1126 = vpop.permute.xlu0 %1125
      %1127 = vrot.lane.b32.xlu0 %v1056, 16
      %v1128 = vpop.permute.xlu0 %1127
      %1129 = vrot.lane.b32.xlu0 %v1057, 16
      %v1130 = vpop.permute.xlu0 %1129
      %1131 = vrot.lane.b32.xlu0 %v1058, 16
      %v1132 = vpop.permute.xlu0 %1131
      %1133 = vrot.lane.b32.xlu0 %v1059, 16
      %v1134 = vpop.permute.xlu0 %1133
      %1135 = vrot.lane.b32.xlu0 %v1060, 16
      %v1136 = vpop.permute.xlu0 %1135
      %1137 = vrot.lane.b32.xlu0 %v1061, 16
      %v1138 = vpop.permute.xlu0 %1137
      %1139 = vrot.lane.b32.xlu0 %v1062, 16
      %v1140 = vpop.permute.xlu0 %1139
      %1141 = vrot.lane.b32.xlu0 %v1063, 16
      %v1142 = vpop.permute.xlu0 %1141
      %1143 = vrot.lane.b32.xlu0 %v1064, 16
      %v1144 = vpop.permute.xlu0 %1143
      %1145 = vrot.lane.b32.xlu0 %v1065, 16
      %v1146 = vpop.permute.xlu0 %1145
      %1147 = vrot.lane.b32.xlu0 %v1066, 16
      %v1148 = vpop.permute.xlu0 %1147
      %1149 = vrot.lane.b32.xlu0 %v1067, 16
      %v1150 = vpop.permute.xlu0 %1149
      %1151 = vrot.lane.b32.xlu0 %v1068, 16
      %v1152 = vpop.permute.xlu0 %1151
      %1153 = vrot.lane.b32.xlu0 %v1069, 16
      %v1154 = vpop.permute.xlu0 %1153
      %1155 = vrot.lane.b32.xlu0 %v1070, 16
      %v1156 = vpop.permute.xlu0 %1155
      %1157 = vrot.lane.b32.xlu0 %v1071, 16
      %v1158 = vpop.permute.xlu0 %1157
      %1159 = vrot.lane.b32.xlu0 %v1072, 16
      %v1160 = vpop.permute.xlu0 %1159
      %1161 = vrot.lane.b32.xlu0 %v1073, 16
      %v1162 = vpop.permute.xlu0 %1161
      %1163 = vrot.lane.b32.xlu0 %v1074, 16
      %v1164 = vpop.permute.xlu0 %1163
      %1165 = vrot.lane.b32.xlu0 %v1075, 16
      %v1166 = vpop.permute.xlu0 %1165
      %1167 = vrot.lane.b32.xlu0 %v1076, 16
      %v1168 = vpop.permute.xlu0 %1167
      %1169 = vrot.lane.b32.xlu0 %v1077, 16
      %v1170 = vpop.permute.xlu0 %1169
      %1171 = vrot.lane.b32.xlu0 %v1078, 16
      %v1172 = vpop.permute.xlu0 %1171
      %1173 = vrot.lane.b32.xlu0 %v1079, 16
      %v1174 = vpop.permute.xlu0 %1173
      %1175 = vrot.lane.b32.xlu0 %v1080, 16
      %v1176 = vpop.permute.xlu0 %1175
      %vm1209 = vcmask 162944
      %1210 = vst.msk [vmem:[#allocation3] sm:$0xff] %vm1209, %v1114
      %1211 = vst.msk [vmem:[#allocation3 + $0x8] sm:$0xff] %vm1209, %v1116
      %1212 = vst.msk [vmem:[#allocation3 + $0x10] sm:$0xff] %vm1209, %v1118
      %1213 = vst.msk [vmem:[#allocation3 + $0x18] sm:$0xff] %vm1209, %v1120
      %1214 = vst.msk [vmem:[#allocation3 + $0x20] sm:$0xff] %vm1209, %v1122
      %1215 = vst.msk [vmem:[#allocation3 + $0x28] sm:$0xff] %vm1209, %v1124
      %1216 = vst.msk [vmem:[#allocation3 + $0x30] sm:$0xff] %vm1209, %v1126
      %1217 = vst.msk [vmem:[#allocation3 + $0x38] sm:$0xff] %vm1209, %v1128
      %1218 = vst.msk [vmem:[#allocation3 + $0x40] sm:$0xff] %vm1209, %v1130
      %1219 = vst.msk [vmem:[#allocation3 + $0x48] sm:$0xff] %vm1209, %v1132
      %1220 = vst.msk [vmem:[#allocation3 + $0x50] sm:$0xff] %vm1209, %v1134
      %1221 = vst.msk [vmem:[#allocation3 + $0x58] sm:$0xff] %vm1209, %v1136
      %1222 = vst.msk [vmem:[#allocation3 + $0x60] sm:$0xff] %vm1209, %v1138
      %1223 = vst.msk [vmem:[#allocation3 + $0x68] sm:$0xff] %vm1209, %v1140
      %1224 = vst.msk [vmem:[#allocation3 + $0x70] sm:$0xff] %vm1209, %v1142
      %1225 = vst.msk [vmem:[#allocation3 + $0x78] sm:$0xff] %vm1209, %v1144
      %1226 = vst.msk [vmem:[#allocation3 + $0x80] sm:$0xff] %vm1209, %v1146
      %1227 = vst.msk [vmem:[#allocation3 + $0x88] sm:$0xff] %vm1209, %v1148
      %1228 = vst.msk [vmem:[#allocation3 + $0x90] sm:$0xff] %vm1209, %v1150
      %1229 = vst.msk [vmem:[#allocation3 + $0x98] sm:$0xff] %vm1209, %v1152
      %1230 = vst.msk [vmem:[#allocation3 + $0xa0] sm:$0xff] %vm1209, %v1154
      %1231 = vst.msk [vmem:[#allocation3 + $0xa8] sm:$0xff] %vm1209, %v1156
      %1232 = vst.msk [vmem:[#allocation3 + $0xb0] sm:$0xff] %vm1209, %v1158
      %1233 = vst.msk [vmem:[#allocation3 + $0xb8] sm:$0xff] %vm1209, %v1160
      %1234 = vst.msk [vmem:[#allocation3 + $0xc0] sm:$0xff] %vm1209, %v1162
      %1235 = vst.msk [vmem:[#allocation3 + $0xc8] sm:$0xff] %vm1209, %v1164
      %1236 = vst.msk [vmem:[#allocation3 + $0xd0] sm:$0xff] %vm1209, %v1166
      %1237 = vst.msk [vmem:[#allocation3 + $0xd8] sm:$0xff] %vm1209, %v1168
      %1238 = vst.msk [vmem:[#allocation3 + $0xe0] sm:$0xff] %vm1209, %v1170
      %1239 = vst.msk [vmem:[#allocation3 + $0xe8] sm:$0xff] %vm1209, %v1172
      %1240 = vst.msk [vmem:[#allocation3 + $0xf0] sm:$0xff] %vm1209, %v1174
      %1241 = vst.msk [vmem:[#allocation3 + $0xf8] sm:$0xff] %vm1209, %v1176
      %s1242 = scalar_lea.vmem [#allocation2], 24
      %v1243 = vld [vmem:[%s1242] sm:$0xff]
      %v1244 = vld [vmem:[%s1242 + $0x8] sm:$0xff]
      %v1245 = vld [vmem:[%s1242 + $0x18] sm:$0xff]
      %v1246 = vld [vmem:[%s1242 + $0x20] sm:$0xff]
      %v1247 = vld [vmem:[%s1242 + $0x30] sm:$0xff]
      %v1248 = vld [vmem:[%s1242 + $0x38] sm:$0xff]
      %v1249 = vld [vmem:[%s1242 + $0x48] sm:$0xff]
      %v1250 = vld [vmem:[%s1242 + $0x50] sm:$0xff]
      %v1251 = vld [vmem:[%s1242 + $0x60] sm:$0xff]
      %v1252 = vld [vmem:[%s1242 + $0x68] sm:$0xff]
      %v1253 = vld [vmem:[%s1242 + $0x78] sm:$0xff]
      %v1254 = vld [vmem:[%s1242 + $0x80] sm:$0xff]
      %v1255 = vld [vmem:[%s1242 + $0x90] sm:$0xff]
      %v1256 = vld [vmem:[%s1242 + $0x98] sm:$0xff]
      %v1257 = vld [vmem:[%s1242 + $0xa8] sm:$0xff]
      %v1258 = vld [vmem:[%s1242 + $0xb0] sm:$0xff]
      %v1259 = vld [vmem:[%s1242 + $0xc0] sm:$0xff]
      %v1260 = vld [vmem:[%s1242 + $0xc8] sm:$0xff]
      %v1261 = vld [vmem:[%s1242 + $0xd8] sm:$0xff]
      %v1262 = vld [vmem:[%s1242 + $0xe0] sm:$0xff]
      %v1263 = vld [vmem:[%s1242 + $0xf0] sm:$0xff]
      %v1264 = vld [vmem:[%s1242 + $0xf8] sm:$0xff]
      %v1265 = vld [vmem:[%s1242 + $0x108] sm:$0xff]
      %v1266 = vld [vmem:[%s1242 + $0x110] sm:$0xff]
      %v1267 = vld [vmem:[%s1242 + $0x120] sm:$0xff]
      %v1268 = vld [vmem:[%s1242 + $0x128] sm:$0xff]
      %v1269 = vld [vmem:[%s1242 + $0x138] sm:$0xff]
      %v1270 = vld [vmem:[%s1242 + $0x140] sm:$0xff]
      %v1271 = vld [vmem:[%s1242 + $0x150] sm:$0xff]
      %v1272 = vld [vmem:[%s1242 + $0x158] sm:$0xff]
      %v1273 = vld [vmem:[%s1242 + $0x168] sm:$0xff]
      %v1274 = vld [vmem:[%s1242 + $0x170] sm:$0xff]
      %1307 = vrot.lane.b32.xlu0 %v1243, 20
      %v1308 = vpop.permute.xlu0 %1307
      %1309 = vrot.lane.b32.xlu0 %v1244, 20
      %v1310 = vpop.permute.xlu0 %1309
      %1311 = vrot.lane.b32.xlu0 %v1245, 20
      %v1312 = vpop.permute.xlu0 %1311
      %1313 = vrot.lane.b32.xlu0 %v1246, 20
      %v1314 = vpop.permute.xlu0 %1313
      %1315 = vrot.lane.b32.xlu0 %v1247, 20
      %v1316 = vpop.permute.xlu0 %1315
      %1317 = vrot.lane.b32.xlu0 %v1248, 20
      %v1318 = vpop.permute.xlu0 %1317
      %1319 = vrot.lane.b32.xlu0 %v1249, 20
      %v1320 = vpop.permute.xlu0 %1319
      %1321 = vrot.lane.b32.xlu0 %v1250, 20
      %v1322 = vpop.permute.xlu0 %1321
      %1323 = vrot.lane.b32.xlu0 %v1251, 20
      %v1324 = vpop.permute.xlu0 %1323
      %1325 = vrot.lane.b32.xlu0 %v1252, 20
      %v1326 = vpop.permute.xlu0 %1325
      %1327 = vrot.lane.b32.xlu0 %v1253, 20
      %v1328 = vpop.permute.xlu0 %1327
      %1329 = vrot.lane.b32.xlu0 %v1254, 20
      %v1330 = vpop.permute.xlu0 %1329
      %1331 = vrot.lane.b32.xlu0 %v1255, 20
      %v1332 = vpop.permute.xlu0 %1331
      %1333 = vrot.lane.b32.xlu0 %v1256, 20
      %v1334 = vpop.permute.xlu0 %1333
      %1335 = vrot.lane.b32.xlu0 %v1257, 20
      %v1336 = vpop.permute.xlu0 %1335
      %1337 = vrot.lane.b32.xlu0 %v1258, 20
      %v1338 = vpop.permute.xlu0 %1337
      %1339 = vrot.lane.b32.xlu0 %v1259, 20
      %v1340 = vpop.permute.xlu0 %1339
      %1341 = vrot.lane.b32.xlu0 %v1260, 20
      %v1342 = vpop.permute.xlu0 %1341
      %1343 = vrot.lane.b32.xlu0 %v1261, 20
      %v1344 = vpop.permute.xlu0 %1343
      %1345 = vrot.lane.b32.xlu0 %v1262, 20
      %v1346 = vpop.permute.xlu0 %1345
      %1347 = vrot.lane.b32.xlu0 %v1263, 20
      %v1348 = vpop.permute.xlu0 %1347
      %1349 = vrot.lane.b32.xlu0 %v1264, 20
      %v1350 = vpop.permute.xlu0 %1349
      %1351 = vrot.lane.b32.xlu0 %v1265, 20
      %v1352 = vpop.permute.xlu0 %1351
      %1353 = vrot.lane.b32.xlu0 %v1266, 20
      %v1354 = vpop.permute.xlu0 %1353
      %1355 = vrot.lane.b32.xlu0 %v1267, 20
      %v1356 = vpop.permute.xlu0 %1355
      %1357 = vrot.lane.b32.xlu0 %v1268, 20
      %v1358 = vpop.permute.xlu0 %1357
      %1359 = vrot.lane.b32.xlu0 %v1269, 20
      %v1360 = vpop.permute.xlu0 %1359
      %1361 = vrot.lane.b32.xlu0 %v1270, 20
      %v1362 = vpop.permute.xlu0 %1361
      %1363 = vrot.lane.b32.xlu0 %v1271, 20
      %v1364 = vpop.permute.xlu0 %1363
      %1365 = vrot.lane.b32.xlu0 %v1272, 20
      %v1366 = vpop.permute.xlu0 %1365
      %1367 = vrot.lane.b32.xlu0 %v1273, 20
      %v1368 = vpop.permute.xlu0 %1367
      %1369 = vrot.lane.b32.xlu0 %v1274, 20
      %v1370 = vpop.permute.xlu0 %1369
      %vm1403 = vcmask 195744
      %1404 = vst.msk [vmem:[#allocation3] sm:$0xff] %vm1403, %v1308
      %1405 = vst.msk [vmem:[#allocation3 + $0x8] sm:$0xff] %vm1403, %v1310
      %1406 = vst.msk [vmem:[#allocation3 + $0x10] sm:$0xff] %vm1403, %v1312
      %1407 = vst.msk [vmem:[#allocation3 + $0x18] sm:$0xff] %vm1403, %v1314
      %1408 = vst.msk [vmem:[#allocation3 + $0x20] sm:$0xff] %vm1403, %v1316
      %1409 = vst.msk [vmem:[#allocation3 + $0x28] sm:$0xff] %vm1403, %v1318
      %1410 = vst.msk [vmem:[#allocation3 + $0x30] sm:$0xff] %vm1403, %v1320
      %1411 = vst.msk [vmem:[#allocation3 + $0x38] sm:$0xff] %vm1403, %v1322
      %1412 = vst.msk [vmem:[#allocation3 + $0x40] sm:$0xff] %vm1403, %v1324
      %1413 = vst.msk [vmem:[#allocation3 + $0x48] sm:$0xff] %vm1403, %v1326
      %1414 = vst.msk [vmem:[#allocation3 + $0x50] sm:$0xff] %vm1403, %v1328
      %1415 = vst.msk [vmem:[#allocation3 + $0x58] sm:$0xff] %vm1403, %v1330
      %1416 = vst.msk [vmem:[#allocation3 + $0x60] sm:$0xff] %vm1403, %v1332
      %1417 = vst.msk [vmem:[#allocation3 + $0x68] sm:$0xff] %vm1403, %v1334
      %1418 = vst.msk [vmem:[#allocation3 + $0x70] sm:$0xff] %vm1403, %v1336
      %1419 = vst.msk [vmem:[#allocation3 + $0x78] sm:$0xff] %vm1403, %v1338
      %1420 = vst.msk [vmem:[#allocation3 + $0x80] sm:$0xff] %vm1403, %v1340
      %1421 = vst.msk [vmem:[#allocation3 + $0x88] sm:$0xff] %vm1403, %v1342
      %1422 = vst.msk [vmem:[#allocation3 + $0x90] sm:$0xff] %vm1403, %v1344
      %1423 = vst.msk [vmem:[#allocation3 + $0x98] sm:$0xff] %vm1403, %v1346
      %1424 = vst.msk [vmem:[#allocation3 + $0xa0] sm:$0xff] %vm1403, %v1348
      %1425 = vst.msk [vmem:[#allocation3 + $0xa8] sm:$0xff] %vm1403, %v1350
      %1426 = vst.msk [vmem:[#allocation3 + $0xb0] sm:$0xff] %vm1403, %v1352
      %1427 = vst.msk [vmem:[#allocation3 + $0xb8] sm:$0xff] %vm1403, %v1354
      %1428 = vst.msk [vmem:[#allocation3 + $0xc0] sm:$0xff] %vm1403, %v1356
      %1429 = vst.msk [vmem:[#allocation3 + $0xc8] sm:$0xff] %vm1403, %v1358
      %1430 = vst.msk [vmem:[#allocation3 + $0xd0] sm:$0xff] %vm1403, %v1360
      %1431 = vst.msk [vmem:[#allocation3 + $0xd8] sm:$0xff] %vm1403, %v1362
      %1432 = vst.msk [vmem:[#allocation3 + $0xe0] sm:$0xff] %vm1403, %v1364
      %1433 = vst.msk [vmem:[#allocation3 + $0xe8] sm:$0xff] %vm1403, %v1366
      %1434 = vst.msk [vmem:[#allocation3 + $0xf0] sm:$0xff] %vm1403, %v1368
      %1435 = vst.msk [vmem:[#allocation3 + $0xf8] sm:$0xff] %vm1403, %v1370
      %v1436 = vld [vmem:[%s1242 + $0x1] sm:$0xff]
      %v1437 = vld [vmem:[%s1242 + $0x9] sm:$0xff]
      %v1438 = vld [vmem:[%s1242 + $0x19] sm:$0xff]
      %v1439 = vld [vmem:[%s1242 + $0x21] sm:$0xff]
      %v1440 = vld [vmem:[%s1242 + $0x31] sm:$0xff]
      %v1441 = vld [vmem:[%s1242 + $0x39] sm:$0xff]
      %v1442 = vld [vmem:[%s1242 + $0x49] sm:$0xff]
      %v1443 = vld [vmem:[%s1242 + $0x51] sm:$0xff]
      %v1444 = vld [vmem:[%s1242 + $0x61] sm:$0xff]
      %v1445 = vld [vmem:[%s1242 + $0x69] sm:$0xff]
      %v1446 = vld [vmem:[%s1242 + $0x79] sm:$0xff]
      %v1447 = vld [vmem:[%s1242 + $0x81] sm:$0xff]
      %v1448 = vld [vmem:[%s1242 + $0x91] sm:$0xff]
      %v1449 = vld [vmem:[%s1242 + $0x99] sm:$0xff]
      %v1450 = vld [vmem:[%s1242 + $0xa9] sm:$0xff]
      %v1451 = vld [vmem:[%s1242 + $0xb1] sm:$0xff]
      %v1452 = vld [vmem:[%s1242 + $0xc1] sm:$0xff]
      %v1453 = vld [vmem:[%s1242 + $0xc9] sm:$0xff]
      %v1454 = vld [vmem:[%s1242 + $0xd9] sm:$0xff]
      %v1455 = vld [vmem:[%s1242 + $0xe1] sm:$0xff]
      %v1456 = vld [vmem:[%s1242 + $0xf1] sm:$0xff]
      %v1457 = vld [vmem:[%s1242 + $0xf9] sm:$0xff]
      %v1458 = vld [vmem:[%s1242 + $0x109] sm:$0xff]
      %v1459 = vld [vmem:[%s1242 + $0x111] sm:$0xff]
      %v1460 = vld [vmem:[%s1242 + $0x121] sm:$0xff]
      %v1461 = vld [vmem:[%s1242 + $0x129] sm:$0xff]
      %v1462 = vld [vmem:[%s1242 + $0x139] sm:$0xff]
      %v1463 = vld [vmem:[%s1242 + $0x141] sm:$0xff]
      %v1464 = vld [vmem:[%s1242 + $0x151] sm:$0xff]
      %v1465 = vld [vmem:[%s1242 + $0x159] sm:$0xff]
      %v1466 = vld [vmem:[%s1242 + $0x169] sm:$0xff]
      %v1467 = vld [vmem:[%s1242 + $0x171] sm:$0xff]
      %1500 = vrot.lane.b32.xlu0 %v1436, 24
      %v1501 = vpop.permute.xlu0 %1500
      %1502 = vrot.lane.b32.xlu0 %v1437, 24
      %v1503 = vpop.permute.xlu0 %1502
      %1504 = vrot.lane.b32.xlu0 %v1438, 24
      %v1505 = vpop.permute.xlu0 %1504
      %1506 = vrot.lane.b32.xlu0 %v1439, 24
      %v1507 = vpop.permute.xlu0 %1506
      %1508 = vrot.lane.b32.xlu0 %v1440, 24
      %v1509 = vpop.permute.xlu0 %1508
      %1510 = vrot.lane.b32.xlu0 %v1441, 24
      %v1511 = vpop.permute.xlu0 %1510
      %1512 = vrot.lane.b32.xlu0 %v1442, 24
      %v1513 = vpop.permute.xlu0 %1512
      %1514 = vrot.lane.b32.xlu0 %v1443, 24
      %v1515 = vpop.permute.xlu0 %1514
      %1516 = vrot.lane.b32.xlu0 %v1444, 24
      %v1517 = vpop.permute.xlu0 %1516
      %1518 = vrot.lane.b32.xlu0 %v1445, 24
      %v1519 = vpop.permute.xlu0 %1518
      %1520 = vrot.lane.b32.xlu0 %v1446, 24
      %v1521 = vpop.permute.xlu0 %1520
      %1522 = vrot.lane.b32.xlu0 %v1447, 24
      %v1523 = vpop.permute.xlu0 %1522
      %1524 = vrot.lane.b32.xlu0 %v1448, 24
      %v1525 = vpop.permute.xlu0 %1524
      %1526 = vrot.lane.b32.xlu0 %v1449, 24
      %v1527 = vpop.permute.xlu0 %1526
      %1528 = vrot.lane.b32.xlu0 %v1450, 24
      %v1529 = vpop.permute.xlu0 %1528
      %1530 = vrot.lane.b32.xlu0 %v1451, 24
      %v1531 = vpop.permute.xlu0 %1530
      %1532 = vrot.lane.b32.xlu0 %v1452, 24
      %v1533 = vpop.permute.xlu0 %1532
      %1534 = vrot.lane.b32.xlu0 %v1453, 24
      %v1535 = vpop.permute.xlu0 %1534
      %1536 = vrot.lane.b32.xlu0 %v1454, 24
      %v1537 = vpop.permute.xlu0 %1536
      %1538 = vrot.lane.b32.xlu0 %v1455, 24
      %v1539 = vpop.permute.xlu0 %1538
      %1540 = vrot.lane.b32.xlu0 %v1456, 24
      %v1541 = vpop.permute.xlu0 %1540
      %1542 = vrot.lane.b32.xlu0 %v1457, 24
      %v1543 = vpop.permute.xlu0 %1542
      %1544 = vrot.lane.b32.xlu0 %v1458, 24
      %v1545 = vpop.permute.xlu0 %1544
      %1546 = vrot.lane.b32.xlu0 %v1459, 24
      %v1547 = vpop.permute.xlu0 %1546
      %1548 = vrot.lane.b32.xlu0 %v1460, 24
      %v1549 = vpop.permute.xlu0 %1548
      %1550 = vrot.lane.b32.xlu0 %v1461, 24
      %v1551 = vpop.permute.xlu0 %1550
      %1552 = vrot.lane.b32.xlu0 %v1462, 24
      %v1553 = vpop.permute.xlu0 %1552
      %1554 = vrot.lane.b32.xlu0 %v1463, 24
      %v1555 = vpop.permute.xlu0 %1554
      %1556 = vrot.lane.b32.xlu0 %v1464, 24
      %v1557 = vpop.permute.xlu0 %1556
      %1558 = vrot.lane.b32.xlu0 %v1465, 24
      %v1559 = vpop.permute.xlu0 %1558
      %1560 = vrot.lane.b32.xlu0 %v1466, 24
      %v1561 = vpop.permute.xlu0 %1560
      %1562 = vrot.lane.b32.xlu0 %v1467, 24
      %v1563 = vpop.permute.xlu0 %1562
      %vm1596 = vcmask 228544
      %1597 = vst.msk [vmem:[#allocation3] sm:$0xff] %vm1596, %v1501
      %1598 = vst.msk [vmem:[#allocation3 + $0x8] sm:$0xff] %vm1596, %v1503
      %1599 = vst.msk [vmem:[#allocation3 + $0x10] sm:$0xff] %vm1596, %v1505
      %1600 = vst.msk [vmem:[#allocation3 + $0x18] sm:$0xff] %vm1596, %v1507
      %1601 = vst.msk [vmem:[#allocation3 + $0x20] sm:$0xff] %vm1596, %v1509
      %1602 = vst.msk [vmem:[#allocation3 + $0x28] sm:$0xff] %vm1596, %v1511
      %1603 = vst.msk [vmem:[#allocation3 + $0x30] sm:$0xff] %vm1596, %v1513
      %1604 = vst.msk [vmem:[#allocation3 + $0x38] sm:$0xff] %vm1596, %v1515
      %1605 = vst.msk [vmem:[#allocation3 + $0x40] sm:$0xff] %vm1596, %v1517
      %1606 = vst.msk [vmem:[#allocation3 + $0x48] sm:$0xff] %vm1596, %v1519
      %1607 = vst.msk [vmem:[#allocation3 + $0x50] sm:$0xff] %vm1596, %v1521
      %1608 = vst.msk [vmem:[#allocation3 + $0x58] sm:$0xff] %vm1596, %v1523
      %1609 = vst.msk [vmem:[#allocation3 + $0x60] sm:$0xff] %vm1596, %v1525
      %1610 = vst.msk [vmem:[#allocation3 + $0x68] sm:$0xff] %vm1596, %v1527
      %1611 = vst.msk [vmem:[#allocation3 + $0x70] sm:$0xff] %vm1596, %v1529
      %1612 = vst.msk [vmem:[#allocation3 + $0x78] sm:$0xff] %vm1596, %v1531
      %1613 = vst.msk [vmem:[#allocation3 + $0x80] sm:$0xff] %vm1596, %v1533
      %1614 = vst.msk [vmem:[#allocation3 + $0x88] sm:$0xff] %vm1596, %v1535
      %1615 = vst.msk [vmem:[#allocation3 + $0x90] sm:$0xff] %vm1596, %v1537
      %1616 = vst.msk [vmem:[#allocation3 + $0x98] sm:$0xff] %vm1596, %v1539
      %1617 = vst.msk [vmem:[#allocation3 + $0xa0] sm:$0xff] %vm1596, %v1541
      %1618 = vst.msk [vmem:[#allocation3 + $0xa8] sm:$0xff] %vm1596, %v1543
      %1619 = vst.msk [vmem:[#allocation3 + $0xb0] sm:$0xff] %vm1596, %v1545
      %1620 = vst.msk [vmem:[#allocation3 + $0xb8] sm:$0xff] %vm1596, %v1547
      %1621 = vst.msk [vmem:[#allocation3 + $0xc0] sm:$0xff] %vm1596, %v1549
      %1622 = vst.msk [vmem:[#allocation3 + $0xc8] sm:$0xff] %vm1596, %v1551
      %1623 = vst.msk [vmem:[#allocation3 + $0xd0] sm:$0xff] %vm1596, %v1553
      %1624 = vst.msk [vmem:[#allocation3 + $0xd8] sm:$0xff] %vm1596, %v1555
      %1625 = vst.msk [vmem:[#allocation3 + $0xe0] sm:$0xff] %vm1596, %v1557
      %1626 = vst.msk [vmem:[#allocation3 + $0xe8] sm:$0xff] %vm1596, %v1559
      %1627 = vst.msk [vmem:[#allocation3 + $0xf0] sm:$0xff] %vm1596, %v1561
      %1628 = vst.msk [vmem:[#allocation3 + $0xf8] sm:$0xff] %vm1596, %v1563
      %v1629 = vld [vmem:[%s1242 + $0x2] sm:$0xff]
      %v1630 = vld [vmem:[%s1242 + $0xa] sm:$0xff]
      %v1631 = vld [vmem:[%s1242 + $0x1a] sm:$0xff]
      %v1632 = vld [vmem:[%s1242 + $0x22] sm:$0xff]
      %v1633 = vld [vmem:[%s1242 + $0x32] sm:$0xff]
      %v1634 = vld [vmem:[%s1242 + $0x3a] sm:$0xff]
      %v1635 = vld [vmem:[%s1242 + $0x4a] sm:$0xff]
      %v1636 = vld [vmem:[%s1242 + $0x52] sm:$0xff]
      %v1637 = vld [vmem:[%s1242 + $0x62] sm:$0xff]
      %v1638 = vld [vmem:[%s1242 + $0x6a] sm:$0xff]
      %v1639 = vld [vmem:[%s1242 + $0x7a] sm:$0xff]
      %v1640 = vld [vmem:[%s1242 + $0x82] sm:$0xff]
      %v1641 = vld [vmem:[%s1242 + $0x92] sm:$0xff]
      %v1642 = vld [vmem:[%s1242 + $0x9a] sm:$0xff]
      %v1643 = vld [vmem:[%s1242 + $0xaa] sm:$0xff]
      %v1644 = vld [vmem:[%s1242 + $0xb2] sm:$0xff]
      %v1645 = vld [vmem:[%s1242 + $0xc2] sm:$0xff]
      %v1646 = vld [vmem:[%s1242 + $0xca] sm:$0xff]
      %v1647 = vld [vmem:[%s1242 + $0xda] sm:$0xff]
      %v1648 = vld [vmem:[%s1242 + $0xe2] sm:$0xff]
      %v1649 = vld [vmem:[%s1242 + $0xf2] sm:$0xff]
      %v1650 = vld [vmem:[%s1242 + $0xfa] sm:$0xff]
      %v1651 = vld [vmem:[%s1242 + $0x10a] sm:$0xff]
      %v1652 = vld [vmem:[%s1242 + $0x112] sm:$0xff]
      %v1653 = vld [vmem:[%s1242 + $0x122] sm:$0xff]
      %v1654 = vld [vmem:[%s1242 + $0x12a] sm:$0xff]
      %v1655 = vld [vmem:[%s1242 + $0x13a] sm:$0xff]
      %v1656 = vld [vmem:[%s1242 + $0x142] sm:$0xff]
      %v1657 = vld [vmem:[%s1242 + $0x152] sm:$0xff]
      %v1658 = vld [vmem:[%s1242 + $0x15a] sm:$0xff]
      %v1659 = vld [vmem:[%s1242 + $0x16a] sm:$0xff]
      %v1660 = vld [vmem:[%s1242 + $0x172] sm:$0xff]
      %1693 = vrot.lane.b32.xlu0 %v1629, 28
      %v1694 = vpop.permute.xlu0 %1693
      %1695 = vrot.lane.b32.xlu0 %v1630, 28
      %v1696 = vpop.permute.xlu0 %1695
      %1697 = vrot.lane.b32.xlu0 %v1631, 28
      %v1698 = vpop.permute.xlu0 %1697
      %1699 = vrot.lane.b32.xlu0 %v1632, 28
      %v1700 = vpop.permute.xlu0 %1699
      %1701 = vrot.lane.b32.xlu0 %v1633, 28
      %v1702 = vpop.permute.xlu0 %1701
      %1703 = vrot.lane.b32.xlu0 %v1634, 28
      %v1704 = vpop.permute.xlu0 %1703
      %1705 = vrot.lane.b32.xlu0 %v1635, 28
      %v1706 = vpop.permute.xlu0 %1705
      %1707 = vrot.lane.b32.xlu0 %v1636, 28
      %v1708 = vpop.permute.xlu0 %1707
      %1709 = vrot.lane.b32.xlu0 %v1637, 28
      %v1710 = vpop.permute.xlu0 %1709
      %1711 = vrot.lane.b32.xlu0 %v1638, 28
      %v1712 = vpop.permute.xlu0 %1711
      %1713 = vrot.lane.b32.xlu0 %v1639, 28
      %v1714 = vpop.permute.xlu0 %1713
      %1715 = vrot.lane.b32.xlu0 %v1640, 28
      %v1716 = vpop.permute.xlu0 %1715
      %1717 = vrot.lane.b32.xlu0 %v1641, 28
      %v1718 = vpop.permute.xlu0 %1717
      %1719 = vrot.lane.b32.xlu0 %v1642, 28
      %v1720 = vpop.permute.xlu0 %1719
      %1721 = vrot.lane.b32.xlu0 %v1643, 28
      %v1722 = vpop.permute.xlu0 %1721
      %1723 = vrot.lane.b32.xlu0 %v1644, 28
      %v1724 = vpop.permute.xlu0 %1723
      %1725 = vrot.lane.b32.xlu0 %v1645, 28
      %v1726 = vpop.permute.xlu0 %1725
      %1727 = vrot.lane.b32.xlu0 %v1646, 28
      %v1728 = vpop.permute.xlu0 %1727
      %1729 = vrot.lane.b32.xlu0 %v1647, 28
      %v1730 = vpop.permute.xlu0 %1729
      %1731 = vrot.lane.b32.xlu0 %v1648, 28
      %v1732 = vpop.permute.xlu0 %1731
      %1733 = vrot.lane.b32.xlu0 %v1649, 28
      %v1734 = vpop.permute.xlu0 %1733
      %1735 = vrot.lane.b32.xlu0 %v1650, 28
      %v1736 = vpop.permute.xlu0 %1735
      %1737 = vrot.lane.b32.xlu0 %v1651, 28
      %v1738 = vpop.permute.xlu0 %1737
      %1739 = vrot.lane.b32.xlu0 %v1652, 28
      %v1740 = vpop.permute.xlu0 %1739
      %1741 = vrot.lane.b32.xlu0 %v1653, 28
      %v1742 = vpop.permute.xlu0 %1741
      %1743 = vrot.lane.b32.xlu0 %v1654, 28
      %v1744 = vpop.permute.xlu0 %1743
      %1745 = vrot.lane.b32.xlu0 %v1655, 28
      %v1746 = vpop.permute.xlu0 %1745
      %1747 = vrot.lane.b32.xlu0 %v1656, 28
      %v1748 = vpop.permute.xlu0 %1747
      %1749 = vrot.lane.b32.xlu0 %v1657, 28
      %v1750 = vpop.permute.xlu0 %1749
      %1751 = vrot.lane.b32.xlu0 %v1658, 28
      %v1752 = vpop.permute.xlu0 %1751
      %1753 = vrot.lane.b32.xlu0 %v1659, 28
      %v1754 = vpop.permute.xlu0 %1753
      %1755 = vrot.lane.b32.xlu0 %v1660, 28
      %v1756 = vpop.permute.xlu0 %1755
      %vm1789 = vcmask 261344
      %1790 = vst.msk [vmem:[#allocation3] sm:$0xff] %vm1789, %v1694
      %1791 = vst.msk [vmem:[#allocation3 + $0x8] sm:$0xff] %vm1789, %v1696
      %1792 = vst.msk [vmem:[#allocation3 + $0x10] sm:$0xff] %vm1789, %v1698
      %1793 = vst.msk [vmem:[#allocation3 + $0x18] sm:$0xff] %vm1789, %v1700
      %1794 = vst.msk [vmem:[#allocation3 + $0x20] sm:$0xff] %vm1789, %v1702
      %1795 = vst.msk [vmem:[#allocation3 + $0x28] sm:$0xff] %vm1789, %v1704
      %1796 = vst.msk [vmem:[#allocation3 + $0x30] sm:$0xff] %vm1789, %v1706
      %1797 = vst.msk [vmem:[#allocation3 + $0x38] sm:$0xff] %vm1789, %v1708
      %1798 = vst.msk [vmem:[#allocation3 + $0x40] sm:$0xff] %vm1789, %v1710
      %1799 = vst.msk [vmem:[#allocation3 + $0x48] sm:$0xff] %vm1789, %v1712
      %1800 = vst.msk [vmem:[#allocation3 + $0x50] sm:$0xff] %vm1789, %v1714
      %1801 = vst.msk [vmem:[#allocation3 + $0x58] sm:$0xff] %vm1789, %v1716
      %1802 = vst.msk [vmem:[#allocation3 + $0x60] sm:$0xff] %vm1789, %v1718
      %1803 = vst.msk [vmem:[#allocation3 + $0x68] sm:$0xff] %vm1789, %v1720
      %1804 = vst.msk [vmem:[#allocation3 + $0x70] sm:$0xff] %vm1789, %v1722
      %1805 = vst.msk [vmem:[#allocation3 + $0x78] sm:$0xff] %vm1789, %v1724
      %1806 = vst.msk [vmem:[#allocation3 + $0x80] sm:$0xff] %vm1789, %v1726
      %1807 = vst.msk [vmem:[#allocation3 + $0x88] sm:$0xff] %vm1789, %v1728
      %1808 = vst.msk [vmem:[#allocation3 + $0x90] sm:$0xff] %vm1789, %v1730
      %1809 = vst.msk [vmem:[#allocation3 + $0x98] sm:$0xff] %vm1789, %v1732
      %1810 = vst.msk [vmem:[#allocation3 + $0xa0] sm:$0xff] %vm1789, %v1734
      %1811 = vst.msk [vmem:[#allocation3 + $0xa8] sm:$0xff] %vm1789, %v1736
      %1812 = vst.msk [vmem:[#allocation3 + $0xb0] sm:$0xff] %vm1789, %v1738
      %1813 = vst.msk [vmem:[#allocation3 + $0xb8] sm:$0xff] %vm1789, %v1740
      %1814 = vst.msk [vmem:[#allocation3 + $0xc0] sm:$0xff] %vm1789, %v1742
      %1815 = vst.msk [vmem:[#allocation3 + $0xc8] sm:$0xff] %vm1789, %v1744
      %1816 = vst.msk [vmem:[#allocation3 + $0xd0] sm:$0xff] %vm1789, %v1746
      %1817 = vst.msk [vmem:[#allocation3 + $0xd8] sm:$0xff] %vm1789, %v1748
      %1818 = vst.msk [vmem:[#allocation3 + $0xe0] sm:$0xff] %vm1789, %v1750
      %1819 = vst.msk [vmem:[#allocation3 + $0xe8] sm:$0xff] %vm1789, %v1752
      %1820 = vst.msk [vmem:[#allocation3 + $0xf0] sm:$0xff] %vm1789, %v1754
      %1821 = vst.msk [vmem:[#allocation3 + $0xf8] sm:$0xff] %vm1789, %v1756
      %v1822 = vld [vmem:[%s1242 + $0x3] sm:$0xff]
      %v1823 = vld [vmem:[%s1242 + $0xb] sm:$0xff]
      %v1824 = vld [vmem:[%s1242 + $0x1b] sm:$0xff]
      %v1825 = vld [vmem:[%s1242 + $0x23] sm:$0xff]
      %v1826 = vld [vmem:[%s1242 + $0x33] sm:$0xff]
      %v1827 = vld [vmem:[%s1242 + $0x3b] sm:$0xff]
      %v1828 = vld [vmem:[%s1242 + $0x4b] sm:$0xff]
      %v1829 = vld [vmem:[%s1242 + $0x53] sm:$0xff]
      %v1830 = vld [vmem:[%s1242 + $0x63] sm:$0xff]
      %v1831 = vld [vmem:[%s1242 + $0x6b] sm:$0xff]
      %v1832 = vld [vmem:[%s1242 + $0x7b] sm:$0xff]
      %v1833 = vld [vmem:[%s1242 + $0x83] sm:$0xff]
      %v1834 = vld [vmem:[%s1242 + $0x93] sm:$0xff]
      %v1835 = vld [vmem:[%s1242 + $0x9b] sm:$0xff]
      %v1836 = vld [vmem:[%s1242 + $0xab] sm:$0xff]
      %v1837 = vld [vmem:[%s1242 + $0xb3] sm:$0xff]
      %v1838 = vld [vmem:[%s1242 + $0xc3] sm:$0xff]
      %v1839 = vld [vmem:[%s1242 + $0xcb] sm:$0xff]
      %v1840 = vld [vmem:[%s1242 + $0xdb] sm:$0xff]
      %v1841 = vld [vmem:[%s1242 + $0xe3] sm:$0xff]
      %v1842 = vld [vmem:[%s1242 + $0xf3] sm:$0xff]
      %v1843 = vld [vmem:[%s1242 + $0xfb] sm:$0xff]
      %v1844 = vld [vmem:[%s1242 + $0x10b] sm:$0xff]
      %v1845 = vld [vmem:[%s1242 + $0x113] sm:$0xff]
      %v1846 = vld [vmem:[%s1242 + $0x123] sm:$0xff]
      %v1847 = vld [vmem:[%s1242 + $0x12b] sm:$0xff]
      %v1848 = vld [vmem:[%s1242 + $0x13b] sm:$0xff]
      %v1849 = vld [vmem:[%s1242 + $0x143] sm:$0xff]
      %v1850 = vld [vmem:[%s1242 + $0x153] sm:$0xff]
      %v1851 = vld [vmem:[%s1242 + $0x15b] sm:$0xff]
      %v1852 = vld [vmem:[%s1242 + $0x16b] sm:$0xff]
      %v1853 = vld [vmem:[%s1242 + $0x173] sm:$0xff]
      %1886 = vrot.lane.b32.xlu0 %v1822, 32
      %v1887 = vpop.permute.xlu0 %1886
      %1888 = vrot.lane.b32.xlu0 %v1823, 32
      %v1889 = vpop.permute.xlu0 %1888
      %1890 = vrot.lane.b32.xlu0 %v1824, 32
      %v1891 = vpop.permute.xlu0 %1890
      %1892 = vrot.lane.b32.xlu0 %v1825, 32
      %v1893 = vpop.permute.xlu0 %1892
      %1894 = vrot.lane.b32.xlu0 %v1826, 32
      %v1895 = vpop.permute.xlu0 %1894
      %1896 = vrot.lane.b32.xlu0 %v1827, 32
      %v1897 = vpop.permute.xlu0 %1896
      %1898 = vrot.lane.b32.xlu0 %v1828, 32
      %v1899 = vpop.permute.xlu0 %1898
      %1900 = vrot.lane.b32.xlu0 %v1829, 32
      %v1901 = vpop.permute.xlu0 %1900
      %1902 = vrot.lane.b32.xlu0 %v1830, 32
      %v1903 = vpop.permute.xlu0 %1902
      %1904 = vrot.lane.b32.xlu0 %v1831, 32
      %v1905 = vpop.permute.xlu0 %1904
      %1906 = vrot.lane.b32.xlu0 %v1832, 32
      %v1907 = vpop.permute.xlu0 %1906
      %1908 = vrot.lane.b32.xlu0 %v1833, 32
      %v1909 = vpop.permute.xlu0 %1908
      %1910 = vrot.lane.b32.xlu0 %v1834, 32
      %v1911 = vpop.permute.xlu0 %1910
      %1912 = vrot.lane.b32.xlu0 %v1835, 32
      %v1913 = vpop.permute.xlu0 %1912
      %1914 = vrot.lane.b32.xlu0 %v1836, 32
      %v1915 = vpop.permute.xlu0 %1914
      %1916 = vrot.lane.b32.xlu0 %v1837, 32
      %v1917 = vpop.permute.xlu0 %1916
      %1918 = vrot.lane.b32.xlu0 %v1838, 32
      %v1919 = vpop.permute.xlu0 %1918
      %1920 = vrot.lane.b32.xlu0 %v1839, 32
      %v1921 = vpop.permute.xlu0 %1920
      %1922 = vrot.lane.b32.xlu0 %v1840, 32
      %v1923 = vpop.permute.xlu0 %1922
      %1924 = vrot.lane.b32.xlu0 %v1841, 32
      %v1925 = vpop.permute.xlu0 %1924
      %1926 = vrot.lane.b32.xlu0 %v1842, 32
      %v1927 = vpop.permute.xlu0 %1926
      %1928 = vrot.lane.b32.xlu0 %v1843, 32
      %v1929 = vpop.permute.xlu0 %1928
      %1930 = vrot.lane.b32.xlu0 %v1844, 32
      %v1931 = vpop.permute.xlu0 %1930
      %1932 = vrot.lane.b32.xlu0 %v1845, 32
      %v1933 = vpop.permute.xlu0 %1932
      %1934 = vrot.lane.b32.xlu0 %v1846, 32
      %v1935 = vpop.permute.xlu0 %1934
      %1936 = vrot.lane.b32.xlu0 %v1847, 32
      %v1937 = vpop.permute.xlu0 %1936
      %1938 = vrot.lane.b32.xlu0 %v1848, 32
      %v1939 = vpop.permute.xlu0 %1938
      %1940 = vrot.lane.b32.xlu0 %v1849, 32
      %v1941 = vpop.permute.xlu0 %1940
      %1942 = vrot.lane.b32.xlu0 %v1850, 32
      %v1943 = vpop.permute.xlu0 %1942
      %1944 = vrot.lane.b32.xlu0 %v1851, 32
      %v1945 = vpop.permute.xlu0 %1944
      %1946 = vrot.lane.b32.xlu0 %v1852, 32
      %v1947 = vpop.permute.xlu0 %1946
      %1948 = vrot.lane.b32.xlu0 %v1853, 32
      %v1949 = vpop.permute.xlu0 %1948
      %vm1982 = vcmask 294144
      %1983 = vst.msk [vmem:[#allocation3] sm:$0xff] %vm1982, %v1887
      %1984 = vst.msk [vmem:[#allocation3 + $0x8] sm:$0xff] %vm1982, %v1889
      %1985 = vst.msk [vmem:[#allocation3 + $0x10] sm:$0xff] %vm1982, %v1891
      %1986 = vst.msk [vmem:[#allocation3 + $0x18] sm:$0xff] %vm1982, %v1893
      %1987 = vst.msk [vmem:[#allocation3 + $0x20] sm:$0xff] %vm1982, %v1895
      %1988 = vst.msk [vmem:[#allocation3 + $0x28] sm:$0xff] %vm1982, %v1897
      %1989 = vst.msk [vmem:[#allocation3 + $0x30] sm:$0xff] %vm1982, %v1899
      %1990 = vst.msk [vmem:[#allocation3 + $0x38] sm:$0xff] %vm1982, %v1901
      %1991 = vst.msk [vmem:[#allocation3 + $0x40] sm:$0xff] %vm1982, %v1903
      %1992 = vst.msk [vmem:[#allocation3 + $0x48] sm:$0xff] %vm1982, %v1905
      %1993 = vst.msk [vmem:[#allocation3 + $0x50] sm:$0xff] %vm1982, %v1907
      %1994 = vst.msk [vmem:[#allocation3 + $0x58] sm:$0xff] %vm1982, %v1909
      %1995 = vst.msk [vmem:[#allocation3 + $0x60] sm:$0xff] %vm1982, %v1911
      %1996 = vst.msk [vmem:[#allocation3 + $0x68] sm:$0xff] %vm1982, %v1913
      %1997 = vst.msk [vmem:[#allocation3 + $0x70] sm:$0xff] %vm1982, %v1915
      %1998 = vst.msk [vmem:[#allocation3 + $0x78] sm:$0xff] %vm1982, %v1917
      %1999 = vst.msk [vmem:[#allocation3 + $0x80] sm:$0xff] %vm1982, %v1919
      %2000 = vst.msk [vmem:[#allocation3 + $0x88] sm:$0xff] %vm1982, %v1921
      %2001 = vst.msk [vmem:[#allocation3 + $0x90] sm:$0xff] %vm1982, %v1923
      %2002 = vst.msk [vmem:[#allocation3 + $0x98] sm:$0xff] %vm1982, %v1925
      %2003 = vst.msk [vmem:[#allocation3 + $0xa0] sm:$0xff] %vm1982, %v1927
      %2004 = vst.msk [vmem:[#allocation3 + $0xa8] sm:$0xff] %vm1982, %v1929
      %2005 = vst.msk [vmem:[#allocation3 + $0xb0] sm:$0xff] %vm1982, %v1931
      %2006 = vst.msk [vmem:[#allocation3 + $0xb8] sm:$0xff] %vm1982, %v1933
      %2007 = vst.msk [vmem:[#allocation3 + $0xc0] sm:$0xff] %vm1982, %v1935
      %2008 = vst.msk [vmem:[#allocation3 + $0xc8] sm:$0xff] %vm1982, %v1937
      %2009 = vst.msk [vmem:[#allocation3 + $0xd0] sm:$0xff] %vm1982, %v1939
      %2010 = vst.msk [vmem:[#allocation3 + $0xd8] sm:$0xff] %vm1982, %v1941
      %2011 = vst.msk [vmem:[#allocation3 + $0xe0] sm:$0xff] %vm1982, %v1943
      %2012 = vst.msk [vmem:[#allocation3 + $0xe8] sm:$0xff] %vm1982, %v1945
      %2013 = vst.msk [vmem:[#allocation3 + $0xf0] sm:$0xff] %vm1982, %v1947
      %2014 = vst.msk [vmem:[#allocation3 + $0xf8] sm:$0xff] %vm1982, %v1949
      %v2015 = vld [vmem:[%s1242 + $0x4] sm:$0xff]
      %v2016 = vld [vmem:[%s1242 + $0xc] sm:$0xff]
      %v2017 = vld [vmem:[%s1242 + $0x1c] sm:$0xff]
      %v2018 = vld [vmem:[%s1242 + $0x24] sm:$0xff]
      %v2019 = vld [vmem:[%s1242 + $0x34] sm:$0xff]
      %v2020 = vld [vmem:[%s1242 + $0x3c] sm:$0xff]
      %v2021 = vld [vmem:[%s1242 + $0x4c] sm:$0xff]
      %v2022 = vld [vmem:[%s1242 + $0x54] sm:$0xff]
      %v2023 = vld [vmem:[%s1242 + $0x64] sm:$0xff]
      %v2024 = vld [vmem:[%s1242 + $0x6c] sm:$0xff]
      %v2025 = vld [vmem:[%s1242 + $0x7c] sm:$0xff]
      %v2026 = vld [vmem:[%s1242 + $0x84] sm:$0xff]
      %v2027 = vld [vmem:[%s1242 + $0x94] sm:$0xff]
      %v2028 = vld [vmem:[%s1242 + $0x9c] sm:$0xff]
      %v2029 = vld [vmem:[%s1242 + $0xac] sm:$0xff]
      %v2030 = vld [vmem:[%s1242 + $0xb4] sm:$0xff]
      %v2031 = vld [vmem:[%s1242 + $0xc4] sm:$0xff]
      %v2032 = vld [vmem:[%s1242 + $0xcc] sm:$0xff]
      %v2033 = vld [vmem:[%s1242 + $0xdc] sm:$0xff]
      %v2034 = vld [vmem:[%s1242 + $0xe4] sm:$0xff]
      %v2035 = vld [vmem:[%s1242 + $0xf4] sm:$0xff]
      %v2036 = vld [vmem:[%s1242 + $0xfc] sm:$0xff]
      %v2037 = vld [vmem:[%s1242 + $0x10c] sm:$0xff]
      %v2038 = vld [vmem:[%s1242 + $0x114] sm:$0xff]
      %v2039 = vld [vmem:[%s1242 + $0x124] sm:$0xff]
      %v2040 = vld [vmem:[%s1242 + $0x12c] sm:$0xff]
      %v2041 = vld [vmem:[%s1242 + $0x13c] sm:$0xff]
      %v2042 = vld [vmem:[%s1242 + $0x144] sm:$0xff]
      %v2043 = vld [vmem:[%s1242 + $0x154] sm:$0xff]
      %v2044 = vld [vmem:[%s1242 + $0x15c] sm:$0xff]
      %v2045 = vld [vmem:[%s1242 + $0x16c] sm:$0xff]
      %v2046 = vld [vmem:[%s1242 + $0x174] sm:$0xff]
      %2079 = vrot.lane.b32.xlu0 %v2015, 36
      %v2080 = vpop.permute.xlu0 %2079
      %2081 = vrot.lane.b32.xlu0 %v2016, 36
      %v2082 = vpop.permute.xlu0 %2081
      %2083 = vrot.lane.b32.xlu0 %v2017, 36
      %v2084 = vpop.permute.xlu0 %2083
      %2085 = vrot.lane.b32.xlu0 %v2018, 36
      %v2086 = vpop.permute.xlu0 %2085
      %2087 = vrot.lane.b32.xlu0 %v2019, 36
      %v2088 = vpop.permute.xlu0 %2087
      %2089 = vrot.lane.b32.xlu0 %v2020, 36
      %v2090 = vpop.permute.xlu0 %2089
      %2091 = vrot.lane.b32.xlu0 %v2021, 36
      %v2092 = vpop.permute.xlu0 %2091
      %2093 = vrot.lane.b32.xlu0 %v2022, 36
      %v2094 = vpop.permute.xlu0 %2093
      %2095 = vrot.lane.b32.xlu0 %v2023, 36
      %v2096 = vpop.permute.xlu0 %2095
      %2097 = vrot.lane.b32.xlu0 %v2024, 36
      %v2098 = vpop.permute.xlu0 %2097
      %2099 = vrot.lane.b32.xlu0 %v2025, 36
      %v2100 = vpop.permute.xlu0 %2099
      %2101 = vrot.lane.b32.xlu0 %v2026, 36
      %v2102 = vpop.permute.xlu0 %2101
      %2103 = vrot.lane.b32.xlu0 %v2027, 36
      %v2104 = vpop.permute.xlu0 %2103
      %2105 = vrot.lane.b32.xlu0 %v2028, 36
      %v2106 = vpop.permute.xlu0 %2105
      %2107 = vrot.lane.b32.xlu0 %v2029, 36
      %v2108 = vpop.permute.xlu0 %2107
      %2109 = vrot.lane.b32.xlu0 %v2030, 36
      %v2110 = vpop.permute.xlu0 %2109
      %2111 = vrot.lane.b32.xlu0 %v2031, 36
      %v2112 = vpop.permute.xlu0 %2111
      %2113 = vrot.lane.b32.xlu0 %v2032, 36
      %v2114 = vpop.permute.xlu0 %2113
      %2115 = vrot.lane.b32.xlu0 %v2033, 36
      %v2116 = vpop.permute.xlu0 %2115
      %2117 = vrot.lane.b32.xlu0 %v2034, 36
      %v2118 = vpop.permute.xlu0 %2117
      %2119 = vrot.lane.b32.xlu0 %v2035, 36
      %v2120 = vpop.permute.xlu0 %2119
      %2121 = vrot.lane.b32.xlu0 %v2036, 36
      %v2122 = vpop.permute.xlu0 %2121
      %2123 = vrot.lane.b32.xlu0 %v2037, 36
      %v2124 = vpop.permute.xlu0 %2123
      %2125 = vrot.lane.b32.xlu0 %v2038, 36
      %v2126 = vpop.permute.xlu0 %2125
      %2127 = vrot.lane.b32.xlu0 %v2039, 36
      %v2128 = vpop.permute.xlu0 %2127
      %2129 = vrot.lane.b32.xlu0 %v2040, 36
      %v2130 = vpop.permute.xlu0 %2129
      %2131 = vrot.lane.b32.xlu0 %v2041, 36
      %v2132 = vpop.permute.xlu0 %2131
      %2133 = vrot.lane.b32.xlu0 %v2042, 36
      %v2134 = vpop.permute.xlu0 %2133
      %2135 = vrot.lane.b32.xlu0 %v2043, 36
      %v2136 = vpop.permute.xlu0 %2135
      %2137 = vrot.lane.b32.xlu0 %v2044, 36
      %v2138 = vpop.permute.xlu0 %2137
      %2139 = vrot.lane.b32.xlu0 %v2045, 36
      %v2140 = vpop.permute.xlu0 %2139
      %2141 = vrot.lane.b32.xlu0 %v2046, 36
      %v2142 = vpop.permute.xlu0 %2141
      %vm2175 = vcmask 326944
      %2176 = vst.msk [vmem:[#allocation3] sm:$0xff] %vm2175, %v2080
      %2177 = vst.msk [vmem:[#allocation3 + $0x8] sm:$0xff] %vm2175, %v2082
      %2178 = vst.msk [vmem:[#allocation3 + $0x10] sm:$0xff] %vm2175, %v2084
      %2179 = vst.msk [vmem:[#allocation3 + $0x18] sm:$0xff] %vm2175, %v2086
      %2180 = vst.msk [vmem:[#allocation3 + $0x20] sm:$0xff] %vm2175, %v2088
      %2181 = vst.msk [vmem:[#allocation3 + $0x28] sm:$0xff] %vm2175, %v2090
      %2182 = vst.msk [vmem:[#allocation3 + $0x30] sm:$0xff] %vm2175, %v2092
      %2183 = vst.msk [vmem:[#allocation3 + $0x38] sm:$0xff] %vm2175, %v2094
      %2184 = vst.msk [vmem:[#allocation3 + $0x40] sm:$0xff] %vm2175, %v2096
      %2185 = vst.msk [vmem:[#allocation3 + $0x48] sm:$0xff] %vm2175, %v2098
      %2186 = vst.msk [vmem:[#allocation3 + $0x50] sm:$0xff] %vm2175, %v2100
      %2187 = vst.msk [vmem:[#allocation3 + $0x58] sm:$0xff] %vm2175, %v2102
      %2188 = vst.msk [vmem:[#allocation3 + $0x60] sm:$0xff] %vm2175, %v2104
      %2189 = vst.msk [vmem:[#allocation3 + $0x68] sm:$0xff] %vm2175, %v2106
      %2190 = vst.msk [vmem:[#allocation3 + $0x70] sm:$0xff] %vm2175, %v2108
      %2191 = vst.msk [vmem:[#allocation3 + $0x78] sm:$0xff] %vm2175, %v2110
      %2192 = vst.msk [vmem:[#allocation3 + $0x80] sm:$0xff] %vm2175, %v2112
      %2193 = vst.msk [vmem:[#allocation3 + $0x88] sm:$0xff] %vm2175, %v2114
      %2194 = vst.msk [vmem:[#allocation3 + $0x90] sm:$0xff] %vm2175, %v2116
      %2195 = vst.msk [vmem:[#allocation3 + $0x98] sm:$0xff] %vm2175, %v2118
      %2196 = vst.msk [vmem:[#allocation3 + $0xa0] sm:$0xff] %vm2175, %v2120
      %2197 = vst.msk [vmem:[#allocation3 + $0xa8] sm:$0xff] %vm2175, %v2122
      %2198 = vst.msk [vmem:[#allocation3 + $0xb0] sm:$0xff] %vm2175, %v2124
      %2199 = vst.msk [vmem:[#allocation3 + $0xb8] sm:$0xff] %vm2175, %v2126
      %2200 = vst.msk [vmem:[#allocation3 + $0xc0] sm:$0xff] %vm2175, %v2128
      %2201 = vst.msk [vmem:[#allocation3 + $0xc8] sm:$0xff] %vm2175, %v2130
      %2202 = vst.msk [vmem:[#allocation3 + $0xd0] sm:$0xff] %vm2175, %v2132
      %2203 = vst.msk [vmem:[#allocation3 + $0xd8] sm:$0xff] %vm2175, %v2134
      %2204 = vst.msk [vmem:[#allocation3 + $0xe0] sm:$0xff] %vm2175, %v2136
      %2205 = vst.msk [vmem:[#allocation3 + $0xe8] sm:$0xff] %vm2175, %v2138
      %2206 = vst.msk [vmem:[#allocation3 + $0xf0] sm:$0xff] %vm2175, %v2140
      %2207 = vst.msk [vmem:[#allocation3 + $0xf8] sm:$0xff] %vm2175, %v2142
      %v2208 = vld [vmem:[%s373] sm:$0xff]
      %v2209 = vld [vmem:[%s373 + $0x8] sm:$0xff]
      %v2210 = vld [vmem:[%s373 + $0x18] sm:$0xff]
      %v2211 = vld [vmem:[%s373 + $0x20] sm:$0xff]
      %v2212 = vld [vmem:[%s373 + $0x30] sm:$0xff]
      %v2213 = vld [vmem:[%s373 + $0x38] sm:$0xff]
      %v2214 = vld [vmem:[%s373 + $0x48] sm:$0xff]
      %v2215 = vld [vmem:[%s373 + $0x50] sm:$0xff]
      %v2216 = vld [vmem:[%s373 + $0x60] sm:$0xff]
      %v2217 = vld [vmem:[%s373 + $0x68] sm:$0xff]
      %v2218 = vld [vmem:[%s373 + $0x78] sm:$0xff]
      %v2219 = vld [vmem:[%s373 + $0x80] sm:$0xff]
      %v2220 = vld [vmem:[%s373 + $0x90] sm:$0xff]
      %v2221 = vld [vmem:[%s373 + $0x98] sm:$0xff]
      %v2222 = vld [vmem:[%s373 + $0xa8] sm:$0xff]
      %v2223 = vld [vmem:[%s373 + $0xb0] sm:$0xff]
      %v2224 = vld [vmem:[%s373 + $0xc0] sm:$0xff]
      %v2225 = vld [vmem:[%s373 + $0xc8] sm:$0xff]
      %v2226 = vld [vmem:[%s373 + $0xd8] sm:$0xff]
      %v2227 = vld [vmem:[%s373 + $0xe0] sm:$0xff]
      %v2228 = vld [vmem:[%s373 + $0xf0] sm:$0xff]
      %v2229 = vld [vmem:[%s373 + $0xf8] sm:$0xff]
      %v2230 = vld [vmem:[%s373 + $0x108] sm:$0xff]
      %v2231 = vld [vmem:[%s373 + $0x110] sm:$0xff]
      %v2232 = vld [vmem:[%s373 + $0x120] sm:$0xff]
      %v2233 = vld [vmem:[%s373 + $0x128] sm:$0xff]
      %v2234 = vld [vmem:[%s373 + $0x138] sm:$0xff]
      %v2235 = vld [vmem:[%s373 + $0x140] sm:$0xff]
      %v2236 = vld [vmem:[%s373 + $0x150] sm:$0xff]
      %v2237 = vld [vmem:[%s373 + $0x158] sm:$0xff]
      %v2238 = vld [vmem:[%s373 + $0x168] sm:$0xff]
      %v2239 = vld [vmem:[%s373 + $0x170] sm:$0xff]
      %2272 = vrot.lane.b32.xlu0 %v2208, 40
      %v2273 = vpop.permute.xlu0 %2272
      %2274 = vrot.lane.b32.xlu0 %v2209, 40
      %v2275 = vpop.permute.xlu0 %2274
      %2276 = vrot.lane.b32.xlu0 %v2210, 40
      %v2277 = vpop.permute.xlu0 %2276
      %2278 = vrot.lane.b32.xlu0 %v2211, 40
      %v2279 = vpop.permute.xlu0 %2278
      %2280 = vrot.lane.b32.xlu0 %v2212, 40
      %v2281 = vpop.permute.xlu0 %2280
      %2282 = vrot.lane.b32.xlu0 %v2213, 40
      %v2283 = vpop.permute.xlu0 %2282
      %2284 = vrot.lane.b32.xlu0 %v2214, 40
      %v2285 = vpop.permute.xlu0 %2284
      %2286 = vrot.lane.b32.xlu0 %v2215, 40
      %v2287 = vpop.permute.xlu0 %2286
      %2288 = vrot.lane.b32.xlu0 %v2216, 40
      %v2289 = vpop.permute.xlu0 %2288
      %2290 = vrot.lane.b32.xlu0 %v2217, 40
      %v2291 = vpop.permute.xlu0 %2290
      %2292 = vrot.lane.b32.xlu0 %v2218, 40
      %v2293 = vpop.permute.xlu0 %2292
      %2294 = vrot.lane.b32.xlu0 %v2219, 40
      %v2295 = vpop.permute.xlu0 %2294
      %2296 = vrot.lane.b32.xlu0 %v2220, 40
      %v2297 = vpop.permute.xlu0 %2296
      %2298 = vrot.lane.b32.xlu0 %v2221, 40
      %v2299 = vpop.permute.xlu0 %2298
      %2300 = vrot.lane.b32.xlu0 %v2222, 40
      %v2301 = vpop.permute.xlu0 %2300
      %2302 = vrot.lane.b32.xlu0 %v2223, 40
      %v2303 = vpop.permute.xlu0 %2302
      %2304 = vrot.lane.b32.xlu0 %v2224, 40
      %v2305 = vpop.permute.xlu0 %2304
      %2306 = vrot.lane.b32.xlu0 %v2225, 40
      %v2307 = vpop.permute.xlu0 %2306
      %2308 = vrot.lane.b32.xlu0 %v2226, 40
      %v2309 = vpop.permute.xlu0 %2308
      %2310 = vrot.lane.b32.xlu0 %v2227, 40
      %v2311 = vpop.permute.xlu0 %2310
      %2312 = vrot.lane.b32.xlu0 %v2228, 40
      %v2313 = vpop.permute.xlu0 %2312
      %2314 = vrot.lane.b32.xlu0 %v2229, 40
      %v2315 = vpop.permute.xlu0 %2314
      %2316 = vrot.lane.b32.xlu0 %v2230, 40
      %v2317 = vpop.permute.xlu0 %2316
      %2318 = vrot.lane.b32.xlu0 %v2231, 40
      %v2319 = vpop.permute.xlu0 %2318
      %2320 = vrot.lane.b32.xlu0 %v2232, 40
      %v2321 = vpop.permute.xlu0 %2320
      %2322 = vrot.lane.b32.xlu0 %v2233, 40
      %v2323 = vpop.permute.xlu0 %2322
      %2324 = vrot.lane.b32.xlu0 %v2234, 40
      %v2325 = vpop.permute.xlu0 %2324
      %2326 = vrot.lane.b32.xlu0 %v2235, 40
      %v2327 = vpop.permute.xlu0 %2326
      %2328 = vrot.lane.b32.xlu0 %v2236, 40
      %v2329 = vpop.permute.xlu0 %2328
      %2330 = vrot.lane.b32.xlu0 %v2237, 40
      %v2331 = vpop.permute.xlu0 %2330
      %2332 = vrot.lane.b32.xlu0 %v2238, 40
      %v2333 = vpop.permute.xlu0 %2332
      %2334 = vrot.lane.b32.xlu0 %v2239, 40
      %v2335 = vpop.permute.xlu0 %2334
      %vm2368 = vcmask 359744
      %2369 = vst.msk [vmem:[#allocation3] sm:$0xff] %vm2368, %v2273
      %2370 = vst.msk [vmem:[#allocation3 + $0x8] sm:$0xff] %vm2368, %v2275
      %2371 = vst.msk [vmem:[#allocation3 + $0x10] sm:$0xff] %vm2368, %v2277
      %2372 = vst.msk [vmem:[#allocation3 + $0x18] sm:$0xff] %vm2368, %v2279
      %2373 = vst.msk [vmem:[#allocation3 + $0x20] sm:$0xff] %vm2368, %v2281
      %2374 = vst.msk [vmem:[#allocation3 + $0x28] sm:$0xff] %vm2368, %v2283
      %2375 = vst.msk [vmem:[#allocation3 + $0x30] sm:$0xff] %vm2368, %v2285
      %2376 = vst.msk [vmem:[#allocation3 + $0x38] sm:$0xff] %vm2368, %v2287
      %2377 = vst.msk [vmem:[#allocation3 + $0x40] sm:$0xff] %vm2368, %v2289
      %2378 = vst.msk [vmem:[#allocation3 + $0x48] sm:$0xff] %vm2368, %v2291
      %2379 = vst.msk [vmem:[#allocation3 + $0x50] sm:$0xff] %vm2368, %v2293
      %2380 = vst.msk [vmem:[#allocation3 + $0x58] sm:$0xff] %vm2368, %v2295
      %2381 = vst.msk [vmem:[#allocation3 + $0x60] sm:$0xff] %vm2368, %v2297
      %2382 = vst.msk [vmem:[#allocation3 + $0x68] sm:$0xff] %vm2368, %v2299
      %2383 = vst.msk [vmem:[#allocation3 + $0x70] sm:$0xff] %vm2368, %v2301
      %2384 = vst.msk [vmem:[#allocation3 + $0x78] sm:$0xff] %vm2368, %v2303
      %2385 = vst.msk [vmem:[#allocation3 + $0x80] sm:$0xff] %vm2368, %v2305
      %2386 = vst.msk [vmem:[#allocation3 + $0x88] sm:$0xff] %vm2368, %v2307
      %2387 = vst.msk [vmem:[#allocation3 + $0x90] sm:$0xff] %vm2368, %v2309
      %2388 = vst.msk [vmem:[#allocation3 + $0x98] sm:$0xff] %vm2368, %v2311
      %2389 = vst.msk [vmem:[#allocation3 + $0xa0] sm:$0xff] %vm2368, %v2313
      %2390 = vst.msk [vmem:[#allocation3 + $0xa8] sm:$0xff] %vm2368, %v2315
      %2391 = vst.msk [vmem:[#allocation3 + $0xb0] sm:$0xff] %vm2368, %v2317
      %2392 = vst.msk [vmem:[#allocation3 + $0xb8] sm:$0xff] %vm2368, %v2319
      %2393 = vst.msk [vmem:[#allocation3 + $0xc0] sm:$0xff] %vm2368, %v2321
      %2394 = vst.msk [vmem:[#allocation3 + $0xc8] sm:$0xff] %vm2368, %v2323
      %2395 = vst.msk [vmem:[#allocation3 + $0xd0] sm:$0xff] %vm2368, %v2325
      %2396 = vst.msk [vmem:[#allocation3 + $0xd8] sm:$0xff] %vm2368, %v2327
      %2397 = vst.msk [vmem:[#allocation3 + $0xe0] sm:$0xff] %vm2368, %v2329
      %2398 = vst.msk [vmem:[#allocation3 + $0xe8] sm:$0xff] %vm2368, %v2331
      %2399 = vst.msk [vmem:[#allocation3 + $0xf0] sm:$0xff] %vm2368, %v2333
      %2400 = vst.msk [vmem:[#allocation3 + $0xf8] sm:$0xff] %vm2368, %v2335
      %v2401 = vld [vmem:[%s373 + $0x1] sm:$0xff]
      %v2402 = vld [vmem:[%s373 + $0x9] sm:$0xff]
      %v2403 = vld [vmem:[%s373 + $0x19] sm:$0xff]
      %v2404 = vld [vmem:[%s373 + $0x21] sm:$0xff]
      %v2405 = vld [vmem:[%s373 + $0x31] sm:$0xff]
      %v2406 = vld [vmem:[%s373 + $0x39] sm:$0xff]
      %v2407 = vld [vmem:[%s373 + $0x49] sm:$0xff]
      %v2408 = vld [vmem:[%s373 + $0x51] sm:$0xff]
      %v2409 = vld [vmem:[%s373 + $0x61] sm:$0xff]
      %v2410 = vld [vmem:[%s373 + $0x69] sm:$0xff]
      %v2411 = vld [vmem:[%s373 + $0x79] sm:$0xff]
      %v2412 = vld [vmem:[%s373 + $0x81] sm:$0xff]
      %v2413 = vld [vmem:[%s373 + $0x91] sm:$0xff]
      %v2414 = vld [vmem:[%s373 + $0x99] sm:$0xff]
      %v2415 = vld [vmem:[%s373 + $0xa9] sm:$0xff]
      %v2416 = vld [vmem:[%s373 + $0xb1] sm:$0xff]
      %v2417 = vld [vmem:[%s373 + $0xc1] sm:$0xff]
      %v2418 = vld [vmem:[%s373 + $0xc9] sm:$0xff]
      %v2419 = vld [vmem:[%s373 + $0xd9] sm:$0xff]
      %v2420 = vld [vmem:[%s373 + $0xe1] sm:$0xff]
      %v2421 = vld [vmem:[%s373 + $0xf1] sm:$0xff]
      %v2422 = vld [vmem:[%s373 + $0xf9] sm:$0xff]
      %v2423 = vld [vmem:[%s373 + $0x109] sm:$0xff]
      %v2424 = vld [vmem:[%s373 + $0x111] sm:$0xff]
      %v2425 = vld [vmem:[%s373 + $0x121] sm:$0xff]
      %v2426 = vld [vmem:[%s373 + $0x129] sm:$0xff]
      %v2427 = vld [vmem:[%s373 + $0x139] sm:$0xff]
      %v2428 = vld [vmem:[%s373 + $0x141] sm:$0xff]
      %v2429 = vld [vmem:[%s373 + $0x151] sm:$0xff]
      %v2430 = vld [vmem:[%s373 + $0x159] sm:$0xff]
      %v2431 = vld [vmem:[%s373 + $0x169] sm:$0xff]
      %v2432 = vld [vmem:[%s373 + $0x171] sm:$0xff]
      %2465 = vrot.lane.b32.xlu0 %v2401, 44
      %v2466 = vpop.permute.xlu0 %2465
      %2467 = vrot.lane.b32.xlu0 %v2402, 44
      %v2468 = vpop.permute.xlu0 %2467
      %2469 = vrot.lane.b32.xlu0 %v2403, 44
      %v2470 = vpop.permute.xlu0 %2469
      %2471 = vrot.lane.b32.xlu0 %v2404, 44
      %v2472 = vpop.permute.xlu0 %2471
      %2473 = vrot.lane.b32.xlu0 %v2405, 44
      %v2474 = vpop.permute.xlu0 %2473
      %2475 = vrot.lane.b32.xlu0 %v2406, 44
      %v2476 = vpop.permute.xlu0 %2475
      %2477 = vrot.lane.b32.xlu0 %v2407, 44
      %v2478 = vpop.permute.xlu0 %2477
      %2479 = vrot.lane.b32.xlu0 %v2408, 44
      %v2480 = vpop.permute.xlu0 %2479
      %2481 = vrot.lane.b32.xlu0 %v2409, 44
      %v2482 = vpop.permute.xlu0 %2481
      %2483 = vrot.lane.b32.xlu0 %v2410, 44
      %v2484 = vpop.permute.xlu0 %2483
      %2485 = vrot.lane.b32.xlu0 %v2411, 44
      %v2486 = vpop.permute.xlu0 %2485
      %2487 = vrot.lane.b32.xlu0 %v2412, 44
      %v2488 = vpop.permute.xlu0 %2487
      %2489 = vrot.lane.b32.xlu0 %v2413, 44
      %v2490 = vpop.permute.xlu0 %2489
      %2491 = vrot.lane.b32.xlu0 %v2414, 44
      %v2492 = vpop.permute.xlu0 %2491
      %2493 = vrot.lane.b32.xlu0 %v2415, 44
      %v2494 = vpop.permute.xlu0 %2493
      %2495 = vrot.lane.b32.xlu0 %v2416, 44
      %v2496 = vpop.permute.xlu0 %2495
      %2497 = vrot.lane.b32.xlu0 %v2417, 44
      %v2498 = vpop.permute.xlu0 %2497
      %2499 = vrot.lane.b32.xlu0 %v2418, 44
      %v2500 = vpop.permute.xlu0 %2499
      %2501 = vrot.lane.b32.xlu0 %v2419, 44
      %v2502 = vpop.permute.xlu0 %2501
      %2503 = vrot.lane.b32.xlu0 %v2420, 44
      %v2504 = vpop.permute.xlu0 %2503
      %2505 = vrot.lane.b32.xlu0 %v2421, 44
      %v2506 = vpop.permute.xlu0 %2505
      %2507 = vrot.lane.b32.xlu0 %v2422, 44
      %v2508 = vpop.permute.xlu0 %2507
      %2509 = vrot.lane.b32.xlu0 %v2423, 44
      %v2510 = vpop.permute.xlu0 %2509
      %2511 = vrot.lane.b32.xlu0 %v2424, 44
      %v2512 = vpop.permute.xlu0 %2511
      %2513 = vrot.lane.b32.xlu0 %v2425, 44
      %v2514 = vpop.permute.xlu0 %2513
      %2515 = vrot.lane.b32.xlu0 %v2426, 44
      %v2516 = vpop.permute.xlu0 %2515
      %2517 = vrot.lane.b32.xlu0 %v2427, 44
      %v2518 = vpop.permute.xlu0 %2517
      %2519 = vrot.lane.b32.xlu0 %v2428, 44
      %v2520 = vpop.permute.xlu0 %2519
      %2521 = vrot.lane.b32.xlu0 %v2429, 44
      %v2522 = vpop.permute.xlu0 %2521
      %2523 = vrot.lane.b32.xlu0 %v2430, 44
      %v2524 = vpop.permute.xlu0 %2523
      %2525 = vrot.lane.b32.xlu0 %v2431, 44
      %v2526 = vpop.permute.xlu0 %2525
      %2527 = vrot.lane.b32.xlu0 %v2432, 44
      %v2528 = vpop.permute.xlu0 %2527
      %vm2561 = vcmask 392544
      %2562 = vst.msk [vmem:[#allocation3] sm:$0xff] %vm2561, %v2466
      %2563 = vst.msk [vmem:[#allocation3 + $0x8] sm:$0xff] %vm2561, %v2468
      %2564 = vst.msk [vmem:[#allocation3 + $0x10] sm:$0xff] %vm2561, %v2470
      %2565 = vst.msk [vmem:[#allocation3 + $0x18] sm:$0xff] %vm2561, %v2472
      %2566 = vst.msk [vmem:[#allocation3 + $0x20] sm:$0xff] %vm2561, %v2474
      %2567 = vst.msk [vmem:[#allocation3 + $0x28] sm:$0xff] %vm2561, %v2476
      %2568 = vst.msk [vmem:[#allocation3 + $0x30] sm:$0xff] %vm2561, %v2478
      %2569 = vst.msk [vmem:[#allocation3 + $0x38] sm:$0xff] %vm2561, %v2480
      %2570 = vst.msk [vmem:[#allocation3 + $0x40] sm:$0xff] %vm2561, %v2482
      %2571 = vst.msk [vmem:[#allocation3 + $0x48] sm:$0xff] %vm2561, %v2484
      %2572 = vst.msk [vmem:[#allocation3 + $0x50] sm:$0xff] %vm2561, %v2486
      %2573 = vst.msk [vmem:[#allocation3 + $0x58] sm:$0xff] %vm2561, %v2488
      %2574 = vst.msk [vmem:[#allocation3 + $0x60] sm:$0xff] %vm2561, %v2490
      %2575 = vst.msk [vmem:[#allocation3 + $0x68] sm:$0xff] %vm2561, %v2492
      %2576 = vst.msk [vmem:[#allocation3 + $0x70] sm:$0xff] %vm2561, %v2494
      %2577 = vst.msk [vmem:[#allocation3 + $0x78] sm:$0xff] %vm2561, %v2496
      %2578 = vst.msk [vmem:[#allocation3 + $0x80] sm:$0xff] %vm2561, %v2498
      %2579 = vst.msk [vmem:[#allocation3 + $0x88] sm:$0xff] %vm2561, %v2500
      %2580 = vst.msk [vmem:[#allocation3 + $0x90] sm:$0xff] %vm2561, %v2502
      %2581 = vst.msk [vmem:[#allocation3 + $0x98] sm:$0xff] %vm2561, %v2504
      %2582 = vst.msk [vmem:[#allocation3 + $0xa0] sm:$0xff] %vm2561, %v2506
      %2583 = vst.msk [vmem:[#allocation3 + $0xa8] sm:$0xff] %vm2561, %v2508
      %2584 = vst.msk [vmem:[#allocation3 + $0xb0] sm:$0xff] %vm2561, %v2510
      %2585 = vst.msk [vmem:[#allocation3 + $0xb8] sm:$0xff] %vm2561, %v2512
      %2586 = vst.msk [vmem:[#allocation3 + $0xc0] sm:$0xff] %vm2561, %v2514
      %2587 = vst.msk [vmem:[#allocation3 + $0xc8] sm:$0xff] %vm2561, %v2516
      %2588 = vst.msk [vmem:[#allocation3 + $0xd0] sm:$0xff] %vm2561, %v2518
      %2589 = vst.msk [vmem:[#allocation3 + $0xd8] sm:$0xff] %vm2561, %v2520
      %2590 = vst.msk [vmem:[#allocation3 + $0xe0] sm:$0xff] %vm2561, %v2522
      %2591 = vst.msk [vmem:[#allocation3 + $0xe8] sm:$0xff] %vm2561, %v2524
      %2592 = vst.msk [vmem:[#allocation3 + $0xf0] sm:$0xff] %vm2561, %v2526
      %2593 = vst.msk [vmem:[#allocation3 + $0xf8] sm:$0xff] %vm2561, %v2528
      %v2594 = vld [vmem:[%s373 + $0x2] sm:$0xff]
      %v2595 = vld [vmem:[%s373 + $0xa] sm:$0xff]
      %v2596 = vld [vmem:[%s373 + $0x1a] sm:$0xff]
      %v2597 = vld [vmem:[%s373 + $0x22] sm:$0xff]
      %v2598 = vld [vmem:[%s373 + $0x32] sm:$0xff]
      %v2599 = vld [vmem:[%s373 + $0x3a] sm:$0xff]
      %v2600 = vld [vmem:[%s373 + $0x4a] sm:$0xff]
      %v2601 = vld [vmem:[%s373 + $0x52] sm:$0xff]
      %v2602 = vld [vmem:[%s373 + $0x62] sm:$0xff]
      %v2603 = vld [vmem:[%s373 + $0x6a] sm:$0xff]
      %v2604 = vld [vmem:[%s373 + $0x7a] sm:$0xff]
      %v2605 = vld [vmem:[%s373 + $0x82] sm:$0xff]
      %v2606 = vld [vmem:[%s373 + $0x92] sm:$0xff]
      %v2607 = vld [vmem:[%s373 + $0x9a] sm:$0xff]
      %v2608 = vld [vmem:[%s373 + $0xaa] sm:$0xff]
      %v2609 = vld [vmem:[%s373 + $0xb2] sm:$0xff]
      %v2610 = vld [vmem:[%s373 + $0xc2] sm:$0xff]
      %v2611 = vld [vmem:[%s373 + $0xca] sm:$0xff]
      %v2612 = vld [vmem:[%s373 + $0xda] sm:$0xff]
      %v2613 = vld [vmem:[%s373 + $0xe2] sm:$0xff]
      %v2614 = vld [vmem:[%s373 + $0xf2] sm:$0xff]
      %v2615 = vld [vmem:[%s373 + $0xfa] sm:$0xff]
      %v2616 = vld [vmem:[%s373 + $0x10a] sm:$0xff]
      %v2617 = vld [vmem:[%s373 + $0x112] sm:$0xff]
      %v2618 = vld [vmem:[%s373 + $0x122] sm:$0xff]
      %v2619 = vld [vmem:[%s373 + $0x12a] sm:$0xff]
      %v2620 = vld [vmem:[%s373 + $0x13a] sm:$0xff]
      %v2621 = vld [vmem:[%s373 + $0x142] sm:$0xff]
      %v2622 = vld [vmem:[%s373 + $0x152] sm:$0xff]
      %v2623 = vld [vmem:[%s373 + $0x15a] sm:$0xff]
      %v2624 = vld [vmem:[%s373 + $0x16a] sm:$0xff]
      %v2625 = vld [vmem:[%s373 + $0x172] sm:$0xff]
      %2658 = vrot.lane.b32.xlu0 %v2594, 48
      %v2659 = vpop.permute.xlu0 %2658
      %2660 = vrot.lane.b32.xlu0 %v2595, 48
      %v2661 = vpop.permute.xlu0 %2660
      %2662 = vrot.lane.b32.xlu0 %v2596, 48
      %v2663 = vpop.permute.xlu0 %2662
      %2664 = vrot.lane.b32.xlu0 %v2597, 48
      %v2665 = vpop.permute.xlu0 %2664
      %2666 = vrot.lane.b32.xlu0 %v2598, 48
      %v2667 = vpop.permute.xlu0 %2666
      %2668 = vrot.lane.b32.xlu0 %v2599, 48
      %v2669 = vpop.permute.xlu0 %2668
      %2670 = vrot.lane.b32.xlu0 %v2600, 48
      %v2671 = vpop.permute.xlu0 %2670
      %2672 = vrot.lane.b32.xlu0 %v2601, 48
      %v2673 = vpop.permute.xlu0 %2672
      %2674 = vrot.lane.b32.xlu0 %v2602, 48
      %v2675 = vpop.permute.xlu0 %2674
      %2676 = vrot.lane.b32.xlu0 %v2603, 48
      %v2677 = vpop.permute.xlu0 %2676
      %2678 = vrot.lane.b32.xlu0 %v2604, 48
      %v2679 = vpop.permute.xlu0 %2678
      %2680 = vrot.lane.b32.xlu0 %v2605, 48
      %v2681 = vpop.permute.xlu0 %2680
      %2682 = vrot.lane.b32.xlu0 %v2606, 48
      %v2683 = vpop.permute.xlu0 %2682
      %2684 = vrot.lane.b32.xlu0 %v2607, 48
      %v2685 = vpop.permute.xlu0 %2684
      %2686 = vrot.lane.b32.xlu0 %v2608, 48
      %v2687 = vpop.permute.xlu0 %2686
      %2688 = vrot.lane.b32.xlu0 %v2609, 48
      %v2689 = vpop.permute.xlu0 %2688
      %2690 = vrot.lane.b32.xlu0 %v2610, 48
      %v2691 = vpop.permute.xlu0 %2690
      %2692 = vrot.lane.b32.xlu0 %v2611, 48
      %v2693 = vpop.permute.xlu0 %2692
      %2694 = vrot.lane.b32.xlu0 %v2612, 48
      %v2695 = vpop.permute.xlu0 %2694
      %2696 = vrot.lane.b32.xlu0 %v2613, 48
      %v2697 = vpop.permute.xlu0 %2696
      %2698 = vrot.lane.b32.xlu0 %v2614, 48
      %v2699 = vpop.permute.xlu0 %2698
      %2700 = vrot.lane.b32.xlu0 %v2615, 48
      %v2701 = vpop.permute.xlu0 %2700
      %2702 = vrot.lane.b32.xlu0 %v2616, 48
      %v2703 = vpop.permute.xlu0 %2702
      %2704 = vrot.lane.b32.xlu0 %v2617, 48
      %v2705 = vpop.permute.xlu0 %2704
      %2706 = vrot.lane.b32.xlu0 %v2618, 48
      %v2707 = vpop.permute.xlu0 %2706
      %2708 = vrot.lane.b32.xlu0 %v2619, 48
      %v2709 = vpop.permute.xlu0 %2708
      %2710 = vrot.lane.b32.xlu0 %v2620, 48
      %v2711 = vpop.permute.xlu0 %2710
      %2712 = vrot.lane.b32.xlu0 %v2621, 48
      %v2713 = vpop.permute.xlu0 %2712
      %2714 = vrot.lane.b32.xlu0 %v2622, 48
      %v2715 = vpop.permute.xlu0 %2714
      %2716 = vrot.lane.b32.xlu0 %v2623, 48
      %v2717 = vpop.permute.xlu0 %2716
      %2718 = vrot.lane.b32.xlu0 %v2624, 48
      %v2719 = vpop.permute.xlu0 %2718
      %2720 = vrot.lane.b32.xlu0 %v2625, 48
      %v2721 = vpop.permute.xlu0 %2720
      %vm2754 = vcmask 425344
      %2755 = vst.msk [vmem:[#allocation3] sm:$0xff] %vm2754, %v2659
      %2756 = vst.msk [vmem:[#allocation3 + $0x8] sm:$0xff] %vm2754, %v2661
      %2757 = vst.msk [vmem:[#allocation3 + $0x10] sm:$0xff] %vm2754, %v2663
      %2758 = vst.msk [vmem:[#allocation3 + $0x18] sm:$0xff] %vm2754, %v2665
      %2759 = vst.msk [vmem:[#allocation3 + $0x20] sm:$0xff] %vm2754, %v2667
      %2760 = vst.msk [vmem:[#allocation3 + $0x28] sm:$0xff] %vm2754, %v2669
      %2761 = vst.msk [vmem:[#allocation3 + $0x30] sm:$0xff] %vm2754, %v2671
      %2762 = vst.msk [vmem:[#allocation3 + $0x38] sm:$0xff] %vm2754, %v2673
      %2763 = vst.msk [vmem:[#allocation3 + $0x40] sm:$0xff] %vm2754, %v2675
      %2764 = vst.msk [vmem:[#allocation3 + $0x48] sm:$0xff] %vm2754, %v2677
      %2765 = vst.msk [vmem:[#allocation3 + $0x50] sm:$0xff] %vm2754, %v2679
      %2766 = vst.msk [vmem:[#allocation3 + $0x58] sm:$0xff] %vm2754, %v2681
      %2767 = vst.msk [vmem:[#allocation3 + $0x60] sm:$0xff] %vm2754, %v2683
      %2768 = vst.msk [vmem:[#allocation3 + $0x68] sm:$0xff] %vm2754, %v2685
      %2769 = vst.msk [vmem:[#allocation3 + $0x70] sm:$0xff] %vm2754, %v2687
      %2770 = vst.msk [vmem:[#allocation3 + $0x78] sm:$0xff] %vm2754, %v2689
      %2771 = vst.msk [vmem:[#allocation3 + $0x80] sm:$0xff] %vm2754, %v2691
      %2772 = vst.msk [vmem:[#allocation3 + $0x88] sm:$0xff] %vm2754, %v2693
      %2773 = vst.msk [vmem:[#allocation3 + $0x90] sm:$0xff] %vm2754, %v2695
      %2774 = vst.msk [vmem:[#allocation3 + $0x98] sm:$0xff] %vm2754, %v2697
      %2775 = vst.msk [vmem:[#allocation3 + $0xa0] sm:$0xff] %vm2754, %v2699
      %2776 = vst.msk [vmem:[#allocation3 + $0xa8] sm:$0xff] %vm2754, %v2701
      %2777 = vst.msk [vmem:[#allocation3 + $0xb0] sm:$0xff] %vm2754, %v2703
      %2778 = vst.msk [vmem:[#allocation3 + $0xb8] sm:$0xff] %vm2754, %v2705
      %2779 = vst.msk [vmem:[#allocation3 + $0xc0] sm:$0xff] %vm2754, %v2707
      %2780 = vst.msk [vmem:[#allocation3 + $0xc8] sm:$0xff] %vm2754, %v2709
      %2781 = vst.msk [vmem:[#allocation3 + $0xd0] sm:$0xff] %vm2754, %v2711
      %2782 = vst.msk [vmem:[#allocation3 + $0xd8] sm:$0xff] %vm2754, %v2713
      %2783 = vst.msk [vmem:[#allocation3 + $0xe0] sm:$0xff] %vm2754, %v2715
      %2784 = vst.msk [vmem:[#allocation3 + $0xe8] sm:$0xff] %vm2754, %v2717
      %2785 = vst.msk [vmem:[#allocation3 + $0xf0] sm:$0xff] %vm2754, %v2719
      %2786 = vst.msk [vmem:[#allocation3 + $0xf8] sm:$0xff] %vm2754, %v2721
      %v2787 = vld [vmem:[%s373 + $0x3] sm:$0xff]
      %v2788 = vld [vmem:[%s373 + $0xb] sm:$0xff]
      %v2789 = vld [vmem:[%s373 + $0x1b] sm:$0xff]
      %v2790 = vld [vmem:[%s373 + $0x23] sm:$0xff]
      %v2791 = vld [vmem:[%s373 + $0x33] sm:$0xff]
      %v2792 = vld [vmem:[%s373 + $0x3b] sm:$0xff]
      %v2793 = vld [vmem:[%s373 + $0x4b] sm:$0xff]
      %v2794 = vld [vmem:[%s373 + $0x53] sm:$0xff]
      %v2795 = vld [vmem:[%s373 + $0x63] sm:$0xff]
      %v2796 = vld [vmem:[%s373 + $0x6b] sm:$0xff]
      %v2797 = vld [vmem:[%s373 + $0x7b] sm:$0xff]
      %v2798 = vld [vmem:[%s373 + $0x83] sm:$0xff]
      %v2799 = vld [vmem:[%s373 + $0x93] sm:$0xff]
      %v2800 = vld [vmem:[%s373 + $0x9b] sm:$0xff]
      %v2801 = vld [vmem:[%s373 + $0xab] sm:$0xff]
      %v2802 = vld [vmem:[%s373 + $0xb3] sm:$0xff]
      %v2803 = vld [vmem:[%s373 + $0xc3] sm:$0xff]
      %v2804 = vld [vmem:[%s373 + $0xcb] sm:$0xff]
      %v2805 = vld [vmem:[%s373 + $0xdb] sm:$0xff]
      %v2806 = vld [vmem:[%s373 + $0xe3] sm:$0xff]
      %v2807 = vld [vmem:[%s373 + $0xf3] sm:$0xff]
      %v2808 = vld [vmem:[%s373 + $0xfb] sm:$0xff]
      %v2809 = vld [vmem:[%s373 + $0x10b] sm:$0xff]
      %v2810 = vld [vmem:[%s373 + $0x113] sm:$0xff]
      %v2811 = vld [vmem:[%s373 + $0x123] sm:$0xff]
      %v2812 = vld [vmem:[%s373 + $0x12b] sm:$0xff]
      %v2813 = vld [vmem:[%s373 + $0x13b] sm:$0xff]
      %v2814 = vld [vmem:[%s373 + $0x143] sm:$0xff]
      %v2815 = vld [vmem:[%s373 + $0x153] sm:$0xff]
      %v2816 = vld [vmem:[%s373 + $0x15b] sm:$0xff]
      %v2817 = vld [vmem:[%s373 + $0x16b] sm:$0xff]
      %v2818 = vld [vmem:[%s373 + $0x173] sm:$0xff]
      %2851 = vrot.lane.b32.xlu0 %v2787, 52
      %v2852 = vpop.permute.xlu0 %2851
      %2853 = vrot.lane.b32.xlu0 %v2788, 52
      %v2854 = vpop.permute.xlu0 %2853
      %2855 = vrot.lane.b32.xlu0 %v2789, 52
      %v2856 = vpop.permute.xlu0 %2855
      %2857 = vrot.lane.b32.xlu0 %v2790, 52
      %v2858 = vpop.permute.xlu0 %2857
      %2859 = vrot.lane.b32.xlu0 %v2791, 52
      %v2860 = vpop.permute.xlu0 %2859
      %2861 = vrot.lane.b32.xlu0 %v2792, 52
      %v2862 = vpop.permute.xlu0 %2861
      %2863 = vrot.lane.b32.xlu0 %v2793, 52
      %v2864 = vpop.permute.xlu0 %2863
      %2865 = vrot.lane.b32.xlu0 %v2794, 52
      %v2866 = vpop.permute.xlu0 %2865
      %2867 = vrot.lane.b32.xlu0 %v2795, 52
      %v2868 = vpop.permute.xlu0 %2867
      %2869 = vrot.lane.b32.xlu0 %v2796, 52
      %v2870 = vpop.permute.xlu0 %2869
      %2871 = vrot.lane.b32.xlu0 %v2797, 52
      %v2872 = vpop.permute.xlu0 %2871
      %2873 = vrot.lane.b32.xlu0 %v2798, 52
      %v2874 = vpop.permute.xlu0 %2873
      %2875 = vrot.lane.b32.xlu0 %v2799, 52
      %v2876 = vpop.permute.xlu0 %2875
      %2877 = vrot.lane.b32.xlu0 %v2800, 52
      %v2878 = vpop.permute.xlu0 %2877
      %2879 = vrot.lane.b32.xlu0 %v2801, 52
      %v2880 = vpop.permute.xlu0 %2879
      %2881 = vrot.lane.b32.xlu0 %v2802, 52
      %v2882 = vpop.permute.xlu0 %2881
      %2883 = vrot.lane.b32.xlu0 %v2803, 52
      %v2884 = vpop.permute.xlu0 %2883
      %2885 = vrot.lane.b32.xlu0 %v2804, 52
      %v2886 = vpop.permute.xlu0 %2885
      %2887 = vrot.lane.b32.xlu0 %v2805, 52
      %v2888 = vpop.permute.xlu0 %2887
      %2889 = vrot.lane.b32.xlu0 %v2806, 52
      %v2890 = vpop.permute.xlu0 %2889
      %2891 = vrot.lane.b32.xlu0 %v2807, 52
      %v2892 = vpop.permute.xlu0 %2891
      %2893 = vrot.lane.b32.xlu0 %v2808, 52
      %v2894 = vpop.permute.xlu0 %2893
      %2895 = vrot.lane.b32.xlu0 %v2809, 52
      %v2896 = vpop.permute.xlu0 %2895
      %2897 = vrot.lane.b32.xlu0 %v2810, 52
      %v2898 = vpop.permute.xlu0 %2897
      %2899 = vrot.lane.b32.xlu0 %v2811, 52
      %v2900 = vpop.permute.xlu0 %2899
      %2901 = vrot.lane.b32.xlu0 %v2812, 52
      %v2902 = vpop.permute.xlu0 %2901
      %2903 = vrot.lane.b32.xlu0 %v2813, 52
      %v2904 = vpop.permute.xlu0 %2903
      %2905 = vrot.lane.b32.xlu0 %v2814, 52
      %v2906 = vpop.permute.xlu0 %2905
      %2907 = vrot.lane.b32.xlu0 %v2815, 52
      %v2908 = vpop.permute.xlu0 %2907
      %2909 = vrot.lane.b32.xlu0 %v2816, 52
      %v2910 = vpop.permute.xlu0 %2909
      %2911 = vrot.lane.b32.xlu0 %v2817, 52
      %v2912 = vpop.permute.xlu0 %2911
      %2913 = vrot.lane.b32.xlu0 %v2818, 52
      %v2914 = vpop.permute.xlu0 %2913
      %vm2947 = vcmask 458144
      %2948 = vst.msk [vmem:[#allocation3] sm:$0xff] %vm2947, %v2852
      %2949 = vst.msk [vmem:[#allocation3 + $0x8] sm:$0xff] %vm2947, %v2854
      %2950 = vst.msk [vmem:[#allocation3 + $0x10] sm:$0xff] %vm2947, %v2856
      %2951 = vst.msk [vmem:[#allocation3 + $0x18] sm:$0xff] %vm2947, %v2858
      %2952 = vst.msk [vmem:[#allocation3 + $0x20] sm:$0xff] %vm2947, %v2860
      %2953 = vst.msk [vmem:[#allocation3 + $0x28] sm:$0xff] %vm2947, %v2862
      %2954 = vst.msk [vmem:[#allocation3 + $0x30] sm:$0xff] %vm2947, %v2864
      %2955 = vst.msk [vmem:[#allocation3 + $0x38] sm:$0xff] %vm2947, %v2866
      %2956 = vst.msk [vmem:[#allocation3 + $0x40] sm:$0xff] %vm2947, %v2868
      %2957 = vst.msk [vmem:[#allocation3 + $0x48] sm:$0xff] %vm2947, %v2870
      %2958 = vst.msk [vmem:[#allocation3 + $0x50] sm:$0xff] %vm2947, %v2872
      %2959 = vst.msk [vmem:[#allocation3 + $0x58] sm:$0xff] %vm2947, %v2874
      %2960 = vst.msk [vmem:[#allocation3 + $0x60] sm:$0xff] %vm2947, %v2876
      %2961 = vst.msk [vmem:[#allocation3 + $0x68] sm:$0xff] %vm2947, %v2878
      %2962 = vst.msk [vmem:[#allocation3 + $0x70] sm:$0xff] %vm2947, %v2880
      %2963 = vst.msk [vmem:[#allocation3 + $0x78] sm:$0xff] %vm2947, %v2882
      %2964 = vst.msk [vmem:[#allocation3 + $0x80] sm:$0xff] %vm2947, %v2884
      %2965 = vst.msk [vmem:[#allocation3 + $0x88] sm:$0xff] %vm2947, %v2886
      %2966 = vst.msk [vmem:[#allocation3 + $0x90] sm:$0xff] %vm2947, %v2888
      %2967 = vst.msk [vmem:[#allocation3 + $0x98] sm:$0xff] %vm2947, %v2890
      %2968 = vst.msk [vmem:[#allocation3 + $0xa0] sm:$0xff] %vm2947, %v2892
      %2969 = vst.msk [vmem:[#allocation3 + $0xa8] sm:$0xff] %vm2947, %v2894
      %2970 = vst.msk [vmem:[#allocation3 + $0xb0] sm:$0xff] %vm2947, %v2896
      %2971 = vst.msk [vmem:[#allocation3 + $0xb8] sm:$0xff] %vm2947, %v2898
      %2972 = vst.msk [vmem:[#allocation3 + $0xc0] sm:$0xff] %vm2947, %v2900
      %2973 = vst.msk [vmem:[#allocation3 + $0xc8] sm:$0xff] %vm2947, %v2902
      %2974 = vst.msk [vmem:[#allocation3 + $0xd0] sm:$0xff] %vm2947, %v2904
      %2975 = vst.msk [vmem:[#allocation3 + $0xd8] sm:$0xff] %vm2947, %v2906
      %2976 = vst.msk [vmem:[#allocation3 + $0xe0] sm:$0xff] %vm2947, %v2908
      %2977 = vst.msk [vmem:[#allocation3 + $0xe8] sm:$0xff] %vm2947, %v2910
      %2978 = vst.msk [vmem:[#allocation3 + $0xf0] sm:$0xff] %vm2947, %v2912
      %2979 = vst.msk [vmem:[#allocation3 + $0xf8] sm:$0xff] %vm2947, %v2914
      %v2980 = vld [vmem:[%s373 + $0x4] sm:$0xff]
      %v2981 = vld [vmem:[%s373 + $0xc] sm:$0xff]
      %v2982 = vld [vmem:[%s373 + $0x1c] sm:$0xff]
      %v2983 = vld [vmem:[%s373 + $0x24] sm:$0xff]
      %v2984 = vld [vmem:[%s373 + $0x34] sm:$0xff]
      %v2985 = vld [vmem:[%s373 + $0x3c] sm:$0xff]
      %v2986 = vld [vmem:[%s373 + $0x4c] sm:$0xff]
      %v2987 = vld [vmem:[%s373 + $0x54] sm:$0xff]
      %v2988 = vld [vmem:[%s373 + $0x64] sm:$0xff]
      %v2989 = vld [vmem:[%s373 + $0x6c] sm:$0xff]
      %v2990 = vld [vmem:[%s373 + $0x7c] sm:$0xff]
      %v2991 = vld [vmem:[%s373 + $0x84] sm:$0xff]
      %v2992 = vld [vmem:[%s373 + $0x94] sm:$0xff]
      %v2993 = vld [vmem:[%s373 + $0x9c] sm:$0xff]
      %v2994 = vld [vmem:[%s373 + $0xac] sm:$0xff]
      %v2995 = vld [vmem:[%s373 + $0xb4] sm:$0xff]
      %v2996 = vld [vmem:[%s373 + $0xc4] sm:$0xff]
      %v2997 = vld [vmem:[%s373 + $0xcc] sm:$0xff]
      %v2998 = vld [vmem:[%s373 + $0xdc] sm:$0xff]
      %v2999 = vld [vmem:[%s373 + $0xe4] sm:$0xff]
      %v3000 = vld [vmem:[%s373 + $0xf4] sm:$0xff]
      %v3001 = vld [vmem:[%s373 + $0xfc] sm:$0xff]
      %v3002 = vld [vmem:[%s373 + $0x10c] sm:$0xff]
      %v3003 = vld [vmem:[%s373 + $0x114] sm:$0xff]
      %v3004 = vld [vmem:[%s373 + $0x124] sm:$0xff]
      %v3005 = vld [vmem:[%s373 + $0x12c] sm:$0xff]
      %v3006 = vld [vmem:[%s373 + $0x13c] sm:$0xff]
      %v3007 = vld [vmem:[%s373 + $0x144] sm:$0xff]
      %v3008 = vld [vmem:[%s373 + $0x154] sm:$0xff]
      %v3009 = vld [vmem:[%s373 + $0x15c] sm:$0xff]
      %v3010 = vld [vmem:[%s373 + $0x16c] sm:$0xff]
      %v3011 = vld [vmem:[%s373 + $0x174] sm:$0xff]
      %3044 = vrot.lane.b32.xlu0 %v2980, 56
      %v3045 = vpop.permute.xlu0 %3044
      %3046 = vrot.lane.b32.xlu0 %v2981, 56
      %v3047 = vpop.permute.xlu0 %3046
      %3048 = vrot.lane.b32.xlu0 %v2982, 56
      %v3049 = vpop.permute.xlu0 %3048
      %3050 = vrot.lane.b32.xlu0 %v2983, 56
      %v3051 = vpop.permute.xlu0 %3050
      %3052 = vrot.lane.b32.xlu0 %v2984, 56
      %v3053 = vpop.permute.xlu0 %3052
      %3054 = vrot.lane.b32.xlu0 %v2985, 56
      %v3055 = vpop.permute.xlu0 %3054
      %3056 = vrot.lane.b32.xlu0 %v2986, 56
      %v3057 = vpop.permute.xlu0 %3056
      %3058 = vrot.lane.b32.xlu0 %v2987, 56
      %v3059 = vpop.permute.xlu0 %3058
      %3060 = vrot.lane.b32.xlu0 %v2988, 56
      %v3061 = vpop.permute.xlu0 %3060
      %3062 = vrot.lane.b32.xlu0 %v2989, 56
      %v3063 = vpop.permute.xlu0 %3062
      %3064 = vrot.lane.b32.xlu0 %v2990, 56
      %v3065 = vpop.permute.xlu0 %3064
      %3066 = vrot.lane.b32.xlu0 %v2991, 56
      %v3067 = vpop.permute.xlu0 %3066
      %3068 = vrot.lane.b32.xlu0 %v2992, 56
      %v3069 = vpop.permute.xlu0 %3068
      %3070 = vrot.lane.b32.xlu0 %v2993, 56
      %v3071 = vpop.permute.xlu0 %3070
      %3072 = vrot.lane.b32.xlu0 %v2994, 56
      %v3073 = vpop.permute.xlu0 %3072
      %3074 = vrot.lane.b32.xlu0 %v2995, 56
      %v3075 = vpop.permute.xlu0 %3074
      %3076 = vrot.lane.b32.xlu0 %v2996, 56
      %v3077 = vpop.permute.xlu0 %3076
      %3078 = vrot.lane.b32.xlu0 %v2997, 56
      %v3079 = vpop.permute.xlu0 %3078
      %3080 = vrot.lane.b32.xlu0 %v2998, 56
      %v3081 = vpop.permute.xlu0 %3080
      %3082 = vrot.lane.b32.xlu0 %v2999, 56
      %v3083 = vpop.permute.xlu0 %3082
      %3084 = vrot.lane.b32.xlu0 %v3000, 56
      %v3085 = vpop.permute.xlu0 %3084
      %3086 = vrot.lane.b32.xlu0 %v3001, 56
      %v3087 = vpop.permute.xlu0 %3086
      %3088 = vrot.lane.b32.xlu0 %v3002, 56
      %v3089 = vpop.permute.xlu0 %3088
      %3090 = vrot.lane.b32.xlu0 %v3003, 56
      %v3091 = vpop.permute.xlu0 %3090
      %3092 = vrot.lane.b32.xlu0 %v3004, 56
      %v3093 = vpop.permute.xlu0 %3092
      %3094 = vrot.lane.b32.xlu0 %v3005, 56
      %v3095 = vpop.permute.xlu0 %3094
      %3096 = vrot.lane.b32.xlu0 %v3006, 56
      %v3097 = vpop.permute.xlu0 %3096
      %3098 = vrot.lane.b32.xlu0 %v3007, 56
      %v3099 = vpop.permute.xlu0 %3098
      %3100 = vrot.lane.b32.xlu0 %v3008, 56
      %v3101 = vpop.permute.xlu0 %3100
      %3102 = vrot.lane.b32.xlu0 %v3009, 56
      %v3103 = vpop.permute.xlu0 %3102
      %3104 = vrot.lane.b32.xlu0 %v3010, 56
      %v3105 = vpop.permute.xlu0 %3104
      %3106 = vrot.lane.b32.xlu0 %v3011, 56
      %v3107 = vpop.permute.xlu0 %3106
      %vm3140 = vcmask 490944
      %3141 = vst.msk [vmem:[#allocation3] sm:$0xff] %vm3140, %v3045
      %3142 = vst.msk [vmem:[#allocation3 + $0x8] sm:$0xff] %vm3140, %v3047
      %3143 = vst.msk [vmem:[#allocation3 + $0x10] sm:$0xff] %vm3140, %v3049
      %3144 = vst.msk [vmem:[#allocation3 + $0x18] sm:$0xff] %vm3140, %v3051
      %3145 = vst.msk [vmem:[#allocation3 + $0x20] sm:$0xff] %vm3140, %v3053
      %3146 = vst.msk [vmem:[#allocation3 + $0x28] sm:$0xff] %vm3140, %v3055
      %3147 = vst.msk [vmem:[#allocation3 + $0x30] sm:$0xff] %vm3140, %v3057
      %3148 = vst.msk [vmem:[#allocation3 + $0x38] sm:$0xff] %vm3140, %v3059
      %3149 = vst.msk [vmem:[#allocation3 + $0x40] sm:$0xff] %vm3140, %v3061
      %3150 = vst.msk [vmem:[#allocation3 + $0x48] sm:$0xff] %vm3140, %v3063
      %3151 = vst.msk [vmem:[#allocation3 + $0x50] sm:$0xff] %vm3140, %v3065
      %3152 = vst.msk [vmem:[#allocation3 + $0x58] sm:$0xff] %vm3140, %v3067
      %3153 = vst.msk [vmem:[#allocation3 + $0x60] sm:$0xff] %vm3140, %v3069
      %3154 = vst.msk [vmem:[#allocation3 + $0x68] sm:$0xff] %vm3140, %v3071
      %3155 = vst.msk [vmem:[#allocation3 + $0x70] sm:$0xff] %vm3140, %v3073
      %3156 = vst.msk [vmem:[#allocation3 + $0x78] sm:$0xff] %vm3140, %v3075
      %3157 = vst.msk [vmem:[#allocation3 + $0x80] sm:$0xff] %vm3140, %v3077
      %3158 = vst.msk [vmem:[#allocation3 + $0x88] sm:$0xff] %vm3140, %v3079
      %3159 = vst.msk [vmem:[#allocation3 + $0x90] sm:$0xff] %vm3140, %v3081
      %3160 = vst.msk [vmem:[#allocation3 + $0x98] sm:$0xff] %vm3140, %v3083
      %3161 = vst.msk [vmem:[#allocation3 + $0xa0] sm:$0xff] %vm3140, %v3085
      %3162 = vst.msk [vmem:[#allocation3 + $0xa8] sm:$0xff] %vm3140, %v3087
      %3163 = vst.msk [vmem:[#allocation3 + $0xb0] sm:$0xff] %vm3140, %v3089
      %3164 = vst.msk [vmem:[#allocation3 + $0xb8] sm:$0xff] %vm3140, %v3091
      %3165 = vst.msk [vmem:[#allocation3 + $0xc0] sm:$0xff] %vm3140, %v3093
      %3166 = vst.msk [vmem:[#allocation3 + $0xc8] sm:$0xff] %vm3140, %v3095
      %3167 = vst.msk [vmem:[#allocation3 + $0xd0] sm:$0xff] %vm3140, %v3097
      %3168 = vst.msk [vmem:[#allocation3 + $0xd8] sm:$0xff] %vm3140, %v3099
      %3169 = vst.msk [vmem:[#allocation3 + $0xe0] sm:$0xff] %vm3140, %v3101
      %3170 = vst.msk [vmem:[#allocation3 + $0xe8] sm:$0xff] %vm3140, %v3103
      %3171 = vst.msk [vmem:[#allocation3 + $0xf0] sm:$0xff] %vm3140, %v3105
      %3172 = vst.msk [vmem:[#allocation3 + $0xf8] sm:$0xff] %vm3140, %v3107
      %s3173 = scalar_lea.vmem [#allocation2], 72
      %v3174 = vld [vmem:[%s3173] sm:$0xff]
      %v3175 = vld [vmem:[%s3173 + $0x8] sm:$0xff]
      %v3176 = vld [vmem:[%s3173 + $0x18] sm:$0xff]
      %v3177 = vld [vmem:[%s3173 + $0x20] sm:$0xff]
      %v3178 = vld [vmem:[%s3173 + $0x30] sm:$0xff]
      %v3179 = vld [vmem:[%s3173 + $0x38] sm:$0xff]
      %v3180 = vld [vmem:[%s3173 + $0x48] sm:$0xff]
      %v3181 = vld [vmem:[%s3173 + $0x50] sm:$0xff]
      %v3182 = vld [vmem:[%s3173 + $0x60] sm:$0xff]
      %v3183 = vld [vmem:[%s3173 + $0x68] sm:$0xff]
      %v3184 = vld [vmem:[%s3173 + $0x78] sm:$0xff]
      %v3185 = vld [vmem:[%s3173 + $0x80] sm:$0xff]
      %v3186 = vld [vmem:[%s3173 + $0x90] sm:$0xff]
      %v3187 = vld [vmem:[%s3173 + $0x98] sm:$0xff]
      %v3188 = vld [vmem:[%s3173 + $0xa8] sm:$0xff]
      %v3189 = vld [vmem:[%s3173 + $0xb0] sm:$0xff]
      %v3190 = vld [vmem:[%s3173 + $0xc0] sm:$0xff]
      %v3191 = vld [vmem:[%s3173 + $0xc8] sm:$0xff]
      %v3192 = vld [vmem:[%s3173 + $0xd8] sm:$0xff]
      %v3193 = vld [vmem:[%s3173 + $0xe0] sm:$0xff]
      %v3194 = vld [vmem:[%s3173 + $0xf0] sm:$0xff]
      %v3195 = vld [vmem:[%s3173 + $0xf8] sm:$0xff]
      %v3196 = vld [vmem:[%s3173 + $0x108] sm:$0xff]
      %v3197 = vld [vmem:[%s3173 + $0x110] sm:$0xff]
      %v3198 = vld [vmem:[%s3173 + $0x120] sm:$0xff]
      %v3199 = vld [vmem:[%s3173 + $0x128] sm:$0xff]
      %v3200 = vld [vmem:[%s3173 + $0x138] sm:$0xff]
      %v3201 = vld [vmem:[%s3173 + $0x140] sm:$0xff]
      %v3202 = vld [vmem:[%s3173 + $0x150] sm:$0xff]
      %v3203 = vld [vmem:[%s3173 + $0x158] sm:$0xff]
      %v3204 = vld [vmem:[%s3173 + $0x168] sm:$0xff]
      %v3205 = vld [vmem:[%s3173 + $0x170] sm:$0xff]
      %3238 = vrot.lane.b32.xlu0 %v3174, 60
      %v3239 = vpop.permute.xlu0 %3238
      %3240 = vrot.lane.b32.xlu0 %v3175, 60
      %v3241 = vpop.permute.xlu0 %3240
      %3242 = vrot.lane.b32.xlu0 %v3176, 60
      %v3243 = vpop.permute.xlu0 %3242
      %3244 = vrot.lane.b32.xlu0 %v3177, 60
      %v3245 = vpop.permute.xlu0 %3244
      %3246 = vrot.lane.b32.xlu0 %v3178, 60
      %v3247 = vpop.permute.xlu0 %3246
      %3248 = vrot.lane.b32.xlu0 %v3179, 60
      %v3249 = vpop.permute.xlu0 %3248
      %3250 = vrot.lane.b32.xlu0 %v3180, 60
      %v3251 = vpop.permute.xlu0 %3250
      %3252 = vrot.lane.b32.xlu0 %v3181, 60
      %v3253 = vpop.permute.xlu0 %3252
      %3254 = vrot.lane.b32.xlu0 %v3182, 60
      %v3255 = vpop.permute.xlu0 %3254
      %3256 = vrot.lane.b32.xlu0 %v3183, 60
      %v3257 = vpop.permute.xlu0 %3256
      %3258 = vrot.lane.b32.xlu0 %v3184, 60
      %v3259 = vpop.permute.xlu0 %3258
      %3260 = vrot.lane.b32.xlu0 %v3185, 60
      %v3261 = vpop.permute.xlu0 %3260
      %3262 = vrot.lane.b32.xlu0 %v3186, 60
      %v3263 = vpop.permute.xlu0 %3262
      %3264 = vrot.lane.b32.xlu0 %v3187, 60
      %v3265 = vpop.permute.xlu0 %3264
      %3266 = vrot.lane.b32.xlu0 %v3188, 60
      %v3267 = vpop.permute.xlu0 %3266
      %3268 = vrot.lane.b32.xlu0 %v3189, 60
      %v3269 = vpop.permute.xlu0 %3268
      %3270 = vrot.lane.b32.xlu0 %v3190, 60
      %v3271 = vpop.permute.xlu0 %3270
      %3272 = vrot.lane.b32.xlu0 %v3191, 60
      %v3273 = vpop.permute.xlu0 %3272
      %3274 = vrot.lane.b32.xlu0 %v3192, 60
      %v3275 = vpop.permute.xlu0 %3274
      %3276 = vrot.lane.b32.xlu0 %v3193, 60
      %v3277 = vpop.permute.xlu0 %3276
      %3278 = vrot.lane.b32.xlu0 %v3194, 60
      %v3279 = vpop.permute.xlu0 %3278
      %3280 = vrot.lane.b32.xlu0 %v3195, 60
      %v3281 = vpop.permute.xlu0 %3280
      %3282 = vrot.lane.b32.xlu0 %v3196, 60
      %v3283 = vpop.permute.xlu0 %3282
      %3284 = vrot.lane.b32.xlu0 %v3197, 60
      %v3285 = vpop.permute.xlu0 %3284
      %3286 = vrot.lane.b32.xlu0 %v3198, 60
      %v3287 = vpop.permute.xlu0 %3286
      %3288 = vrot.lane.b32.xlu0 %v3199, 60
      %v3289 = vpop.permute.xlu0 %3288
      %3290 = vrot.lane.b32.xlu0 %v3200, 60
      %v3291 = vpop.permute.xlu0 %3290
      %3292 = vrot.lane.b32.xlu0 %v3201, 60
      %v3293 = vpop.permute.xlu0 %3292
      %3294 = vrot.lane.b32.xlu0 %v3202, 60
      %v3295 = vpop.permute.xlu0 %3294
      %3296 = vrot.lane.b32.xlu0 %v3203, 60
      %v3297 = vpop.permute.xlu0 %3296
      %3298 = vrot.lane.b32.xlu0 %v3204, 60
      %v3299 = vpop.permute.xlu0 %3298
      %3300 = vrot.lane.b32.xlu0 %v3205, 60
      %v3301 = vpop.permute.xlu0 %3300
      %vm3334 = vcmask 523744
      %3335 = vst.msk [vmem:[#allocation3] sm:$0xff] %vm3334, %v3239
      %3336 = vst.msk [vmem:[#allocation3 + $0x8] sm:$0xff] %vm3334, %v3241
      %3337 = vst.msk [vmem:[#allocation3 + $0x10] sm:$0xff] %vm3334, %v3243
      %3338 = vst.msk [vmem:[#allocation3 + $0x18] sm:$0xff] %vm3334, %v3245
      %3339 = vst.msk [vmem:[#allocation3 + $0x20] sm:$0xff] %vm3334, %v3247
      %3340 = vst.msk [vmem:[#allocation3 + $0x28] sm:$0xff] %vm3334, %v3249
      %3341 = vst.msk [vmem:[#allocation3 + $0x30] sm:$0xff] %vm3334, %v3251
      %3342 = vst.msk [vmem:[#allocation3 + $0x38] sm:$0xff] %vm3334, %v3253
      %3343 = vst.msk [vmem:[#allocation3 + $0x40] sm:$0xff] %vm3334, %v3255
      %3344 = vst.msk [vmem:[#allocation3 + $0x48] sm:$0xff] %vm3334, %v3257
      %3345 = vst.msk [vmem:[#allocation3 + $0x50] sm:$0xff] %vm3334, %v3259
      %3346 = vst.msk [vmem:[#allocation3 + $0x58] sm:$0xff] %vm3334, %v3261
      %3347 = vst.msk [vmem:[#allocation3 + $0x60] sm:$0xff] %vm3334, %v3263
      %3348 = vst.msk [vmem:[#allocation3 + $0x68] sm:$0xff] %vm3334, %v3265
      %3349 = vst.msk [vmem:[#allocation3 + $0x70] sm:$0xff] %vm3334, %v3267
      %3350 = vst.msk [vmem:[#allocation3 + $0x78] sm:$0xff] %vm3334, %v3269
      %3351 = vst.msk [vmem:[#allocation3 + $0x80] sm:$0xff] %vm3334, %v3271
      %3352 = vst.msk [vmem:[#allocation3 + $0x88] sm:$0xff] %vm3334, %v3273
      %3353 = vst.msk [vmem:[#allocation3 + $0x90] sm:$0xff] %vm3334, %v3275
      %3354 = vst.msk [vmem:[#allocation3 + $0x98] sm:$0xff] %vm3334, %v3277
      %3355 = vst.msk [vmem:[#allocation3 + $0xa0] sm:$0xff] %vm3334, %v3279
      %3356 = vst.msk [vmem:[#allocation3 + $0xa8] sm:$0xff] %vm3334, %v3281
      %3357 = vst.msk [vmem:[#allocation3 + $0xb0] sm:$0xff] %vm3334, %v3283
      %3358 = vst.msk [vmem:[#allocation3 + $0xb8] sm:$0xff] %vm3334, %v3285
      %3359 = vst.msk [vmem:[#allocation3 + $0xc0] sm:$0xff] %vm3334, %v3287
      %3360 = vst.msk [vmem:[#allocation3 + $0xc8] sm:$0xff] %vm3334, %v3289
      %3361 = vst.msk [vmem:[#allocation3 + $0xd0] sm:$0xff] %vm3334, %v3291
      %3362 = vst.msk [vmem:[#allocation3 + $0xd8] sm:$0xff] %vm3334, %v3293
      %3363 = vst.msk [vmem:[#allocation3 + $0xe0] sm:$0xff] %vm3334, %v3295
      %3364 = vst.msk [vmem:[#allocation3 + $0xe8] sm:$0xff] %vm3334, %v3297
      %3365 = vst.msk [vmem:[#allocation3 + $0xf0] sm:$0xff] %vm3334, %v3299
      %3366 = vst.msk [vmem:[#allocation3 + $0xf8] sm:$0xff] %vm3334, %v3301
      %v3367 = vld [vmem:[%s3173 + $0x1] sm:$0xff]
      %v3368 = vld [vmem:[%s3173 + $0x9] sm:$0xff]
      %v3369 = vld [vmem:[%s3173 + $0x19] sm:$0xff]
      %v3370 = vld [vmem:[%s3173 + $0x21] sm:$0xff]
      %v3371 = vld [vmem:[%s3173 + $0x31] sm:$0xff]
      %v3372 = vld [vmem:[%s3173 + $0x39] sm:$0xff]
      %v3373 = vld [vmem:[%s3173 + $0x49] sm:$0xff]
      %v3374 = vld [vmem:[%s3173 + $0x51] sm:$0xff]
      %v3375 = vld [vmem:[%s3173 + $0x61] sm:$0xff]
      %v3376 = vld [vmem:[%s3173 + $0x69] sm:$0xff]
      %v3377 = vld [vmem:[%s3173 + $0x79] sm:$0xff]
      %v3378 = vld [vmem:[%s3173 + $0x81] sm:$0xff]
      %v3379 = vld [vmem:[%s3173 + $0x91] sm:$0xff]
      %v3380 = vld [vmem:[%s3173 + $0x99] sm:$0xff]
      %v3381 = vld [vmem:[%s3173 + $0xa9] sm:$0xff]
      %v3382 = vld [vmem:[%s3173 + $0xb1] sm:$0xff]
      %v3383 = vld [vmem:[%s3173 + $0xc1] sm:$0xff]
      %v3384 = vld [vmem:[%s3173 + $0xc9] sm:$0xff]
      %v3385 = vld [vmem:[%s3173 + $0xd9] sm:$0xff]
      %v3386 = vld [vmem:[%s3173 + $0xe1] sm:$0xff]
      %v3387 = vld [vmem:[%s3173 + $0xf1] sm:$0xff]
      %v3388 = vld [vmem:[%s3173 + $0xf9] sm:$0xff]
      %v3389 = vld [vmem:[%s3173 + $0x109] sm:$0xff]
      %v3390 = vld [vmem:[%s3173 + $0x111] sm:$0xff]
      %v3391 = vld [vmem:[%s3173 + $0x121] sm:$0xff]
      %v3392 = vld [vmem:[%s3173 + $0x129] sm:$0xff]
      %v3393 = vld [vmem:[%s3173 + $0x139] sm:$0xff]
      %v3394 = vld [vmem:[%s3173 + $0x141] sm:$0xff]
      %v3395 = vld [vmem:[%s3173 + $0x151] sm:$0xff]
      %v3396 = vld [vmem:[%s3173 + $0x159] sm:$0xff]
      %v3397 = vld [vmem:[%s3173 + $0x169] sm:$0xff]
      %v3398 = vld [vmem:[%s3173 + $0x171] sm:$0xff]
      %3431 = vrot.lane.b32.xlu0 %v3367, 64
      %v3432 = vpop.permute.xlu0 %3431
      %3433 = vrot.lane.b32.xlu0 %v3368, 64
      %v3434 = vpop.permute.xlu0 %3433
      %3435 = vrot.lane.b32.xlu0 %v3369, 64
      %v3436 = vpop.permute.xlu0 %3435
      %3437 = vrot.lane.b32.xlu0 %v3370, 64
      %v3438 = vpop.permute.xlu0 %3437
      %3439 = vrot.lane.b32.xlu0 %v3371, 64
      %v3440 = vpop.permute.xlu0 %3439
      %3441 = vrot.lane.b32.xlu0 %v3372, 64
      %v3442 = vpop.permute.xlu0 %3441
      %3443 = vrot.lane.b32.xlu0 %v3373, 64
      %v3444 = vpop.permute.xlu0 %3443
      %3445 = vrot.lane.b32.xlu0 %v3374, 64
      %v3446 = vpop.permute.xlu0 %3445
      %3447 = vrot.lane.b32.xlu0 %v3375, 64
      %v3448 = vpop.permute.xlu0 %3447
      %3449 = vrot.lane.b32.xlu0 %v3376, 64
      %v3450 = vpop.permute.xlu0 %3449
      %3451 = vrot.lane.b32.xlu0 %v3377, 64
      %v3452 = vpop.permute.xlu0 %3451
      %3453 = vrot.lane.b32.xlu0 %v3378, 64
      %v3454 = vpop.permute.xlu0 %3453
      %3455 = vrot.lane.b32.xlu0 %v3379, 64
      %v3456 = vpop.permute.xlu0 %3455
      %3457 = vrot.lane.b32.xlu0 %v3380, 64
      %v3458 = vpop.permute.xlu0 %3457
      %3459 = vrot.lane.b32.xlu0 %v3381, 64
      %v3460 = vpop.permute.xlu0 %3459
      %3461 = vrot.lane.b32.xlu0 %v3382, 64
      %v3462 = vpop.permute.xlu0 %3461
      %3463 = vrot.lane.b32.xlu0 %v3383, 64
      %v3464 = vpop.permute.xlu0 %3463
      %3465 = vrot.lane.b32.xlu0 %v3384, 64
      %v3466 = vpop.permute.xlu0 %3465
      %3467 = vrot.lane.b32.xlu0 %v3385, 64
      %v3468 = vpop.permute.xlu0 %3467
      %3469 = vrot.lane.b32.xlu0 %v3386, 64
      %v3470 = vpop.permute.xlu0 %3469
      %3471 = vrot.lane.b32.xlu0 %v3387, 64
      %v3472 = vpop.permute.xlu0 %3471
      %3473 = vrot.lane.b32.xlu0 %v3388, 64
      %v3474 = vpop.permute.xlu0 %3473
      %3475 = vrot.lane.b32.xlu0 %v3389, 64
      %v3476 = vpop.permute.xlu0 %3475
      %3477 = vrot.lane.b32.xlu0 %v3390, 64
      %v3478 = vpop.permute.xlu0 %3477
      %3479 = vrot.lane.b32.xlu0 %v3391, 64
      %v3480 = vpop.permute.xlu0 %3479
      %3481 = vrot.lane.b32.xlu0 %v3392, 64
      %v3482 = vpop.permute.xlu0 %3481
      %3483 = vrot.lane.b32.xlu0 %v3393, 64
      %v3484 = vpop.permute.xlu0 %3483
      %3485 = vrot.lane.b32.xlu0 %v3394, 64
      %v3486 = vpop.permute.xlu0 %3485
      %3487 = vrot.lane.b32.xlu0 %v3395, 64
      %v3488 = vpop.permute.xlu0 %3487
      %3489 = vrot.lane.b32.xlu0 %v3396, 64
      %v3490 = vpop.permute.xlu0 %3489
      %3491 = vrot.lane.b32.xlu0 %v3397, 64
      %v3492 = vpop.permute.xlu0 %3491
      %3493 = vrot.lane.b32.xlu0 %v3398, 64
      %v3494 = vpop.permute.xlu0 %3493
      %vm3527 = vcmask 556544
      %3528 = vst.msk [vmem:[#allocation3] sm:$0xff] %vm3527, %v3432
      %3529 = vst.msk [vmem:[#allocation3 + $0x8] sm:$0xff] %vm3527, %v3434
      %3530 = vst.msk [vmem:[#allocation3 + $0x10] sm:$0xff] %vm3527, %v3436
      %3531 = vst.msk [vmem:[#allocation3 + $0x18] sm:$0xff] %vm3527, %v3438
      %3532 = vst.msk [vmem:[#allocation3 + $0x20] sm:$0xff] %vm3527, %v3440
      %3533 = vst.msk [vmem:[#allocation3 + $0x28] sm:$0xff] %vm3527, %v3442
      %3534 = vst.msk [vmem:[#allocation3 + $0x30] sm:$0xff] %vm3527, %v3444
      %3535 = vst.msk [vmem:[#allocation3 + $0x38] sm:$0xff] %vm3527, %v3446
      %3536 = vst.msk [vmem:[#allocation3 + $0x40] sm:$0xff] %vm3527, %v3448
      %3537 = vst.msk [vmem:[#allocation3 + $0x48] sm:$0xff] %vm3527, %v3450
      %3538 = vst.msk [vmem:[#allocation3 + $0x50] sm:$0xff] %vm3527, %v3452
      %3539 = vst.msk [vmem:[#allocation3 + $0x58] sm:$0xff] %vm3527, %v3454
      %3540 = vst.msk [vmem:[#allocation3 + $0x60] sm:$0xff] %vm3527, %v3456
      %3541 = vst.msk [vmem:[#allocation3 + $0x68] sm:$0xff] %vm3527, %v3458
      %3542 = vst.msk [vmem:[#allocation3 + $0x70] sm:$0xff] %vm3527, %v3460
      %3543 = vst.msk [vmem:[#allocation3 + $0x78] sm:$0xff] %vm3527, %v3462
      %3544 = vst.msk [vmem:[#allocation3 + $0x80] sm:$0xff] %vm3527, %v3464
      %3545 = vst.msk [vmem:[#allocation3 + $0x88] sm:$0xff] %vm3527, %v3466
      %3546 = vst.msk [vmem:[#allocation3 + $0x90] sm:$0xff] %vm3527, %v3468
      %3547 = vst.msk [vmem:[#allocation3 + $0x98] sm:$0xff] %vm3527, %v3470
      %3548 = vst.msk [vmem:[#allocation3 + $0xa0] sm:$0xff] %vm3527, %v3472
      %3549 = vst.msk [vmem:[#allocation3 + $0xa8] sm:$0xff] %vm3527, %v3474
      %3550 = vst.msk [vmem:[#allocation3 + $0xb0] sm:$0xff] %vm3527, %v3476
      %3551 = vst.msk [vmem:[#allocation3 + $0xb8] sm:$0xff] %vm3527, %v3478
      %3552 = vst.msk [vmem:[#allocation3 + $0xc0] sm:$0xff] %vm3527, %v3480
      %3553 = vst.msk [vmem:[#allocation3 + $0xc8] sm:$0xff] %vm3527, %v3482
      %3554 = vst.msk [vmem:[#allocation3 + $0xd0] sm:$0xff] %vm3527, %v3484
      %3555 = vst.msk [vmem:[#allocation3 + $0xd8] sm:$0xff] %vm3527, %v3486
      %3556 = vst.msk [vmem:[#allocation3 + $0xe0] sm:$0xff] %vm3527, %v3488
      %3557 = vst.msk [vmem:[#allocation3 + $0xe8] sm:$0xff] %vm3527, %v3490
      %3558 = vst.msk [vmem:[#allocation3 + $0xf0] sm:$0xff] %vm3527, %v3492
      %3559 = vst.msk [vmem:[#allocation3 + $0xf8] sm:$0xff] %vm3527, %v3494
      %v3560 = vld [vmem:[%s3173 + $0x2] sm:$0xff]
      %v3561 = vld [vmem:[%s3173 + $0xa] sm:$0xff]
      %v3562 = vld [vmem:[%s3173 + $0x1a] sm:$0xff]
      %v3563 = vld [vmem:[%s3173 + $0x22] sm:$0xff]
      %v3564 = vld [vmem:[%s3173 + $0x32] sm:$0xff]
      %v3565 = vld [vmem:[%s3173 + $0x3a] sm:$0xff]
      %v3566 = vld [vmem:[%s3173 + $0x4a] sm:$0xff]
      %v3567 = vld [vmem:[%s3173 + $0x52] sm:$0xff]
      %v3568 = vld [vmem:[%s3173 + $0x62] sm:$0xff]
      %v3569 = vld [vmem:[%s3173 + $0x6a] sm:$0xff]
      %v3570 = vld [vmem:[%s3173 + $0x7a] sm:$0xff]
      %v3571 = vld [vmem:[%s3173 + $0x82] sm:$0xff]
      %v3572 = vld [vmem:[%s3173 + $0x92] sm:$0xff]
      %v3573 = vld [vmem:[%s3173 + $0x9a] sm:$0xff]
      %v3574 = vld [vmem:[%s3173 + $0xaa] sm:$0xff]
      %v3575 = vld [vmem:[%s3173 + $0xb2] sm:$0xff]
      %v3576 = vld [vmem:[%s3173 + $0xc2] sm:$0xff]
      %v3577 = vld [vmem:[%s3173 + $0xca] sm:$0xff]
      %v3578 = vld [vmem:[%s3173 + $0xda] sm:$0xff]
      %v3579 = vld [vmem:[%s3173 + $0xe2] sm:$0xff]
      %v3580 = vld [vmem:[%s3173 + $0xf2] sm:$0xff]
      %v3581 = vld [vmem:[%s3173 + $0xfa] sm:$0xff]
      %v3582 = vld [vmem:[%s3173 + $0x10a] sm:$0xff]
      %v3583 = vld [vmem:[%s3173 + $0x112] sm:$0xff]
      %v3584 = vld [vmem:[%s3173 + $0x122] sm:$0xff]
      %v3585 = vld [vmem:[%s3173 + $0x12a] sm:$0xff]
      %v3586 = vld [vmem:[%s3173 + $0x13a] sm:$0xff]
      %v3587 = vld [vmem:[%s3173 + $0x142] sm:$0xff]
      %v3588 = vld [vmem:[%s3173 + $0x152] sm:$0xff]
      %v3589 = vld [vmem:[%s3173 + $0x15a] sm:$0xff]
      %v3590 = vld [vmem:[%s3173 + $0x16a] sm:$0xff]
      %v3591 = vld [vmem:[%s3173 + $0x172] sm:$0xff]
      %3624 = vrot.lane.b32.xlu0 %v3560, 68
      %v3625 = vpop.permute.xlu0 %3624
      %3626 = vrot.lane.b32.xlu0 %v3561, 68
      %v3627 = vpop.permute.xlu0 %3626
      %3628 = vrot.lane.b32.xlu0 %v3562, 68
      %v3629 = vpop.permute.xlu0 %3628
      %3630 = vrot.lane.b32.xlu0 %v3563, 68
      %v3631 = vpop.permute.xlu0 %3630
      %3632 = vrot.lane.b32.xlu0 %v3564, 68
      %v3633 = vpop.permute.xlu0 %3632
      %3634 = vrot.lane.b32.xlu0 %v3565, 68
      %v3635 = vpop.permute.xlu0 %3634
      %3636 = vrot.lane.b32.xlu0 %v3566, 68
      %v3637 = vpop.permute.xlu0 %3636
      %3638 = vrot.lane.b32.xlu0 %v3567, 68
      %v3639 = vpop.permute.xlu0 %3638
      %3640 = vrot.lane.b32.xlu0 %v3568, 68
      %v3641 = vpop.permute.xlu0 %3640
      %3642 = vrot.lane.b32.xlu0 %v3569, 68
      %v3643 = vpop.permute.xlu0 %3642
      %3644 = vrot.lane.b32.xlu0 %v3570, 68
      %v3645 = vpop.permute.xlu0 %3644
      %3646 = vrot.lane.b32.xlu0 %v3571, 68
      %v3647 = vpop.permute.xlu0 %3646
      %3648 = vrot.lane.b32.xlu0 %v3572, 68
      %v3649 = vpop.permute.xlu0 %3648
      %3650 = vrot.lane.b32.xlu0 %v3573, 68
      %v3651 = vpop.permute.xlu0 %3650
      %3652 = vrot.lane.b32.xlu0 %v3574, 68
      %v3653 = vpop.permute.xlu0 %3652
      %3654 = vrot.lane.b32.xlu0 %v3575, 68
      %v3655 = vpop.permute.xlu0 %3654
      %3656 = vrot.lane.b32.xlu0 %v3576, 68
      %v3657 = vpop.permute.xlu0 %3656
      %3658 = vrot.lane.b32.xlu0 %v3577, 68
      %v3659 = vpop.permute.xlu0 %3658
      %3660 = vrot.lane.b32.xlu0 %v3578, 68
      %v3661 = vpop.permute.xlu0 %3660
      %3662 = vrot.lane.b32.xlu0 %v3579, 68
      %v3663 = vpop.permute.xlu0 %3662
      %3664 = vrot.lane.b32.xlu0 %v3580, 68
      %v3665 = vpop.permute.xlu0 %3664
      %3666 = vrot.lane.b32.xlu0 %v3581, 68
      %v3667 = vpop.permute.xlu0 %3666
      %3668 = vrot.lane.b32.xlu0 %v3582, 68
      %v3669 = vpop.permute.xlu0 %3668
      %3670 = vrot.lane.b32.xlu0 %v3583, 68
      %v3671 = vpop.permute.xlu0 %3670
      %3672 = vrot.lane.b32.xlu0 %v3584, 68
      %v3673 = vpop.permute.xlu0 %3672
      %3674 = vrot.lane.b32.xlu0 %v3585, 68
      %v3675 = vpop.permute.xlu0 %3674
      %3676 = vrot.lane.b32.xlu0 %v3586, 68
      %v3677 = vpop.permute.xlu0 %3676
      %3678 = vrot.lane.b32.xlu0 %v3587, 68
      %v3679 = vpop.permute.xlu0 %3678
      %3680 = vrot.lane.b32.xlu0 %v3588, 68
      %v3681 = vpop.permute.xlu0 %3680
      %3682 = vrot.lane.b32.xlu0 %v3589, 68
      %v3683 = vpop.permute.xlu0 %3682
      %3684 = vrot.lane.b32.xlu0 %v3590, 68
      %v3685 = vpop.permute.xlu0 %3684
      %3686 = vrot.lane.b32.xlu0 %v3591, 68
      %v3687 = vpop.permute.xlu0 %3686
      %vm3720 = vcmask 589344
      %3721 = vst.msk [vmem:[#allocation3] sm:$0xff] %vm3720, %v3625
      %3722 = vst.msk [vmem:[#allocation3 + $0x8] sm:$0xff] %vm3720, %v3627
      %3723 = vst.msk [vmem:[#allocation3 + $0x10] sm:$0xff] %vm3720, %v3629
      %3724 = vst.msk [vmem:[#allocation3 + $0x18] sm:$0xff] %vm3720, %v3631
      %3725 = vst.msk [vmem:[#allocation3 + $0x20] sm:$0xff] %vm3720, %v3633
      %3726 = vst.msk [vmem:[#allocation3 + $0x28] sm:$0xff] %vm3720, %v3635
      %3727 = vst.msk [vmem:[#allocation3 + $0x30] sm:$0xff] %vm3720, %v3637
      %3728 = vst.msk [vmem:[#allocation3 + $0x38] sm:$0xff] %vm3720, %v3639
      %3729 = vst.msk [vmem:[#allocation3 + $0x40] sm:$0xff] %vm3720, %v3641
      %3730 = vst.msk [vmem:[#allocation3 + $0x48] sm:$0xff] %vm3720, %v3643
      %3731 = vst.msk [vmem:[#allocation3 + $0x50] sm:$0xff] %vm3720, %v3645
      %3732 = vst.msk [vmem:[#allocation3 + $0x58] sm:$0xff] %vm3720, %v3647
      %3733 = vst.msk [vmem:[#allocation3 + $0x60] sm:$0xff] %vm3720, %v3649
      %3734 = vst.msk [vmem:[#allocation3 + $0x68] sm:$0xff] %vm3720, %v3651
      %3735 = vst.msk [vmem:[#allocation3 + $0x70] sm:$0xff] %vm3720, %v3653
      %3736 = vst.msk [vmem:[#allocation3 + $0x78] sm:$0xff] %vm3720, %v3655
      %3737 = vst.msk [vmem:[#allocation3 + $0x80] sm:$0xff] %vm3720, %v3657
      %3738 = vst.msk [vmem:[#allocation3 + $0x88] sm:$0xff] %vm3720, %v3659
      %3739 = vst.msk [vmem:[#allocation3 + $0x90] sm:$0xff] %vm3720, %v3661
      %3740 = vst.msk [vmem:[#allocation3 + $0x98] sm:$0xff] %vm3720, %v3663
      %3741 = vst.msk [vmem:[#allocation3 + $0xa0] sm:$0xff] %vm3720, %v3665
      %3742 = vst.msk [vmem:[#allocation3 + $0xa8] sm:$0xff] %vm3720, %v3667
      %3743 = vst.msk [vmem:[#allocation3 + $0xb0] sm:$0xff] %vm3720, %v3669
      %3744 = vst.msk [vmem:[#allocation3 + $0xb8] sm:$0xff] %vm3720, %v3671
      %3745 = vst.msk [vmem:[#allocation3 + $0xc0] sm:$0xff] %vm3720, %v3673
      %3746 = vst.msk [vmem:[#allocation3 + $0xc8] sm:$0xff] %vm3720, %v3675
      %3747 = vst.msk [vmem:[#allocation3 + $0xd0] sm:$0xff] %vm3720, %v3677
      %3748 = vst.msk [vmem:[#allocation3 + $0xd8] sm:$0xff] %vm3720, %v3679
      %3749 = vst.msk [vmem:[#allocation3 + $0xe0] sm:$0xff] %vm3720, %v3681
      %3750 = vst.msk [vmem:[#allocation3 + $0xe8] sm:$0xff] %vm3720, %v3683
      %3751 = vst.msk [vmem:[#allocation3 + $0xf0] sm:$0xff] %vm3720, %v3685
      %3752 = vst.msk [vmem:[#allocation3 + $0xf8] sm:$0xff] %vm3720, %v3687
      %v3753 = vld [vmem:[%s3173 + $0x3] sm:$0xff]
      %v3754 = vld [vmem:[%s3173 + $0xb] sm:$0xff]
      %v3755 = vld [vmem:[%s3173 + $0x1b] sm:$0xff]
      %v3756 = vld [vmem:[%s3173 + $0x23] sm:$0xff]
      %v3757 = vld [vmem:[%s3173 + $0x33] sm:$0xff]
      %v3758 = vld [vmem:[%s3173 + $0x3b] sm:$0xff]
      %v3759 = vld [vmem:[%s3173 + $0x4b] sm:$0xff]
      %v3760 = vld [vmem:[%s3173 + $0x53] sm:$0xff]
      %v3761 = vld [vmem:[%s3173 + $0x63] sm:$0xff]
      %v3762 = vld [vmem:[%s3173 + $0x6b] sm:$0xff]
      %v3763 = vld [vmem:[%s3173 + $0x7b] sm:$0xff]
      %v3764 = vld [vmem:[%s3173 + $0x83] sm:$0xff]
      %v3765 = vld [vmem:[%s3173 + $0x93] sm:$0xff]
      %v3766 = vld [vmem:[%s3173 + $0x9b] sm:$0xff]
      %v3767 = vld [vmem:[%s3173 + $0xab] sm:$0xff]
      %v3768 = vld [vmem:[%s3173 + $0xb3] sm:$0xff]
      %v3769 = vld [vmem:[%s3173 + $0xc3] sm:$0xff]
      %v3770 = vld [vmem:[%s3173 + $0xcb] sm:$0xff]
      %v3771 = vld [vmem:[%s3173 + $0xdb] sm:$0xff]
      %v3772 = vld [vmem:[%s3173 + $0xe3] sm:$0xff]
      %v3773 = vld [vmem:[%s3173 + $0xf3] sm:$0xff]
      %v3774 = vld [vmem:[%s3173 + $0xfb] sm:$0xff]
      %v3775 = vld [vmem:[%s3173 + $0x10b] sm:$0xff]
      %v3776 = vld [vmem:[%s3173 + $0x113] sm:$0xff]
      %v3777 = vld [vmem:[%s3173 + $0x123] sm:$0xff]
      %v3778 = vld [vmem:[%s3173 + $0x12b] sm:$0xff]
      %v3779 = vld [vmem:[%s3173 + $0x13b] sm:$0xff]
      %v3780 = vld [vmem:[%s3173 + $0x143] sm:$0xff]
      %v3781 = vld [vmem:[%s3173 + $0x153] sm:$0xff]
      %v3782 = vld [vmem:[%s3173 + $0x15b] sm:$0xff]
      %v3783 = vld [vmem:[%s3173 + $0x16b] sm:$0xff]
      %v3784 = vld [vmem:[%s3173 + $0x173] sm:$0xff]
      %3817 = vrot.lane.b32.xlu0 %v3753, 72
      %v3818 = vpop.permute.xlu0 %3817
      %3819 = vrot.lane.b32.xlu0 %v3754, 72
      %v3820 = vpop.permute.xlu0 %3819
      %3821 = vrot.lane.b32.xlu0 %v3755, 72
      %v3822 = vpop.permute.xlu0 %3821
      %3823 = vrot.lane.b32.xlu0 %v3756, 72
      %v3824 = vpop.permute.xlu0 %3823
      %3825 = vrot.lane.b32.xlu0 %v3757, 72
      %v3826 = vpop.permute.xlu0 %3825
      %3827 = vrot.lane.b32.xlu0 %v3758, 72
      %v3828 = vpop.permute.xlu0 %3827
      %3829 = vrot.lane.b32.xlu0 %v3759, 72
      %v3830 = vpop.permute.xlu0 %3829
      %3831 = vrot.lane.b32.xlu0 %v3760, 72
      %v3832 = vpop.permute.xlu0 %3831
      %3833 = vrot.lane.b32.xlu0 %v3761, 72
      %v3834 = vpop.permute.xlu0 %3833
      %3835 = vrot.lane.b32.xlu0 %v3762, 72
      %v3836 = vpop.permute.xlu0 %3835
      %3837 = vrot.lane.b32.xlu0 %v3763, 72
      %v3838 = vpop.permute.xlu0 %3837
      %3839 = vrot.lane.b32.xlu0 %v3764, 72
      %v3840 = vpop.permute.xlu0 %3839
      %3841 = vrot.lane.b32.xlu0 %v3765, 72
      %v3842 = vpop.permute.xlu0 %3841
      %3843 = vrot.lane.b32.xlu0 %v3766, 72
      %v3844 = vpop.permute.xlu0 %3843
      %3845 = vrot.lane.b32.xlu0 %v3767, 72
      %v3846 = vpop.permute.xlu0 %3845
      %3847 = vrot.lane.b32.xlu0 %v3768, 72
      %v3848 = vpop.permute.xlu0 %3847
      %3849 = vrot.lane.b32.xlu0 %v3769, 72
      %v3850 = vpop.permute.xlu0 %3849
      %3851 = vrot.lane.b32.xlu0 %v3770, 72
      %v3852 = vpop.permute.xlu0 %3851
      %3853 = vrot.lane.b32.xlu0 %v3771, 72
      %v3854 = vpop.permute.xlu0 %3853
      %3855 = vrot.lane.b32.xlu0 %v3772, 72
      %v3856 = vpop.permute.xlu0 %3855
      %3857 = vrot.lane.b32.xlu0 %v3773, 72
      %v3858 = vpop.permute.xlu0 %3857
      %3859 = vrot.lane.b32.xlu0 %v3774, 72
      %v3860 = vpop.permute.xlu0 %3859
      %3861 = vrot.lane.b32.xlu0 %v3775, 72
      %v3862 = vpop.permute.xlu0 %3861
      %3863 = vrot.lane.b32.xlu0 %v3776, 72
      %v3864 = vpop.permute.xlu0 %3863
      %3865 = vrot.lane.b32.xlu0 %v3777, 72
      %v3866 = vpop.permute.xlu0 %3865
      %3867 = vrot.lane.b32.xlu0 %v3778, 72
      %v3868 = vpop.permute.xlu0 %3867
      %3869 = vrot.lane.b32.xlu0 %v3779, 72
      %v3870 = vpop.permute.xlu0 %3869
      %3871 = vrot.lane.b32.xlu0 %v3780, 72
      %v3872 = vpop.permute.xlu0 %3871
      %3873 = vrot.lane.b32.xlu0 %v3781, 72
      %v3874 = vpop.permute.xlu0 %3873
      %3875 = vrot.lane.b32.xlu0 %v3782, 72
      %v3876 = vpop.permute.xlu0 %3875
      %3877 = vrot.lane.b32.xlu0 %v3783, 72
      %v3878 = vpop.permute.xlu0 %3877
      %3879 = vrot.lane.b32.xlu0 %v3784, 72
      %v3880 = vpop.permute.xlu0 %3879
      %vm3913 = vcmask 622144
      %3914 = vst.msk [vmem:[#allocation3] sm:$0xff] %vm3913, %v3818
      %3915 = vst.msk [vmem:[#allocation3 + $0x8] sm:$0xff] %vm3913, %v3820
      %3916 = vst.msk [vmem:[#allocation3 + $0x10] sm:$0xff] %vm3913, %v3822
      %3917 = vst.msk [vmem:[#allocation3 + $0x18] sm:$0xff] %vm3913, %v3824
      %3918 = vst.msk [vmem:[#allocation3 + $0x20] sm:$0xff] %vm3913, %v3826
      %3919 = vst.msk [vmem:[#allocation3 + $0x28] sm:$0xff] %vm3913, %v3828
      %3920 = vst.msk [vmem:[#allocation3 + $0x30] sm:$0xff] %vm3913, %v3830
      %3921 = vst.msk [vmem:[#allocation3 + $0x38] sm:$0xff] %vm3913, %v3832
      %3922 = vst.msk [vmem:[#allocation3 + $0x40] sm:$0xff] %vm3913, %v3834
      %3923 = vst.msk [vmem:[#allocation3 + $0x48] sm:$0xff] %vm3913, %v3836
      %3924 = vst.msk [vmem:[#allocation3 + $0x50] sm:$0xff] %vm3913, %v3838
      %3925 = vst.msk [vmem:[#allocation3 + $0x58] sm:$0xff] %vm3913, %v3840
      %3926 = vst.msk [vmem:[#allocation3 + $0x60] sm:$0xff] %vm3913, %v3842
      %3927 = vst.msk [vmem:[#allocation3 + $0x68] sm:$0xff] %vm3913, %v3844
      %3928 = vst.msk [vmem:[#allocation3 + $0x70] sm:$0xff] %vm3913, %v3846
      %3929 = vst.msk [vmem:[#allocation3 + $0x78] sm:$0xff] %vm3913, %v3848
      %3930 = vst.msk [vmem:[#allocation3 + $0x80] sm:$0xff] %vm3913, %v3850
      %3931 = vst.msk [vmem:[#allocation3 + $0x88] sm:$0xff] %vm3913, %v3852
      %3932 = vst.msk [vmem:[#allocation3 + $0x90] sm:$0xff] %vm3913, %v3854
      %3933 = vst.msk [vmem:[#allocation3 + $0x98] sm:$0xff] %vm3913, %v3856
      %3934 = vst.msk [vmem:[#allocation3 + $0xa0] sm:$0xff] %vm3913, %v3858
      %3935 = vst.msk [vmem:[#allocation3 + $0xa8] sm:$0xff] %vm3913, %v3860
      %3936 = vst.msk [vmem:[#allocation3 + $0xb0] sm:$0xff] %vm3913, %v3862
      %3937 = vst.msk [vmem:[#allocation3 + $0xb8] sm:$0xff] %vm3913, %v3864
      %3938 = vst.msk [vmem:[#allocation3 + $0xc0] sm:$0xff] %vm3913, %v3866
      %3939 = vst.msk [vmem:[#allocation3 + $0xc8] sm:$0xff] %vm3913, %v3868
      %3940 = vst.msk [vmem:[#allocation3 + $0xd0] sm:$0xff] %vm3913, %v3870
      %3941 = vst.msk [vmem:[#allocation3 + $0xd8] sm:$0xff] %vm3913, %v3872
      %3942 = vst.msk [vmem:[#allocation3 + $0xe0] sm:$0xff] %vm3913, %v3874
      %3943 = vst.msk [vmem:[#allocation3 + $0xe8] sm:$0xff] %vm3913, %v3876
      %3944 = vst.msk [vmem:[#allocation3 + $0xf0] sm:$0xff] %vm3913, %v3878
      %3945 = vst.msk [vmem:[#allocation3 + $0xf8] sm:$0xff] %vm3913, %v3880
      %v3946 = vld [vmem:[%s3173 + $0x4] sm:$0xff]
      %v3947 = vld [vmem:[%s3173 + $0xc] sm:$0xff]
      %v3948 = vld [vmem:[%s3173 + $0x1c] sm:$0xff]
      %v3949 = vld [vmem:[%s3173 + $0x24] sm:$0xff]
      %v3950 = vld [vmem:[%s3173 + $0x34] sm:$0xff]
      %v3951 = vld [vmem:[%s3173 + $0x3c] sm:$0xff]
      %v3952 = vld [vmem:[%s3173 + $0x4c] sm:$0xff]
      %v3953 = vld [vmem:[%s3173 + $0x54] sm:$0xff]
      %v3954 = vld [vmem:[%s3173 + $0x64] sm:$0xff]
      %v3955 = vld [vmem:[%s3173 + $0x6c] sm:$0xff]
      %v3956 = vld [vmem:[%s3173 + $0x7c] sm:$0xff]
      %v3957 = vld [vmem:[%s3173 + $0x84] sm:$0xff]
      %v3958 = vld [vmem:[%s3173 + $0x94] sm:$0xff]
      %v3959 = vld [vmem:[%s3173 + $0x9c] sm:$0xff]
      %v3960 = vld [vmem:[%s3173 + $0xac] sm:$0xff]
      %v3961 = vld [vmem:[%s3173 + $0xb4] sm:$0xff]
      %v3962 = vld [vmem:[%s3173 + $0xc4] sm:$0xff]
      %v3963 = vld [vmem:[%s3173 + $0xcc] sm:$0xff]
      %v3964 = vld [vmem:[%s3173 + $0xdc] sm:$0xff]
      %v3965 = vld [vmem:[%s3173 + $0xe4] sm:$0xff]
      %v3966 = vld [vmem:[%s3173 + $0xf4] sm:$0xff]
      %v3967 = vld [vmem:[%s3173 + $0xfc] sm:$0xff]
      %v3968 = vld [vmem:[%s3173 + $0x10c] sm:$0xff]
      %v3969 = vld [vmem:[%s3173 + $0x114] sm:$0xff]
      %v3970 = vld [vmem:[%s3173 + $0x124] sm:$0xff]
      %v3971 = vld [vmem:[%s3173 + $0x12c] sm:$0xff]
      %v3972 = vld [vmem:[%s3173 + $0x13c] sm:$0xff]
      %v3973 = vld [vmem:[%s3173 + $0x144] sm:$0xff]
      %v3974 = vld [vmem:[%s3173 + $0x154] sm:$0xff]
      %v3975 = vld [vmem:[%s3173 + $0x15c] sm:$0xff]
      %v3976 = vld [vmem:[%s3173 + $0x16c] sm:$0xff]
      %v3977 = vld [vmem:[%s3173 + $0x174] sm:$0xff]
      %4010 = vrot.lane.b32.xlu0 %v3946, 76
      %v4011 = vpop.permute.xlu0 %4010
      %4012 = vrot.lane.b32.xlu0 %v3947, 76
      %v4013 = vpop.permute.xlu0 %4012
      %4014 = vrot.lane.b32.xlu0 %v3948, 76
      %v4015 = vpop.permute.xlu0 %4014
      %4016 = vrot.lane.b32.xlu0 %v3949, 76
      %v4017 = vpop.permute.xlu0 %4016
      %4018 = vrot.lane.b32.xlu0 %v3950, 76
      %v4019 = vpop.permute.xlu0 %4018
      %4020 = vrot.lane.b32.xlu0 %v3951, 76
      %v4021 = vpop.permute.xlu0 %4020
      %4022 = vrot.lane.b32.xlu0 %v3952, 76
      %v4023 = vpop.permute.xlu0 %4022
      %4024 = vrot.lane.b32.xlu0 %v3953, 76
      %v4025 = vpop.permute.xlu0 %4024
      %4026 = vrot.lane.b32.xlu0 %v3954, 76
      %v4027 = vpop.permute.xlu0 %4026
      %4028 = vrot.lane.b32.xlu0 %v3955, 76
      %v4029 = vpop.permute.xlu0 %4028
      %4030 = vrot.lane.b32.xlu0 %v3956, 76
      %v4031 = vpop.permute.xlu0 %4030
      %4032 = vrot.lane.b32.xlu0 %v3957, 76
      %v4033 = vpop.permute.xlu0 %4032
      %4034 = vrot.lane.b32.xlu0 %v3958, 76
      %v4035 = vpop.permute.xlu0 %4034
      %4036 = vrot.lane.b32.xlu0 %v3959, 76
      %v4037 = vpop.permute.xlu0 %4036
      %4038 = vrot.lane.b32.xlu0 %v3960, 76
      %v4039 = vpop.permute.xlu0 %4038
      %4040 = vrot.lane.b32.xlu0 %v3961, 76
      %v4041 = vpop.permute.xlu0 %4040
      %4042 = vrot.lane.b32.xlu0 %v3962, 76
      %v4043 = vpop.permute.xlu0 %4042
      %4044 = vrot.lane.b32.xlu0 %v3963, 76
      %v4045 = vpop.permute.xlu0 %4044
      %4046 = vrot.lane.b32.xlu0 %v3964, 76
      %v4047 = vpop.permute.xlu0 %4046
      %4048 = vrot.lane.b32.xlu0 %v3965, 76
      %v4049 = vpop.permute.xlu0 %4048
      %4050 = vrot.lane.b32.xlu0 %v3966, 76
      %v4051 = vpop.permute.xlu0 %4050
      %4052 = vrot.lane.b32.xlu0 %v3967, 76
      %v4053 = vpop.permute.xlu0 %4052
      %4054 = vrot.lane.b32.xlu0 %v3968, 76
      %v4055 = vpop.permute.xlu0 %4054
      %4056 = vrot.lane.b32.xlu0 %v3969, 76
      %v4057 = vpop.permute.xlu0 %4056
      %4058 = vrot.lane.b32.xlu0 %v3970, 76
      %v4059 = vpop.permute.xlu0 %4058
      %4060 = vrot.lane.b32.xlu0 %v3971, 76
      %v4061 = vpop.permute.xlu0 %4060
      %4062 = vrot.lane.b32.xlu0 %v3972, 76
      %v4063 = vpop.permute.xlu0 %4062
      %4064 = vrot.lane.b32.xlu0 %v3973, 76
      %v4065 = vpop.permute.xlu0 %4064
      %4066 = vrot.lane.b32.xlu0 %v3974, 76
      %v4067 = vpop.permute.xlu0 %4066
      %4068 = vrot.lane.b32.xlu0 %v3975, 76
      %v4069 = vpop.permute.xlu0 %4068
      %4070 = vrot.lane.b32.xlu0 %v3976, 76
      %v4071 = vpop.permute.xlu0 %4070
      %4072 = vrot.lane.b32.xlu0 %v3977, 76
      %v4073 = vpop.permute.xlu0 %4072
      %vm4106 = vcmask 654944
      %4107 = vst.msk [vmem:[#allocation3] sm:$0xff] %vm4106, %v4011
      %4108 = vst.msk [vmem:[#allocation3 + $0x8] sm:$0xff] %vm4106, %v4013
      %4109 = vst.msk [vmem:[#allocation3 + $0x10] sm:$0xff] %vm4106, %v4015
      %4110 = vst.msk [vmem:[#allocation3 + $0x18] sm:$0xff] %vm4106, %v4017
      %4111 = vst.msk [vmem:[#allocation3 + $0x20] sm:$0xff] %vm4106, %v4019
      %4112 = vst.msk [vmem:[#allocation3 + $0x28] sm:$0xff] %vm4106, %v4021
      %4113 = vst.msk [vmem:[#allocation3 + $0x30] sm:$0xff] %vm4106, %v4023
      %4114 = vst.msk [vmem:[#allocation3 + $0x38] sm:$0xff] %vm4106, %v4025
      %4115 = vst.msk [vmem:[#allocation3 + $0x40] sm:$0xff] %vm4106, %v4027
      %4116 = vst.msk [vmem:[#allocation3 + $0x48] sm:$0xff] %vm4106, %v4029
      %4117 = vst.msk [vmem:[#allocation3 + $0x50] sm:$0xff] %vm4106, %v4031
      %4118 = vst.msk [vmem:[#allocation3 + $0x58] sm:$0xff] %vm4106, %v4033
      %4119 = vst.msk [vmem:[#allocation3 + $0x60] sm:$0xff] %vm4106, %v4035
      %4120 = vst.msk [vmem:[#allocation3 + $0x68] sm:$0xff] %vm4106, %v4037
      %4121 = vst.msk [vmem:[#allocation3 + $0x70] sm:$0xff] %vm4106, %v4039
      %4122 = vst.msk [vmem:[#allocation3 + $0x78] sm:$0xff] %vm4106, %v4041
      %4123 = vst.msk [vmem:[#allocation3 + $0x80] sm:$0xff] %vm4106, %v4043
      %4124 = vst.msk [vmem:[#allocation3 + $0x88] sm:$0xff] %vm4106, %v4045
      %4125 = vst.msk [vmem:[#allocation3 + $0x90] sm:$0xff] %vm4106, %v4047
      %4126 = vst.msk [vmem:[#allocation3 + $0x98] sm:$0xff] %vm4106, %v4049
      %4127 = vst.msk [vmem:[#allocation3 + $0xa0] sm:$0xff] %vm4106, %v4051
      %4128 = vst.msk [vmem:[#allocation3 + $0xa8] sm:$0xff] %vm4106, %v4053
      %4129 = vst.msk [vmem:[#allocation3 + $0xb0] sm:$0xff] %vm4106, %v4055
      %4130 = vst.msk [vmem:[#allocation3 + $0xb8] sm:$0xff] %vm4106, %v4057
      %4131 = vst.msk [vmem:[#allocation3 + $0xc0] sm:$0xff] %vm4106, %v4059
      %4132 = vst.msk [vmem:[#allocation3 + $0xc8] sm:$0xff] %vm4106, %v4061
      %4133 = vst.msk [vmem:[#allocation3 + $0xd0] sm:$0xff] %vm4106, %v4063
      %4134 = vst.msk [vmem:[#allocation3 + $0xd8] sm:$0xff] %vm4106, %v4065
      %4135 = vst.msk [vmem:[#allocation3 + $0xe0] sm:$0xff] %vm4106, %v4067
      %4136 = vst.msk [vmem:[#allocation3 + $0xe8] sm:$0xff] %vm4106, %v4069
      %4137 = vst.msk [vmem:[#allocation3 + $0xf0] sm:$0xff] %vm4106, %v4071
      %4138 = vst.msk [vmem:[#allocation3 + $0xf8] sm:$0xff] %vm4106, %v4073
      %s4139 = scalar_lea.vmem [#allocation2], 96
      %v4140 = vld [vmem:[%s4139] sm:$0xff]
      %v4141 = vld [vmem:[%s4139 + $0x8] sm:$0xff]
      %v4142 = vld [vmem:[%s4139 + $0x18] sm:$0xff]
      %v4143 = vld [vmem:[%s4139 + $0x20] sm:$0xff]
      %v4144 = vld [vmem:[%s4139 + $0x30] sm:$0xff]
      %v4145 = vld [vmem:[%s4139 + $0x38] sm:$0xff]
      %v4146 = vld [vmem:[%s4139 + $0x48] sm:$0xff]
      %v4147 = vld [vmem:[%s4139 + $0x50] sm:$0xff]
      %v4148 = vld [vmem:[%s4139 + $0x60] sm:$0xff]
      %v4149 = vld [vmem:[%s4139 + $0x68] sm:$0xff]
      %v4150 = vld [vmem:[%s4139 + $0x78] sm:$0xff]
      %v4151 = vld [vmem:[%s4139 + $0x80] sm:$0xff]
      %v4152 = vld [vmem:[%s4139 + $0x90] sm:$0xff]
      %v4153 = vld [vmem:[%s4139 + $0x98] sm:$0xff]
      %v4154 = vld [vmem:[%s4139 + $0xa8] sm:$0xff]
      %v4155 = vld [vmem:[%s4139 + $0xb0] sm:$0xff]
      %v4156 = vld [vmem:[%s4139 + $0xc0] sm:$0xff]
      %v4157 = vld [vmem:[%s4139 + $0xc8] sm:$0xff]
      %v4158 = vld [vmem:[%s4139 + $0xd8] sm:$0xff]
      %v4159 = vld [vmem:[%s4139 + $0xe0] sm:$0xff]
      %v4160 = vld [vmem:[%s4139 + $0xf0] sm:$0xff]
      %v4161 = vld [vmem:[%s4139 + $0xf8] sm:$0xff]
      %v4162 = vld [vmem:[%s4139 + $0x108] sm:$0xff]
      %v4163 = vld [vmem:[%s4139 + $0x110] sm:$0xff]
      %v4164 = vld [vmem:[%s4139 + $0x120] sm:$0xff]
      %v4165 = vld [vmem:[%s4139 + $0x128] sm:$0xff]
      %v4166 = vld [vmem:[%s4139 + $0x138] sm:$0xff]
      %v4167 = vld [vmem:[%s4139 + $0x140] sm:$0xff]
      %v4168 = vld [vmem:[%s4139 + $0x150] sm:$0xff]
      %v4169 = vld [vmem:[%s4139 + $0x158] sm:$0xff]
      %v4170 = vld [vmem:[%s4139 + $0x168] sm:$0xff]
      %v4171 = vld [vmem:[%s4139 + $0x170] sm:$0xff]
      %4204 = vrot.lane.b32.xlu0 %v4140, 80
      %v4205 = vpop.permute.xlu0 %4204
      %4206 = vrot.lane.b32.xlu0 %v4141, 80
      %v4207 = vpop.permute.xlu0 %4206
      %4208 = vrot.lane.b32.xlu0 %v4142, 80
      %v4209 = vpop.permute.xlu0 %4208
      %4210 = vrot.lane.b32.xlu0 %v4143, 80
      %v4211 = vpop.permute.xlu0 %4210
      %4212 = vrot.lane.b32.xlu0 %v4144, 80
      %v4213 = vpop.permute.xlu0 %4212
      %4214 = vrot.lane.b32.xlu0 %v4145, 80
      %v4215 = vpop.permute.xlu0 %4214
      %4216 = vrot.lane.b32.xlu0 %v4146, 80
      %v4217 = vpop.permute.xlu0 %4216
      %4218 = vrot.lane.b32.xlu0 %v4147, 80
      %v4219 = vpop.permute.xlu0 %4218
      %4220 = vrot.lane.b32.xlu0 %v4148, 80
      %v4221 = vpop.permute.xlu0 %4220
      %4222 = vrot.lane.b32.xlu0 %v4149, 80
      %v4223 = vpop.permute.xlu0 %4222
      %4224 = vrot.lane.b32.xlu0 %v4150, 80
      %v4225 = vpop.permute.xlu0 %4224
      %4226 = vrot.lane.b32.xlu0 %v4151, 80
      %v4227 = vpop.permute.xlu0 %4226
      %4228 = vrot.lane.b32.xlu0 %v4152, 80
      %v4229 = vpop.permute.xlu0 %4228
      %4230 = vrot.lane.b32.xlu0 %v4153, 80
      %v4231 = vpop.permute.xlu0 %4230
      %4232 = vrot.lane.b32.xlu0 %v4154, 80
      %v4233 = vpop.permute.xlu0 %4232
      %4234 = vrot.lane.b32.xlu0 %v4155, 80
      %v4235 = vpop.permute.xlu0 %4234
      %4236 = vrot.lane.b32.xlu0 %v4156, 80
      %v4237 = vpop.permute.xlu0 %4236
      %4238 = vrot.lane.b32.xlu0 %v4157, 80
      %v4239 = vpop.permute.xlu0 %4238
      %4240 = vrot.lane.b32.xlu0 %v4158, 80
      %v4241 = vpop.permute.xlu0 %4240
      %4242 = vrot.lane.b32.xlu0 %v4159, 80
      %v4243 = vpop.permute.xlu0 %4242
      %4244 = vrot.lane.b32.xlu0 %v4160, 80
      %v4245 = vpop.permute.xlu0 %4244
      %4246 = vrot.lane.b32.xlu0 %v4161, 80
      %v4247 = vpop.permute.xlu0 %4246
      %4248 = vrot.lane.b32.xlu0 %v4162, 80
      %v4249 = vpop.permute.xlu0 %4248
      %4250 = vrot.lane.b32.xlu0 %v4163, 80
      %v4251 = vpop.permute.xlu0 %4250
      %4252 = vrot.lane.b32.xlu0 %v4164, 80
      %v4253 = vpop.permute.xlu0 %4252
      %4254 = vrot.lane.b32.xlu0 %v4165, 80
      %v4255 = vpop.permute.xlu0 %4254
      %4256 = vrot.lane.b32.xlu0 %v4166, 80
      %v4257 = vpop.permute.xlu0 %4256
      %4258 = vrot.lane.b32.xlu0 %v4167, 80
      %v4259 = vpop.permute.xlu0 %4258
      %4260 = vrot.lane.b32.xlu0 %v4168, 80
      %v4261 = vpop.permute.xlu0 %4260
      %4262 = vrot.lane.b32.xlu0 %v4169, 80
      %v4263 = vpop.permute.xlu0 %4262
      %4264 = vrot.lane.b32.xlu0 %v4170, 80
      %v4265 = vpop.permute.xlu0 %4264
      %4266 = vrot.lane.b32.xlu0 %v4171, 80
      %v4267 = vpop.permute.xlu0 %4266
      %vm4300 = vcmask 687744
      %4301 = vst.msk [vmem:[#allocation3] sm:$0xff] %vm4300, %v4205
      %4302 = vst.msk [vmem:[#allocation3 + $0x8] sm:$0xff] %vm4300, %v4207
      %4303 = vst.msk [vmem:[#allocation3 + $0x10] sm:$0xff] %vm4300, %v4209
      %4304 = vst.msk [vmem:[#allocation3 + $0x18] sm:$0xff] %vm4300, %v4211
      %4305 = vst.msk [vmem:[#allocation3 + $0x20] sm:$0xff] %vm4300, %v4213
      %4306 = vst.msk [vmem:[#allocation3 + $0x28] sm:$0xff] %vm4300, %v4215
      %4307 = vst.msk [vmem:[#allocation3 + $0x30] sm:$0xff] %vm4300, %v4217
      %4308 = vst.msk [vmem:[#allocation3 + $0x38] sm:$0xff] %vm4300, %v4219
      %4309 = vst.msk [vmem:[#allocation3 + $0x40] sm:$0xff] %vm4300, %v4221
      %4310 = vst.msk [vmem:[#allocation3 + $0x48] sm:$0xff] %vm4300, %v4223
      %4311 = vst.msk [vmem:[#allocation3 + $0x50] sm:$0xff] %vm4300, %v4225
      %4312 = vst.msk [vmem:[#allocation3 + $0x58] sm:$0xff] %vm4300, %v4227
      %4313 = vst.msk [vmem:[#allocation3 + $0x60] sm:$0xff] %vm4300, %v4229
      %4314 = vst.msk [vmem:[#allocation3 + $0x68] sm:$0xff] %vm4300, %v4231
      %4315 = vst.msk [vmem:[#allocation3 + $0x70] sm:$0xff] %vm4300, %v4233
      %4316 = vst.msk [vmem:[#allocation3 + $0x78] sm:$0xff] %vm4300, %v4235
      %4317 = vst.msk [vmem:[#allocation3 + $0x80] sm:$0xff] %vm4300, %v4237
      %4318 = vst.msk [vmem:[#allocation3 + $0x88] sm:$0xff] %vm4300, %v4239
      %4319 = vst.msk [vmem:[#allocation3 + $0x90] sm:$0xff] %vm4300, %v4241
      %4320 = vst.msk [vmem:[#allocation3 + $0x98] sm:$0xff] %vm4300, %v4243
      %4321 = vst.msk [vmem:[#allocation3 + $0xa0] sm:$0xff] %vm4300, %v4245
      %4322 = vst.msk [vmem:[#allocation3 + $0xa8] sm:$0xff] %vm4300, %v4247
      %4323 = vst.msk [vmem:[#allocation3 + $0xb0] sm:$0xff] %vm4300, %v4249
      %4324 = vst.msk [vmem:[#allocation3 + $0xb8] sm:$0xff] %vm4300, %v4251
      %4325 = vst.msk [vmem:[#allocation3 + $0xc0] sm:$0xff] %vm4300, %v4253
      %4326 = vst.msk [vmem:[#allocation3 + $0xc8] sm:$0xff] %vm4300, %v4255
      %4327 = vst.msk [vmem:[#allocation3 + $0xd0] sm:$0xff] %vm4300, %v4257
      %4328 = vst.msk [vmem:[#allocation3 + $0xd8] sm:$0xff] %vm4300, %v4259
      %4329 = vst.msk [vmem:[#allocation3 + $0xe0] sm:$0xff] %vm4300, %v4261
      %4330 = vst.msk [vmem:[#allocation3 + $0xe8] sm:$0xff] %vm4300, %v4263
      %4331 = vst.msk [vmem:[#allocation3 + $0xf0] sm:$0xff] %vm4300, %v4265
      %4332 = vst.msk [vmem:[#allocation3 + $0xf8] sm:$0xff] %vm4300, %v4267
      %v4333 = vld [vmem:[%s4139 + $0x1] sm:$0xff]
      %v4334 = vld [vmem:[%s4139 + $0x9] sm:$0xff]
      %v4335 = vld [vmem:[%s4139 + $0x19] sm:$0xff]
      %v4336 = vld [vmem:[%s4139 + $0x21] sm:$0xff]
      %v4337 = vld [vmem:[%s4139 + $0x31] sm:$0xff]
      %v4338 = vld [vmem:[%s4139 + $0x39] sm:$0xff]
      %v4339 = vld [vmem:[%s4139 + $0x49] sm:$0xff]
      %v4340 = vld [vmem:[%s4139 + $0x51] sm:$0xff]
      %v4341 = vld [vmem:[%s4139 + $0x61] sm:$0xff]
      %v4342 = vld [vmem:[%s4139 + $0x69] sm:$0xff]
      %v4343 = vld [vmem:[%s4139 + $0x79] sm:$0xff]
      %v4344 = vld [vmem:[%s4139 + $0x81] sm:$0xff]
      %v4345 = vld [vmem:[%s4139 + $0x91] sm:$0xff]
      %v4346 = vld [vmem:[%s4139 + $0x99] sm:$0xff]
      %v4347 = vld [vmem:[%s4139 + $0xa9] sm:$0xff]
      %v4348 = vld [vmem:[%s4139 + $0xb1] sm:$0xff]
      %v4349 = vld [vmem:[%s4139 + $0xc1] sm:$0xff]
      %v4350 = vld [vmem:[%s4139 + $0xc9] sm:$0xff]
      %v4351 = vld [vmem:[%s4139 + $0xd9] sm:$0xff]
      %v4352 = vld [vmem:[%s4139 + $0xe1] sm:$0xff]
      %v4353 = vld [vmem:[%s4139 + $0xf1] sm:$0xff]
      %v4354 = vld [vmem:[%s4139 + $0xf9] sm:$0xff]
      %v4355 = vld [vmem:[%s4139 + $0x109] sm:$0xff]
      %v4356 = vld [vmem:[%s4139 + $0x111] sm:$0xff]
      %v4357 = vld [vmem:[%s4139 + $0x121] sm:$0xff]
      %v4358 = vld [vmem:[%s4139 + $0x129] sm:$0xff]
      %v4359 = vld [vmem:[%s4139 + $0x139] sm:$0xff]
      %v4360 = vld [vmem:[%s4139 + $0x141] sm:$0xff]
      %v4361 = vld [vmem:[%s4139 + $0x151] sm:$0xff]
      %v4362 = vld [vmem:[%s4139 + $0x159] sm:$0xff]
      %v4363 = vld [vmem:[%s4139 + $0x169] sm:$0xff]
      %v4364 = vld [vmem:[%s4139 + $0x171] sm:$0xff]
      %4397 = vrot.lane.b32.xlu0 %v4333, 84
      %v4398 = vpop.permute.xlu0 %4397
      %4399 = vrot.lane.b32.xlu0 %v4334, 84
      %v4400 = vpop.permute.xlu0 %4399
      %4401 = vrot.lane.b32.xlu0 %v4335, 84
      %v4402 = vpop.permute.xlu0 %4401
      %4403 = vrot.lane.b32.xlu0 %v4336, 84
      %v4404 = vpop.permute.xlu0 %4403
      %4405 = vrot.lane.b32.xlu0 %v4337, 84
      %v4406 = vpop.permute.xlu0 %4405
      %4407 = vrot.lane.b32.xlu0 %v4338, 84
      %v4408 = vpop.permute.xlu0 %4407
      %4409 = vrot.lane.b32.xlu0 %v4339, 84
      %v4410 = vpop.permute.xlu0 %4409
      %4411 = vrot.lane.b32.xlu0 %v4340, 84
      %v4412 = vpop.permute.xlu0 %4411
      %4413 = vrot.lane.b32.xlu0 %v4341, 84
      %v4414 = vpop.permute.xlu0 %4413
      %4415 = vrot.lane.b32.xlu0 %v4342, 84
      %v4416 = vpop.permute.xlu0 %4415
      %4417 = vrot.lane.b32.xlu0 %v4343, 84
      %v4418 = vpop.permute.xlu0 %4417
      %4419 = vrot.lane.b32.xlu0 %v4344, 84
      %v4420 = vpop.permute.xlu0 %4419
      %4421 = vrot.lane.b32.xlu0 %v4345, 84
      %v4422 = vpop.permute.xlu0 %4421
      %4423 = vrot.lane.b32.xlu0 %v4346, 84
      %v4424 = vpop.permute.xlu0 %4423
      %4425 = vrot.lane.b32.xlu0 %v4347, 84
      %v4426 = vpop.permute.xlu0 %4425
      %4427 = vrot.lane.b32.xlu0 %v4348, 84
      %v4428 = vpop.permute.xlu0 %4427
      %4429 = vrot.lane.b32.xlu0 %v4349, 84
      %v4430 = vpop.permute.xlu0 %4429
      %4431 = vrot.lane.b32.xlu0 %v4350, 84
      %v4432 = vpop.permute.xlu0 %4431
      %4433 = vrot.lane.b32.xlu0 %v4351, 84
      %v4434 = vpop.permute.xlu0 %4433
      %4435 = vrot.lane.b32.xlu0 %v4352, 84
      %v4436 = vpop.permute.xlu0 %4435
      %4437 = vrot.lane.b32.xlu0 %v4353, 84
      %v4438 = vpop.permute.xlu0 %4437
      %4439 = vrot.lane.b32.xlu0 %v4354, 84
      %v4440 = vpop.permute.xlu0 %4439
      %4441 = vrot.lane.b32.xlu0 %v4355, 84
      %v4442 = vpop.permute.xlu0 %4441
      %4443 = vrot.lane.b32.xlu0 %v4356, 84
      %v4444 = vpop.permute.xlu0 %4443
      %4445 = vrot.lane.b32.xlu0 %v4357, 84
      %v4446 = vpop.permute.xlu0 %4445
      %4447 = vrot.lane.b32.xlu0 %v4358, 84
      %v4448 = vpop.permute.xlu0 %4447
      %4449 = vrot.lane.b32.xlu0 %v4359, 84
      %v4450 = vpop.permute.xlu0 %4449
      %4451 = vrot.lane.b32.xlu0 %v4360, 84
      %v4452 = vpop.permute.xlu0 %4451
      %4453 = vrot.lane.b32.xlu0 %v4361, 84
      %v4454 = vpop.permute.xlu0 %4453
      %4455 = vrot.lane.b32.xlu0 %v4362, 84
      %v4456 = vpop.permute.xlu0 %4455
      %4457 = vrot.lane.b32.xlu0 %v4363, 84
      %v4458 = vpop.permute.xlu0 %4457
      %4459 = vrot.lane.b32.xlu0 %v4364, 84
      %v4460 = vpop.permute.xlu0 %4459
      %vm4493 = vcmask 720544
      %4494 = vst.msk [vmem:[#allocation3] sm:$0xff] %vm4493, %v4398
      %4495 = vst.msk [vmem:[#allocation3 + $0x8] sm:$0xff] %vm4493, %v4400
      %4496 = vst.msk [vmem:[#allocation3 + $0x10] sm:$0xff] %vm4493, %v4402
      %4497 = vst.msk [vmem:[#allocation3 + $0x18] sm:$0xff] %vm4493, %v4404
      %4498 = vst.msk [vmem:[#allocation3 + $0x20] sm:$0xff] %vm4493, %v4406
      %4499 = vst.msk [vmem:[#allocation3 + $0x28] sm:$0xff] %vm4493, %v4408
      %4500 = vst.msk [vmem:[#allocation3 + $0x30] sm:$0xff] %vm4493, %v4410
      %4501 = vst.msk [vmem:[#allocation3 + $0x38] sm:$0xff] %vm4493, %v4412
      %4502 = vst.msk [vmem:[#allocation3 + $0x40] sm:$0xff] %vm4493, %v4414
      %4503 = vst.msk [vmem:[#allocation3 + $0x48] sm:$0xff] %vm4493, %v4416
      %4504 = vst.msk [vmem:[#allocation3 + $0x50] sm:$0xff] %vm4493, %v4418
      %4505 = vst.msk [vmem:[#allocation3 + $0x58] sm:$0xff] %vm4493, %v4420
      %4506 = vst.msk [vmem:[#allocation3 + $0x60] sm:$0xff] %vm4493, %v4422
      %4507 = vst.msk [vmem:[#allocation3 + $0x68] sm:$0xff] %vm4493, %v4424
      %4508 = vst.msk [vmem:[#allocation3 + $0x70] sm:$0xff] %vm4493, %v4426
      %4509 = vst.msk [vmem:[#allocation3 + $0x78] sm:$0xff] %vm4493, %v4428
      %4510 = vst.msk [vmem:[#allocation3 + $0x80] sm:$0xff] %vm4493, %v4430
      %4511 = vst.msk [vmem:[#allocation3 + $0x88] sm:$0xff] %vm4493, %v4432
      %4512 = vst.msk [vmem:[#allocation3 + $0x90] sm:$0xff] %vm4493, %v4434
      %4513 = vst.msk [vmem:[#allocation3 + $0x98] sm:$0xff] %vm4493, %v4436
      %4514 = vst.msk [vmem:[#allocation3 + $0xa0] sm:$0xff] %vm4493, %v4438
      %4515 = vst.msk [vmem:[#allocation3 + $0xa8] sm:$0xff] %vm4493, %v4440
      %4516 = vst.msk [vmem:[#allocation3 + $0xb0] sm:$0xff] %vm4493, %v4442
      %4517 = vst.msk [vmem:[#allocation3 + $0xb8] sm:$0xff] %vm4493, %v4444
      %4518 = vst.msk [vmem:[#allocation3 + $0xc0] sm:$0xff] %vm4493, %v4446
      %4519 = vst.msk [vmem:[#allocation3 + $0xc8] sm:$0xff] %vm4493, %v4448
      %4520 = vst.msk [vmem:[#allocation3 + $0xd0] sm:$0xff] %vm4493, %v4450
      %4521 = vst.msk [vmem:[#allocation3 + $0xd8] sm:$0xff] %vm4493, %v4452
      %4522 = vst.msk [vmem:[#allocation3 + $0xe0] sm:$0xff] %vm4493, %v4454
      %4523 = vst.msk [vmem:[#allocation3 + $0xe8] sm:$0xff] %vm4493, %v4456
      %4524 = vst.msk [vmem:[#allocation3 + $0xf0] sm:$0xff] %vm4493, %v4458
      %4525 = vst.msk [vmem:[#allocation3 + $0xf8] sm:$0xff] %vm4493, %v4460
      %v4526 = vld [vmem:[%s4139 + $0x2] sm:$0xff]
      %v4527 = vld [vmem:[%s4139 + $0xa] sm:$0xff]
      %v4528 = vld [vmem:[%s4139 + $0x1a] sm:$0xff]
      %v4529 = vld [vmem:[%s4139 + $0x22] sm:$0xff]
      %v4530 = vld [vmem:[%s4139 + $0x32] sm:$0xff]
      %v4531 = vld [vmem:[%s4139 + $0x3a] sm:$0xff]
      %v4532 = vld [vmem:[%s4139 + $0x4a] sm:$0xff]
      %v4533 = vld [vmem:[%s4139 + $0x52] sm:$0xff]
      %v4534 = vld [vmem:[%s4139 + $0x62] sm:$0xff]
      %v4535 = vld [vmem:[%s4139 + $0x6a] sm:$0xff]
      %v4536 = vld [vmem:[%s4139 + $0x7a] sm:$0xff]
      %v4537 = vld [vmem:[%s4139 + $0x82] sm:$0xff]
      %v4538 = vld [vmem:[%s4139 + $0x92] sm:$0xff]
      %v4539 = vld [vmem:[%s4139 + $0x9a] sm:$0xff]
      %v4540 = vld [vmem:[%s4139 + $0xaa] sm:$0xff]
      %v4541 = vld [vmem:[%s4139 + $0xb2] sm:$0xff]
      %v4542 = vld [vmem:[%s4139 + $0xc2] sm:$0xff]
      %v4543 = vld [vmem:[%s4139 + $0xca] sm:$0xff]
      %v4544 = vld [vmem:[%s4139 + $0xda] sm:$0xff]
      %v4545 = vld [vmem:[%s4139 + $0xe2] sm:$0xff]
      %v4546 = vld [vmem:[%s4139 + $0xf2] sm:$0xff]
      %v4547 = vld [vmem:[%s4139 + $0xfa] sm:$0xff]
      %v4548 = vld [vmem:[%s4139 + $0x10a] sm:$0xff]
      %v4549 = vld [vmem:[%s4139 + $0x112] sm:$0xff]
      %v4550 = vld [vmem:[%s4139 + $0x122] sm:$0xff]
      %v4551 = vld [vmem:[%s4139 + $0x12a] sm:$0xff]
      %v4552 = vld [vmem:[%s4139 + $0x13a] sm:$0xff]
      %v4553 = vld [vmem:[%s4139 + $0x142] sm:$0xff]
      %v4554 = vld [vmem:[%s4139 + $0x152] sm:$0xff]
      %v4555 = vld [vmem:[%s4139 + $0x15a] sm:$0xff]
      %v4556 = vld [vmem:[%s4139 + $0x16a] sm:$0xff]
      %v4557 = vld [vmem:[%s4139 + $0x172] sm:$0xff]
      %4590 = vrot.lane.b32.xlu0 %v4526, 88
      %v4591 = vpop.permute.xlu0 %4590
      %4592 = vrot.lane.b32.xlu0 %v4527, 88
      %v4593 = vpop.permute.xlu0 %4592
      %4594 = vrot.lane.b32.xlu0 %v4528, 88
      %v4595 = vpop.permute.xlu0 %4594
      %4596 = vrot.lane.b32.xlu0 %v4529, 88
      %v4597 = vpop.permute.xlu0 %4596
      %4598 = vrot.lane.b32.xlu0 %v4530, 88
      %v4599 = vpop.permute.xlu0 %4598
      %4600 = vrot.lane.b32.xlu0 %v4531, 88
      %v4601 = vpop.permute.xlu0 %4600
      %4602 = vrot.lane.b32.xlu0 %v4532, 88
      %v4603 = vpop.permute.xlu0 %4602
      %4604 = vrot.lane.b32.xlu0 %v4533, 88
      %v4605 = vpop.permute.xlu0 %4604
      %4606 = vrot.lane.b32.xlu0 %v4534, 88
      %v4607 = vpop.permute.xlu0 %4606
      %4608 = vrot.lane.b32.xlu0 %v4535, 88
      %v4609 = vpop.permute.xlu0 %4608
      %4610 = vrot.lane.b32.xlu0 %v4536, 88
      %v4611 = vpop.permute.xlu0 %4610
      %4612 = vrot.lane.b32.xlu0 %v4537, 88
      %v4613 = vpop.permute.xlu0 %4612
      %4614 = vrot.lane.b32.xlu0 %v4538, 88
      %v4615 = vpop.permute.xlu0 %4614
      %4616 = vrot.lane.b32.xlu0 %v4539, 88
      %v4617 = vpop.permute.xlu0 %4616
      %4618 = vrot.lane.b32.xlu0 %v4540, 88
      %v4619 = vpop.permute.xlu0 %4618
      %4620 = vrot.lane.b32.xlu0 %v4541, 88
      %v4621 = vpop.permute.xlu0 %4620
      %4622 = vrot.lane.b32.xlu0 %v4542, 88
      %v4623 = vpop.permute.xlu0 %4622
      %4624 = vrot.lane.b32.xlu0 %v4543, 88
      %v4625 = vpop.permute.xlu0 %4624
      %4626 = vrot.lane.b32.xlu0 %v4544, 88
      %v4627 = vpop.permute.xlu0 %4626
      %4628 = vrot.lane.b32.xlu0 %v4545, 88
      %v4629 = vpop.permute.xlu0 %4628
      %4630 = vrot.lane.b32.xlu0 %v4546, 88
      %v4631 = vpop.permute.xlu0 %4630
      %4632 = vrot.lane.b32.xlu0 %v4547, 88
      %v4633 = vpop.permute.xlu0 %4632
      %4634 = vrot.lane.b32.xlu0 %v4548, 88
      %v4635 = vpop.permute.xlu0 %4634
      %4636 = vrot.lane.b32.xlu0 %v4549, 88
      %v4637 = vpop.permute.xlu0 %4636
      %4638 = vrot.lane.b32.xlu0 %v4550, 88
      %v4639 = vpop.permute.xlu0 %4638
      %4640 = vrot.lane.b32.xlu0 %v4551, 88
      %v4641 = vpop.permute.xlu0 %4640
      %4642 = vrot.lane.b32.xlu0 %v4552, 88
      %v4643 = vpop.permute.xlu0 %4642
      %4644 = vrot.lane.b32.xlu0 %v4553, 88
      %v4645 = vpop.permute.xlu0 %4644
      %4646 = vrot.lane.b32.xlu0 %v4554, 88
      %v4647 = vpop.permute.xlu0 %4646
      %4648 = vrot.lane.b32.xlu0 %v4555, 88
      %v4649 = vpop.permute.xlu0 %4648
      %4650 = vrot.lane.b32.xlu0 %v4556, 88
      %v4651 = vpop.permute.xlu0 %4650
      %4652 = vrot.lane.b32.xlu0 %v4557, 88
      %v4653 = vpop.permute.xlu0 %4652
      %vm4686 = vcmask 753344
      %4687 = vst.msk [vmem:[#allocation3] sm:$0xff] %vm4686, %v4591
      %4688 = vst.msk [vmem:[#allocation3 + $0x8] sm:$0xff] %vm4686, %v4593
      %4689 = vst.msk [vmem:[#allocation3 + $0x10] sm:$0xff] %vm4686, %v4595
      %4690 = vst.msk [vmem:[#allocation3 + $0x18] sm:$0xff] %vm4686, %v4597
      %4691 = vst.msk [vmem:[#allocation3 + $0x20] sm:$0xff] %vm4686, %v4599
      %4692 = vst.msk [vmem:[#allocation3 + $0x28] sm:$0xff] %vm4686, %v4601
      %4693 = vst.msk [vmem:[#allocation3 + $0x30] sm:$0xff] %vm4686, %v4603
      %4694 = vst.msk [vmem:[#allocation3 + $0x38] sm:$0xff] %vm4686, %v4605
      %4695 = vst.msk [vmem:[#allocation3 + $0x40] sm:$0xff] %vm4686, %v4607
      %4696 = vst.msk [vmem:[#allocation3 + $0x48] sm:$0xff] %vm4686, %v4609
      %4697 = vst.msk [vmem:[#allocation3 + $0x50] sm:$0xff] %vm4686, %v4611
      %4698 = vst.msk [vmem:[#allocation3 + $0x58] sm:$0xff] %vm4686, %v4613
      %4699 = vst.msk [vmem:[#allocation3 + $0x60] sm:$0xff] %vm4686, %v4615
      %4700 = vst.msk [vmem:[#allocation3 + $0x68] sm:$0xff] %vm4686, %v4617
      %4701 = vst.msk [vmem:[#allocation3 + $0x70] sm:$0xff] %vm4686, %v4619
      %4702 = vst.msk [vmem:[#allocation3 + $0x78] sm:$0xff] %vm4686, %v4621
      %4703 = vst.msk [vmem:[#allocation3 + $0x80] sm:$0xff] %vm4686, %v4623
      %4704 = vst.msk [vmem:[#allocation3 + $0x88] sm:$0xff] %vm4686, %v4625
      %4705 = vst.msk [vmem:[#allocation3 + $0x90] sm:$0xff] %vm4686, %v4627
      %4706 = vst.msk [vmem:[#allocation3 + $0x98] sm:$0xff] %vm4686, %v4629
      %4707 = vst.msk [vmem:[#allocation3 + $0xa0] sm:$0xff] %vm4686, %v4631
      %4708 = vst.msk [vmem:[#allocation3 + $0xa8] sm:$0xff] %vm4686, %v4633
      %4709 = vst.msk [vmem:[#allocation3 + $0xb0] sm:$0xff] %vm4686, %v4635
      %4710 = vst.msk [vmem:[#allocation3 + $0xb8] sm:$0xff] %vm4686, %v4637
      %4711 = vst.msk [vmem:[#allocation3 + $0xc0] sm:$0xff] %vm4686, %v4639
      %4712 = vst.msk [vmem:[#allocation3 + $0xc8] sm:$0xff] %vm4686, %v4641
      %4713 = vst.msk [vmem:[#allocation3 + $0xd0] sm:$0xff] %vm4686, %v4643
      %4714 = vst.msk [vmem:[#allocation3 + $0xd8] sm:$0xff] %vm4686, %v4645
      %4715 = vst.msk [vmem:[#allocation3 + $0xe0] sm:$0xff] %vm4686, %v4647
      %4716 = vst.msk [vmem:[#allocation3 + $0xe8] sm:$0xff] %vm4686, %v4649
      %4717 = vst.msk [vmem:[#allocation3 + $0xf0] sm:$0xff] %vm4686, %v4651
      %4718 = vst.msk [vmem:[#allocation3 + $0xf8] sm:$0xff] %vm4686, %v4653
      %v4719 = vld [vmem:[%s4139 + $0x3] sm:$0xff]
      %v4720 = vld [vmem:[%s4139 + $0xb] sm:$0xff]
      %v4721 = vld [vmem:[%s4139 + $0x1b] sm:$0xff]
      %v4722 = vld [vmem:[%s4139 + $0x23] sm:$0xff]
      %v4723 = vld [vmem:[%s4139 + $0x33] sm:$0xff]
      %v4724 = vld [vmem:[%s4139 + $0x3b] sm:$0xff]
      %v4725 = vld [vmem:[%s4139 + $0x4b] sm:$0xff]
      %v4726 = vld [vmem:[%s4139 + $0x53] sm:$0xff]
      %v4727 = vld [vmem:[%s4139 + $0x63] sm:$0xff]
      %v4728 = vld [vmem:[%s4139 + $0x6b] sm:$0xff]
      %v4729 = vld [vmem:[%s4139 + $0x7b] sm:$0xff]
      %v4730 = vld [vmem:[%s4139 + $0x83] sm:$0xff]
      %v4731 = vld [vmem:[%s4139 + $0x93] sm:$0xff]
      %v4732 = vld [vmem:[%s4139 + $0x9b] sm:$0xff]
      %v4733 = vld [vmem:[%s4139 + $0xab] sm:$0xff]
      %v4734 = vld [vmem:[%s4139 + $0xb3] sm:$0xff]
      %v4735 = vld [vmem:[%s4139 + $0xc3] sm:$0xff]
      %v4736 = vld [vmem:[%s4139 + $0xcb] sm:$0xff]
      %v4737 = vld [vmem:[%s4139 + $0xdb] sm:$0xff]
      %v4738 = vld [vmem:[%s4139 + $0xe3] sm:$0xff]
      %v4739 = vld [vmem:[%s4139 + $0xf3] sm:$0xff]
      %v4740 = vld [vmem:[%s4139 + $0xfb] sm:$0xff]
      %v4741 = vld [vmem:[%s4139 + $0x10b] sm:$0xff]
      %v4742 = vld [vmem:[%s4139 + $0x113] sm:$0xff]
      %v4743 = vld [vmem:[%s4139 + $0x123] sm:$0xff]
      %v4744 = vld [vmem:[%s4139 + $0x12b] sm:$0xff]
      %v4745 = vld [vmem:[%s4139 + $0x13b] sm:$0xff]
      %v4746 = vld [vmem:[%s4139 + $0x143] sm:$0xff]
      %v4747 = vld [vmem:[%s4139 + $0x153] sm:$0xff]
      %v4748 = vld [vmem:[%s4139 + $0x15b] sm:$0xff]
      %v4749 = vld [vmem:[%s4139 + $0x16b] sm:$0xff]
      %v4750 = vld [vmem:[%s4139 + $0x173] sm:$0xff]
      %4783 = vrot.lane.b32.xlu0 %v4719, 92
      %v4784 = vpop.permute.xlu0 %4783
      %4785 = vrot.lane.b32.xlu0 %v4720, 92
      %v4786 = vpop.permute.xlu0 %4785
      %4787 = vrot.lane.b32.xlu0 %v4721, 92
      %v4788 = vpop.permute.xlu0 %4787
      %4789 = vrot.lane.b32.xlu0 %v4722, 92
      %v4790 = vpop.permute.xlu0 %4789
      %4791 = vrot.lane.b32.xlu0 %v4723, 92
      %v4792 = vpop.permute.xlu0 %4791
      %4793 = vrot.lane.b32.xlu0 %v4724, 92
      %v4794 = vpop.permute.xlu0 %4793
      %4795 = vrot.lane.b32.xlu0 %v4725, 92
      %v4796 = vpop.permute.xlu0 %4795
      %4797 = vrot.lane.b32.xlu0 %v4726, 92
      %v4798 = vpop.permute.xlu0 %4797
      %4799 = vrot.lane.b32.xlu0 %v4727, 92
      %v4800 = vpop.permute.xlu0 %4799
      %4801 = vrot.lane.b32.xlu0 %v4728, 92
      %v4802 = vpop.permute.xlu0 %4801
      %4803 = vrot.lane.b32.xlu0 %v4729, 92
      %v4804 = vpop.permute.xlu0 %4803
      %4805 = vrot.lane.b32.xlu0 %v4730, 92
      %v4806 = vpop.permute.xlu0 %4805
      %4807 = vrot.lane.b32.xlu0 %v4731, 92
      %v4808 = vpop.permute.xlu0 %4807
      %4809 = vrot.lane.b32.xlu0 %v4732, 92
      %v4810 = vpop.permute.xlu0 %4809
      %4811 = vrot.lane.b32.xlu0 %v4733, 92
      %v4812 = vpop.permute.xlu0 %4811
      %4813 = vrot.lane.b32.xlu0 %v4734, 92
      %v4814 = vpop.permute.xlu0 %4813
      %4815 = vrot.lane.b32.xlu0 %v4735, 92
      %v4816 = vpop.permute.xlu0 %4815
      %4817 = vrot.lane.b32.xlu0 %v4736, 92
      %v4818 = vpop.permute.xlu0 %4817
      %4819 = vrot.lane.b32.xlu0 %v4737, 92
      %v4820 = vpop.permute.xlu0 %4819
      %4821 = vrot.lane.b32.xlu0 %v4738, 92
      %v4822 = vpop.permute.xlu0 %4821
      %4823 = vrot.lane.b32.xlu0 %v4739, 92
      %v4824 = vpop.permute.xlu0 %4823
      %4825 = vrot.lane.b32.xlu0 %v4740, 92
      %v4826 = vpop.permute.xlu0 %4825
      %4827 = vrot.lane.b32.xlu0 %v4741, 92
      %v4828 = vpop.permute.xlu0 %4827
      %4829 = vrot.lane.b32.xlu0 %v4742, 92
      %v4830 = vpop.permute.xlu0 %4829
      %4831 = vrot.lane.b32.xlu0 %v4743, 92
      %v4832 = vpop.permute.xlu0 %4831
      %4833 = vrot.lane.b32.xlu0 %v4744, 92
      %v4834 = vpop.permute.xlu0 %4833
      %4835 = vrot.lane.b32.xlu0 %v4745, 92
      %v4836 = vpop.permute.xlu0 %4835
      %4837 = vrot.lane.b32.xlu0 %v4746, 92
      %v4838 = vpop.permute.xlu0 %4837
      %4839 = vrot.lane.b32.xlu0 %v4747, 92
      %v4840 = vpop.permute.xlu0 %4839
      %4841 = vrot.lane.b32.xlu0 %v4748, 92
      %v4842 = vpop.permute.xlu0 %4841
      %4843 = vrot.lane.b32.xlu0 %v4749, 92
      %v4844 = vpop.permute.xlu0 %4843
      %4845 = vrot.lane.b32.xlu0 %v4750, 92
      %v4846 = vpop.permute.xlu0 %4845
      %vm4879 = vcmask 786144
      %4880 = vst.msk [vmem:[#allocation3] sm:$0xff] %vm4879, %v4784
      %4881 = vst.msk [vmem:[#allocation3 + $0x8] sm:$0xff] %vm4879, %v4786
      %4882 = vst.msk [vmem:[#allocation3 + $0x10] sm:$0xff] %vm4879, %v4788
      %4883 = vst.msk [vmem:[#allocation3 + $0x18] sm:$0xff] %vm4879, %v4790
      %4884 = vst.msk [vmem:[#allocation3 + $0x20] sm:$0xff] %vm4879, %v4792
      %4885 = vst.msk [vmem:[#allocation3 + $0x28] sm:$0xff] %vm4879, %v4794
      %4886 = vst.msk [vmem:[#allocation3 + $0x30] sm:$0xff] %vm4879, %v4796
      %4887 = vst.msk [vmem:[#allocation3 + $0x38] sm:$0xff] %vm4879, %v4798
      %4888 = vst.msk [vmem:[#allocation3 + $0x40] sm:$0xff] %vm4879, %v4800
      %4889 = vst.msk [vmem:[#allocation3 + $0x48] sm:$0xff] %vm4879, %v4802
      %4890 = vst.msk [vmem:[#allocation3 + $0x50] sm:$0xff] %vm4879, %v4804
      %4891 = vst.msk [vmem:[#allocation3 + $0x58] sm:$0xff] %vm4879, %v4806
      %4892 = vst.msk [vmem:[#allocation3 + $0x60] sm:$0xff] %vm4879, %v4808
      %4893 = vst.msk [vmem:[#allocation3 + $0x68] sm:$0xff] %vm4879, %v4810
      %4894 = vst.msk [vmem:[#allocation3 + $0x70] sm:$0xff] %vm4879, %v4812
      %4895 = vst.msk [vmem:[#allocation3 + $0x78] sm:$0xff] %vm4879, %v4814
      %4896 = vst.msk [vmem:[#allocation3 + $0x80] sm:$0xff] %vm4879, %v4816
      %4897 = vst.msk [vmem:[#allocation3 + $0x88] sm:$0xff] %vm4879, %v4818
      %4898 = vst.msk [vmem:[#allocation3 + $0x90] sm:$0xff] %vm4879, %v4820
      %4899 = vst.msk [vmem:[#allocation3 + $0x98] sm:$0xff] %vm4879, %v4822
      %4900 = vst.msk [vmem:[#allocation3 + $0xa0] sm:$0xff] %vm4879, %v4824
      %4901 = vst.msk [vmem:[#allocation3 + $0xa8] sm:$0xff] %vm4879, %v4826
      %4902 = vst.msk [vmem:[#allocation3 + $0xb0] sm:$0xff] %vm4879, %v4828
      %4903 = vst.msk [vmem:[#allocation3 + $0xb8] sm:$0xff] %vm4879, %v4830
      %4904 = vst.msk [vmem:[#allocation3 + $0xc0] sm:$0xff] %vm4879, %v4832
      %4905 = vst.msk [vmem:[#allocation3 + $0xc8] sm:$0xff] %vm4879, %v4834
      %4906 = vst.msk [vmem:[#allocation3 + $0xd0] sm:$0xff] %vm4879, %v4836
      %4907 = vst.msk [vmem:[#allocation3 + $0xd8] sm:$0xff] %vm4879, %v4838
      %4908 = vst.msk [vmem:[#allocation3 + $0xe0] sm:$0xff] %vm4879, %v4840
      %4909 = vst.msk [vmem:[#allocation3 + $0xe8] sm:$0xff] %vm4879, %v4842
      %4910 = vst.msk [vmem:[#allocation3 + $0xf0] sm:$0xff] %vm4879, %v4844
      %4911 = vst.msk [vmem:[#allocation3 + $0xf8] sm:$0xff] %vm4879, %v4846
      %v4912 = vld [vmem:[%s4139 + $0x4] sm:$0xff]
      %v4913 = vld [vmem:[%s4139 + $0xc] sm:$0xff]
      %v4914 = vld [vmem:[%s4139 + $0x1c] sm:$0xff]
      %v4915 = vld [vmem:[%s4139 + $0x24] sm:$0xff]
      %v4916 = vld [vmem:[%s4139 + $0x34] sm:$0xff]
      %v4917 = vld [vmem:[%s4139 + $0x3c] sm:$0xff]
      %v4918 = vld [vmem:[%s4139 + $0x4c] sm:$0xff]
      %v4919 = vld [vmem:[%s4139 + $0x54] sm:$0xff]
      %v4920 = vld [vmem:[%s4139 + $0x64] sm:$0xff]
      %v4921 = vld [vmem:[%s4139 + $0x6c] sm:$0xff]
      %v4922 = vld [vmem:[%s4139 + $0x7c] sm:$0xff]
      %v4923 = vld [vmem:[%s4139 + $0x84] sm:$0xff]
      %v4924 = vld [vmem:[%s4139 + $0x94] sm:$0xff]
      %v4925 = vld [vmem:[%s4139 + $0x9c] sm:$0xff]
      %v4926 = vld [vmem:[%s4139 + $0xac] sm:$0xff]
      %v4927 = vld [vmem:[%s4139 + $0xb4] sm:$0xff]
      %v4928 = vld [vmem:[%s4139 + $0xc4] sm:$0xff]
      %v4929 = vld [vmem:[%s4139 + $0xcc] sm:$0xff]
      %v4930 = vld [vmem:[%s4139 + $0xdc] sm:$0xff]
      %v4931 = vld [vmem:[%s4139 + $0xe4] sm:$0xff]
      %v4932 = vld [vmem:[%s4139 + $0xf4] sm:$0xff]
      %v4933 = vld [vmem:[%s4139 + $0xfc] sm:$0xff]
      %v4934 = vld [vmem:[%s4139 + $0x10c] sm:$0xff]
      %v4935 = vld [vmem:[%s4139 + $0x114] sm:$0xff]
      %v4936 = vld [vmem:[%s4139 + $0x124] sm:$0xff]
      %v4937 = vld [vmem:[%s4139 + $0x12c] sm:$0xff]
      %v4938 = vld [vmem:[%s4139 + $0x13c] sm:$0xff]
      %v4939 = vld [vmem:[%s4139 + $0x144] sm:$0xff]
      %v4940 = vld [vmem:[%s4139 + $0x154] sm:$0xff]
      %v4941 = vld [vmem:[%s4139 + $0x15c] sm:$0xff]
      %v4942 = vld [vmem:[%s4139 + $0x16c] sm:$0xff]
      %v4943 = vld [vmem:[%s4139 + $0x174] sm:$0xff]
      %4976 = vrot.lane.b32.xlu0 %v4912, 96
      %v4977 = vpop.permute.xlu0 %4976
      %4978 = vrot.lane.b32.xlu0 %v4913, 96
      %v4979 = vpop.permute.xlu0 %4978
      %4980 = vrot.lane.b32.xlu0 %v4914, 96
      %v4981 = vpop.permute.xlu0 %4980
      %4982 = vrot.lane.b32.xlu0 %v4915, 96
      %v4983 = vpop.permute.xlu0 %4982
      %4984 = vrot.lane.b32.xlu0 %v4916, 96
      %v4985 = vpop.permute.xlu0 %4984
      %4986 = vrot.lane.b32.xlu0 %v4917, 96
      %v4987 = vpop.permute.xlu0 %4986
      %4988 = vrot.lane.b32.xlu0 %v4918, 96
      %v4989 = vpop.permute.xlu0 %4988
      %4990 = vrot.lane.b32.xlu0 %v4919, 96
      %v4991 = vpop.permute.xlu0 %4990
      %4992 = vrot.lane.b32.xlu0 %v4920, 96
      %v4993 = vpop.permute.xlu0 %4992
      %4994 = vrot.lane.b32.xlu0 %v4921, 96
      %v4995 = vpop.permute.xlu0 %4994
      %4996 = vrot.lane.b32.xlu0 %v4922, 96
      %v4997 = vpop.permute.xlu0 %4996
      %4998 = vrot.lane.b32.xlu0 %v4923, 96
      %v4999 = vpop.permute.xlu0 %4998
      %5000 = vrot.lane.b32.xlu0 %v4924, 96
      %v5001 = vpop.permute.xlu0 %5000
      %5002 = vrot.lane.b32.xlu0 %v4925, 96
      %v5003 = vpop.permute.xlu0 %5002
      %5004 = vrot.lane.b32.xlu0 %v4926, 96
      %v5005 = vpop.permute.xlu0 %5004
      %5006 = vrot.lane.b32.xlu0 %v4927, 96
      %v5007 = vpop.permute.xlu0 %5006
      %5008 = vrot.lane.b32.xlu0 %v4928, 96
      %v5009 = vpop.permute.xlu0 %5008
      %5010 = vrot.lane.b32.xlu0 %v4929, 96
      %v5011 = vpop.permute.xlu0 %5010
      %5012 = vrot.lane.b32.xlu0 %v4930, 96
      %v5013 = vpop.permute.xlu0 %5012
      %5014 = vrot.lane.b32.xlu0 %v4931, 96
      %v5015 = vpop.permute.xlu0 %5014
      %5016 = vrot.lane.b32.xlu0 %v4932, 96
      %v5017 = vpop.permute.xlu0 %5016
      %5018 = vrot.lane.b32.xlu0 %v4933, 96
      %v5019 = vpop.permute.xlu0 %5018
      %5020 = vrot.lane.b32.xlu0 %v4934, 96
      %v5021 = vpop.permute.xlu0 %5020
      %5022 = vrot.lane.b32.xlu0 %v4935, 96
      %v5023 = vpop.permute.xlu0 %5022
      %5024 = vrot.lane.b32.xlu0 %v4936, 96
      %v5025 = vpop.permute.xlu0 %5024
      %5026 = vrot.lane.b32.xlu0 %v4937, 96
      %v5027 = vpop.permute.xlu0 %5026
      %5028 = vrot.lane.b32.xlu0 %v4938, 96
      %v5029 = vpop.permute.xlu0 %5028
      %5030 = vrot.lane.b32.xlu0 %v4939, 96
      %v5031 = vpop.permute.xlu0 %5030
      %5032 = vrot.lane.b32.xlu0 %v4940, 96
      %v5033 = vpop.permute.xlu0 %5032
      %5034 = vrot.lane.b32.xlu0 %v4941, 96
      %v5035 = vpop.permute.xlu0 %5034
      %5036 = vrot.lane.b32.xlu0 %v4942, 96
      %v5037 = vpop.permute.xlu0 %5036
      %5038 = vrot.lane.b32.xlu0 %v4943, 96
      %v5039 = vpop.permute.xlu0 %5038
      %vm5072 = vcmask 818944
      %5073 = vst.msk [vmem:[#allocation3] sm:$0xff] %vm5072, %v4977
      %5074 = vst.msk [vmem:[#allocation3 + $0x8] sm:$0xff] %vm5072, %v4979
      %5075 = vst.msk [vmem:[#allocation3 + $0x10] sm:$0xff] %vm5072, %v4981
      %5076 = vst.msk [vmem:[#allocation3 + $0x18] sm:$0xff] %vm5072, %v4983
      %5077 = vst.msk [vmem:[#allocation3 + $0x20] sm:$0xff] %vm5072, %v4985
      %5078 = vst.msk [vmem:[#allocation3 + $0x28] sm:$0xff] %vm5072, %v4987
      %5079 = vst.msk [vmem:[#allocation3 + $0x30] sm:$0xff] %vm5072, %v4989
      %5080 = vst.msk [vmem:[#allocation3 + $0x38] sm:$0xff] %vm5072, %v4991
      %5081 = vst.msk [vmem:[#allocation3 + $0x40] sm:$0xff] %vm5072, %v4993
      %5082 = vst.msk [vmem:[#allocation3 + $0x48] sm:$0xff] %vm5072, %v4995
      %5083 = vst.msk [vmem:[#allocation3 + $0x50] sm:$0xff] %vm5072, %v4997
      %5084 = vst.msk [vmem:[#allocation3 + $0x58] sm:$0xff] %vm5072, %v4999
      %5085 = vst.msk [vmem:[#allocation3 + $0x60] sm:$0xff] %vm5072, %v5001
      %5086 = vst.msk [vmem:[#allocation3 + $0x68] sm:$0xff] %vm5072, %v5003
      %5087 = vst.msk [vmem:[#allocation3 + $0x70] sm:$0xff] %vm5072, %v5005
      %5088 = vst.msk [vmem:[#allocation3 + $0x78] sm:$0xff] %vm5072, %v5007
      %5089 = vst.msk [vmem:[#allocation3 + $0x80] sm:$0xff] %vm5072, %v5009
      %5090 = vst.msk [vmem:[#allocation3 + $0x88] sm:$0xff] %vm5072, %v5011
      %5091 = vst.msk [vmem:[#allocation3 + $0x90] sm:$0xff] %vm5072, %v5013
      %5092 = vst.msk [vmem:[#allocation3 + $0x98] sm:$0xff] %vm5072, %v5015
      %5093 = vst.msk [vmem:[#allocation3 + $0xa0] sm:$0xff] %vm5072, %v5017
      %5094 = vst.msk [vmem:[#allocation3 + $0xa8] sm:$0xff] %vm5072, %v5019
      %5095 = vst.msk [vmem:[#allocation3 + $0xb0] sm:$0xff] %vm5072, %v5021
      %5096 = vst.msk [vmem:[#allocation3 + $0xb8] sm:$0xff] %vm5072, %v5023
      %5097 = vst.msk [vmem:[#allocation3 + $0xc0] sm:$0xff] %vm5072, %v5025
      %5098 = vst.msk [vmem:[#allocation3 + $0xc8] sm:$0xff] %vm5072, %v5027
      %5099 = vst.msk [vmem:[#allocation3 + $0xd0] sm:$0xff] %vm5072, %v5029
      %5100 = vst.msk [vmem:[#allocation3 + $0xd8] sm:$0xff] %vm5072, %v5031
      %5101 = vst.msk [vmem:[#allocation3 + $0xe0] sm:$0xff] %vm5072, %v5033
      %5102 = vst.msk [vmem:[#allocation3 + $0xe8] sm:$0xff] %vm5072, %v5035
      %5103 = vst.msk [vmem:[#allocation3 + $0xf0] sm:$0xff] %vm5072, %v5037
      %5104 = vst.msk [vmem:[#allocation3 + $0xf8] sm:$0xff] %vm5072, %v5039
      %v5105 = vld [vmem:[#allocation3] sm:$0xff]
      %v5106 = vld [vmem:[#allocation3 + $0x8] sm:$0xff]
      %v5107 = vld [vmem:[#allocation3 + $0x10] sm:$0xff]
      %v5108 = vld [vmem:[#allocation3 + $0x18] sm:$0xff]
      %v5109 = vld [vmem:[#allocation3 + $0x20] sm:$0xff]
      %v5110 = vld [vmem:[#allocation3 + $0x28] sm:$0xff]
      %v5111 = vld [vmem:[#allocation3 + $0x30] sm:$0xff]
      %v5112 = vld [vmem:[#allocation3 + $0x38] sm:$0xff]
      %v5113 = vld [vmem:[#allocation3 + $0x40] sm:$0xff]
      %v5114 = vld [vmem:[#allocation3 + $0x48] sm:$0xff]
      %v5115 = vld [vmem:[#allocation3 + $0x50] sm:$0xff]
      %v5116 = vld [vmem:[#allocation3 + $0x58] sm:$0xff]
      %v5117 = vld [vmem:[#allocation3 + $0x60] sm:$0xff]
      %v5118 = vld [vmem:[#allocation3 + $0x68] sm:$0xff]
      %v5119 = vld [vmem:[#allocation3 + $0x70] sm:$0xff]
      %v5120 = vld [vmem:[#allocation3 + $0x78] sm:$0xff]
      %v5121 = vld [vmem:[#allocation3 + $0x80] sm:$0xff]
      %v5122 = vld [vmem:[#allocation3 + $0x88] sm:$0xff]
      %v5123 = vld [vmem:[#allocation3 + $0x90] sm:$0xff]
      %v5124 = vld [vmem:[#allocation3 + $0x98] sm:$0xff]
      %v5125 = vld [vmem:[#allocation3 + $0xa0] sm:$0xff]
      %v5126 = vld [vmem:[#allocation3 + $0xa8] sm:$0xff]
      %v5127 = vld [vmem:[#allocation3 + $0xb0] sm:$0xff]
      %v5128 = vld [vmem:[#allocation3 + $0xb8] sm:$0xff]
      %v5129 = vld [vmem:[#allocation3 + $0xc0] sm:$0xff]
      %v5130 = vld [vmem:[#allocation3 + $0xc8] sm:$0xff]
      %v5131 = vld [vmem:[#allocation3 + $0xd0] sm:$0xff]
      %v5132 = vld [vmem:[#allocation3 + $0xd8] sm:$0xff]
      %v5133 = vld [vmem:[#allocation3 + $0xe0] sm:$0xff]
      %v5134 = vld [vmem:[#allocation3 + $0xe8] sm:$0xff]
      %v5135 = vld [vmem:[#allocation3 + $0xf0] sm:$0xff]
      %v5136 = vld [vmem:[#allocation3 + $0xf8] sm:$0xff]
      %v5137 = vld [vmem:[%s1] sm:$0xff]
      %v5138 = vld [vmem:[%s1 + $0x8] sm:$0xff]
      %v5139 = vld [vmem:[%s1 + $0x10] sm:$0xff]
      %v5140 = vld [vmem:[%s1 + $0x18] sm:$0xff]
      %v5141 = vld [vmem:[%s1 + $0x20] sm:$0xff]
      %v5142 = vld [vmem:[%s1 + $0x28] sm:$0xff]
      %v5143 = vld [vmem:[%s1 + $0x30] sm:$0xff]
      %v5144 = vld [vmem:[%s1 + $0x38] sm:$0xff]
      %v5145 = vld [vmem:[%s1 + $0x40] sm:$0xff]
      %v5146 = vld [vmem:[%s1 + $0x48] sm:$0xff]
      %v5147 = vld [vmem:[%s1 + $0x50] sm:$0xff]
      %v5148 = vld [vmem:[%s1 + $0x58] sm:$0xff]
      %v5149 = vld [vmem:[%s1 + $0x60] sm:$0xf]
      %v5150 = vld [vmem:[%s2] sm:$0x1]
      %v5152 = vlaneseq
      %v5153 = vshrl.u32 %v5152, 7
      %v5154 = vsub.s32 0, %v5153
      %v5155 = vrot.slane %v5150, %v5154
      %vm5157 = vcmask 818176
      %v5159 = vsel %vm5157, %v5105, 0
      %v5162 = vsel %vm5157, %v5106, 0
      %v5165 = vsel %vm5157, %v5107, 0
      %v5168 = vsel %vm5157, %v5108, 0
      %v5171 = vsel %vm5157, %v5109, 0
      %v5174 = vsel %vm5157, %v5110, 0
      %v5177 = vsel %vm5157, %v5111, 0
      %v5180 = vsel %vm5157, %v5112, 0
      %v5183 = vsel %vm5157, %v5113, 0
      %v5186 = vsel %vm5157, %v5114, 0
      %v5189 = vsel %vm5157, %v5115, 0
      %v5192 = vsel %vm5157, %v5116, 0
      %v5195 = vsel %vm5157, %v5117, 0
      %v5198 = vsel %vm5157, %v5118, 0
      %v5201 = vsel %vm5157, %v5119, 0
      %v5204 = vsel %vm5157, %v5120, 0
      %v5207 = vsel %vm5157, %v5121, 0
      %v5210 = vsel %vm5157, %v5122, 0
      %v5213 = vsel %vm5157, %v5123, 0
      %v5216 = vsel %vm5157, %v5124, 0
      %v5219 = vsel %vm5157, %v5125, 0
      %v5222 = vsel %vm5157, %v5126, 0
      %v5225 = vsel %vm5157, %v5127, 0
      %v5228 = vsel %vm5157, %v5128, 0
      %v5231 = vsel %vm5157, %v5129, 0
      %v5234 = vsel %vm5157, %v5130, 0
      %v5237 = vsel %vm5157, %v5131, 0
      %v5240 = vsel %vm5157, %v5132, 0
      %v5243 = vsel %vm5157, %v5133, 0
      %v5246 = vsel %vm5157, %v5134, 0
      %v5249 = vsel %vm5157, %v5135, 0
      %v5252 = vsel %vm5157, %v5136, 0
      %vm5254 = vcmask 1043456
      %v5256 = vsel %vm5254, %v5149, 0
      %5258 = vmatprep.subr.mxu0 0.0
      %5259 = vmatpush1.msra.mxu0 %v5137
      %5260 = vmatprep.subr.mxu0 0.0
      %5261 = vmatpush1.msra.mxu0 %v5138
      %5262 = vmatprep.subr.mxu0 0.0
      %5263 = vmatpush1.msra.mxu0 %v5139
      %5264 = vmatprep.subr.mxu0 0.0
      %5265 = vmatpush1.msra.mxu0 %v5140
      %5266 = vmatprep.subr.mxu0 0.0
      %5267 = vmatpush1.msra.mxu0 %v5141
      %5268 = vmatprep.subr.mxu0 0.0
      %5269 = vmatpush1.msra.mxu0 %v5142
      %5270 = vmatprep.subr.mxu0 0.0
      %5271 = vmatpush1.msra.mxu0 %v5143
      %5272 = vmatprep.subr.mxu0 0.0
      %5273 = vmatpush1.msra.mxu0 %v5144
      %5274 = vmatprep.subr.mxu0 0.0
      %5275 = vmatpush1.msra.mxu0 %v5145
      %5276 = vmatprep.subr.mxu0 0.0
      %5277 = vmatpush1.msra.mxu0 %v5146
      %5278 = vmatprep.subr.mxu0 0.0
      %5279 = vmatpush1.msra.mxu0 %v5147
      %5280 = vmatprep.subr.mxu0 0.0
      %5281 = vmatpush1.msra.mxu0 %v5148
      %5282 = vmatprep.subr.mxu0 0.0
      %5283 = vmatpush1.msra.mxu0 %v5256
      %5284 = vmatprep.subr.mxu0 0.0
      %5285 = vmatpush1.msra.mxu0 0.0
      %5286 = vmatprep.subr.mxu0 0.0
      %5287 = vmatpush1.msra.mxu0 0.0
      %5288 = vmatprep.subr.mxu0 0.0
      %5289 = vmatpush1.msra.mxu0 0.0
      %5290 = vmatprep.subr.mxu0 0.0
      %5291 = vmatpush1.msra.mxu0 0.0
      %5292 = vmatprep.subr.mxu0 0.0
      %5293 = vmatpush1.msra.mxu0 0.0
      %5294 = vmatprep.subr.mxu0 0.0
      %5295 = vmatpush1.msra.mxu0 0.0
      %5296 = vmatprep.subr.mxu0 0.0
      %5297 = vmatpush1.msra.mxu0 0.0
      %5298 = vmatprep.subr.mxu0 0.0
      %5299 = vmatpush1.msra.mxu0 0.0
      %5300 = vmatprep.subr.mxu0 0.0
      %5301 = vmatpush1.msra.mxu0 0.0
      %5302 = vmatprep.subr.mxu0 0.0
      %5303 = vmatpush1.msra.mxu0 0.0
      %5304 = vmatprep.subr.mxu0 0.0
      %5305 = vmatpush1.msra.mxu0 0.0
      %5306 = vmatprep.subr.mxu0 0.0
      %5307 = vmatpush1.msra.mxu0 0.0
      %5308 = vmatprep.subr.mxu0 0.0
      %5309 = vmatpush1.msra.mxu0 0.0
      %5310 = vmatprep.subr.mxu0 0.0
      %5311 = vmatpush1.msra.mxu0 0.0
      %5312 = vmatprep.subr.mxu0 0.0
      %5313 = vmatpush1.msra.mxu0 0.0
      %5314 = vmatprep.subr.mxu0 0.0
      %5315 = vmatpush1.msra.mxu0 0.0
      %5316 = vmatprep.subr.mxu0 0.0
      %5317 = vmatpush1.msra.mxu0 0.0
      %5318 = vmatprep.subr.mxu0 0.0
      %5319 = vmatpush1.msra.mxu0 0.0
      %5320 = vmatprep.subr.mxu0 0.0
      %5321 = vmatpush1.msra.mxu0 0.0
      %5322 = vmatprep.mubr.f32.mxu0 0.0
      %5323 = vmatmul.mubr.f32.gmra.mrb[0].mxu0 %v5159
      %v5324 = vpop.f32.mrb[0].mxu0
      %v5325 = vadd.f32 %v5155, %v5324
      %v5326 = vpop.f32.mrb[0].mxu0
      %5327 = vmatprep.mubr.f32.mxu0 0.0
      %5328 = vmatmul.mubr.f32.gmra.mrb[0].mxu0 %v5162
      %v5329 = vpop.f32.mrb[0].mxu0
      %v5330 = vadd.f32 %v5155, %v5329
      %v5331 = vpop.f32.mrb[0].mxu0
      %5332 = vmatprep.mubr.f32.mxu0 0.0
      %5333 = vmatmul.mubr.f32.gmra.mrb[0].mxu0 %v5165
      %v5334 = vpop.f32.mrb[0].mxu0
      %v5335 = vadd.f32 %v5155, %v5334
      %v5336 = vpop.f32.mrb[0].mxu0
      %5337 = vmatprep.mubr.f32.mxu0 0.0
      %5338 = vmatmul.mubr.f32.gmra.mrb[0].mxu0 %v5168
      %v5339 = vpop.f32.mrb[0].mxu0
      %v5340 = vadd.f32 %v5155, %v5339
      %v5341 = vpop.f32.mrb[0].mxu0
      %5342 = vmatprep.mubr.f32.mxu0 0.0
      %5343 = vmatmul.mubr.f32.gmra.mrb[0].mxu0 %v5171
      %v5344 = vpop.f32.mrb[0].mxu0
      %v5345 = vadd.f32 %v5155, %v5344
      %v5346 = vpop.f32.mrb[0].mxu0
      %5347 = vmatprep.mubr.f32.mxu0 0.0
      %5348 = vmatmul.mubr.f32.gmra.mrb[0].mxu0 %v5174
      %v5349 = vpop.f32.mrb[0].mxu0
      %v5350 = vadd.f32 %v5155, %v5349
      %v5351 = vpop.f32.mrb[0].mxu0
      %5352 = vmatprep.mubr.f32.mxu0 0.0
      %5353 = vmatmul.mubr.f32.gmra.mrb[0].mxu0 %v5177
      %v5354 = vpop.f32.mrb[0].mxu0
      %v5355 = vadd.f32 %v5155, %v5354
      %v5356 = vpop.f32.mrb[0].mxu0
      %5357 = vmatprep.mubr.f32.mxu0 0.0
      %5358 = vmatmul.mubr.f32.gmra.mrb[0].mxu0 %v5180
      %v5359 = vpop.f32.mrb[0].mxu0
      %v5360 = vadd.f32 %v5155, %v5359
      %v5361 = vpop.f32.mrb[0].mxu0
      %5362 = vmatprep.mubr.f32.mxu0 0.0
      %5363 = vmatmul.mubr.f32.gmra.mrb[0].mxu0 %v5183
      %v5364 = vpop.f32.mrb[0].mxu0
      %v5365 = vadd.f32 %v5155, %v5364
      %v5366 = vpop.f32.mrb[0].mxu0
      %5367 = vmatprep.mubr.f32.mxu0 0.0
      %5368 = vmatmul.mubr.f32.gmra.mrb[0].mxu0 %v5186
      %v5369 = vpop.f32.mrb[0].mxu0
      %v5370 = vadd.f32 %v5155, %v5369
      %v5371 = vpop.f32.mrb[0].mxu0
      %5372 = vmatprep.mubr.f32.mxu0 0.0
      %5373 = vmatmul.mubr.f32.gmra.mrb[0].mxu0 %v5189
      %v5374 = vpop.f32.mrb[0].mxu0
      %v5375 = vadd.f32 %v5155, %v5374
      %v5376 = vpop.f32.mrb[0].mxu0
      %5377 = vmatprep.mubr.f32.mxu0 0.0
      %5378 = vmatmul.mubr.f32.gmra.mrb[0].mxu0 %v5192
      %v5379 = vpop.f32.mrb[0].mxu0
      %v5380 = vadd.f32 %v5155, %v5379
      %v5381 = vpop.f32.mrb[0].mxu0
      %5382 = vmatprep.mubr.f32.mxu0 0.0
      %5383 = vmatmul.mubr.f32.gmra.mrb[0].mxu0 %v5195
      %v5384 = vpop.f32.mrb[0].mxu0
      %v5385 = vadd.f32 %v5155, %v5384
      %v5386 = vpop.f32.mrb[0].mxu0
      %5387 = vmatprep.mubr.f32.mxu0 0.0
      %5388 = vmatmul.mubr.f32.gmra.mrb[0].mxu0 %v5198
      %v5389 = vpop.f32.mrb[0].mxu0
      %v5390 = vadd.f32 %v5155, %v5389
      %v5391 = vpop.f32.mrb[0].mxu0
      %5392 = vmatprep.mubr.f32.mxu0 0.0
      %5393 = vmatmul.mubr.f32.gmra.mrb[0].mxu0 %v5201
      %v5394 = vpop.f32.mrb[0].mxu0
      %v5395 = vadd.f32 %v5155, %v5394
      %v5396 = vpop.f32.mrb[0].mxu0
      %5397 = vmatprep.mubr.f32.mxu0 0.0
      %5398 = vmatmul.mubr.f32.gmra.mrb[0].mxu0 %v5204
      %v5399 = vpop.f32.mrb[0].mxu0
      %v5400 = vadd.f32 %v5155, %v5399
      %v5401 = vpop.f32.mrb[0].mxu0
      %5402 = vmatprep.mubr.f32.mxu0 0.0
      %5403 = vmatmul.mubr.f32.gmra.mrb[0].mxu0 %v5207
      %v5404 = vpop.f32.mrb[0].mxu0
      %v5405 = vadd.f32 %v5155, %v5404
      %v5406 = vpop.f32.mrb[0].mxu0
      %5407 = vmatprep.mubr.f32.mxu0 0.0
      %5408 = vmatmul.mubr.f32.gmra.mrb[0].mxu0 %v5210
      %v5409 = vpop.f32.mrb[0].mxu0
      %v5410 = vadd.f32 %v5155, %v5409
      %v5411 = vpop.f32.mrb[0].mxu0
      %5412 = vmatprep.mubr.f32.mxu0 0.0
      %5413 = vmatmul.mubr.f32.gmra.mrb[0].mxu0 %v5213
      %v5414 = vpop.f32.mrb[0].mxu0
      %v5415 = vadd.f32 %v5155, %v5414
      %v5416 = vpop.f32.mrb[0].mxu0
      %5417 = vmatprep.mubr.f32.mxu0 0.0
      %5418 = vmatmul.mubr.f32.gmra.mrb[0].mxu0 %v5216
      %v5419 = vpop.f32.mrb[0].mxu0
      %v5420 = vadd.f32 %v5155, %v5419
      %v5421 = vpop.f32.mrb[0].mxu0
      %5422 = vmatprep.mubr.f32.mxu0 0.0
      %5423 = vmatmul.mubr.f32.gmra.mrb[0].mxu0 %v5219
      %v5424 = vpop.f32.mrb[0].mxu0
      %v5425 = vadd.f32 %v5155, %v5424
      %v5426 = vpop.f32.mrb[0].mxu0
      %5427 = vmatprep.mubr.f32.mxu0 0.0
      %5428 = vmatmul.mubr.f32.gmra.mrb[0].mxu0 %v5222
      %v5429 = vpop.f32.mrb[0].mxu0
      %v5430 = vadd.f32 %v5155, %v5429
      %v5431 = vpop.f32.mrb[0].mxu0
      %5432 = vmatprep.mubr.f32.mxu0 0.0
      %5433 = vmatmul.mubr.f32.gmra.mrb[0].mxu0 %v5225
      %v5434 = vpop.f32.mrb[0].mxu0
      %v5435 = vadd.f32 %v5155, %v5434
      %v5436 = vpop.f32.mrb[0].mxu0
      %5437 = vmatprep.mubr.f32.mxu0 0.0
      %5438 = vmatmul.mubr.f32.gmra.mrb[0].mxu0 %v5228
      %v5439 = vpop.f32.mrb[0].mxu0
      %v5440 = vadd.f32 %v5155, %v5439
      %v5441 = vpop.f32.mrb[0].mxu0
      %5442 = vmatprep.mubr.f32.mxu0 0.0
      %5443 = vmatmul.mubr.f32.gmra.mrb[0].mxu0 %v5231
      %v5444 = vpop.f32.mrb[0].mxu0
      %v5445 = vadd.f32 %v5155, %v5444
      %v5446 = vpop.f32.mrb[0].mxu0
      %5447 = vmatprep.mubr.f32.mxu0 0.0
      %5448 = vmatmul.mubr.f32.gmra.mrb[0].mxu0 %v5234
      %v5449 = vpop.f32.mrb[0].mxu0
      %v5450 = vadd.f32 %v5155, %v5449
      %v5451 = vpop.f32.mrb[0].mxu0
      %5452 = vmatprep.mubr.f32.mxu0 0.0
      %5453 = vmatmul.mubr.f32.gmra.mrb[0].mxu0 %v5237
      %v5454 = vpop.f32.mrb[0].mxu0
      %v5455 = vadd.f32 %v5155, %v5454
      %v5456 = vpop.f32.mrb[0].mxu0
      %5457 = vmatprep.mubr.f32.mxu0 0.0
      %5458 = vmatmul.mubr.f32.gmra.mrb[0].mxu0 %v5240
      %v5459 = vpop.f32.mrb[0].mxu0
      %v5460 = vadd.f32 %v5155, %v5459
      %v5461 = vpop.f32.mrb[0].mxu0
      %5462 = vmatprep.mubr.f32.mxu0 0.0
      %5463 = vmatmul.mubr.f32.gmra.mrb[0].mxu0 %v5243
      %v5464 = vpop.f32.mrb[0].mxu0
      %v5465 = vadd.f32 %v5155, %v5464
      %v5466 = vpop.f32.mrb[0].mxu0
      %5467 = vmatprep.mubr.f32.mxu0 0.0
      %5468 = vmatmul.mubr.f32.gmra.mrb[0].mxu0 %v5246
      %v5469 = vpop.f32.mrb[0].mxu0
      %v5470 = vadd.f32 %v5155, %v5469
      %v5471 = vpop.f32.mrb[0].mxu0
      %5472 = vmatprep.mubr.f32.mxu0 0.0
      %5473 = vmatmul.mubr.f32.gmra.mrb[0].mxu0 %v5249
      %v5474 = vpop.f32.mrb[0].mxu0
      %v5475 = vadd.f32 %v5155, %v5474
      %v5476 = vpop.f32.mrb[0].mxu0
      %5477 = vmatprep.mubr.f32.mxu0 0.0
      %5478 = vmatmul.mubr.f32.gmra.mrb[0].mxu0 %v5252
      %v5479 = vpop.f32.mrb[0].mxu0
      %v5480 = vadd.f32 %v5155, %v5479
      %v5481 = vpop.f32.mrb[0].mxu0
      %5482 = vdwg.mxu0
      %vm5483 = vcmp.ge.f32.partialorder %v5325, 0.0
      %vm5484 = vcmp.ge.f32.partialorder %v5330, 0.0
      %vm5485 = vcmp.ge.f32.partialorder %v5335, 0.0
      %vm5486 = vcmp.ge.f32.partialorder %v5340, 0.0
      %vm5487 = vcmp.ge.f32.partialorder %v5345, 0.0
      %vm5488 = vcmp.ge.f32.partialorder %v5350, 0.0
      %vm5489 = vcmp.ge.f32.partialorder %v5355, 0.0
      %vm5490 = vcmp.ge.f32.partialorder %v5360, 0.0
      %vm5491 = vcmp.ge.f32.partialorder %v5365, 0.0
      %vm5492 = vcmp.ge.f32.partialorder %v5370, 0.0
      %vm5493 = vcmp.ge.f32.partialorder %v5375, 0.0
      %vm5494 = vcmp.ge.f32.partialorder %v5380, 0.0
      %vm5495 = vcmp.ge.f32.partialorder %v5385, 0.0
      %vm5496 = vcmp.ge.f32.partialorder %v5390, 0.0
      %vm5497 = vcmp.ge.f32.partialorder %v5395, 0.0
      %vm5498 = vcmp.ge.f32.partialorder %v5400, 0.0
      %vm5499 = vcmp.ge.f32.partialorder %v5405, 0.0
      %vm5500 = vcmp.ge.f32.partialorder %v5410, 0.0
      %vm5501 = vcmp.ge.f32.partialorder %v5415, 0.0
      %vm5502 = vcmp.ge.f32.partialorder %v5420, 0.0
      %vm5503 = vcmp.ge.f32.partialorder %v5425, 0.0
      %vm5504 = vcmp.ge.f32.partialorder %v5430, 0.0
      %vm5505 = vcmp.ge.f32.partialorder %v5435, 0.0
      %vm5506 = vcmp.ge.f32.partialorder %v5440, 0.0
      %vm5507 = vcmp.ge.f32.partialorder %v5445, 0.0
      %vm5508 = vcmp.ge.f32.partialorder %v5450, 0.0
      %vm5509 = vcmp.ge.f32.partialorder %v5455, 0.0
      %vm5510 = vcmp.ge.f32.partialorder %v5460, 0.0
      %vm5511 = vcmp.ge.f32.partialorder %v5465, 0.0
      %vm5512 = vcmp.ge.f32.partialorder %v5470, 0.0
      %vm5513 = vcmp.ge.f32.partialorder %v5475, 0.0
      %vm5514 = vcmp.ge.f32.partialorder %v5480, 0.0
      %v5515 = vmul.f32 %v5325, 0.01
      %v5516 = vmul.f32 %v5330, 0.01
      %v5517 = vmul.f32 %v5335, 0.01
      %v5518 = vmul.f32 %v5340, 0.01
      %v5519 = vmul.f32 %v5345, 0.01
      %v5520 = vmul.f32 %v5350, 0.01
      %v5521 = vmul.f32 %v5355, 0.01
      %v5522 = vmul.f32 %v5360, 0.01
      %v5523 = vmul.f32 %v5365, 0.01
      %v5524 = vmul.f32 %v5370, 0.01
      %v5525 = vmul.f32 %v5375, 0.01
      %v5526 = vmul.f32 %v5380, 0.01
      %v5527 = vmul.f32 %v5385, 0.01
      %v5528 = vmul.f32 %v5390, 0.01
      %v5529 = vmul.f32 %v5395, 0.01
      %v5530 = vmul.f32 %v5400, 0.01
      %v5531 = vmul.f32 %v5405, 0.01
      %v5532 = vmul.f32 %v5410, 0.01
      %v5533 = vmul.f32 %v5415, 0.01
      %v5534 = vmul.f32 %v5420, 0.01
      %v5535 = vmul.f32 %v5425, 0.01
      %v5536 = vmul.f32 %v5430, 0.01
      %v5537 = vmul.f32 %v5435, 0.01
      %v5538 = vmul.f32 %v5440, 0.01
      %v5539 = vmul.f32 %v5445, 0.01
      %v5540 = vmul.f32 %v5450, 0.01
      %v5541 = vmul.f32 %v5455, 0.01
      %v5542 = vmul.f32 %v5460, 0.01
      %v5543 = vmul.f32 %v5465, 0.01
      %v5544 = vmul.f32 %v5470, 0.01
      %v5545 = vmul.f32 %v5475, 0.01
      %v5546 = vmul.f32 %v5480, 0.01
      %v5547 = vsel %vm5483, %v5325, %v5515
      %v5548 = vsel %vm5484, %v5330, %v5516
      %v5549 = vsel %vm5485, %v5335, %v5517
      %v5550 = vsel %vm5486, %v5340, %v5518
      %v5551 = vsel %vm5487, %v5345, %v5519
      %v5552 = vsel %vm5488, %v5350, %v5520
      %v5553 = vsel %vm5489, %v5355, %v5521
      %v5554 = vsel %vm5490, %v5360, %v5522
      %v5555 = vsel %vm5491, %v5365, %v5523
      %v5556 = vsel %vm5492, %v5370, %v5524
      %v5557 = vsel %vm5493, %v5375, %v5525
      %v5558 = vsel %vm5494, %v5380, %v5526
      %v5559 = vsel %vm5495, %v5385, %v5527
      %v5560 = vsel %vm5496, %v5390, %v5528
      %v5561 = vsel %vm5497, %v5395, %v5529
      %v5562 = vsel %vm5498, %v5400, %v5530
      %v5563 = vsel %vm5499, %v5405, %v5531
      %v5564 = vsel %vm5500, %v5410, %v5532
      %v5565 = vsel %vm5501, %v5415, %v5533
      %v5566 = vsel %vm5502, %v5420, %v5534
      %v5567 = vsel %vm5503, %v5425, %v5535
      %v5568 = vsel %vm5504, %v5430, %v5536
      %v5569 = vsel %vm5505, %v5435, %v5537
      %v5570 = vsel %vm5506, %v5440, %v5538
      %v5571 = vsel %vm5507, %v5445, %v5539
      %v5572 = vsel %vm5508, %v5450, %v5540
      %v5573 = vsel %vm5509, %v5455, %v5541
      %v5574 = vsel %vm5510, %v5460, %v5542
      %v5575 = vsel %vm5511, %v5465, %v5543
      %v5576 = vsel %vm5512, %v5470, %v5544
      %v5577 = vsel %vm5513, %v5475, %v5545
      %v5578 = vsel %vm5514, %v5480, %v5546
      %vm5579 = vcmask 162816
      %5580 = vst.msk [vmem:[#allocation4] sm:$0xff] %vm5579, 0.0
      %5581 = vst.msk [vmem:[#allocation4 + $0x8] sm:$0xff] %vm5579, 0.0
      %vm5582 = vcmask 156672
      %5583 = vst.msk [vmem:[#allocation4 + $0x10] sm:$0x3] %vm5582, 0.0
      %5584 = vst.msk [vmem:[#allocation4 + $0x18] sm:$0xff] %vm5579, 0.0
      %5585 = vst.msk [vmem:[#allocation4 + $0x20] sm:$0xff] %vm5579, 0.0
      %5586 = vst.msk [vmem:[#allocation4 + $0x28] sm:$0x3] %vm5582, 0.0
      %5587 = vst.msk [vmem:[#allocation4 + $0x30] sm:$0xff] %vm5579, 0.0
      %5588 = vst.msk [vmem:[#allocation4 + $0x38] sm:$0xff] %vm5579, 0.0
      %5589 = vst.msk [vmem:[#allocation4 + $0x40] sm:$0x3] %vm5582, 0.0
      %5590 = vst.msk [vmem:[#allocation4 + $0x48] sm:$0xff] %vm5579, 0.0
      %5591 = vst.msk [vmem:[#allocation4 + $0x50] sm:$0xff] %vm5579, 0.0
      %5592 = vst.msk [vmem:[#allocation4 + $0x58] sm:$0x3] %vm5582, 0.0
      %5593 = vst.msk [vmem:[#allocation4 + $0x60] sm:$0xff] %vm5579, 0.0
      %5594 = vst.msk [vmem:[#allocation4 + $0x68] sm:$0xff] %vm5579, 0.0
      %5595 = vst.msk [vmem:[#allocation4 + $0x70] sm:$0x3] %vm5582, 0.0
      %5596 = vst.msk [vmem:[#allocation4 + $0x78] sm:$0xff] %vm5579, 0.0
      %5597 = vst.msk [vmem:[#allocation4 + $0x80] sm:$0xff] %vm5579, 0.0
      %5598 = vst.msk [vmem:[#allocation4 + $0x88] sm:$0x3] %vm5582, 0.0
      %5599 = vst.msk [vmem:[#allocation4 + $0x90] sm:$0xff] %vm5579, 0.0
      %5600 = vst.msk [vmem:[#allocation4 + $0x98] sm:$0xff] %vm5579, 0.0
      %5601 = vst.msk [vmem:[#allocation4 + $0xa0] sm:$0x3] %vm5582, 0.0
      %5602 = vst.msk [vmem:[#allocation4 + $0xa8] sm:$0xff] %vm5579, 0.0
      %5603 = vst.msk [vmem:[#allocation4 + $0xb0] sm:$0xff] %vm5579, 0.0
      %5604 = vst.msk [vmem:[#allocation4 + $0xb8] sm:$0x3] %vm5582, 0.0
      %5605 = vst.msk [vmem:[#allocation4 + $0xc0] sm:$0xff] %vm5579, 0.0
      %5606 = vst.msk [vmem:[#allocation4 + $0xc8] sm:$0xff] %vm5579, 0.0
      %5607 = vst.msk [vmem:[#allocation4 + $0xd0] sm:$0x3] %vm5582, 0.0
      %5608 = vst.msk [vmem:[#allocation4 + $0xd8] sm:$0xff] %vm5579, 0.0
      %5609 = vst.msk [vmem:[#allocation4 + $0xe0] sm:$0xff] %vm5579, 0.0
      %5610 = vst.msk [vmem:[#allocation4 + $0xe8] sm:$0x3] %vm5582, 0.0
      %5611 = vst.msk [vmem:[#allocation4 + $0xf0] sm:$0xff] %vm5579, 0.0
      %5612 = vst.msk [vmem:[#allocation4 + $0xf8] sm:$0xff] %vm5579, 0.0
      %5613 = vst.msk [vmem:[#allocation4 + $0x100] sm:$0x3] %vm5582, 0.0
      %5614 = vst.msk [vmem:[#allocation4 + $0x108] sm:$0xff] %vm5579, 0.0
      %5615 = vst.msk [vmem:[#allocation4 + $0x110] sm:$0xff] %vm5579, 0.0
      %5616 = vst.msk [vmem:[#allocation4 + $0x118] sm:$0x3] %vm5582, 0.0
      %5617 = vst.msk [vmem:[#allocation4 + $0x120] sm:$0xff] %vm5579, 0.0
      %5618 = vst.msk [vmem:[#allocation4 + $0x128] sm:$0xff] %vm5579, 0.0
      %5619 = vst.msk [vmem:[#allocation4 + $0x130] sm:$0x3] %vm5582, 0.0
      %5620 = vst.msk [vmem:[#allocation4 + $0x138] sm:$0xff] %vm5579, 0.0
      %5621 = vst.msk [vmem:[#allocation4 + $0x140] sm:$0xff] %vm5579, 0.0
      %5622 = vst.msk [vmem:[#allocation4 + $0x148] sm:$0x3] %vm5582, 0.0
      %5623 = vst.msk [vmem:[#allocation4 + $0x150] sm:$0xff] %vm5579, 0.0
      %5624 = vst.msk [vmem:[#allocation4 + $0x158] sm:$0xff] %vm5579, 0.0
      %5625 = vst.msk [vmem:[#allocation4 + $0x160] sm:$0x3] %vm5582, 0.0
      %5626 = vst.msk [vmem:[#allocation4 + $0x168] sm:$0xff] %vm5579, 0.0
      %5627 = vst.msk [vmem:[#allocation4 + $0x170] sm:$0xff] %vm5579, 0.0
      %5628 = vst.msk [vmem:[#allocation4 + $0x178] sm:$0x3] %vm5582, 0.0
      %5629 = vst.msk [vmem:[#allocation4 + $0x180] sm:$0xff] %vm5579, 0.0
      %5630 = vst.msk [vmem:[#allocation4 + $0x188] sm:$0xff] %vm5579, 0.0
      %5631 = vst.msk [vmem:[#allocation4 + $0x190] sm:$0x3] %vm5582, 0.0
      %5632 = vst.msk [vmem:[#allocation4 + $0x198] sm:$0xff] %vm5579, 0.0
      %5633 = vst.msk [vmem:[#allocation4 + $0x1a0] sm:$0xff] %vm5579, 0.0
      %5634 = vst.msk [vmem:[#allocation4 + $0x1a8] sm:$0x3] %vm5582, 0.0
      %s5635 = scalar_lea.vmem [#allocation4], 24
      %5636 = vst.msk [vmem:[%s5635 + $0x1] sm:$0xff] %vm5579, %v5547
      %5637 = vst.msk [vmem:[%s5635 + $0x9] sm:$0xff] %vm5579, %v5548
      %5638 = vst.msk [vmem:[%s5635 + $0x19] sm:$0xff] %vm5579, %v5549
      %5639 = vst.msk [vmem:[%s5635 + $0x21] sm:$0xff] %vm5579, %v5550
      %5640 = vst.msk [vmem:[%s5635 + $0x31] sm:$0xff] %vm5579, %v5551
      %5641 = vst.msk [vmem:[%s5635 + $0x39] sm:$0xff] %vm5579, %v5552
      %5642 = vst.msk [vmem:[%s5635 + $0x49] sm:$0xff] %vm5579, %v5553
      %5643 = vst.msk [vmem:[%s5635 + $0x51] sm:$0xff] %vm5579, %v5554
      %5644 = vst.msk [vmem:[%s5635 + $0x61] sm:$0xff] %vm5579, %v5555
      %5645 = vst.msk [vmem:[%s5635 + $0x69] sm:$0xff] %vm5579, %v5556
      %5646 = vst.msk [vmem:[%s5635 + $0x79] sm:$0xff] %vm5579, %v5557
      %5647 = vst.msk [vmem:[%s5635 + $0x81] sm:$0xff] %vm5579, %v5558
      %5648 = vst.msk [vmem:[%s5635 + $0x91] sm:$0xff] %vm5579, %v5559
      %5649 = vst.msk [vmem:[%s5635 + $0x99] sm:$0xff] %vm5579, %v5560
      %5650 = vst.msk [vmem:[%s5635 + $0xa9] sm:$0xff] %vm5579, %v5561
      %5651 = vst.msk [vmem:[%s5635 + $0xb1] sm:$0xff] %vm5579, %v5562
      %5652 = vst.msk [vmem:[%s5635 + $0xc1] sm:$0xff] %vm5579, %v5563
      %5653 = vst.msk [vmem:[%s5635 + $0xc9] sm:$0xff] %vm5579, %v5564
      %5654 = vst.msk [vmem:[%s5635 + $0xd9] sm:$0xff] %vm5579, %v5565
      %5655 = vst.msk [vmem:[%s5635 + $0xe1] sm:$0xff] %vm5579, %v5566
      %5656 = vst.msk [vmem:[%s5635 + $0xf1] sm:$0xff] %vm5579, %v5567
      %5657 = vst.msk [vmem:[%s5635 + $0xf9] sm:$0xff] %vm5579, %v5568
      %5658 = vst.msk [vmem:[%s5635 + $0x109] sm:$0xff] %vm5579, %v5569
      %5659 = vst.msk [vmem:[%s5635 + $0x111] sm:$0xff] %vm5579, %v5570
      %5660 = vst.msk [vmem:[%s5635 + $0x121] sm:$0xff] %vm5579, %v5571
      %5661 = vst.msk [vmem:[%s5635 + $0x129] sm:$0xff] %vm5579, %v5572
      %5662 = vst.msk [vmem:[%s5635 + $0x139] sm:$0xff] %vm5579, %v5573
      %5663 = vst.msk [vmem:[%s5635 + $0x141] sm:$0xff] %vm5579, %v5574
      %5664 = vst.msk [vmem:[%s5635 + $0x151] sm:$0xff] %vm5579, %v5575
      %5665 = vst.msk [vmem:[%s5635 + $0x159] sm:$0xff] %vm5579, %v5576
      %5666 = vst.msk [vmem:[%s5635 + $0x169] sm:$0xff] %vm5579, %v5577
      %5667 = vst.msk [vmem:[%s5635 + $0x171] sm:$0xff] %vm5579, %v5578
      %v5668 = vld [vmem:[#allocation4] sm:$0xff]
      %v5669 = vld [vmem:[#allocation4 + $0x8] sm:$0xff]
      %v5670 = vld [vmem:[#allocation4 + $0x18] sm:$0xff]
      %v5671 = vld [vmem:[#allocation4 + $0x20] sm:$0xff]
      %v5672 = vld [vmem:[#allocation4 + $0x30] sm:$0xff]
      %v5673 = vld [vmem:[#allocation4 + $0x38] sm:$0xff]
      %v5674 = vld [vmem:[#allocation4 + $0x48] sm:$0xff]
      %v5675 = vld [vmem:[#allocation4 + $0x50] sm:$0xff]
      %v5676 = vld [vmem:[#allocation4 + $0x60] sm:$0xff]
      %v5677 = vld [vmem:[#allocation4 + $0x68] sm:$0xff]
      %v5678 = vld [vmem:[#allocation4 + $0x78] sm:$0xff]
      %v5679 = vld [vmem:[#allocation4 + $0x80] sm:$0xff]
      %v5680 = vld [vmem:[#allocation4 + $0x90] sm:$0xff]
      %v5681 = vld [vmem:[#allocation4 + $0x98] sm:$0xff]
      %v5682 = vld [vmem:[#allocation4 + $0xa8] sm:$0xff]
      %v5683 = vld [vmem:[#allocation4 + $0xb0] sm:$0xff]
      %v5684 = vld [vmem:[#allocation4 + $0xc0] sm:$0xff]
      %v5685 = vld [vmem:[#allocation4 + $0xc8] sm:$0xff]
      %v5686 = vld [vmem:[#allocation4 + $0xd8] sm:$0xff]
      %v5687 = vld [vmem:[#allocation4 + $0xe0] sm:$0xff]
      %v5688 = vld [vmem:[#allocation4 + $0xf0] sm:$0xff]
      %v5689 = vld [vmem:[#allocation4 + $0xf8] sm:$0xff]
      %v5690 = vld [vmem:[#allocation4 + $0x108] sm:$0xff]
      %v5691 = vld [vmem:[#allocation4 + $0x110] sm:$0xff]
      %v5692 = vld [vmem:[#allocation4 + $0x120] sm:$0xff]
      %v5693 = vld [vmem:[#allocation4 + $0x128] sm:$0xff]
      %v5694 = vld [vmem:[#allocation4 + $0x138] sm:$0xff]
      %v5695 = vld [vmem:[#allocation4 + $0x140] sm:$0xff]
      %v5696 = vld [vmem:[#allocation4 + $0x150] sm:$0xff]
      %v5697 = vld [vmem:[#allocation4 + $0x158] sm:$0xff]
      %v5698 = vld [vmem:[#allocation4 + $0x168] sm:$0xff]
      %v5699 = vld [vmem:[#allocation4 + $0x170] sm:$0xff]
      %5700 = vst.msk [vmem:[#allocation5] sm:$0xff] %vm5579, %v5668
      %5701 = vst.msk [vmem:[#allocation5 + $0x10] sm:$0xff] %vm5579, %v5669
      %5702 = vst.msk [vmem:[#allocation5 + $0x20] sm:$0xff] %vm5579, %v5670
      %5703 = vst.msk [vmem:[#allocation5 + $0x30] sm:$0xff] %vm5579, %v5671
      %5704 = vst.msk [vmem:[#allocation5 + $0x40] sm:$0xff] %vm5579, %v5672
      %5705 = vst.msk [vmem:[#allocation5 + $0x50] sm:$0xff] %vm5579, %v5673
      %5706 = vst.msk [vmem:[#allocation5 + $0x60] sm:$0xff] %vm5579, %v5674
      %5707 = vst.msk [vmem:[#allocation5 + $0x70] sm:$0xff] %vm5579, %v5675
      %5708 = vst.msk [vmem:[#allocation5 + $0x80] sm:$0xff] %vm5579, %v5676
      %5709 = vst.msk [vmem:[#allocation5 + $0x90] sm:$0xff] %vm5579, %v5677
      %5710 = vst.msk [vmem:[#allocation5 + $0xa0] sm:$0xff] %vm5579, %v5678
      %5711 = vst.msk [vmem:[#allocation5 + $0xb0] sm:$0xff] %vm5579, %v5679
      %5712 = vst.msk [vmem:[#allocation5 + $0xc0] sm:$0xff] %vm5579, %v5680
      %5713 = vst.msk [vmem:[#allocation5 + $0xd0] sm:$0xff] %vm5579, %v5681
      %5714 = vst.msk [vmem:[#allocation5 + $0xe0] sm:$0xff] %vm5579, %v5682
      %5715 = vst.msk [vmem:[#allocation5 + $0xf0] sm:$0xff] %vm5579, %v5683
      %5716 = vst.msk [vmem:[#allocation5 + $0x100] sm:$0xff] %vm5579, %v5684
      %5717 = vst.msk [vmem:[#allocation5 + $0x110] sm:$0xff] %vm5579, %v5685
      %5718 = vst.msk [vmem:[#allocation5 + $0x120] sm:$0xff] %vm5579, %v5686
      %5719 = vst.msk [vmem:[#allocation5 + $0x130] sm:$0xff] %vm5579, %v5687
      %5720 = vst.msk [vmem:[#allocation5 + $0x140] sm:$0xff] %vm5579, %v5688
      %5721 = vst.msk [vmem:[#allocation5 + $0x150] sm:$0xff] %vm5579, %v5689
      %5722 = vst.msk [vmem:[#allocation5 + $0x160] sm:$0xff] %vm5579, %v5690
      %5723 = vst.msk [vmem:[#allocation5 + $0x170] sm:$0xff] %vm5579, %v5691
      %5724 = vst.msk [vmem:[#allocation5 + $0x180] sm:$0xff] %vm5579, %v5692
      %5725 = vst.msk [vmem:[#allocation5 + $0x190] sm:$0xff] %vm5579, %v5693
      %5726 = vst.msk [vmem:[#allocation5 + $0x1a0] sm:$0xff] %vm5579, %v5694
      %5727 = vst.msk [vmem:[#allocation5 + $0x1b0] sm:$0xff] %vm5579, %v5695
      %5728 = vst.msk [vmem:[#allocation5 + $0x1c0] sm:$0xff] %vm5579, %v5696
      %5729 = vst.msk [vmem:[#allocation5 + $0x1d0] sm:$0xff] %vm5579, %v5697
      %5730 = vst.msk [vmem:[#allocation5 + $0x1e0] sm:$0xff] %vm5579, %v5698
      %5731 = vst.msk [vmem:[#allocation5 + $0x1f0] sm:$0xff] %vm5579, %v5699
      %v5732 = vld [vmem:[#allocation4 + $0x1] sm:$0xff]
      %v5733 = vld [vmem:[#allocation4 + $0x9] sm:$0xff]
      %v5734 = vld [vmem:[#allocation4 + $0x19] sm:$0xff]
      %v5735 = vld [vmem:[#allocation4 + $0x21] sm:$0xff]
      %v5736 = vld [vmem:[#allocation4 + $0x31] sm:$0xff]
      %v5737 = vld [vmem:[#allocation4 + $0x39] sm:$0xff]
      %v5738 = vld [vmem:[#allocation4 + $0x49] sm:$0xff]
      %v5739 = vld [vmem:[#allocation4 + $0x51] sm:$0xff]
      %v5740 = vld [vmem:[#allocation4 + $0x61] sm:$0xff]
      %v5741 = vld [vmem:[#allocation4 + $0x69] sm:$0xff]
      %v5742 = vld [vmem:[#allocation4 + $0x79] sm:$0xff]
      %v5743 = vld [vmem:[#allocation4 + $0x81] sm:$0xff]
      %v5744 = vld [vmem:[#allocation4 + $0x91] sm:$0xff]
      %v5745 = vld [vmem:[#allocation4 + $0x99] sm:$0xff]
      %v5746 = vld [vmem:[#allocation4 + $0xa9] sm:$0xff]
      %v5747 = vld [vmem:[#allocation4 + $0xb1] sm:$0xff]
      %v5748 = vld [vmem:[#allocation4 + $0xc1] sm:$0xff]
      %v5749 = vld [vmem:[#allocation4 + $0xc9] sm:$0xff]
      %v5750 = vld [vmem:[#allocation4 + $0xd9] sm:$0xff]
      %v5751 = vld [vmem:[#allocation4 + $0xe1] sm:$0xff]
      %v5752 = vld [vmem:[#allocation4 + $0xf1] sm:$0xff]
      %v5753 = vld [vmem:[#allocation4 + $0xf9] sm:$0xff]
      %v5754 = vld [vmem:[#allocation4 + $0x109] sm:$0xff]
      %v5755 = vld [vmem:[#allocation4 + $0x111] sm:$0xff]
      %v5756 = vld [vmem:[#allocation4 + $0x121] sm:$0xff]
      %v5757 = vld [vmem:[#allocation4 + $0x129] sm:$0xff]
      %v5758 = vld [vmem:[#allocation4 + $0x139] sm:$0xff]
      %v5759 = vld [vmem:[#allocation4 + $0x141] sm:$0xff]
      %v5760 = vld [vmem:[#allocation4 + $0x151] sm:$0xff]
      %v5761 = vld [vmem:[#allocation4 + $0x159] sm:$0xff]
      %v5762 = vld [vmem:[#allocation4 + $0x169] sm:$0xff]
      %v5763 = vld [vmem:[#allocation4 + $0x171] sm:$0xff]
      %5796 = vrot.lane.b32.xlu0 %v5732, 20
      %v5797 = vpop.permute.xlu0 %5796
      %5798 = vrot.lane.b32.xlu0 %v5733, 20
      %v5799 = vpop.permute.xlu0 %5798
      %5800 = vrot.lane.b32.xlu0 %v5734, 20
      %v5801 = vpop.permute.xlu0 %5800
      %5802 = vrot.lane.b32.xlu0 %v5735, 20
      %v5803 = vpop.permute.xlu0 %5802
      %5804 = vrot.lane.b32.xlu0 %v5736, 20
      %v5805 = vpop.permute.xlu0 %5804
      %5806 = vrot.lane.b32.xlu0 %v5737, 20
      %v5807 = vpop.permute.xlu0 %5806
      %5808 = vrot.lane.b32.xlu0 %v5738, 20
      %v5809 = vpop.permute.xlu0 %5808
      %5810 = vrot.lane.b32.xlu0 %v5739, 20
      %v5811 = vpop.permute.xlu0 %5810
      %5812 = vrot.lane.b32.xlu0 %v5740, 20
      %v5813 = vpop.permute.xlu0 %5812
      %5814 = vrot.lane.b32.xlu0 %v5741, 20
      %v5815 = vpop.permute.xlu0 %5814
      %5816 = vrot.lane.b32.xlu0 %v5742, 20
      %v5817 = vpop.permute.xlu0 %5816
      %5818 = vrot.lane.b32.xlu0 %v5743, 20
      %v5819 = vpop.permute.xlu0 %5818
      %5820 = vrot.lane.b32.xlu0 %v5744, 20
      %v5821 = vpop.permute.xlu0 %5820
      %5822 = vrot.lane.b32.xlu0 %v5745, 20
      %v5823 = vpop.permute.xlu0 %5822
      %5824 = vrot.lane.b32.xlu0 %v5746, 20
      %v5825 = vpop.permute.xlu0 %5824
      %5826 = vrot.lane.b32.xlu0 %v5747, 20
      %v5827 = vpop.permute.xlu0 %5826
      %5828 = vrot.lane.b32.xlu0 %v5748, 20
      %v5829 = vpop.permute.xlu0 %5828
      %5830 = vrot.lane.b32.xlu0 %v5749, 20
      %v5831 = vpop.permute.xlu0 %5830
      %5832 = vrot.lane.b32.xlu0 %v5750, 20
      %v5833 = vpop.permute.xlu0 %5832
      %5834 = vrot.lane.b32.xlu0 %v5751, 20
      %v5835 = vpop.permute.xlu0 %5834
      %5836 = vrot.lane.b32.xlu0 %v5752, 20
      %v5837 = vpop.permute.xlu0 %5836
      %5838 = vrot.lane.b32.xlu0 %v5753, 20
      %v5839 = vpop.permute.xlu0 %5838
      %5840 = vrot.lane.b32.xlu0 %v5754, 20
      %v5841 = vpop.permute.xlu0 %5840
      %5842 = vrot.lane.b32.xlu0 %v5755, 20
      %v5843 = vpop.permute.xlu0 %5842
      %5844 = vrot.lane.b32.xlu0 %v5756, 20
      %v5845 = vpop.permute.xlu0 %5844
      %5846 = vrot.lane.b32.xlu0 %v5757, 20
      %v5847 = vpop.permute.xlu0 %5846
      %5848 = vrot.lane.b32.xlu0 %v5758, 20
      %v5849 = vpop.permute.xlu0 %5848
      %5850 = vrot.lane.b32.xlu0 %v5759, 20
      %v5851 = vpop.permute.xlu0 %5850
      %5852 = vrot.lane.b32.xlu0 %v5760, 20
      %v5853 = vpop.permute.xlu0 %5852
      %5854 = vrot.lane.b32.xlu0 %v5761, 20
      %v5855 = vpop.permute.xlu0 %5854
      %5856 = vrot.lane.b32.xlu0 %v5762, 20
      %v5857 = vpop.permute.xlu0 %5856
      %5858 = vrot.lane.b32.xlu0 %v5763, 20
      %v5859 = vpop.permute.xlu0 %5858
      %vm5892 = vcmask 326816
      %5893 = vst.msk [vmem:[#allocation5] sm:$0xff] %vm5892, %v5797
      %5894 = vst.msk [vmem:[#allocation5 + $0x10] sm:$0xff] %vm5892, %v5799
      %5895 = vst.msk [vmem:[#allocation5 + $0x20] sm:$0xff] %vm5892, %v5801
      %5896 = vst.msk [vmem:[#allocation5 + $0x30] sm:$0xff] %vm5892, %v5803
      %5897 = vst.msk [vmem:[#allocation5 + $0x40] sm:$0xff] %vm5892, %v5805
      %5898 = vst.msk [vmem:[#allocation5 + $0x50] sm:$0xff] %vm5892, %v5807
      %5899 = vst.msk [vmem:[#allocation5 + $0x60] sm:$0xff] %vm5892, %v5809
      %5900 = vst.msk [vmem:[#allocation5 + $0x70] sm:$0xff] %vm5892, %v5811
      %5901 = vst.msk [vmem:[#allocation5 + $0x80] sm:$0xff] %vm5892, %v5813
      %5902 = vst.msk [vmem:[#allocation5 + $0x90] sm:$0xff] %vm5892, %v5815
      %5903 = vst.msk [vmem:[#allocation5 + $0xa0] sm:$0xff] %vm5892, %v5817
      %5904 = vst.msk [vmem:[#allocation5 + $0xb0] sm:$0xff] %vm5892, %v5819
      %5905 = vst.msk [vmem:[#allocation5 + $0xc0] sm:$0xff] %vm5892, %v5821
      %5906 = vst.msk [vmem:[#allocation5 + $0xd0] sm:$0xff] %vm5892, %v5823
      %5907 = vst.msk [vmem:[#allocation5 + $0xe0] sm:$0xff] %vm5892, %v5825
      %5908 = vst.msk [vmem:[#allocation5 + $0xf0] sm:$0xff] %vm5892, %v5827
      %5909 = vst.msk [vmem:[#allocation5 + $0x100] sm:$0xff] %vm5892, %v5829
      %5910 = vst.msk [vmem:[#allocation5 + $0x110] sm:$0xff] %vm5892, %v5831
      %5911 = vst.msk [vmem:[#allocation5 + $0x120] sm:$0xff] %vm5892, %v5833
      %5912 = vst.msk [vmem:[#allocation5 + $0x130] sm:$0xff] %vm5892, %v5835
      %5913 = vst.msk [vmem:[#allocation5 + $0x140] sm:$0xff] %vm5892, %v5837
      %5914 = vst.msk [vmem:[#allocation5 + $0x150] sm:$0xff] %vm5892, %v5839
      %5915 = vst.msk [vmem:[#allocation5 + $0x160] sm:$0xff] %vm5892, %v5841
      %5916 = vst.msk [vmem:[#allocation5 + $0x170] sm:$0xff] %vm5892, %v5843
      %5917 = vst.msk [vmem:[#allocation5 + $0x180] sm:$0xff] %vm5892, %v5845
      %5918 = vst.msk [vmem:[#allocation5 + $0x190] sm:$0xff] %vm5892, %v5847
      %5919 = vst.msk [vmem:[#allocation5 + $0x1a0] sm:$0xff] %vm5892, %v5849
      %5920 = vst.msk [vmem:[#allocation5 + $0x1b0] sm:$0xff] %vm5892, %v5851
      %5921 = vst.msk [vmem:[#allocation5 + $0x1c0] sm:$0xff] %vm5892, %v5853
      %5922 = vst.msk [vmem:[#allocation5 + $0x1d0] sm:$0xff] %vm5892, %v5855
      %5923 = vst.msk [vmem:[#allocation5 + $0x1e0] sm:$0xff] %vm5892, %v5857
      %5924 = vst.msk [vmem:[#allocation5 + $0x1f0] sm:$0xff] %vm5892, %v5859
      %v5925 = vld [vmem:[#allocation4 + $0x2] sm:$0xff]
      %v5926 = vld [vmem:[#allocation4 + $0xa] sm:$0xff]
      %v5927 = vld [vmem:[#allocation4 + $0x1a] sm:$0xff]
      %v5928 = vld [vmem:[#allocation4 + $0x22] sm:$0xff]
      %v5929 = vld [vmem:[#allocation4 + $0x32] sm:$0xff]
      %v5930 = vld [vmem:[#allocation4 + $0x3a] sm:$0xff]
      %v5931 = vld [vmem:[#allocation4 + $0x4a] sm:$0xff]
      %v5932 = vld [vmem:[#allocation4 + $0x52] sm:$0xff]
      %v5933 = vld [vmem:[#allocation4 + $0x62] sm:$0xff]
      %v5934 = vld [vmem:[#allocation4 + $0x6a] sm:$0xff]
      %v5935 = vld [vmem:[#allocation4 + $0x7a] sm:$0xff]
      %v5936 = vld [vmem:[#allocation4 + $0x82] sm:$0xff]
      %v5937 = vld [vmem:[#allocation4 + $0x92] sm:$0xff]
      %v5938 = vld [vmem:[#allocation4 + $0x9a] sm:$0xff]
      %v5939 = vld [vmem:[#allocation4 + $0xaa] sm:$0xff]
      %v5940 = vld [vmem:[#allocation4 + $0xb2] sm:$0xff]
      %v5941 = vld [vmem:[#allocation4 + $0xc2] sm:$0xff]
      %v5942 = vld [vmem:[#allocation4 + $0xca] sm:$0xff]
      %v5943 = vld [vmem:[#allocation4 + $0xda] sm:$0xff]
      %v5944 = vld [vmem:[#allocation4 + $0xe2] sm:$0xff]
      %v5945 = vld [vmem:[#allocation4 + $0xf2] sm:$0xff]
      %v5946 = vld [vmem:[#allocation4 + $0xfa] sm:$0xff]
      %v5947 = vld [vmem:[#allocation4 + $0x10a] sm:$0xff]
      %v5948 = vld [vmem:[#allocation4 + $0x112] sm:$0xff]
      %v5949 = vld [vmem:[#allocation4 + $0x122] sm:$0xff]
      %v5950 = vld [vmem:[#allocation4 + $0x12a] sm:$0xff]
      %v5951 = vld [vmem:[#allocation4 + $0x13a] sm:$0xff]
      %v5952 = vld [vmem:[#allocation4 + $0x142] sm:$0xff]
      %v5953 = vld [vmem:[#allocation4 + $0x152] sm:$0xff]
      %v5954 = vld [vmem:[#allocation4 + $0x15a] sm:$0xff]
      %v5955 = vld [vmem:[#allocation4 + $0x16a] sm:$0xff]
      %v5956 = vld [vmem:[#allocation4 + $0x172] sm:$0xff]
      %5989 = vrot.lane.b32.xlu0 %v5925, 40
      %v5990 = vpop.permute.xlu0 %5989
      %5991 = vrot.lane.b32.xlu0 %v5926, 40
      %v5992 = vpop.permute.xlu0 %5991
      %5993 = vrot.lane.b32.xlu0 %v5927, 40
      %v5994 = vpop.permute.xlu0 %5993
      %5995 = vrot.lane.b32.xlu0 %v5928, 40
      %v5996 = vpop.permute.xlu0 %5995
      %5997 = vrot.lane.b32.xlu0 %v5929, 40
      %v5998 = vpop.permute.xlu0 %5997
      %5999 = vrot.lane.b32.xlu0 %v5930, 40
      %v6000 = vpop.permute.xlu0 %5999
      %6001 = vrot.lane.b32.xlu0 %v5931, 40
      %v6002 = vpop.permute.xlu0 %6001
      %6003 = vrot.lane.b32.xlu0 %v5932, 40
      %v6004 = vpop.permute.xlu0 %6003
      %6005 = vrot.lane.b32.xlu0 %v5933, 40
      %v6006 = vpop.permute.xlu0 %6005
      %6007 = vrot.lane.b32.xlu0 %v5934, 40
      %v6008 = vpop.permute.xlu0 %6007
      %6009 = vrot.lane.b32.xlu0 %v5935, 40
      %v6010 = vpop.permute.xlu0 %6009
      %6011 = vrot.lane.b32.xlu0 %v5936, 40
      %v6012 = vpop.permute.xlu0 %6011
      %6013 = vrot.lane.b32.xlu0 %v5937, 40
      %v6014 = vpop.permute.xlu0 %6013
      %6015 = vrot.lane.b32.xlu0 %v5938, 40
      %v6016 = vpop.permute.xlu0 %6015
      %6017 = vrot.lane.b32.xlu0 %v5939, 40
      %v6018 = vpop.permute.xlu0 %6017
      %6019 = vrot.lane.b32.xlu0 %v5940, 40
      %v6020 = vpop.permute.xlu0 %6019
      %6021 = vrot.lane.b32.xlu0 %v5941, 40
      %v6022 = vpop.permute.xlu0 %6021
      %6023 = vrot.lane.b32.xlu0 %v5942, 40
      %v6024 = vpop.permute.xlu0 %6023
      %6025 = vrot.lane.b32.xlu0 %v5943, 40
      %v6026 = vpop.permute.xlu0 %6025
      %6027 = vrot.lane.b32.xlu0 %v5944, 40
      %v6028 = vpop.permute.xlu0 %6027
      %6029 = vrot.lane.b32.xlu0 %v5945, 40
      %v6030 = vpop.permute.xlu0 %6029
      %6031 = vrot.lane.b32.xlu0 %v5946, 40
      %v6032 = vpop.permute.xlu0 %6031
      %6033 = vrot.lane.b32.xlu0 %v5947, 40
      %v6034 = vpop.permute.xlu0 %6033
      %6035 = vrot.lane.b32.xlu0 %v5948, 40
      %v6036 = vpop.permute.xlu0 %6035
      %6037 = vrot.lane.b32.xlu0 %v5949, 40
      %v6038 = vpop.permute.xlu0 %6037
      %6039 = vrot.lane.b32.xlu0 %v5950, 40
      %v6040 = vpop.permute.xlu0 %6039
      %6041 = vrot.lane.b32.xlu0 %v5951, 40
      %v6042 = vpop.permute.xlu0 %6041
      %6043 = vrot.lane.b32.xlu0 %v5952, 40
      %v6044 = vpop.permute.xlu0 %6043
      %6045 = vrot.lane.b32.xlu0 %v5953, 40
      %v6046 = vpop.permute.xlu0 %6045
      %6047 = vrot.lane.b32.xlu0 %v5954, 40
      %v6048 = vpop.permute.xlu0 %6047
      %6049 = vrot.lane.b32.xlu0 %v5955, 40
      %v6050 = vpop.permute.xlu0 %6049
      %6051 = vrot.lane.b32.xlu0 %v5956, 40
      %v6052 = vpop.permute.xlu0 %6051
      %vm6085 = vcmask 490816
      %6086 = vst.msk [vmem:[#allocation5] sm:$0xff] %vm6085, %v5990
      %6087 = vst.msk [vmem:[#allocation5 + $0x10] sm:$0xff] %vm6085, %v5992
      %6088 = vst.msk [vmem:[#allocation5 + $0x20] sm:$0xff] %vm6085, %v5994
      %6089 = vst.msk [vmem:[#allocation5 + $0x30] sm:$0xff] %vm6085, %v5996
      %6090 = vst.msk [vmem:[#allocation5 + $0x40] sm:$0xff] %vm6085, %v5998
      %6091 = vst.msk [vmem:[#allocation5 + $0x50] sm:$0xff] %vm6085, %v6000
      %6092 = vst.msk [vmem:[#allocation5 + $0x60] sm:$0xff] %vm6085, %v6002
      %6093 = vst.msk [vmem:[#allocation5 + $0x70] sm:$0xff] %vm6085, %v6004
      %6094 = vst.msk [vmem:[#allocation5 + $0x80] sm:$0xff] %vm6085, %v6006
      %6095 = vst.msk [vmem:[#allocation5 + $0x90] sm:$0xff] %vm6085, %v6008
      %6096 = vst.msk [vmem:[#allocation5 + $0xa0] sm:$0xff] %vm6085, %v6010
      %6097 = vst.msk [vmem:[#allocation5 + $0xb0] sm:$0xff] %vm6085, %v6012
      %6098 = vst.msk [vmem:[#allocation5 + $0xc0] sm:$0xff] %vm6085, %v6014
      %6099 = vst.msk [vmem:[#allocation5 + $0xd0] sm:$0xff] %vm6085, %v6016
      %6100 = vst.msk [vmem:[#allocation5 + $0xe0] sm:$0xff] %vm6085, %v6018
      %6101 = vst.msk [vmem:[#allocation5 + $0xf0] sm:$0xff] %vm6085, %v6020
      %6102 = vst.msk [vmem:[#allocation5 + $0x100] sm:$0xff] %vm6085, %v6022
      %6103 = vst.msk [vmem:[#allocation5 + $0x110] sm:$0xff] %vm6085, %v6024
      %6104 = vst.msk [vmem:[#allocation5 + $0x120] sm:$0xff] %vm6085, %v6026
      %6105 = vst.msk [vmem:[#allocation5 + $0x130] sm:$0xff] %vm6085, %v6028
      %6106 = vst.msk [vmem:[#allocation5 + $0x140] sm:$0xff] %vm6085, %v6030
      %6107 = vst.msk [vmem:[#allocation5 + $0x150] sm:$0xff] %vm6085, %v6032
      %6108 = vst.msk [vmem:[#allocation5 + $0x160] sm:$0xff] %vm6085, %v6034
      %6109 = vst.msk [vmem:[#allocation5 + $0x170] sm:$0xff] %vm6085, %v6036
      %6110 = vst.msk [vmem:[#allocation5 + $0x180] sm:$0xff] %vm6085, %v6038
      %6111 = vst.msk [vmem:[#allocation5 + $0x190] sm:$0xff] %vm6085, %v6040
      %6112 = vst.msk [vmem:[#allocation5 + $0x1a0] sm:$0xff] %vm6085, %v6042
      %6113 = vst.msk [vmem:[#allocation5 + $0x1b0] sm:$0xff] %vm6085, %v6044
      %6114 = vst.msk [vmem:[#allocation5 + $0x1c0] sm:$0xff] %vm6085, %v6046
      %6115 = vst.msk [vmem:[#allocation5 + $0x1d0] sm:$0xff] %vm6085, %v6048
      %6116 = vst.msk [vmem:[#allocation5 + $0x1e0] sm:$0xff] %vm6085, %v6050
      %6117 = vst.msk [vmem:[#allocation5 + $0x1f0] sm:$0xff] %vm6085, %v6052
      %v6118 = vld [vmem:[%s5635] sm:$0xff]
      %v6119 = vld [vmem:[%s5635 + $0x8] sm:$0xff]
      %v6120 = vld [vmem:[%s5635 + $0x18] sm:$0xff]
      %v6121 = vld [vmem:[%s5635 + $0x20] sm:$0xff]
      %v6122 = vld [vmem:[%s5635 + $0x30] sm:$0xff]
      %v6123 = vld [vmem:[%s5635 + $0x38] sm:$0xff]
      %v6124 = vld [vmem:[%s5635 + $0x48] sm:$0xff]
      %v6125 = vld [vmem:[%s5635 + $0x50] sm:$0xff]
      %v6126 = vld [vmem:[%s5635 + $0x60] sm:$0xff]
      %v6127 = vld [vmem:[%s5635 + $0x68] sm:$0xff]
      %v6128 = vld [vmem:[%s5635 + $0x78] sm:$0xff]
      %v6129 = vld [vmem:[%s5635 + $0x80] sm:$0xff]
      %v6130 = vld [vmem:[%s5635 + $0x90] sm:$0xff]
      %v6131 = vld [vmem:[%s5635 + $0x98] sm:$0xff]
      %v6132 = vld [vmem:[%s5635 + $0xa8] sm:$0xff]
      %v6133 = vld [vmem:[%s5635 + $0xb0] sm:$0xff]
      %v6134 = vld [vmem:[%s5635 + $0xc0] sm:$0xff]
      %v6135 = vld [vmem:[%s5635 + $0xc8] sm:$0xff]
      %v6136 = vld [vmem:[%s5635 + $0xd8] sm:$0xff]
      %v6137 = vld [vmem:[%s5635 + $0xe0] sm:$0xff]
      %v6138 = vld [vmem:[%s5635 + $0xf0] sm:$0xff]
      %v6139 = vld [vmem:[%s5635 + $0xf8] sm:$0xff]
      %v6140 = vld [vmem:[%s5635 + $0x108] sm:$0xff]
      %v6141 = vld [vmem:[%s5635 + $0x110] sm:$0xff]
      %v6142 = vld [vmem:[%s5635 + $0x120] sm:$0xff]
      %v6143 = vld [vmem:[%s5635 + $0x128] sm:$0xff]
      %v6144 = vld [vmem:[%s5635 + $0x138] sm:$0xff]
      %v6145 = vld [vmem:[%s5635 + $0x140] sm:$0xff]
      %v6146 = vld [vmem:[%s5635 + $0x150] sm:$0xff]
      %v6147 = vld [vmem:[%s5635 + $0x158] sm:$0xff]
      %v6148 = vld [vmem:[%s5635 + $0x168] sm:$0xff]
      %v6149 = vld [vmem:[%s5635 + $0x170] sm:$0xff]
      %6182 = vrot.lane.b32.xlu0 %v6118, 60
      %v6183 = vpop.permute.xlu0 %6182
      %6184 = vrot.lane.b32.xlu0 %v6119, 60
      %v6185 = vpop.permute.xlu0 %6184
      %6186 = vrot.lane.b32.xlu0 %v6120, 60
      %v6187 = vpop.permute.xlu0 %6186
      %6188 = vrot.lane.b32.xlu0 %v6121, 60
      %v6189 = vpop.permute.xlu0 %6188
      %6190 = vrot.lane.b32.xlu0 %v6122, 60
      %v6191 = vpop.permute.xlu0 %6190
      %6192 = vrot.lane.b32.xlu0 %v6123, 60
      %v6193 = vpop.permute.xlu0 %6192
      %6194 = vrot.lane.b32.xlu0 %v6124, 60
      %v6195 = vpop.permute.xlu0 %6194
      %6196 = vrot.lane.b32.xlu0 %v6125, 60
      %v6197 = vpop.permute.xlu0 %6196
      %6198 = vrot.lane.b32.xlu0 %v6126, 60
      %v6199 = vpop.permute.xlu0 %6198
      %6200 = vrot.lane.b32.xlu0 %v6127, 60
      %v6201 = vpop.permute.xlu0 %6200
      %6202 = vrot.lane.b32.xlu0 %v6128, 60
      %v6203 = vpop.permute.xlu0 %6202
      %6204 = vrot.lane.b32.xlu0 %v6129, 60
      %v6205 = vpop.permute.xlu0 %6204
      %6206 = vrot.lane.b32.xlu0 %v6130, 60
      %v6207 = vpop.permute.xlu0 %6206
      %6208 = vrot.lane.b32.xlu0 %v6131, 60
      %v6209 = vpop.permute.xlu0 %6208
      %6210 = vrot.lane.b32.xlu0 %v6132, 60
      %v6211 = vpop.permute.xlu0 %6210
      %6212 = vrot.lane.b32.xlu0 %v6133, 60
      %v6213 = vpop.permute.xlu0 %6212
      %6214 = vrot.lane.b32.xlu0 %v6134, 60
      %v6215 = vpop.permute.xlu0 %6214
      %6216 = vrot.lane.b32.xlu0 %v6135, 60
      %v6217 = vpop.permute.xlu0 %6216
      %6218 = vrot.lane.b32.xlu0 %v6136, 60
      %v6219 = vpop.permute.xlu0 %6218
      %6220 = vrot.lane.b32.xlu0 %v6137, 60
      %v6221 = vpop.permute.xlu0 %6220
      %6222 = vrot.lane.b32.xlu0 %v6138, 60
      %v6223 = vpop.permute.xlu0 %6222
      %6224 = vrot.lane.b32.xlu0 %v6139, 60
      %v6225 = vpop.permute.xlu0 %6224
      %6226 = vrot.lane.b32.xlu0 %v6140, 60
      %v6227 = vpop.permute.xlu0 %6226
      %6228 = vrot.lane.b32.xlu0 %v6141, 60
      %v6229 = vpop.permute.xlu0 %6228
      %6230 = vrot.lane.b32.xlu0 %v6142, 60
      %v6231 = vpop.permute.xlu0 %6230
      %6232 = vrot.lane.b32.xlu0 %v6143, 60
      %v6233 = vpop.permute.xlu0 %6232
      %6234 = vrot.lane.b32.xlu0 %v6144, 60
      %v6235 = vpop.permute.xlu0 %6234
      %6236 = vrot.lane.b32.xlu0 %v6145, 60
      %v6237 = vpop.permute.xlu0 %6236
      %6238 = vrot.lane.b32.xlu0 %v6146, 60
      %v6239 = vpop.permute.xlu0 %6238
      %6240 = vrot.lane.b32.xlu0 %v6147, 60
      %v6241 = vpop.permute.xlu0 %6240
      %6242 = vrot.lane.b32.xlu0 %v6148, 60
      %v6243 = vpop.permute.xlu0 %6242
      %6244 = vrot.lane.b32.xlu0 %v6149, 60
      %v6245 = vpop.permute.xlu0 %6244
      %vm6278 = vcmask 654816
      %6279 = vst.msk [vmem:[#allocation5] sm:$0xff] %vm6278, %v6183
      %6280 = vst.msk [vmem:[#allocation5 + $0x10] sm:$0xff] %vm6278, %v6185
      %6281 = vst.msk [vmem:[#allocation5 + $0x20] sm:$0xff] %vm6278, %v6187
      %6282 = vst.msk [vmem:[#allocation5 + $0x30] sm:$0xff] %vm6278, %v6189
      %6283 = vst.msk [vmem:[#allocation5 + $0x40] sm:$0xff] %vm6278, %v6191
      %6284 = vst.msk [vmem:[#allocation5 + $0x50] sm:$0xff] %vm6278, %v6193
      %6285 = vst.msk [vmem:[#allocation5 + $0x60] sm:$0xff] %vm6278, %v6195
      %6286 = vst.msk [vmem:[#allocation5 + $0x70] sm:$0xff] %vm6278, %v6197
      %6287 = vst.msk [vmem:[#allocation5 + $0x80] sm:$0xff] %vm6278, %v6199
      %6288 = vst.msk [vmem:[#allocation5 + $0x90] sm:$0xff] %vm6278, %v6201
      %6289 = vst.msk [vmem:[#allocation5 + $0xa0] sm:$0xff] %vm6278, %v6203
      %6290 = vst.msk [vmem:[#allocation5 + $0xb0] sm:$0xff] %vm6278, %v6205
      %6291 = vst.msk [vmem:[#allocation5 + $0xc0] sm:$0xff] %vm6278, %v6207
      %6292 = vst.msk [vmem:[#allocation5 + $0xd0] sm:$0xff] %vm6278, %v6209
      %6293 = vst.msk [vmem:[#allocation5 + $0xe0] sm:$0xff] %vm6278, %v6211
      %6294 = vst.msk [vmem:[#allocation5 + $0xf0] sm:$0xff] %vm6278, %v6213
      %6295 = vst.msk [vmem:[#allocation5 + $0x100] sm:$0xff] %vm6278, %v6215
      %6296 = vst.msk [vmem:[#allocation5 + $0x110] sm:$0xff] %vm6278, %v6217
      %6297 = vst.msk [vmem:[#allocation5 + $0x120] sm:$0xff] %vm6278, %v6219
      %6298 = vst.msk [vmem:[#allocation5 + $0x130] sm:$0xff] %vm6278, %v6221
      %6299 = vst.msk [vmem:[#allocation5 + $0x140] sm:$0xff] %vm6278, %v6223
      %6300 = vst.msk [vmem:[#allocation5 + $0x150] sm:$0xff] %vm6278, %v6225
      %6301 = vst.msk [vmem:[#allocation5 + $0x160] sm:$0xff] %vm6278, %v6227
      %6302 = vst.msk [vmem:[#allocation5 + $0x170] sm:$0xff] %vm6278, %v6229
      %6303 = vst.msk [vmem:[#allocation5 + $0x180] sm:$0xff] %vm6278, %v6231
      %6304 = vst.msk [vmem:[#allocation5 + $0x190] sm:$0xff] %vm6278, %v6233
      %6305 = vst.msk [vmem:[#allocation5 + $0x1a0] sm:$0xff] %vm6278, %v6235
      %6306 = vst.msk [vmem:[#allocation5 + $0x1b0] sm:$0xff] %vm6278, %v6237
      %6307 = vst.msk [vmem:[#allocation5 + $0x1c0] sm:$0xff] %vm6278, %v6239
      %6308 = vst.msk [vmem:[#allocation5 + $0x1d0] sm:$0xff] %vm6278, %v6241
      %6309 = vst.msk [vmem:[#allocation5 + $0x1e0] sm:$0xff] %vm6278, %v6243
      %6310 = vst.msk [vmem:[#allocation5 + $0x1f0] sm:$0xff] %vm6278, %v6245
      %v6311 = vld [vmem:[%s5635 + $0x1] sm:$0xff]
      %v6312 = vld [vmem:[%s5635 + $0x9] sm:$0xff]
      %v6313 = vld [vmem:[%s5635 + $0x19] sm:$0xff]
      %v6314 = vld [vmem:[%s5635 + $0x21] sm:$0xff]
      %v6315 = vld [vmem:[%s5635 + $0x31] sm:$0xff]
      %v6316 = vld [vmem:[%s5635 + $0x39] sm:$0xff]
      %v6317 = vld [vmem:[%s5635 + $0x49] sm:$0xff]
      %v6318 = vld [vmem:[%s5635 + $0x51] sm:$0xff]
      %v6319 = vld [vmem:[%s5635 + $0x61] sm:$0xff]
      %v6320 = vld [vmem:[%s5635 + $0x69] sm:$0xff]
      %v6321 = vld [vmem:[%s5635 + $0x79] sm:$0xff]
      %v6322 = vld [vmem:[%s5635 + $0x81] sm:$0xff]
      %v6323 = vld [vmem:[%s5635 + $0x91] sm:$0xff]
      %v6324 = vld [vmem:[%s5635 + $0x99] sm:$0xff]
      %v6325 = vld [vmem:[%s5635 + $0xa9] sm:$0xff]
      %v6326 = vld [vmem:[%s5635 + $0xb1] sm:$0xff]
      %v6327 = vld [vmem:[%s5635 + $0xc1] sm:$0xff]
      %v6328 = vld [vmem:[%s5635 + $0xc9] sm:$0xff]
      %v6329 = vld [vmem:[%s5635 + $0xd9] sm:$0xff]
      %v6330 = vld [vmem:[%s5635 + $0xe1] sm:$0xff]
      %v6331 = vld [vmem:[%s5635 + $0xf1] sm:$0xff]
      %v6332 = vld [vmem:[%s5635 + $0xf9] sm:$0xff]
      %v6333 = vld [vmem:[%s5635 + $0x109] sm:$0xff]
      %v6334 = vld [vmem:[%s5635 + $0x111] sm:$0xff]
      %v6335 = vld [vmem:[%s5635 + $0x121] sm:$0xff]
      %v6336 = vld [vmem:[%s5635 + $0x129] sm:$0xff]
      %v6337 = vld [vmem:[%s5635 + $0x139] sm:$0xff]
      %v6338 = vld [vmem:[%s5635 + $0x141] sm:$0xff]
      %v6339 = vld [vmem:[%s5635 + $0x151] sm:$0xff]
      %v6340 = vld [vmem:[%s5635 + $0x159] sm:$0xff]
      %v6341 = vld [vmem:[%s5635 + $0x169] sm:$0xff]
      %v6342 = vld [vmem:[%s5635 + $0x171] sm:$0xff]
      %6375 = vrot.lane.b32.xlu0 %v6311, 80
      %v6376 = vpop.permute.xlu0 %6375
      %6377 = vrot.lane.b32.xlu0 %v6312, 80
      %v6378 = vpop.permute.xlu0 %6377
      %6379 = vrot.lane.b32.xlu0 %v6313, 80
      %v6380 = vpop.permute.xlu0 %6379
      %6381 = vrot.lane.b32.xlu0 %v6314, 80
      %v6382 = vpop.permute.xlu0 %6381
      %6383 = vrot.lane.b32.xlu0 %v6315, 80
      %v6384 = vpop.permute.xlu0 %6383
      %6385 = vrot.lane.b32.xlu0 %v6316, 80
      %v6386 = vpop.permute.xlu0 %6385
      %6387 = vrot.lane.b32.xlu0 %v6317, 80
      %v6388 = vpop.permute.xlu0 %6387
      %6389 = vrot.lane.b32.xlu0 %v6318, 80
      %v6390 = vpop.permute.xlu0 %6389
      %6391 = vrot.lane.b32.xlu0 %v6319, 80
      %v6392 = vpop.permute.xlu0 %6391
      %6393 = vrot.lane.b32.xlu0 %v6320, 80
      %v6394 = vpop.permute.xlu0 %6393
      %6395 = vrot.lane.b32.xlu0 %v6321, 80
      %v6396 = vpop.permute.xlu0 %6395
      %6397 = vrot.lane.b32.xlu0 %v6322, 80
      %v6398 = vpop.permute.xlu0 %6397
      %6399 = vrot.lane.b32.xlu0 %v6323, 80
      %v6400 = vpop.permute.xlu0 %6399
      %6401 = vrot.lane.b32.xlu0 %v6324, 80
      %v6402 = vpop.permute.xlu0 %6401
      %6403 = vrot.lane.b32.xlu0 %v6325, 80
      %v6404 = vpop.permute.xlu0 %6403
      %6405 = vrot.lane.b32.xlu0 %v6326, 80
      %v6406 = vpop.permute.xlu0 %6405
      %6407 = vrot.lane.b32.xlu0 %v6327, 80
      %v6408 = vpop.permute.xlu0 %6407
      %6409 = vrot.lane.b32.xlu0 %v6328, 80
      %v6410 = vpop.permute.xlu0 %6409
      %6411 = vrot.lane.b32.xlu0 %v6329, 80
      %v6412 = vpop.permute.xlu0 %6411
      %6413 = vrot.lane.b32.xlu0 %v6330, 80
      %v6414 = vpop.permute.xlu0 %6413
      %6415 = vrot.lane.b32.xlu0 %v6331, 80
      %v6416 = vpop.permute.xlu0 %6415
      %6417 = vrot.lane.b32.xlu0 %v6332, 80
      %v6418 = vpop.permute.xlu0 %6417
      %6419 = vrot.lane.b32.xlu0 %v6333, 80
      %v6420 = vpop.permute.xlu0 %6419
      %6421 = vrot.lane.b32.xlu0 %v6334, 80
      %v6422 = vpop.permute.xlu0 %6421
      %6423 = vrot.lane.b32.xlu0 %v6335, 80
      %v6424 = vpop.permute.xlu0 %6423
      %6425 = vrot.lane.b32.xlu0 %v6336, 80
      %v6426 = vpop.permute.xlu0 %6425
      %6427 = vrot.lane.b32.xlu0 %v6337, 80
      %v6428 = vpop.permute.xlu0 %6427
      %6429 = vrot.lane.b32.xlu0 %v6338, 80
      %v6430 = vpop.permute.xlu0 %6429
      %6431 = vrot.lane.b32.xlu0 %v6339, 80
      %v6432 = vpop.permute.xlu0 %6431
      %6433 = vrot.lane.b32.xlu0 %v6340, 80
      %v6434 = vpop.permute.xlu0 %6433
      %6435 = vrot.lane.b32.xlu0 %v6341, 80
      %v6436 = vpop.permute.xlu0 %6435
      %6437 = vrot.lane.b32.xlu0 %v6342, 80
      %v6438 = vpop.permute.xlu0 %6437
      %vm6471 = vcmask 818816
      %6472 = vst.msk [vmem:[#allocation5] sm:$0xff] %vm6471, %v6376
      %6473 = vst.msk [vmem:[#allocation5 + $0x10] sm:$0xff] %vm6471, %v6378
      %6474 = vst.msk [vmem:[#allocation5 + $0x20] sm:$0xff] %vm6471, %v6380
      %6475 = vst.msk [vmem:[#allocation5 + $0x30] sm:$0xff] %vm6471, %v6382
      %6476 = vst.msk [vmem:[#allocation5 + $0x40] sm:$0xff] %vm6471, %v6384
      %6477 = vst.msk [vmem:[#allocation5 + $0x50] sm:$0xff] %vm6471, %v6386
      %6478 = vst.msk [vmem:[#allocation5 + $0x60] sm:$0xff] %vm6471, %v6388
      %6479 = vst.msk [vmem:[#allocation5 + $0x70] sm:$0xff] %vm6471, %v6390
      %6480 = vst.msk [vmem:[#allocation5 + $0x80] sm:$0xff] %vm6471, %v6392
      %6481 = vst.msk [vmem:[#allocation5 + $0x90] sm:$0xff] %vm6471, %v6394
      %6482 = vst.msk [vmem:[#allocation5 + $0xa0] sm:$0xff] %vm6471, %v6396
      %6483 = vst.msk [vmem:[#allocation5 + $0xb0] sm:$0xff] %vm6471, %v6398
      %6484 = vst.msk [vmem:[#allocation5 + $0xc0] sm:$0xff] %vm6471, %v6400
      %6485 = vst.msk [vmem:[#allocation5 + $0xd0] sm:$0xff] %vm6471, %v6402
      %6486 = vst.msk [vmem:[#allocation5 + $0xe0] sm:$0xff] %vm6471, %v6404
      %6487 = vst.msk [vmem:[#allocation5 + $0xf0] sm:$0xff] %vm6471, %v6406
      %6488 = vst.msk [vmem:[#allocation5 + $0x100] sm:$0xff] %vm6471, %v6408
      %6489 = vst.msk [vmem:[#allocation5 + $0x110] sm:$0xff] %vm6471, %v6410
      %6490 = vst.msk [vmem:[#allocation5 + $0x120] sm:$0xff] %vm6471, %v6412
      %6491 = vst.msk [vmem:[#allocation5 + $0x130] sm:$0xff] %vm6471, %v6414
      %6492 = vst.msk [vmem:[#allocation5 + $0x140] sm:$0xff] %vm6471, %v6416
      %6493 = vst.msk [vmem:[#allocation5 + $0x150] sm:$0xff] %vm6471, %v6418
      %6494 = vst.msk [vmem:[#allocation5 + $0x160] sm:$0xff] %vm6471, %v6420
      %6495 = vst.msk [vmem:[#allocation5 + $0x170] sm:$0xff] %vm6471, %v6422
      %6496 = vst.msk [vmem:[#allocation5 + $0x180] sm:$0xff] %vm6471, %v6424
      %6497 = vst.msk [vmem:[#allocation5 + $0x190] sm:$0xff] %vm6471, %v6426
      %6498 = vst.msk [vmem:[#allocation5 + $0x1a0] sm:$0xff] %vm6471, %v6428
      %6499 = vst.msk [vmem:[#allocation5 + $0x1b0] sm:$0xff] %vm6471, %v6430
      %6500 = vst.msk [vmem:[#allocation5 + $0x1c0] sm:$0xff] %vm6471, %v6432
      %6501 = vst.msk [vmem:[#allocation5 + $0x1d0] sm:$0xff] %vm6471, %v6434
      %6502 = vst.msk [vmem:[#allocation5 + $0x1e0] sm:$0xff] %vm6471, %v6436
      %6503 = vst.msk [vmem:[#allocation5 + $0x1f0] sm:$0xff] %vm6471, %v6438
      %v6504 = vld [vmem:[%s5635 + $0x2] sm:$0xff]
      %v6505 = vld [vmem:[%s5635 + $0xa] sm:$0xff]
      %v6506 = vld [vmem:[%s5635 + $0x1a] sm:$0xff]
      %v6507 = vld [vmem:[%s5635 + $0x22] sm:$0xff]
      %v6508 = vld [vmem:[%s5635 + $0x32] sm:$0xff]
      %v6509 = vld [vmem:[%s5635 + $0x3a] sm:$0xff]
      %v6510 = vld [vmem:[%s5635 + $0x4a] sm:$0xff]
      %v6511 = vld [vmem:[%s5635 + $0x52] sm:$0xff]
      %v6512 = vld [vmem:[%s5635 + $0x62] sm:$0xff]
      %v6513 = vld [vmem:[%s5635 + $0x6a] sm:$0xff]
      %v6514 = vld [vmem:[%s5635 + $0x7a] sm:$0xff]
      %v6515 = vld [vmem:[%s5635 + $0x82] sm:$0xff]
      %v6516 = vld [vmem:[%s5635 + $0x92] sm:$0xff]
      %v6517 = vld [vmem:[%s5635 + $0x9a] sm:$0xff]
      %v6518 = vld [vmem:[%s5635 + $0xaa] sm:$0xff]
      %v6519 = vld [vmem:[%s5635 + $0xb2] sm:$0xff]
      %v6520 = vld [vmem:[%s5635 + $0xc2] sm:$0xff]
      %v6521 = vld [vmem:[%s5635 + $0xca] sm:$0xff]
      %v6522 = vld [vmem:[%s5635 + $0xda] sm:$0xff]
      %v6523 = vld [vmem:[%s5635 + $0xe2] sm:$0xff]
      %v6524 = vld [vmem:[%s5635 + $0xf2] sm:$0xff]
      %v6525 = vld [vmem:[%s5635 + $0xfa] sm:$0xff]
      %v6526 = vld [vmem:[%s5635 + $0x10a] sm:$0xff]
      %v6527 = vld [vmem:[%s5635 + $0x112] sm:$0xff]
      %v6528 = vld [vmem:[%s5635 + $0x122] sm:$0xff]
      %v6529 = vld [vmem:[%s5635 + $0x12a] sm:$0xff]
      %v6530 = vld [vmem:[%s5635 + $0x13a] sm:$0xff]
      %v6531 = vld [vmem:[%s5635 + $0x142] sm:$0xff]
      %v6532 = vld [vmem:[%s5635 + $0x152] sm:$0xff]
      %v6533 = vld [vmem:[%s5635 + $0x15a] sm:$0xff]
      %v6534 = vld [vmem:[%s5635 + $0x16a] sm:$0xff]
      %v6535 = vld [vmem:[%s5635 + $0x172] sm:$0xff]
      %6568 = vrot.lane.b32.xlu0 %v6504, 100
      %v6569 = vpop.permute.xlu0 %6568
      %6570 = vrot.lane.b32.xlu0 %v6505, 100
      %v6571 = vpop.permute.xlu0 %6570
      %6572 = vrot.lane.b32.xlu0 %v6506, 100
      %v6573 = vpop.permute.xlu0 %6572
      %6574 = vrot.lane.b32.xlu0 %v6507, 100
      %v6575 = vpop.permute.xlu0 %6574
      %6576 = vrot.lane.b32.xlu0 %v6508, 100
      %v6577 = vpop.permute.xlu0 %6576
      %6578 = vrot.lane.b32.xlu0 %v6509, 100
      %v6579 = vpop.permute.xlu0 %6578
      %6580 = vrot.lane.b32.xlu0 %v6510, 100
      %v6581 = vpop.permute.xlu0 %6580
      %6582 = vrot.lane.b32.xlu0 %v6511, 100
      %v6583 = vpop.permute.xlu0 %6582
      %6584 = vrot.lane.b32.xlu0 %v6512, 100
      %v6585 = vpop.permute.xlu0 %6584
      %6586 = vrot.lane.b32.xlu0 %v6513, 100
      %v6587 = vpop.permute.xlu0 %6586
      %6588 = vrot.lane.b32.xlu0 %v6514, 100
      %v6589 = vpop.permute.xlu0 %6588
      %6590 = vrot.lane.b32.xlu0 %v6515, 100
      %v6591 = vpop.permute.xlu0 %6590
      %6592 = vrot.lane.b32.xlu0 %v6516, 100
      %v6593 = vpop.permute.xlu0 %6592
      %6594 = vrot.lane.b32.xlu0 %v6517, 100
      %v6595 = vpop.permute.xlu0 %6594
      %6596 = vrot.lane.b32.xlu0 %v6518, 100
      %v6597 = vpop.permute.xlu0 %6596
      %6598 = vrot.lane.b32.xlu0 %v6519, 100
      %v6599 = vpop.permute.xlu0 %6598
      %6600 = vrot.lane.b32.xlu0 %v6520, 100
      %v6601 = vpop.permute.xlu0 %6600
      %6602 = vrot.lane.b32.xlu0 %v6521, 100
      %v6603 = vpop.permute.xlu0 %6602
      %6604 = vrot.lane.b32.xlu0 %v6522, 100
      %v6605 = vpop.permute.xlu0 %6604
      %6606 = vrot.lane.b32.xlu0 %v6523, 100
      %v6607 = vpop.permute.xlu0 %6606
      %6608 = vrot.lane.b32.xlu0 %v6524, 100
      %v6609 = vpop.permute.xlu0 %6608
      %6610 = vrot.lane.b32.xlu0 %v6525, 100
      %v6611 = vpop.permute.xlu0 %6610
      %6612 = vrot.lane.b32.xlu0 %v6526, 100
      %v6613 = vpop.permute.xlu0 %6612
      %6614 = vrot.lane.b32.xlu0 %v6527, 100
      %v6615 = vpop.permute.xlu0 %6614
      %6616 = vrot.lane.b32.xlu0 %v6528, 100
      %v6617 = vpop.permute.xlu0 %6616
      %6618 = vrot.lane.b32.xlu0 %v6529, 100
      %v6619 = vpop.permute.xlu0 %6618
      %6620 = vrot.lane.b32.xlu0 %v6530, 100
      %v6621 = vpop.permute.xlu0 %6620
      %6622 = vrot.lane.b32.xlu0 %v6531, 100
      %v6623 = vpop.permute.xlu0 %6622
      %6624 = vrot.lane.b32.xlu0 %v6532, 100
      %v6625 = vpop.permute.xlu0 %6624
      %6626 = vrot.lane.b32.xlu0 %v6533, 100
      %v6627 = vpop.permute.xlu0 %6626
      %6628 = vrot.lane.b32.xlu0 %v6534, 100
      %v6629 = vpop.permute.xlu0 %6628
      %6630 = vrot.lane.b32.xlu0 %v6535, 100
      %v6631 = vpop.permute.xlu0 %6630
      %vm6664 = vcmask 982816
      %6665 = vst.msk [vmem:[#allocation5] sm:$0xff] %vm6664, %v6569
      %6666 = vst.msk [vmem:[#allocation5 + $0x10] sm:$0xff] %vm6664, %v6571
      %6667 = vst.msk [vmem:[#allocation5 + $0x20] sm:$0xff] %vm6664, %v6573
      %6668 = vst.msk [vmem:[#allocation5 + $0x30] sm:$0xff] %vm6664, %v6575
      %6669 = vst.msk [vmem:[#allocation5 + $0x40] sm:$0xff] %vm6664, %v6577
      %6670 = vst.msk [vmem:[#allocation5 + $0x50] sm:$0xff] %vm6664, %v6579
      %6671 = vst.msk [vmem:[#allocation5 + $0x60] sm:$0xff] %vm6664, %v6581
      %6672 = vst.msk [vmem:[#allocation5 + $0x70] sm:$0xff] %vm6664, %v6583
      %6673 = vst.msk [vmem:[#allocation5 + $0x80] sm:$0xff] %vm6664, %v6585
      %6674 = vst.msk [vmem:[#allocation5 + $0x90] sm:$0xff] %vm6664, %v6587
      %6675 = vst.msk [vmem:[#allocation5 + $0xa0] sm:$0xff] %vm6664, %v6589
      %6676 = vst.msk [vmem:[#allocation5 + $0xb0] sm:$0xff] %vm6664, %v6591
      %6677 = vst.msk [vmem:[#allocation5 + $0xc0] sm:$0xff] %vm6664, %v6593
      %6678 = vst.msk [vmem:[#allocation5 + $0xd0] sm:$0xff] %vm6664, %v6595
      %6679 = vst.msk [vmem:[#allocation5 + $0xe0] sm:$0xff] %vm6664, %v6597
      %6680 = vst.msk [vmem:[#allocation5 + $0xf0] sm:$0xff] %vm6664, %v6599
      %6681 = vst.msk [vmem:[#allocation5 + $0x100] sm:$0xff] %vm6664, %v6601
      %6682 = vst.msk [vmem:[#allocation5 + $0x110] sm:$0xff] %vm6664, %v6603
      %6683 = vst.msk [vmem:[#allocation5 + $0x120] sm:$0xff] %vm6664, %v6605
      %6684 = vst.msk [vmem:[#allocation5 + $0x130] sm:$0xff] %vm6664, %v6607
      %6685 = vst.msk [vmem:[#allocation5 + $0x140] sm:$0xff] %vm6664, %v6609
      %6686 = vst.msk [vmem:[#allocation5 + $0x150] sm:$0xff] %vm6664, %v6611
      %6687 = vst.msk [vmem:[#allocation5 + $0x160] sm:$0xff] %vm6664, %v6613
      %6688 = vst.msk [vmem:[#allocation5 + $0x170] sm:$0xff] %vm6664, %v6615
      %6689 = vst.msk [vmem:[#allocation5 + $0x180] sm:$0xff] %vm6664, %v6617
      %6690 = vst.msk [vmem:[#allocation5 + $0x190] sm:$0xff] %vm6664, %v6619
      %6691 = vst.msk [vmem:[#allocation5 + $0x1a0] sm:$0xff] %vm6664, %v6621
      %6692 = vst.msk [vmem:[#allocation5 + $0x1b0] sm:$0xff] %vm6664, %v6623
      %6693 = vst.msk [vmem:[#allocation5 + $0x1c0] sm:$0xff] %vm6664, %v6625
      %6694 = vst.msk [vmem:[#allocation5 + $0x1d0] sm:$0xff] %vm6664, %v6627
      %6695 = vst.msk [vmem:[#allocation5 + $0x1e0] sm:$0xff] %vm6664, %v6629
      %6696 = vst.msk [vmem:[#allocation5 + $0x1f0] sm:$0xff] %vm6664, %v6631
      %s6697 = scalar_lea.vmem [#allocation4], 48
      %v6698 = vld [vmem:[%s6697] sm:$0xff]
      %v6699 = vld [vmem:[%s6697 + $0x8] sm:$0xff]
      %v6700 = vld [vmem:[%s6697 + $0x18] sm:$0xff]
      %v6701 = vld [vmem:[%s6697 + $0x20] sm:$0xff]
      %v6702 = vld [vmem:[%s6697 + $0x30] sm:$0xff]
      %v6703 = vld [vmem:[%s6697 + $0x38] sm:$0xff]
      %v6704 = vld [vmem:[%s6697 + $0x48] sm:$0xff]
      %v6705 = vld [vmem:[%s6697 + $0x50] sm:$0xff]
      %v6706 = vld [vmem:[%s6697 + $0x60] sm:$0xff]
      %v6707 = vld [vmem:[%s6697 + $0x68] sm:$0xff]
      %v6708 = vld [vmem:[%s6697 + $0x78] sm:$0xff]
      %v6709 = vld [vmem:[%s6697 + $0x80] sm:$0xff]
      %v6710 = vld [vmem:[%s6697 + $0x90] sm:$0xff]
      %v6711 = vld [vmem:[%s6697 + $0x98] sm:$0xff]
      %v6712 = vld [vmem:[%s6697 + $0xa8] sm:$0xff]
      %v6713 = vld [vmem:[%s6697 + $0xb0] sm:$0xff]
      %v6714 = vld [vmem:[%s6697 + $0xc0] sm:$0xff]
      %v6715 = vld [vmem:[%s6697 + $0xc8] sm:$0xff]
      %v6716 = vld [vmem:[%s6697 + $0xd8] sm:$0xff]
      %v6717 = vld [vmem:[%s6697 + $0xe0] sm:$0xff]
      %v6718 = vld [vmem:[%s6697 + $0xf0] sm:$0xff]
      %v6719 = vld [vmem:[%s6697 + $0xf8] sm:$0xff]
      %v6720 = vld [vmem:[%s6697 + $0x108] sm:$0xff]
      %v6721 = vld [vmem:[%s6697 + $0x110] sm:$0xff]
      %v6722 = vld [vmem:[%s6697 + $0x120] sm:$0xff]
      %v6723 = vld [vmem:[%s6697 + $0x128] sm:$0xff]
      %v6724 = vld [vmem:[%s6697 + $0x138] sm:$0xff]
      %v6725 = vld [vmem:[%s6697 + $0x140] sm:$0xff]
      %v6726 = vld [vmem:[%s6697 + $0x150] sm:$0xff]
      %v6727 = vld [vmem:[%s6697 + $0x158] sm:$0xff]
      %v6728 = vld [vmem:[%s6697 + $0x168] sm:$0xff]
      %v6729 = vld [vmem:[%s6697 + $0x170] sm:$0xff]
      %6762 = vrot.lane.b32.xlu0 %v6698, 120
      %v6763 = vpop.permute.xlu0 %6762
      %6764 = vrot.lane.b32.xlu0 %v6699, 120
      %v6765 = vpop.permute.xlu0 %6764
      %6766 = vrot.lane.b32.xlu0 %v6700, 120
      %v6767 = vpop.permute.xlu0 %6766
      %6768 = vrot.lane.b32.xlu0 %v6701, 120
      %v6769 = vpop.permute.xlu0 %6768
      %6770 = vrot.lane.b32.xlu0 %v6702, 120
      %v6771 = vpop.permute.xlu0 %6770
      %6772 = vrot.lane.b32.xlu0 %v6703, 120
      %v6773 = vpop.permute.xlu0 %6772
      %6774 = vrot.lane.b32.xlu0 %v6704, 120
      %v6775 = vpop.permute.xlu0 %6774
      %6776 = vrot.lane.b32.xlu0 %v6705, 120
      %v6777 = vpop.permute.xlu0 %6776
      %6778 = vrot.lane.b32.xlu0 %v6706, 120
      %v6779 = vpop.permute.xlu0 %6778
      %6780 = vrot.lane.b32.xlu0 %v6707, 120
      %v6781 = vpop.permute.xlu0 %6780
      %6782 = vrot.lane.b32.xlu0 %v6708, 120
      %v6783 = vpop.permute.xlu0 %6782
      %6784 = vrot.lane.b32.xlu0 %v6709, 120
      %v6785 = vpop.permute.xlu0 %6784
      %6786 = vrot.lane.b32.xlu0 %v6710, 120
      %v6787 = vpop.permute.xlu0 %6786
      %6788 = vrot.lane.b32.xlu0 %v6711, 120
      %v6789 = vpop.permute.xlu0 %6788
      %6790 = vrot.lane.b32.xlu0 %v6712, 120
      %v6791 = vpop.permute.xlu0 %6790
      %6792 = vrot.lane.b32.xlu0 %v6713, 120
      %v6793 = vpop.permute.xlu0 %6792
      %6794 = vrot.lane.b32.xlu0 %v6714, 120
      %v6795 = vpop.permute.xlu0 %6794
      %6796 = vrot.lane.b32.xlu0 %v6715, 120
      %v6797 = vpop.permute.xlu0 %6796
      %6798 = vrot.lane.b32.xlu0 %v6716, 120
      %v6799 = vpop.permute.xlu0 %6798
      %6800 = vrot.lane.b32.xlu0 %v6717, 120
      %v6801 = vpop.permute.xlu0 %6800
      %6802 = vrot.lane.b32.xlu0 %v6718, 120
      %v6803 = vpop.permute.xlu0 %6802
      %6804 = vrot.lane.b32.xlu0 %v6719, 120
      %v6805 = vpop.permute.xlu0 %6804
      %6806 = vrot.lane.b32.xlu0 %v6720, 120
      %v6807 = vpop.permute.xlu0 %6806
      %6808 = vrot.lane.b32.xlu0 %v6721, 120
      %v6809 = vpop.permute.xlu0 %6808
      %6810 = vrot.lane.b32.xlu0 %v6722, 120
      %v6811 = vpop.permute.xlu0 %6810
      %6812 = vrot.lane.b32.xlu0 %v6723, 120
      %v6813 = vpop.permute.xlu0 %6812
      %6814 = vrot.lane.b32.xlu0 %v6724, 120
      %v6815 = vpop.permute.xlu0 %6814
      %6816 = vrot.lane.b32.xlu0 %v6725, 120
      %v6817 = vpop.permute.xlu0 %6816
      %6818 = vrot.lane.b32.xlu0 %v6726, 120
      %v6819 = vpop.permute.xlu0 %6818
      %6820 = vrot.lane.b32.xlu0 %v6727, 120
      %v6821 = vpop.permute.xlu0 %6820
      %6822 = vrot.lane.b32.xlu0 %v6728, 120
      %v6823 = vpop.permute.xlu0 %6822
      %6824 = vrot.lane.b32.xlu0 %v6729, 120
      %v6825 = vpop.permute.xlu0 %6824
      %vm6858 = vcmask 1048512
      %6859 = vst.msk [vmem:[#allocation5] sm:$0xff] %vm6858, %v6763
      %vm6860 = vcmask 97280
      %6861 = vst.msk [vmem:[#allocation5 + $0x8] sm:$0xff] %vm6860, %v6763
      %6862 = vst.msk [vmem:[#allocation5 + $0x10] sm:$0xff] %vm6858, %v6765
      %6863 = vst.msk [vmem:[#allocation5 + $0x18] sm:$0xff] %vm6860, %v6765
      %6864 = vst.msk [vmem:[#allocation5 + $0x20] sm:$0xff] %vm6858, %v6767
      %6865 = vst.msk [vmem:[#allocation5 + $0x28] sm:$0xff] %vm6860, %v6767
      %6866 = vst.msk [vmem:[#allocation5 + $0x30] sm:$0xff] %vm6858, %v6769
      %6867 = vst.msk [vmem:[#allocation5 + $0x38] sm:$0xff] %vm6860, %v6769
      %6868 = vst.msk [vmem:[#allocation5 + $0x40] sm:$0xff] %vm6858, %v6771
      %6869 = vst.msk [vmem:[#allocation5 + $0x48] sm:$0xff] %vm6860, %v6771
      %6870 = vst.msk [vmem:[#allocation5 + $0x50] sm:$0xff] %vm6858, %v6773
      %6871 = vst.msk [vmem:[#allocation5 + $0x58] sm:$0xff] %vm6860, %v6773
      %6872 = vst.msk [vmem:[#allocation5 + $0x60] sm:$0xff] %vm6858, %v6775
      %6873 = vst.msk [vmem:[#allocation5 + $0x68] sm:$0xff] %vm6860, %v6775
      %6874 = vst.msk [vmem:[#allocation5 + $0x70] sm:$0xff] %vm6858, %v6777
      %6875 = vst.msk [vmem:[#allocation5 + $0x78] sm:$0xff] %vm6860, %v6777
      %6876 = vst.msk [vmem:[#allocation5 + $0x80] sm:$0xff] %vm6858, %v6779
      %6877 = vst.msk [vmem:[#allocation5 + $0x88] sm:$0xff] %vm6860, %v6779
      %6878 = vst.msk [vmem:[#allocation5 + $0x90] sm:$0xff] %vm6858, %v6781
      %6879 = vst.msk [vmem:[#allocation5 + $0x98] sm:$0xff] %vm6860, %v6781
      %6880 = vst.msk [vmem:[#allocation5 + $0xa0] sm:$0xff] %vm6858, %v6783
      %6881 = vst.msk [vmem:[#allocation5 + $0xa8] sm:$0xff] %vm6860, %v6783
      %6882 = vst.msk [vmem:[#allocation5 + $0xb0] sm:$0xff] %vm6858, %v6785
      %6883 = vst.msk [vmem:[#allocation5 + $0xb8] sm:$0xff] %vm6860, %v6785
      %6884 = vst.msk [vmem:[#allocation5 + $0xc0] sm:$0xff] %vm6858, %v6787
      %6885 = vst.msk [vmem:[#allocation5 + $0xc8] sm:$0xff] %vm6860, %v6787
      %6886 = vst.msk [vmem:[#allocation5 + $0xd0] sm:$0xff] %vm6858, %v6789
      %6887 = vst.msk [vmem:[#allocation5 + $0xd8] sm:$0xff] %vm6860, %v6789
      %6888 = vst.msk [vmem:[#allocation5 + $0xe0] sm:$0xff] %vm6858, %v6791
      %6889 = vst.msk [vmem:[#allocation5 + $0xe8] sm:$0xff] %vm6860, %v6791
      %6890 = vst.msk [vmem:[#allocation5 + $0xf0] sm:$0xff] %vm6858, %v6793
      %6891 = vst.msk [vmem:[#allocation5 + $0xf8] sm:$0xff] %vm6860, %v6793
      %6892 = vst.msk [vmem:[#allocation5 + $0x100] sm:$0xff] %vm6858, %v6795
      %6893 = vst.msk [vmem:[#allocation5 + $0x108] sm:$0xff] %vm6860, %v6795
      %6894 = vst.msk [vmem:[#allocation5 + $0x110] sm:$0xff] %vm6858, %v6797
      %6895 = vst.msk [vmem:[#allocation5 + $0x118] sm:$0xff] %vm6860, %v6797
      %6896 = vst.msk [vmem:[#allocation5 + $0x120] sm:$0xff] %vm6858, %v6799
      %6897 = vst.msk [vmem:[#allocation5 + $0x128] sm:$0xff] %vm6860, %v6799
      %6898 = vst.msk [vmem:[#allocation5 + $0x130] sm:$0xff] %vm6858, %v6801
      %6899 = vst.msk [vmem:[#allocation5 + $0x138] sm:$0xff] %vm6860, %v6801
      %6900 = vst.msk [vmem:[#allocation5 + $0x140] sm:$0xff] %vm6858, %v6803
      %6901 = vst.msk [vmem:[#allocation5 + $0x148] sm:$0xff] %vm6860, %v6803
      %6902 = vst.msk [vmem:[#allocation5 + $0x150] sm:$0xff] %vm6858, %v6805
      %6903 = vst.msk [vmem:[#allocation5 + $0x158] sm:$0xff] %vm6860, %v6805
      %6904 = vst.msk [vmem:[#allocation5 + $0x160] sm:$0xff] %vm6858, %v6807
      %6905 = vst.msk [vmem:[#allocation5 + $0x168] sm:$0xff] %vm6860, %v6807
      %6906 = vst.msk [vmem:[#allocation5 + $0x170] sm:$0xff] %vm6858, %v6809
      %6907 = vst.msk [vmem:[#allocation5 + $0x178] sm:$0xff] %vm6860, %v6809
      %6908 = vst.msk [vmem:[#allocation5 + $0x180] sm:$0xff] %vm6858, %v6811
      %6909 = vst.msk [vmem:[#allocation5 + $0x188] sm:$0xff] %vm6860, %v6811
      %6910 = vst.msk [vmem:[#allocation5 + $0x190] sm:$0xff] %vm6858, %v6813
      %6911 = vst.msk [vmem:[#allocation5 + $0x198] sm:$0xff] %vm6860, %v6813
      %6912 = vst.msk [vmem:[#allocation5 + $0x1a0] sm:$0xff] %vm6858, %v6815
      %6913 = vst.msk [vmem:[#allocation5 + $0x1a8] sm:$0xff] %vm6860, %v6815
      %6914 = vst.msk [vmem:[#allocation5 + $0x1b0] sm:$0xff] %vm6858, %v6817
      %6915 = vst.msk [vmem:[#allocation5 + $0x1b8] sm:$0xff] %vm6860, %v6817
      %6916 = vst.msk [vmem:[#allocation5 + $0x1c0] sm:$0xff] %vm6858, %v6819
      %6917 = vst.msk [vmem:[#allocation5 + $0x1c8] sm:$0xff] %vm6860, %v6819
      %6918 = vst.msk [vmem:[#allocation5 + $0x1d0] sm:$0xff] %vm6858, %v6821
      %6919 = vst.msk [vmem:[#allocation5 + $0x1d8] sm:$0xff] %vm6860, %v6821
      %6920 = vst.msk [vmem:[#allocation5 + $0x1e0] sm:$0xff] %vm6858, %v6823
      %6921 = vst.msk [vmem:[#allocation5 + $0x1e8] sm:$0xff] %vm6860, %v6823
      %6922 = vst.msk [vmem:[#allocation5 + $0x1f0] sm:$0xff] %vm6858, %v6825
      %6923 = vst.msk [vmem:[#allocation5 + $0x1f8] sm:$0xff] %vm6860, %v6825
      %v6924 = vld [vmem:[%s6697 + $0x1] sm:$0xff]
      %v6925 = vld [vmem:[%s6697 + $0x9] sm:$0xff]
      %v6926 = vld [vmem:[%s6697 + $0x19] sm:$0xff]
      %v6927 = vld [vmem:[%s6697 + $0x21] sm:$0xff]
      %v6928 = vld [vmem:[%s6697 + $0x31] sm:$0xff]
      %v6929 = vld [vmem:[%s6697 + $0x39] sm:$0xff]
      %v6930 = vld [vmem:[%s6697 + $0x49] sm:$0xff]
      %v6931 = vld [vmem:[%s6697 + $0x51] sm:$0xff]
      %v6932 = vld [vmem:[%s6697 + $0x61] sm:$0xff]
      %v6933 = vld [vmem:[%s6697 + $0x69] sm:$0xff]
      %v6934 = vld [vmem:[%s6697 + $0x79] sm:$0xff]
      %v6935 = vld [vmem:[%s6697 + $0x81] sm:$0xff]
      %v6936 = vld [vmem:[%s6697 + $0x91] sm:$0xff]
      %v6937 = vld [vmem:[%s6697 + $0x99] sm:$0xff]
      %v6938 = vld [vmem:[%s6697 + $0xa9] sm:$0xff]
      %v6939 = vld [vmem:[%s6697 + $0xb1] sm:$0xff]
      %v6940 = vld [vmem:[%s6697 + $0xc1] sm:$0xff]
      %v6941 = vld [vmem:[%s6697 + $0xc9] sm:$0xff]
      %v6942 = vld [vmem:[%s6697 + $0xd9] sm:$0xff]
      %v6943 = vld [vmem:[%s6697 + $0xe1] sm:$0xff]
      %v6944 = vld [vmem:[%s6697 + $0xf1] sm:$0xff]
      %v6945 = vld [vmem:[%s6697 + $0xf9] sm:$0xff]
      %v6946 = vld [vmem:[%s6697 + $0x109] sm:$0xff]
      %v6947 = vld [vmem:[%s6697 + $0x111] sm:$0xff]
      %v6948 = vld [vmem:[%s6697 + $0x121] sm:$0xff]
      %v6949 = vld [vmem:[%s6697 + $0x129] sm:$0xff]
      %v6950 = vld [vmem:[%s6697 + $0x139] sm:$0xff]
      %v6951 = vld [vmem:[%s6697 + $0x141] sm:$0xff]
      %v6952 = vld [vmem:[%s6697 + $0x151] sm:$0xff]
      %v6953 = vld [vmem:[%s6697 + $0x159] sm:$0xff]
      %v6954 = vld [vmem:[%s6697 + $0x169] sm:$0xff]
      %v6955 = vld [vmem:[%s6697 + $0x171] sm:$0xff]
      %6988 = vrot.lane.b32.xlu0 %v6924, 12
      %v6989 = vpop.permute.xlu0 %6988
      %6990 = vrot.lane.b32.xlu0 %v6925, 12
      %v6991 = vpop.permute.xlu0 %6990
      %6992 = vrot.lane.b32.xlu0 %v6926, 12
      %v6993 = vpop.permute.xlu0 %6992
      %6994 = vrot.lane.b32.xlu0 %v6927, 12
      %v6995 = vpop.permute.xlu0 %6994
      %6996 = vrot.lane.b32.xlu0 %v6928, 12
      %v6997 = vpop.permute.xlu0 %6996
      %6998 = vrot.lane.b32.xlu0 %v6929, 12
      %v6999 = vpop.permute.xlu0 %6998
      %7000 = vrot.lane.b32.xlu0 %v6930, 12
      %v7001 = vpop.permute.xlu0 %7000
      %7002 = vrot.lane.b32.xlu0 %v6931, 12
      %v7003 = vpop.permute.xlu0 %7002
      %7004 = vrot.lane.b32.xlu0 %v6932, 12
      %v7005 = vpop.permute.xlu0 %7004
      %7006 = vrot.lane.b32.xlu0 %v6933, 12
      %v7007 = vpop.permute.xlu0 %7006
      %7008 = vrot.lane.b32.xlu0 %v6934, 12
      %v7009 = vpop.permute.xlu0 %7008
      %7010 = vrot.lane.b32.xlu0 %v6935, 12
      %v7011 = vpop.permute.xlu0 %7010
      %7012 = vrot.lane.b32.xlu0 %v6936, 12
      %v7013 = vpop.permute.xlu0 %7012
      %7014 = vrot.lane.b32.xlu0 %v6937, 12
      %v7015 = vpop.permute.xlu0 %7014
      %7016 = vrot.lane.b32.xlu0 %v6938, 12
      %v7017 = vpop.permute.xlu0 %7016
      %7018 = vrot.lane.b32.xlu0 %v6939, 12
      %v7019 = vpop.permute.xlu0 %7018
      %7020 = vrot.lane.b32.xlu0 %v6940, 12
      %v7021 = vpop.permute.xlu0 %7020
      %7022 = vrot.lane.b32.xlu0 %v6941, 12
      %v7023 = vpop.permute.xlu0 %7022
      %7024 = vrot.lane.b32.xlu0 %v6942, 12
      %v7025 = vpop.permute.xlu0 %7024
      %7026 = vrot.lane.b32.xlu0 %v6943, 12
      %v7027 = vpop.permute.xlu0 %7026
      %7028 = vrot.lane.b32.xlu0 %v6944, 12
      %v7029 = vpop.permute.xlu0 %7028
      %7030 = vrot.lane.b32.xlu0 %v6945, 12
      %v7031 = vpop.permute.xlu0 %7030
      %7032 = vrot.lane.b32.xlu0 %v6946, 12
      %v7033 = vpop.permute.xlu0 %7032
      %7034 = vrot.lane.b32.xlu0 %v6947, 12
      %v7035 = vpop.permute.xlu0 %7034
      %7036 = vrot.lane.b32.xlu0 %v6948, 12
      %v7037 = vpop.permute.xlu0 %7036
      %7038 = vrot.lane.b32.xlu0 %v6949, 12
      %v7039 = vpop.permute.xlu0 %7038
      %7040 = vrot.lane.b32.xlu0 %v6950, 12
      %v7041 = vpop.permute.xlu0 %7040
      %7042 = vrot.lane.b32.xlu0 %v6951, 12
      %v7043 = vpop.permute.xlu0 %7042
      %7044 = vrot.lane.b32.xlu0 %v6952, 12
      %v7045 = vpop.permute.xlu0 %7044
      %7046 = vrot.lane.b32.xlu0 %v6953, 12
      %v7047 = vpop.permute.xlu0 %7046
      %7048 = vrot.lane.b32.xlu0 %v6954, 12
      %v7049 = vpop.permute.xlu0 %7048
      %7050 = vrot.lane.b32.xlu0 %v6955, 12
      %v7051 = vpop.permute.xlu0 %7050
      %vm7084 = vcmask 261216
      %7085 = vst.msk [vmem:[#allocation5 + $0x8] sm:$0xff] %vm7084, %v6989
      %7086 = vst.msk [vmem:[#allocation5 + $0x18] sm:$0xff] %vm7084, %v6991
      %7087 = vst.msk [vmem:[#allocation5 + $0x28] sm:$0xff] %vm7084, %v6993
      %7088 = vst.msk [vmem:[#allocation5 + $0x38] sm:$0xff] %vm7084, %v6995
      %7089 = vst.msk [vmem:[#allocation5 + $0x48] sm:$0xff] %vm7084, %v6997
      %7090 = vst.msk [vmem:[#allocation5 + $0x58] sm:$0xff] %vm7084, %v6999
      %7091 = vst.msk [vmem:[#allocation5 + $0x68] sm:$0xff] %vm7084, %v7001
      %7092 = vst.msk [vmem:[#allocation5 + $0x78] sm:$0xff] %vm7084, %v7003
      %7093 = vst.msk [vmem:[#allocation5 + $0x88] sm:$0xff] %vm7084, %v7005
      %7094 = vst.msk [vmem:[#allocation5 + $0x98] sm:$0xff] %vm7084, %v7007
      %7095 = vst.msk [vmem:[#allocation5 + $0xa8] sm:$0xff] %vm7084, %v7009
      %7096 = vst.msk [vmem:[#allocation5 + $0xb8] sm:$0xff] %vm7084, %v7011
      %7097 = vst.msk [vmem:[#allocation5 + $0xc8] sm:$0xff] %vm7084, %v7013
      %7098 = vst.msk [vmem:[#allocation5 + $0xd8] sm:$0xff] %vm7084, %v7015
      %7099 = vst.msk [vmem:[#allocation5 + $0xe8] sm:$0xff] %vm7084, %v7017
      %7100 = vst.msk [vmem:[#allocation5 + $0xf8] sm:$0xff] %vm7084, %v7019
      %7101 = vst.msk [vmem:[#allocation5 + $0x108] sm:$0xff] %vm7084, %v7021
      %7102 = vst.msk [vmem:[#allocation5 + $0x118] sm:$0xff] %vm7084, %v7023
      %7103 = vst.msk [vmem:[#allocation5 + $0x128] sm:$0xff] %vm7084, %v7025
      %7104 = vst.msk [vmem:[#allocation5 + $0x138] sm:$0xff] %vm7084, %v7027
      %7105 = vst.msk [vmem:[#allocation5 + $0x148] sm:$0xff] %vm7084, %v7029
      %7106 = vst.msk [vmem:[#allocation5 + $0x158] sm:$0xff] %vm7084, %v7031
      %7107 = vst.msk [vmem:[#allocation5 + $0x168] sm:$0xff] %vm7084, %v7033
      %7108 = vst.msk [vmem:[#allocation5 + $0x178] sm:$0xff] %vm7084, %v7035
      %7109 = vst.msk [vmem:[#allocation5 + $0x188] sm:$0xff] %vm7084, %v7037
      %7110 = vst.msk [vmem:[#allocation5 + $0x198] sm:$0xff] %vm7084, %v7039
      %7111 = vst.msk [vmem:[#allocation5 + $0x1a8] sm:$0xff] %vm7084, %v7041
      %7112 = vst.msk [vmem:[#allocation5 + $0x1b8] sm:$0xff] %vm7084, %v7043
      %7113 = vst.msk [vmem:[#allocation5 + $0x1c8] sm:$0xff] %vm7084, %v7045
      %7114 = vst.msk [vmem:[#allocation5 + $0x1d8] sm:$0xff] %vm7084, %v7047
      %7115 = vst.msk [vmem:[#allocation5 + $0x1e8] sm:$0xff] %vm7084, %v7049
      %7116 = vst.msk [vmem:[#allocation5 + $0x1f8] sm:$0xff] %vm7084, %v7051
      %v7117 = vld [vmem:[%s6697 + $0x2] sm:$0xff]
      %v7118 = vld [vmem:[%s6697 + $0xa] sm:$0xff]
      %v7119 = vld [vmem:[%s6697 + $0x1a] sm:$0xff]
      %v7120 = vld [vmem:[%s6697 + $0x22] sm:$0xff]
      %v7121 = vld [vmem:[%s6697 + $0x32] sm:$0xff]
      %v7122 = vld [vmem:[%s6697 + $0x3a] sm:$0xff]
      %v7123 = vld [vmem:[%s6697 + $0x4a] sm:$0xff]
      %v7124 = vld [vmem:[%s6697 + $0x52] sm:$0xff]
      %v7125 = vld [vmem:[%s6697 + $0x62] sm:$0xff]
      %v7126 = vld [vmem:[%s6697 + $0x6a] sm:$0xff]
      %v7127 = vld [vmem:[%s6697 + $0x7a] sm:$0xff]
      %v7128 = vld [vmem:[%s6697 + $0x82] sm:$0xff]
      %v7129 = vld [vmem:[%s6697 + $0x92] sm:$0xff]
      %v7130 = vld [vmem:[%s6697 + $0x9a] sm:$0xff]
      %v7131 = vld [vmem:[%s6697 + $0xaa] sm:$0xff]
      %v7132 = vld [vmem:[%s6697 + $0xb2] sm:$0xff]
      %v7133 = vld [vmem:[%s6697 + $0xc2] sm:$0xff]
      %v7134 = vld [vmem:[%s6697 + $0xca] sm:$0xff]
      %v7135 = vld [vmem:[%s6697 + $0xda] sm:$0xff]
      %v7136 = vld [vmem:[%s6697 + $0xe2] sm:$0xff]
      %v7137 = vld [vmem:[%s6697 + $0xf2] sm:$0xff]
      %v7138 = vld [vmem:[%s6697 + $0xfa] sm:$0xff]
      %v7139 = vld [vmem:[%s6697 + $0x10a] sm:$0xff]
      %v7140 = vld [vmem:[%s6697 + $0x112] sm:$0xff]
      %v7141 = vld [vmem:[%s6697 + $0x122] sm:$0xff]
      %v7142 = vld [vmem:[%s6697 + $0x12a] sm:$0xff]
      %v7143 = vld [vmem:[%s6697 + $0x13a] sm:$0xff]
      %v7144 = vld [vmem:[%s6697 + $0x142] sm:$0xff]
      %v7145 = vld [vmem:[%s6697 + $0x152] sm:$0xff]
      %v7146 = vld [vmem:[%s6697 + $0x15a] sm:$0xff]
      %v7147 = vld [vmem:[%s6697 + $0x16a] sm:$0xff]
      %v7148 = vld [vmem:[%s6697 + $0x172] sm:$0xff]
      %7181 = vrot.lane.b32.xlu0 %v7117, 32
      %v7182 = vpop.permute.xlu0 %7181
      %7183 = vrot.lane.b32.xlu0 %v7118, 32
      %v7184 = vpop.permute.xlu0 %7183
      %7185 = vrot.lane.b32.xlu0 %v7119, 32
      %v7186 = vpop.permute.xlu0 %7185
      %7187 = vrot.lane.b32.xlu0 %v7120, 32
      %v7188 = vpop.permute.xlu0 %7187
      %7189 = vrot.lane.b32.xlu0 %v7121, 32
      %v7190 = vpop.permute.xlu0 %7189
      %7191 = vrot.lane.b32.xlu0 %v7122, 32
      %v7192 = vpop.permute.xlu0 %7191
      %7193 = vrot.lane.b32.xlu0 %v7123, 32
      %v7194 = vpop.permute.xlu0 %7193
      %7195 = vrot.lane.b32.xlu0 %v7124, 32
      %v7196 = vpop.permute.xlu0 %7195
      %7197 = vrot.lane.b32.xlu0 %v7125, 32
      %v7198 = vpop.permute.xlu0 %7197
      %7199 = vrot.lane.b32.xlu0 %v7126, 32
      %v7200 = vpop.permute.xlu0 %7199
      %7201 = vrot.lane.b32.xlu0 %v7127, 32
      %v7202 = vpop.permute.xlu0 %7201
      %7203 = vrot.lane.b32.xlu0 %v7128, 32
      %v7204 = vpop.permute.xlu0 %7203
      %7205 = vrot.lane.b32.xlu0 %v7129, 32
      %v7206 = vpop.permute.xlu0 %7205
      %7207 = vrot.lane.b32.xlu0 %v7130, 32
      %v7208 = vpop.permute.xlu0 %7207
      %7209 = vrot.lane.b32.xlu0 %v7131, 32
      %v7210 = vpop.permute.xlu0 %7209
      %7211 = vrot.lane.b32.xlu0 %v7132, 32
      %v7212 = vpop.permute.xlu0 %7211
      %7213 = vrot.lane.b32.xlu0 %v7133, 32
      %v7214 = vpop.permute.xlu0 %7213
      %7215 = vrot.lane.b32.xlu0 %v7134, 32
      %v7216 = vpop.permute.xlu0 %7215
      %7217 = vrot.lane.b32.xlu0 %v7135, 32
      %v7218 = vpop.permute.xlu0 %7217
      %7219 = vrot.lane.b32.xlu0 %v7136, 32
      %v7220 = vpop.permute.xlu0 %7219
      %7221 = vrot.lane.b32.xlu0 %v7137, 32
      %v7222 = vpop.permute.xlu0 %7221
      %7223 = vrot.lane.b32.xlu0 %v7138, 32
      %v7224 = vpop.permute.xlu0 %7223
      %7225 = vrot.lane.b32.xlu0 %v7139, 32
      %v7226 = vpop.permute.xlu0 %7225
      %7227 = vrot.lane.b32.xlu0 %v7140, 32
      %v7228 = vpop.permute.xlu0 %7227
      %7229 = vrot.lane.b32.xlu0 %v7141, 32
      %v7230 = vpop.permute.xlu0 %7229
      %7231 = vrot.lane.b32.xlu0 %v7142, 32
      %v7232 = vpop.permute.xlu0 %7231
      %7233 = vrot.lane.b32.xlu0 %v7143, 32
      %v7234 = vpop.permute.xlu0 %7233
      %7235 = vrot.lane.b32.xlu0 %v7144, 32
      %v7236 = vpop.permute.xlu0 %7235
      %7237 = vrot.lane.b32.xlu0 %v7145, 32
      %v7238 = vpop.permute.xlu0 %7237
      %7239 = vrot.lane.b32.xlu0 %v7146, 32
      %v7240 = vpop.permute.xlu0 %7239
      %7241 = vrot.lane.b32.xlu0 %v7147, 32
      %v7242 = vpop.permute.xlu0 %7241
      %7243 = vrot.lane.b32.xlu0 %v7148, 32
      %v7244 = vpop.permute.xlu0 %7243
      %vm7277 = vcmask 425216
      %7278 = vst.msk [vmem:[#allocation5 + $0x8] sm:$0xff] %vm7277, %v7182
      %7279 = vst.msk [vmem:[#allocation5 + $0x18] sm:$0xff] %vm7277, %v7184
      %7280 = vst.msk [vmem:[#allocation5 + $0x28] sm:$0xff] %vm7277, %v7186
      %7281 = vst.msk [vmem:[#allocation5 + $0x38] sm:$0xff] %vm7277, %v7188
      %7282 = vst.msk [vmem:[#allocation5 + $0x48] sm:$0xff] %vm7277, %v7190
      %7283 = vst.msk [vmem:[#allocation5 + $0x58] sm:$0xff] %vm7277, %v7192
      %7284 = vst.msk [vmem:[#allocation5 + $0x68] sm:$0xff] %vm7277, %v7194
      %7285 = vst.msk [vmem:[#allocation5 + $0x78] sm:$0xff] %vm7277, %v7196
      %7286 = vst.msk [vmem:[#allocation5 + $0x88] sm:$0xff] %vm7277, %v7198
      %7287 = vst.msk [vmem:[#allocation5 + $0x98] sm:$0xff] %vm7277, %v7200
      %7288 = vst.msk [vmem:[#allocation5 + $0xa8] sm:$0xff] %vm7277, %v7202
      %7289 = vst.msk [vmem:[#allocation5 + $0xb8] sm:$0xff] %vm7277, %v7204
      %7290 = vst.msk [vmem:[#allocation5 + $0xc8] sm:$0xff] %vm7277, %v7206
      %7291 = vst.msk [vmem:[#allocation5 + $0xd8] sm:$0xff] %vm7277, %v7208
      %7292 = vst.msk [vmem:[#allocation5 + $0xe8] sm:$0xff] %vm7277, %v7210
      %7293 = vst.msk [vmem:[#allocation5 + $0xf8] sm:$0xff] %vm7277, %v7212
      %7294 = vst.msk [vmem:[#allocation5 + $0x108] sm:$0xff] %vm7277, %v7214
      %7295 = vst.msk [vmem:[#allocation5 + $0x118] sm:$0xff] %vm7277, %v7216
      %7296 = vst.msk [vmem:[#allocation5 + $0x128] sm:$0xff] %vm7277, %v7218
      %7297 = vst.msk [vmem:[#allocation5 + $0x138] sm:$0xff] %vm7277, %v7220
      %7298 = vst.msk [vmem:[#allocation5 + $0x148] sm:$0xff] %vm7277, %v7222
      %7299 = vst.msk [vmem:[#allocation5 + $0x158] sm:$0xff] %vm7277, %v7224
      %7300 = vst.msk [vmem:[#allocation5 + $0x168] sm:$0xff] %vm7277, %v7226
      %7301 = vst.msk [vmem:[#allocation5 + $0x178] sm:$0xff] %vm7277, %v7228
      %7302 = vst.msk [vmem:[#allocation5 + $0x188] sm:$0xff] %vm7277, %v7230
      %7303 = vst.msk [vmem:[#allocation5 + $0x198] sm:$0xff] %vm7277, %v7232
      %7304 = vst.msk [vmem:[#allocation5 + $0x1a8] sm:$0xff] %vm7277, %v7234
      %7305 = vst.msk [vmem:[#allocation5 + $0x1b8] sm:$0xff] %vm7277, %v7236
      %7306 = vst.msk [vmem:[#allocation5 + $0x1c8] sm:$0xff] %vm7277, %v7238
      %7307 = vst.msk [vmem:[#allocation5 + $0x1d8] sm:$0xff] %vm7277, %v7240
      %7308 = vst.msk [vmem:[#allocation5 + $0x1e8] sm:$0xff] %vm7277, %v7242
      %7309 = vst.msk [vmem:[#allocation5 + $0x1f8] sm:$0xff] %vm7277, %v7244
      %v7310 = vld [vmem:[#allocation5] sm:$0xff]
      %v7311 = vld [vmem:[#allocation5 + $0x8] sm:$0xff]
      %v7312 = vld [vmem:[#allocation5 + $0x10] sm:$0xff]
      %v7313 = vld [vmem:[#allocation5 + $0x18] sm:$0xff]
      %v7314 = vld [vmem:[#allocation5 + $0x20] sm:$0xff]
      %v7315 = vld [vmem:[#allocation5 + $0x28] sm:$0xff]
      %v7316 = vld [vmem:[#allocation5 + $0x30] sm:$0xff]
      %v7317 = vld [vmem:[#allocation5 + $0x38] sm:$0xff]
      %v7318 = vld [vmem:[#allocation5 + $0x40] sm:$0xff]
      %v7319 = vld [vmem:[#allocation5 + $0x48] sm:$0xff]
      %v7320 = vld [vmem:[#allocation5 + $0x50] sm:$0xff]
      %v7321 = vld [vmem:[#allocation5 + $0x58] sm:$0xff]
      %v7322 = vld [vmem:[#allocation5 + $0x60] sm:$0xff]
      %v7323 = vld [vmem:[#allocation5 + $0x68] sm:$0xff]
      %v7324 = vld [vmem:[#allocation5 + $0x70] sm:$0xff]
      %v7325 = vld [vmem:[#allocation5 + $0x78] sm:$0xff]
      %v7326 = vld [vmem:[#allocation5 + $0x80] sm:$0xff]
      %v7327 = vld [vmem:[#allocation5 + $0x88] sm:$0xff]
      %v7328 = vld [vmem:[#allocation5 + $0x90] sm:$0xff]
      %v7329 = vld [vmem:[#allocation5 + $0x98] sm:$0xff]
      %v7330 = vld [vmem:[#allocation5 + $0xa0] sm:$0xff]
      %v7331 = vld [vmem:[#allocation5 + $0xa8] sm:$0xff]
      %v7332 = vld [vmem:[#allocation5 + $0xb0] sm:$0xff]
      %v7333 = vld [vmem:[#allocation5 + $0xb8] sm:$0xff]
      %v7334 = vld [vmem:[#allocation5 + $0xc0] sm:$0xff]
      %v7335 = vld [vmem:[#allocation5 + $0xc8] sm:$0xff]
      %v7336 = vld [vmem:[#allocation5 + $0xd0] sm:$0xff]
      %v7337 = vld [vmem:[#allocation5 + $0xd8] sm:$0xff]
      %v7338 = vld [vmem:[#allocation5 + $0xe0] sm:$0xff]
      %v7339 = vld [vmem:[#allocation5 + $0xe8] sm:$0xff]
      %v7340 = vld [vmem:[#allocation5 + $0xf0] sm:$0xff]
      %v7341 = vld [vmem:[#allocation5 + $0xf8] sm:$0xff]
      %v7342 = vld [vmem:[#allocation5 + $0x100] sm:$0xff]
      %v7343 = vld [vmem:[#allocation5 + $0x108] sm:$0xff]
      %v7344 = vld [vmem:[#allocation5 + $0x110] sm:$0xff]
      %v7345 = vld [vmem:[#allocation5 + $0x118] sm:$0xff]
      %v7346 = vld [vmem:[#allocation5 + $0x120] sm:$0xff]
      %v7347 = vld [vmem:[#allocation5 + $0x128] sm:$0xff]
      %v7348 = vld [vmem:[#allocation5 + $0x130] sm:$0xff]
      %v7349 = vld [vmem:[#allocation5 + $0x138] sm:$0xff]
      %v7350 = vld [vmem:[#allocation5 + $0x140] sm:$0xff]
      %v7351 = vld [vmem:[#allocation5 + $0x148] sm:$0xff]
      %v7352 = vld [vmem:[#allocation5 + $0x150] sm:$0xff]
      %v7353 = vld [vmem:[#allocation5 + $0x158] sm:$0xff]
      %v7354 = vld [vmem:[#allocation5 + $0x160] sm:$0xff]
      %v7355 = vld [vmem:[#allocation5 + $0x168] sm:$0xff]
      %v7356 = vld [vmem:[#allocation5 + $0x170] sm:$0xff]
      %v7357 = vld [vmem:[#allocation5 + $0x178] sm:$0xff]
      %v7358 = vld [vmem:[#allocation5 + $0x180] sm:$0xff]
      %v7359 = vld [vmem:[#allocation5 + $0x188] sm:$0xff]
      %v7360 = vld [vmem:[#allocation5 + $0x190] sm:$0xff]
      %v7361 = vld [vmem:[#allocation5 + $0x198] sm:$0xff]
      %v7362 = vld [vmem:[#allocation5 + $0x1a0] sm:$0xff]
      %v7363 = vld [vmem:[#allocation5 + $0x1a8] sm:$0xff]
      %v7364 = vld [vmem:[#allocation5 + $0x1b0] sm:$0xff]
      %v7365 = vld [vmem:[#allocation5 + $0x1b8] sm:$0xff]
      %v7366 = vld [vmem:[#allocation5 + $0x1c0] sm:$0xff]
      %v7367 = vld [vmem:[#allocation5 + $0x1c8] sm:$0xff]
      %v7368 = vld [vmem:[#allocation5 + $0x1d0] sm:$0xff]
      %v7369 = vld [vmem:[#allocation5 + $0x1d8] sm:$0xff]
      %v7370 = vld [vmem:[#allocation5 + $0x1e0] sm:$0xff]
      %v7371 = vld [vmem:[#allocation5 + $0x1e8] sm:$0xff]
      %v7372 = vld [vmem:[#allocation5 + $0x1f0] sm:$0xff]
      %v7373 = vld [vmem:[#allocation5 + $0x1f8] sm:$0xff]
      %v7374 = vld [vmem:[%s3] sm:$0xff]
      %v7375 = vld [vmem:[%s3 + $0x8] sm:$0xff]
      %v7376 = vld [vmem:[%s3 + $0x10] sm:$0xff]
      %v7377 = vld [vmem:[%s3 + $0x18] sm:$0xff]
      %v7378 = vld [vmem:[%s3 + $0x20] sm:$0xff]
      %v7379 = vld [vmem:[%s3 + $0x28] sm:$0xff]
      %v7380 = vld [vmem:[%s3 + $0x30] sm:$0xff]
      %v7381 = vld [vmem:[%s3 + $0x38] sm:$0xff]
      %v7382 = vld [vmem:[%s3 + $0x40] sm:$0xff]
      %v7383 = vld [vmem:[%s3 + $0x48] sm:$0xff]
      %v7384 = vld [vmem:[%s3 + $0x50] sm:$0xff]
      %v7385 = vld [vmem:[%s3 + $0x58] sm:$0xff]
      %v7386 = vld [vmem:[%s3 + $0x60] sm:$0xff]
      %v7387 = vld [vmem:[%s3 + $0x68] sm:$0xff]
      %v7388 = vld [vmem:[%s3 + $0x70] sm:$0xff]
      %v7389 = vld [vmem:[%s3 + $0x78] sm:$0xff]
      %v7390 = vld [vmem:[%s3 + $0x80] sm:$0xff]
      %v7391 = vld [vmem:[%s3 + $0x88] sm:$0xff]
      %v7392 = vld [vmem:[%s3 + $0x90] sm:$0xff]
      %v7393 = vld [vmem:[%s3 + $0x98] sm:$0xff]
      %v7394 = vld [vmem:[%s3 + $0xa0] sm:$0xff]
      %v7395 = vld [vmem:[%s3 + $0xa8] sm:$0xff]
      %v7396 = vld [vmem:[%s3 + $0xb0] sm:$0xf]
      %v7397 = vld [vmem:[%s4] sm:$0x1]
      %v7399 = vlaneseq
      %v7400 = vshrl.u32 %v7399, 7
      %v7401 = vsub.s32 0, %v7400
      %v7402 = vrot.slane %v7397, %v7401
      %vm7404 = vcmask 424960
      %v7406 = vsel %vm7404, %v7311, 0
      %v7409 = vsel %vm7404, %v7313, 0
      %v7412 = vsel %vm7404, %v7315, 0
      %v7415 = vsel %vm7404, %v7317, 0
      %v7418 = vsel %vm7404, %v7319, 0
      %v7421 = vsel %vm7404, %v7321, 0
      %v7424 = vsel %vm7404, %v7323, 0
      %v7427 = vsel %vm7404, %v7325, 0
      %v7430 = vsel %vm7404, %v7327, 0
      %v7433 = vsel %vm7404, %v7329, 0
      %v7436 = vsel %vm7404, %v7331, 0
      %v7439 = vsel %vm7404, %v7333, 0
      %v7442 = vsel %vm7404, %v7335, 0
      %v7445 = vsel %vm7404, %v7337, 0
      %v7448 = vsel %vm7404, %v7339, 0
      %v7451 = vsel %vm7404, %v7341, 0
      %v7454 = vsel %vm7404, %v7343, 0
      %v7457 = vsel %vm7404, %v7345, 0
      %v7460 = vsel %vm7404, %v7347, 0
      %v7463 = vsel %vm7404, %v7349, 0
      %v7466 = vsel %vm7404, %v7351, 0
      %v7469 = vsel %vm7404, %v7353, 0
      %v7472 = vsel %vm7404, %v7355, 0
      %v7475 = vsel %vm7404, %v7357, 0
      %v7478 = vsel %vm7404, %v7359, 0
      %v7481 = vsel %vm7404, %v7361, 0
      %v7484 = vsel %vm7404, %v7363, 0
      %v7487 = vsel %vm7404, %v7365, 0
      %v7490 = vsel %vm7404, %v7367, 0
      %v7493 = vsel %vm7404, %v7369, 0
      %v7496 = vsel %vm7404, %v7371, 0
      %v7499 = vsel %vm7404, %v7373, 0
      %v7502 = vsel %vm5254, %v7396, 0
      %7504 = vmatprep.subr.mxu0 0.0
      %7505 = vmatpush1.msra.mxu0 %v7374
      %7506 = vmatprep.subr.mxu0 0.0
      %7507 = vmatpush1.msra.mxu0 %v7375
      %7508 = vmatprep.subr.mxu0 0.0
      %7509 = vmatpush1.msra.mxu0 %v7376
      %7510 = vmatprep.subr.mxu0 0.0
      %7511 = vmatpush1.msra.mxu0 %v7377
      %7512 = vmatprep.subr.mxu0 0.0
      %7513 = vmatpush1.msra.mxu0 %v7378
      %7514 = vmatprep.subr.mxu0 0.0
      %7515 = vmatpush1.msra.mxu0 %v7379
      %7516 = vmatprep.subr.mxu0 0.0
      %7517 = vmatpush1.msra.mxu0 %v7380
      %7518 = vmatprep.subr.mxu0 0.0
      %7519 = vmatpush1.msra.mxu0 %v7381
      %7520 = vmatprep.subr.mxu0 0.0
      %7521 = vmatpush1.msra.mxu0 %v7382
      %7522 = vmatprep.subr.mxu0 0.0
      %7523 = vmatpush1.msra.mxu0 %v7383
      %7524 = vmatprep.subr.mxu0 0.0
      %7525 = vmatpush1.msra.mxu0 %v7384
      %7526 = vmatprep.subr.mxu0 0.0
      %7527 = vmatpush1.msra.mxu0 %v7385
      %7528 = vmatprep.subr.mxu0 0.0
      %7529 = vmatpush1.msra.mxu0 %v7386
      %7530 = vmatprep.subr.mxu0 0.0
      %7531 = vmatpush1.msra.mxu0 %v7387
      %7532 = vmatprep.subr.mxu0 0.0
      %7533 = vmatpush1.msra.mxu0 %v7388
      %7534 = vmatprep.subr.mxu0 0.0
      %7535 = vmatpush1.msra.mxu0 %v7389
      %7536 = vmatprep.subr.mxu0 0.0
      %7537 = vmatpush1.msra.mxu0 %v7390
      %7538 = vmatprep.subr.mxu0 0.0
      %7539 = vmatpush1.msra.mxu0 %v7391
      %7540 = vmatprep.subr.mxu0 0.0
      %7541 = vmatpush1.msra.mxu0 %v7392
      %7542 = vmatprep.subr.mxu0 0.0
      %7543 = vmatpush1.msra.mxu0 %v7393
      %7544 = vmatprep.subr.mxu0 0.0
      %7545 = vmatpush1.msra.mxu0 %v7394
      %7546 = vmatprep.subr.mxu0 0.0
      %7547 = vmatpush1.msra.mxu0 %v7395
      %7548 = vmatprep.subr.mxu0 0.0
      %7549 = vmatpush1.msra.mxu0 %v7502
      %7550 = vmatprep.subr.mxu0 0.0
      %7551 = vmatpush1.msra.mxu0 0.0
      %7552 = vmatprep.subr.mxu0 0.0
      %7553 = vmatpush1.msra.mxu0 0.0
      %7554 = vmatprep.subr.mxu0 0.0
      %7555 = vmatpush1.msra.mxu0 0.0
      %7556 = vmatprep.subr.mxu0 0.0
      %7557 = vmatpush1.msra.mxu0 0.0
      %7558 = vmatprep.subr.mxu0 0.0
      %7559 = vmatpush1.msra.mxu0 0.0
      %7560 = vmatprep.subr.mxu0 0.0
      %7561 = vmatpush1.msra.mxu0 0.0
      %7562 = vmatprep.subr.mxu0 0.0
      %7563 = vmatpush1.msra.mxu0 0.0
      %7564 = vmatprep.subr.mxu0 0.0
      %7565 = vmatpush1.msra.mxu0 0.0
      %7566 = vmatprep.subr.mxu0 0.0
      %7567 = vmatpush1.msra.mxu0 0.0
      %7568 = vmatprep.mubr.f32.mxu0 %v7406
      %7569 = vmatmul.mubr.f32.gmra.mrb[0].mxu0 %v7310
      %v7570 = vpop.f32.mrb[0].mxu0
      %v7571 = vadd.f32 %v7402, %v7570
      %v7572 = vpop.f32.mrb[0].mxu0
      %7573 = vmatprep.mubr.f32.mxu0 %v7409
      %7574 = vmatmul.mubr.f32.gmra.mrb[0].mxu0 %v7312
      %v7575 = vpop.f32.mrb[0].mxu0
      %v7576 = vadd.f32 %v7402, %v7575
      %v7577 = vpop.f32.mrb[0].mxu0
      %7578 = vmatprep.mubr.f32.mxu0 %v7412
      %7579 = vmatmul.mubr.f32.gmra.mrb[0].mxu0 %v7314
      %v7580 = vpop.f32.mrb[0].mxu0
      %v7581 = vadd.f32 %v7402, %v7580
      %v7582 = vpop.f32.mrb[0].mxu0
      %7583 = vmatprep.mubr.f32.mxu0 %v7415
      %7584 = vmatmul.mubr.f32.gmra.mrb[0].mxu0 %v7316
      %v7585 = vpop.f32.mrb[0].mxu0
      %v7586 = vadd.f32 %v7402, %v7585
      %v7587 = vpop.f32.mrb[0].mxu0
      %7588 = vmatprep.mubr.f32.mxu0 %v7418
      %7589 = vmatmul.mubr.f32.gmra.mrb[0].mxu0 %v7318
      %v7590 = vpop.f32.mrb[0].mxu0
      %v7591 = vadd.f32 %v7402, %v7590
      %v7592 = vpop.f32.mrb[0].mxu0
      %7593 = vmatprep.mubr.f32.mxu0 %v7421
      %7594 = vmatmul.mubr.f32.gmra.mrb[0].mxu0 %v7320
      %v7595 = vpop.f32.mrb[0].mxu0
      %v7596 = vadd.f32 %v7402, %v7595
      %v7597 = vpop.f32.mrb[0].mxu0
      %7598 = vmatprep.mubr.f32.mxu0 %v7424
      %7599 = vmatmul.mubr.f32.gmra.mrb[0].mxu0 %v7322
      %v7600 = vpop.f32.mrb[0].mxu0
      %v7601 = vadd.f32 %v7402, %v7600
      %v7602 = vpop.f32.mrb[0].mxu0
      %7603 = vmatprep.mubr.f32.mxu0 %v7427
      %7604 = vmatmul.mubr.f32.gmra.mrb[0].mxu0 %v7324
      %v7605 = vpop.f32.mrb[0].mxu0
      %v7606 = vadd.f32 %v7402, %v7605
      %v7607 = vpop.f32.mrb[0].mxu0
      %7608 = vmatprep.mubr.f32.mxu0 %v7430
      %7609 = vmatmul.mubr.f32.gmra.mrb[0].mxu0 %v7326
      %v7610 = vpop.f32.mrb[0].mxu0
      %v7611 = vadd.f32 %v7402, %v7610
      %v7612 = vpop.f32.mrb[0].mxu0
      %7613 = vmatprep.mubr.f32.mxu0 %v7433
      %7614 = vmatmul.mubr.f32.gmra.mrb[0].mxu0 %v7328
      %v7615 = vpop.f32.mrb[0].mxu0
      %v7616 = vadd.f32 %v7402, %v7615
      %v7617 = vpop.f32.mrb[0].mxu0
      %7618 = vmatprep.mubr.f32.mxu0 %v7436
      %7619 = vmatmul.mubr.f32.gmra.mrb[0].mxu0 %v7330
      %v7620 = vpop.f32.mrb[0].mxu0
      %v7621 = vadd.f32 %v7402, %v7620
      %v7622 = vpop.f32.mrb[0].mxu0
      %7623 = vmatprep.mubr.f32.mxu0 %v7439
      %7624 = vmatmul.mubr.f32.gmra.mrb[0].mxu0 %v7332
      %v7625 = vpop.f32.mrb[0].mxu0
      %v7626 = vadd.f32 %v7402, %v7625
      %v7627 = vpop.f32.mrb[0].mxu0
      %7628 = vmatprep.mubr.f32.mxu0 %v7442
      %7629 = vmatmul.mubr.f32.gmra.mrb[0].mxu0 %v7334
      %v7630 = vpop.f32.mrb[0].mxu0
      %v7631 = vadd.f32 %v7402, %v7630
      %v7632 = vpop.f32.mrb[0].mxu0
      %7633 = vmatprep.mubr.f32.mxu0 %v7445
      %7634 = vmatmul.mubr.f32.gmra.mrb[0].mxu0 %v7336
      %v7635 = vpop.f32.mrb[0].mxu0
      %v7636 = vadd.f32 %v7402, %v7635
      %v7637 = vpop.f32.mrb[0].mxu0
      %7638 = vmatprep.mubr.f32.mxu0 %v7448
      %7639 = vmatmul.mubr.f32.gmra.mrb[0].mxu0 %v7338
      %v7640 = vpop.f32.mrb[0].mxu0
      %v7641 = vadd.f32 %v7402, %v7640
      %v7642 = vpop.f32.mrb[0].mxu0
      %7643 = vmatprep.mubr.f32.mxu0 %v7451
      %7644 = vmatmul.mubr.f32.gmra.mrb[0].mxu0 %v7340
      %v7645 = vpop.f32.mrb[0].mxu0
      %v7646 = vadd.f32 %v7402, %v7645
      %v7647 = vpop.f32.mrb[0].mxu0
      %7648 = vmatprep.mubr.f32.mxu0 %v7454
      %7649 = vmatmul.mubr.f32.gmra.mrb[0].mxu0 %v7342
      %v7650 = vpop.f32.mrb[0].mxu0
      %v7651 = vadd.f32 %v7402, %v7650
      %v7652 = vpop.f32.mrb[0].mxu0
      %7653 = vmatprep.mubr.f32.mxu0 %v7457
      %7654 = vmatmul.mubr.f32.gmra.mrb[0].mxu0 %v7344
      %v7655 = vpop.f32.mrb[0].mxu0
      %v7656 = vadd.f32 %v7402, %v7655
      %v7657 = vpop.f32.mrb[0].mxu0
      %7658 = vmatprep.mubr.f32.mxu0 %v7460
      %7659 = vmatmul.mubr.f32.gmra.mrb[0].mxu0 %v7346
      %v7660 = vpop.f32.mrb[0].mxu0
      %v7661 = vadd.f32 %v7402, %v7660
      %v7662 = vpop.f32.mrb[0].mxu0
      %7663 = vmatprep.mubr.f32.mxu0 %v7463
      %7664 = vmatmul.mubr.f32.gmra.mrb[0].mxu0 %v7348
      %v7665 = vpop.f32.mrb[0].mxu0
      %v7666 = vadd.f32 %v7402, %v7665
      %v7667 = vpop.f32.mrb[0].mxu0
      %7668 = vmatprep.mubr.f32.mxu0 %v7466
      %7669 = vmatmul.mubr.f32.gmra.mrb[0].mxu0 %v7350
      %v7670 = vpop.f32.mrb[0].mxu0
      %v7671 = vadd.f32 %v7402, %v7670
      %v7672 = vpop.f32.mrb[0].mxu0
      %7673 = vmatprep.mubr.f32.mxu0 %v7469
      %7674 = vmatmul.mubr.f32.gmra.mrb[0].mxu0 %v7352
      %v7675 = vpop.f32.mrb[0].mxu0
      %v7676 = vadd.f32 %v7402, %v7675
      %v7677 = vpop.f32.mrb[0].mxu0
      %7678 = vmatprep.mubr.f32.mxu0 %v7472
      %7679 = vmatmul.mubr.f32.gmra.mrb[0].mxu0 %v7354
      %v7680 = vpop.f32.mrb[0].mxu0
      %v7681 = vadd.f32 %v7402, %v7680
      %v7682 = vpop.f32.mrb[0].mxu0
      %7683 = vmatprep.mubr.f32.mxu0 %v7475
      %7684 = vmatmul.mubr.f32.gmra.mrb[0].mxu0 %v7356
      %v7685 = vpop.f32.mrb[0].mxu0
      %v7686 = vadd.f32 %v7402, %v7685
      %v7687 = vpop.f32.mrb[0].mxu0
      %7688 = vmatprep.mubr.f32.mxu0 %v7478
      %7689 = vmatmul.mubr.f32.gmra.mrb[0].mxu0 %v7358
      %v7690 = vpop.f32.mrb[0].mxu0
      %v7691 = vadd.f32 %v7402, %v7690
      %v7692 = vpop.f32.mrb[0].mxu0
      %7693 = vmatprep.mubr.f32.mxu0 %v7481
      %7694 = vmatmul.mubr.f32.gmra.mrb[0].mxu0 %v7360
      %v7695 = vpop.f32.mrb[0].mxu0
      %v7696 = vadd.f32 %v7402, %v7695
      %v7697 = vpop.f32.mrb[0].mxu0
      %7698 = vmatprep.mubr.f32.mxu0 %v7484
      %7699 = vmatmul.mubr.f32.gmra.mrb[0].mxu0 %v7362
      %v7700 = vpop.f32.mrb[0].mxu0
      %v7701 = vadd.f32 %v7402, %v7700
      %v7702 = vpop.f32.mrb[0].mxu0
      %7703 = vmatprep.mubr.f32.mxu0 %v7487
      %7704 = vmatmul.mubr.f32.gmra.mrb[0].mxu0 %v7364
      %v7705 = vpop.f32.mrb[0].mxu0
      %v7706 = vadd.f32 %v7402, %v7705
      %v7707 = vpop.f32.mrb[0].mxu0
      %7708 = vmatprep.mubr.f32.mxu0 %v7490
      %7709 = vmatmul.mubr.f32.gmra.mrb[0].mxu0 %v7366
      %v7710 = vpop.f32.mrb[0].mxu0
      %v7711 = vadd.f32 %v7402, %v7710
      %v7712 = vpop.f32.mrb[0].mxu0
      %7713 = vmatprep.mubr.f32.mxu0 %v7493
      %7714 = vmatmul.mubr.f32.gmra.mrb[0].mxu0 %v7368
      %v7715 = vpop.f32.mrb[0].mxu0
      %v7716 = vadd.f32 %v7402, %v7715
      %v7717 = vpop.f32.mrb[0].mxu0
      %7718 = vmatprep.mubr.f32.mxu0 %v7496
      %7719 = vmatmul.mubr.f32.gmra.mrb[0].mxu0 %v7370
      %v7720 = vpop.f32.mrb[0].mxu0
      %v7721 = vadd.f32 %v7402, %v7720
      %v7722 = vpop.f32.mrb[0].mxu0
      %7723 = vmatprep.mubr.f32.mxu0 %v7499
      %7724 = vmatmul.mubr.f32.gmra.mrb[0].mxu0 %v7372
      %v7725 = vpop.f32.mrb[0].mxu0
      %v7726 = vadd.f32 %v7402, %v7725
      %v7727 = vpop.f32.mrb[0].mxu0
      %7728 = vdwg.mxu0
      %vm7729 = vcmp.ge.f32.partialorder %v7571, 0.0
      %vm7730 = vcmp.ge.f32.partialorder %v7576, 0.0
      %vm7731 = vcmp.ge.f32.partialorder %v7581, 0.0
      %vm7732 = vcmp.ge.f32.partialorder %v7586, 0.0
      %vm7733 = vcmp.ge.f32.partialorder %v7591, 0.0
      %vm7734 = vcmp.ge.f32.partialorder %v7596, 0.0
      %vm7735 = vcmp.ge.f32.partialorder %v7601, 0.0
      %vm7736 = vcmp.ge.f32.partialorder %v7606, 0.0
      %vm7737 = vcmp.ge.f32.partialorder %v7611, 0.0
      %vm7738 = vcmp.ge.f32.partialorder %v7616, 0.0
      %vm7739 = vcmp.ge.f32.partialorder %v7621, 0.0
      %vm7740 = vcmp.ge.f32.partialorder %v7626, 0.0
      %vm7741 = vcmp.ge.f32.partialorder %v7631, 0.0
      %vm7742 = vcmp.ge.f32.partialorder %v7636, 0.0
      %vm7743 = vcmp.ge.f32.partialorder %v7641, 0.0
      %vm7744 = vcmp.ge.f32.partialorder %v7646, 0.0
      %vm7745 = vcmp.ge.f32.partialorder %v7651, 0.0
      %vm7746 = vcmp.ge.f32.partialorder %v7656, 0.0
      %vm7747 = vcmp.ge.f32.partialorder %v7661, 0.0
      %vm7748 = vcmp.ge.f32.partialorder %v7666, 0.0
      %vm7749 = vcmp.ge.f32.partialorder %v7671, 0.0
      %vm7750 = vcmp.ge.f32.partialorder %v7676, 0.0
      %vm7751 = vcmp.ge.f32.partialorder %v7681, 0.0
      %vm7752 = vcmp.ge.f32.partialorder %v7686, 0.0
      %vm7753 = vcmp.ge.f32.partialorder %v7691, 0.0
      %vm7754 = vcmp.ge.f32.partialorder %v7696, 0.0
      %vm7755 = vcmp.ge.f32.partialorder %v7701, 0.0
      %vm7756 = vcmp.ge.f32.partialorder %v7706, 0.0
      %vm7757 = vcmp.ge.f32.partialorder %v7711, 0.0
      %vm7758 = vcmp.ge.f32.partialorder %v7716, 0.0
      %vm7759 = vcmp.ge.f32.partialorder %v7721, 0.0
      %vm7760 = vcmp.ge.f32.partialorder %v7726, 0.0
      %v7761 = vmul.f32 %v7571, 0.01
      %v7762 = vmul.f32 %v7576, 0.01
      %v7763 = vmul.f32 %v7581, 0.01
      %v7764 = vmul.f32 %v7586, 0.01
      %v7765 = vmul.f32 %v7591, 0.01
      %v7766 = vmul.f32 %v7596, 0.01
      %v7767 = vmul.f32 %v7601, 0.01
      %v7768 = vmul.f32 %v7606, 0.01
      %v7769 = vmul.f32 %v7611, 0.01
      %v7770 = vmul.f32 %v7616, 0.01
      %v7771 = vmul.f32 %v7621, 0.01
      %v7772 = vmul.f32 %v7626, 0.01
      %v7773 = vmul.f32 %v7631, 0.01
      %v7774 = vmul.f32 %v7636, 0.01
      %v7775 = vmul.f32 %v7641, 0.01
      %v7776 = vmul.f32 %v7646, 0.01
      %v7777 = vmul.f32 %v7651, 0.01
      %v7778 = vmul.f32 %v7656, 0.01
      %v7779 = vmul.f32 %v7661, 0.01
      %v7780 = vmul.f32 %v7666, 0.01
      %v7781 = vmul.f32 %v7671, 0.01
      %v7782 = vmul.f32 %v7676, 0.01
      %v7783 = vmul.f32 %v7681, 0.01
      %v7784 = vmul.f32 %v7686, 0.01
      %v7785 = vmul.f32 %v7691, 0.01
      %v7786 = vmul.f32 %v7696, 0.01
      %v7787 = vmul.f32 %v7701, 0.01
      %v7788 = vmul.f32 %v7706, 0.01
      %v7789 = vmul.f32 %v7711, 0.01
      %v7790 = vmul.f32 %v7716, 0.01
      %v7791 = vmul.f32 %v7721, 0.01
      %v7792 = vmul.f32 %v7726, 0.01
      %v7793 = vsel %vm7729, %v7571, %v7761
      %v7794 = vsel %vm7730, %v7576, %v7762
      %v7795 = vsel %vm7731, %v7581, %v7763
      %v7796 = vsel %vm7732, %v7586, %v7764
      %v7797 = vsel %vm7733, %v7591, %v7765
      %v7798 = vsel %vm7734, %v7596, %v7766
      %v7799 = vsel %vm7735, %v7601, %v7767
      %v7800 = vsel %vm7736, %v7606, %v7768
      %v7801 = vsel %vm7737, %v7611, %v7769
      %v7802 = vsel %vm7738, %v7616, %v7770
      %v7803 = vsel %vm7739, %v7621, %v7771
      %v7804 = vsel %vm7740, %v7626, %v7772
      %v7805 = vsel %vm7741, %v7631, %v7773
      %v7806 = vsel %vm7742, %v7636, %v7774
      %v7807 = vsel %vm7743, %v7641, %v7775
      %v7808 = vsel %vm7744, %v7646, %v7776
      %v7809 = vsel %vm7745, %v7651, %v7777
      %v7810 = vsel %vm7746, %v7656, %v7778
      %v7811 = vsel %vm7747, %v7661, %v7779
      %v7812 = vsel %vm7748, %v7666, %v7780
      %v7813 = vsel %vm7749, %v7671, %v7781
      %v7814 = vsel %vm7750, %v7676, %v7782
      %v7815 = vsel %vm7751, %v7681, %v7783
      %v7816 = vsel %vm7752, %v7686, %v7784
      %v7817 = vsel %vm7753, %v7691, %v7785
      %v7818 = vsel %vm7754, %v7696, %v7786
      %v7819 = vsel %vm7755, %v7701, %v7787
      %v7820 = vsel %vm7756, %v7706, %v7788
      %v7821 = vsel %vm7757, %v7711, %v7789
      %v7822 = vsel %vm7758, %v7716, %v7790
      %v7823 = vsel %vm7759, %v7721, %v7791
      %v7824 = vsel %vm7760, %v7726, %v7792
      %vm7825 = vcmask 326656
      %7826 = vst.msk [vmem:[#allocation6] sm:$0xff] %vm7825, 0.0
      %7827 = vst.msk [vmem:[#allocation6 + $0x8] sm:$0xff] %vm7825, 0.0
      %vm7828 = vcmask 320512
      %7829 = vst.msk [vmem:[#allocation6 + $0x10] sm:$0x3] %vm7828, 0.0
      %7830 = vst.msk [vmem:[#allocation6 + $0x18] sm:$0xff] %vm7825, 0.0
      %7831 = vst.msk [vmem:[#allocation6 + $0x20] sm:$0xff] %vm7825, 0.0
      %7832 = vst.msk [vmem:[#allocation6 + $0x28] sm:$0x3] %vm7828, 0.0
      %7833 = vst.msk [vmem:[#allocation6 + $0x30] sm:$0xff] %vm7825, 0.0
      %7834 = vst.msk [vmem:[#allocation6 + $0x38] sm:$0xff] %vm7825, 0.0
      %7835 = vst.msk [vmem:[#allocation6 + $0x40] sm:$0x3] %vm7828, 0.0
      %7836 = vst.msk [vmem:[#allocation6 + $0x48] sm:$0xff] %vm7825, 0.0
      %7837 = vst.msk [vmem:[#allocation6 + $0x50] sm:$0xff] %vm7825, 0.0
      %7838 = vst.msk [vmem:[#allocation6 + $0x58] sm:$0x3] %vm7828, 0.0
      %7839 = vst.msk [vmem:[#allocation6 + $0x60] sm:$0xff] %vm7825, 0.0
      %7840 = vst.msk [vmem:[#allocation6 + $0x68] sm:$0xff] %vm7825, 0.0
      %7841 = vst.msk [vmem:[#allocation6 + $0x70] sm:$0x3] %vm7828, 0.0
      %7842 = vst.msk [vmem:[#allocation6 + $0x78] sm:$0xff] %vm7825, 0.0
      %7843 = vst.msk [vmem:[#allocation6 + $0x80] sm:$0xff] %vm7825, 0.0
      %7844 = vst.msk [vmem:[#allocation6 + $0x88] sm:$0x3] %vm7828, 0.0
      %7845 = vst.msk [vmem:[#allocation6 + $0x90] sm:$0xff] %vm7825, 0.0
      %7846 = vst.msk [vmem:[#allocation6 + $0x98] sm:$0xff] %vm7825, 0.0
      %7847 = vst.msk [vmem:[#allocation6 + $0xa0] sm:$0x3] %vm7828, 0.0
      %7848 = vst.msk [vmem:[#allocation6 + $0xa8] sm:$0xff] %vm7825, 0.0
      %7849 = vst.msk [vmem:[#allocation6 + $0xb0] sm:$0xff] %vm7825, 0.0
      %7850 = vst.msk [vmem:[#allocation6 + $0xb8] sm:$0x3] %vm7828, 0.0
      %7851 = vst.msk [vmem:[#allocation6 + $0xc0] sm:$0xff] %vm7825, 0.0
      %7852 = vst.msk [vmem:[#allocation6 + $0xc8] sm:$0xff] %vm7825, 0.0
      %7853 = vst.msk [vmem:[#allocation6 + $0xd0] sm:$0x3] %vm7828, 0.0
      %7854 = vst.msk [vmem:[#allocation6 + $0xd8] sm:$0xff] %vm7825, 0.0
      %7855 = vst.msk [vmem:[#allocation6 + $0xe0] sm:$0xff] %vm7825, 0.0
      %7856 = vst.msk [vmem:[#allocation6 + $0xe8] sm:$0x3] %vm7828, 0.0
      %7857 = vst.msk [vmem:[#allocation6 + $0xf0] sm:$0xff] %vm7825, 0.0
      %7858 = vst.msk [vmem:[#allocation6 + $0xf8] sm:$0xff] %vm7825, 0.0
      %7859 = vst.msk [vmem:[#allocation6 + $0x100] sm:$0x3] %vm7828, 0.0
      %7860 = vst.msk [vmem:[#allocation6 + $0x108] sm:$0xff] %vm7825, 0.0
      %7861 = vst.msk [vmem:[#allocation6 + $0x110] sm:$0xff] %vm7825, 0.0
      %7862 = vst.msk [vmem:[#allocation6 + $0x118] sm:$0x3] %vm7828, 0.0
      %7863 = vst.msk [vmem:[#allocation6 + $0x120] sm:$0xff] %vm7825, 0.0
      %7864 = vst.msk [vmem:[#allocation6 + $0x128] sm:$0xff] %vm7825, 0.0
      %7865 = vst.msk [vmem:[#allocation6 + $0x130] sm:$0x3] %vm7828, 0.0
      %7866 = vst.msk [vmem:[#allocation6 + $0x138] sm:$0xff] %vm7825, 0.0
      %7867 = vst.msk [vmem:[#allocation6 + $0x140] sm:$0xff] %vm7825, 0.0
      %7868 = vst.msk [vmem:[#allocation6 + $0x148] sm:$0x3] %vm7828, 0.0
      %7869 = vst.msk [vmem:[#allocation6 + $0x150] sm:$0xff] %vm7825, 0.0
      %7870 = vst.msk [vmem:[#allocation6 + $0x158] sm:$0xff] %vm7825, 0.0
      %7871 = vst.msk [vmem:[#allocation6 + $0x160] sm:$0x3] %vm7828, 0.0
      %7872 = vst.msk [vmem:[#allocation6 + $0x168] sm:$0xff] %vm7825, 0.0
      %7873 = vst.msk [vmem:[#allocation6 + $0x170] sm:$0xff] %vm7825, 0.0
      %7874 = vst.msk [vmem:[#allocation6 + $0x178] sm:$0x3] %vm7828, 0.0
      %7875 = vst.msk [vmem:[#allocation6 + $0x180] sm:$0xff] %vm7825, 0.0
      %7876 = vst.msk [vmem:[#allocation6 + $0x188] sm:$0xff] %vm7825, 0.0
      %7877 = vst.msk [vmem:[#allocation6 + $0x190] sm:$0x3] %vm7828, 0.0
      %7878 = vst.msk [vmem:[#allocation6 + $0x198] sm:$0xff] %vm7825, 0.0
      %7879 = vst.msk [vmem:[#allocation6 + $0x1a0] sm:$0xff] %vm7825, 0.0
      %7880 = vst.msk [vmem:[#allocation6 + $0x1a8] sm:$0x3] %vm7828, 0.0
      %s7881 = scalar_lea.vmem [#allocation6], 24
      %7882 = vst.msk [vmem:[%s7881 + $0x1] sm:$0xff] %vm7825, %v7793
      %7883 = vst.msk [vmem:[%s7881 + $0x9] sm:$0xff] %vm7825, %v7794
      %7884 = vst.msk [vmem:[%s7881 + $0x19] sm:$0xff] %vm7825, %v7795
      %7885 = vst.msk [vmem:[%s7881 + $0x21] sm:$0xff] %vm7825, %v7796
      %7886 = vst.msk [vmem:[%s7881 + $0x31] sm:$0xff] %vm7825, %v7797
      %7887 = vst.msk [vmem:[%s7881 + $0x39] sm:$0xff] %vm7825, %v7798
      %7888 = vst.msk [vmem:[%s7881 + $0x49] sm:$0xff] %vm7825, %v7799
      %7889 = vst.msk [vmem:[%s7881 + $0x51] sm:$0xff] %vm7825, %v7800
      %7890 = vst.msk [vmem:[%s7881 + $0x61] sm:$0xff] %vm7825, %v7801
      %7891 = vst.msk [vmem:[%s7881 + $0x69] sm:$0xff] %vm7825, %v7802
      %7892 = vst.msk [vmem:[%s7881 + $0x79] sm:$0xff] %vm7825, %v7803
      %7893 = vst.msk [vmem:[%s7881 + $0x81] sm:$0xff] %vm7825, %v7804
      %7894 = vst.msk [vmem:[%s7881 + $0x91] sm:$0xff] %vm7825, %v7805
      %7895 = vst.msk [vmem:[%s7881 + $0x99] sm:$0xff] %vm7825, %v7806
      %7896 = vst.msk [vmem:[%s7881 + $0xa9] sm:$0xff] %vm7825, %v7807
      %7897 = vst.msk [vmem:[%s7881 + $0xb1] sm:$0xff] %vm7825, %v7808
      %7898 = vst.msk [vmem:[%s7881 + $0xc1] sm:$0xff] %vm7825, %v7809
      %7899 = vst.msk [vmem:[%s7881 + $0xc9] sm:$0xff] %vm7825, %v7810
      %7900 = vst.msk [vmem:[%s7881 + $0xd9] sm:$0xff] %vm7825, %v7811
      %7901 = vst.msk [vmem:[%s7881 + $0xe1] sm:$0xff] %vm7825, %v7812
      %7902 = vst.msk [vmem:[%s7881 + $0xf1] sm:$0xff] %vm7825, %v7813
      %7903 = vst.msk [vmem:[%s7881 + $0xf9] sm:$0xff] %vm7825, %v7814
      %7904 = vst.msk [vmem:[%s7881 + $0x109] sm:$0xff] %vm7825, %v7815
      %7905 = vst.msk [vmem:[%s7881 + $0x111] sm:$0xff] %vm7825, %v7816
      %7906 = vst.msk [vmem:[%s7881 + $0x121] sm:$0xff] %vm7825, %v7817
      %7907 = vst.msk [vmem:[%s7881 + $0x129] sm:$0xff] %vm7825, %v7818
      %7908 = vst.msk [vmem:[%s7881 + $0x139] sm:$0xff] %vm7825, %v7819
      %7909 = vst.msk [vmem:[%s7881 + $0x141] sm:$0xff] %vm7825, %v7820
      %7910 = vst.msk [vmem:[%s7881 + $0x151] sm:$0xff] %vm7825, %v7821
      %7911 = vst.msk [vmem:[%s7881 + $0x159] sm:$0xff] %vm7825, %v7822
      %7912 = vst.msk [vmem:[%s7881 + $0x169] sm:$0xff] %vm7825, %v7823
      %7913 = vst.msk [vmem:[%s7881 + $0x171] sm:$0xff] %vm7825, %v7824
      %v7914 = vld [vmem:[#allocation6] sm:$0xff]
      %v7915 = vld [vmem:[#allocation6 + $0x8] sm:$0xff]
      %v7916 = vld [vmem:[#allocation6 + $0x18] sm:$0xff]
      %v7917 = vld [vmem:[#allocation6 + $0x20] sm:$0xff]
      %v7918 = vld [vmem:[#allocation6 + $0x30] sm:$0xff]
      %v7919 = vld [vmem:[#allocation6 + $0x38] sm:$0xff]
      %v7920 = vld [vmem:[#allocation6 + $0x48] sm:$0xff]
      %v7921 = vld [vmem:[#allocation6 + $0x50] sm:$0xff]
      %v7922 = vld [vmem:[#allocation6 + $0x60] sm:$0xff]
      %v7923 = vld [vmem:[#allocation6 + $0x68] sm:$0xff]
      %v7924 = vld [vmem:[#allocation6 + $0x78] sm:$0xff]
      %v7925 = vld [vmem:[#allocation6 + $0x80] sm:$0xff]
      %v7926 = vld [vmem:[#allocation6 + $0x90] sm:$0xff]
      %v7927 = vld [vmem:[#allocation6 + $0x98] sm:$0xff]
      %v7928 = vld [vmem:[#allocation6 + $0xa8] sm:$0xff]
      %v7929 = vld [vmem:[#allocation6 + $0xb0] sm:$0xff]
      %v7930 = vld [vmem:[#allocation6 + $0xc0] sm:$0xff]
      %v7931 = vld [vmem:[#allocation6 + $0xc8] sm:$0xff]
      %v7932 = vld [vmem:[#allocation6 + $0xd8] sm:$0xff]
      %v7933 = vld [vmem:[#allocation6 + $0xe0] sm:$0xff]
      %v7934 = vld [vmem:[#allocation6 + $0xf0] sm:$0xff]
      %v7935 = vld [vmem:[#allocation6 + $0xf8] sm:$0xff]
      %v7936 = vld [vmem:[#allocation6 + $0x108] sm:$0xff]
      %v7937 = vld [vmem:[#allocation6 + $0x110] sm:$0xff]
      %v7938 = vld [vmem:[#allocation6 + $0x120] sm:$0xff]
      %v7939 = vld [vmem:[#allocation6 + $0x128] sm:$0xff]
      %v7940 = vld [vmem:[#allocation6 + $0x138] sm:$0xff]
      %v7941 = vld [vmem:[#allocation6 + $0x140] sm:$0xff]
      %v7942 = vld [vmem:[#allocation6 + $0x150] sm:$0xff]
      %v7943 = vld [vmem:[#allocation6 + $0x158] sm:$0xff]
      %v7944 = vld [vmem:[#allocation6 + $0x168] sm:$0xff]
      %v7945 = vld [vmem:[#allocation6 + $0x170] sm:$0xff]
      %7946 = vst.msk [vmem:[#allocation7] sm:$0xff] %vm7825, %v7914
      %7947 = vst.msk [vmem:[#allocation7 + $0x18] sm:$0xff] %vm7825, %v7915
      %7948 = vst.msk [vmem:[#allocation7 + $0x30] sm:$0xff] %vm7825, %v7916
      %7949 = vst.msk [vmem:[#allocation7 + $0x48] sm:$0xff] %vm7825, %v7917
      %7950 = vst.msk [vmem:[#allocation7 + $0x60] sm:$0xff] %vm7825, %v7918
      %7951 = vst.msk [vmem:[#allocation7 + $0x78] sm:$0xff] %vm7825, %v7919
      %7952 = vst.msk [vmem:[#allocation7 + $0x90] sm:$0xff] %vm7825, %v7920
      %7953 = vst.msk [vmem:[#allocation7 + $0xa8] sm:$0xff] %vm7825, %v7921
      %7954 = vst.msk [vmem:[#allocation7 + $0xc0] sm:$0xff] %vm7825, %v7922
      %7955 = vst.msk [vmem:[#allocation7 + $0xd8] sm:$0xff] %vm7825, %v7923
      %7956 = vst.msk [vmem:[#allocation7 + $0xf0] sm:$0xff] %vm7825, %v7924
      %7957 = vst.msk [vmem:[#allocation7 + $0x108] sm:$0xff] %vm7825, %v7925
      %7958 = vst.msk [vmem:[#allocation7 + $0x120] sm:$0xff] %vm7825, %v7926
      %7959 = vst.msk [vmem:[#allocation7 + $0x138] sm:$0xff] %vm7825, %v7927
      %7960 = vst.msk [vmem:[#allocation7 + $0x150] sm:$0xff] %vm7825, %v7928
      %7961 = vst.msk [vmem:[#allocation7 + $0x168] sm:$0xff] %vm7825, %v7929
      %7962 = vst.msk [vmem:[#allocation7 + $0x180] sm:$0xff] %vm7825, %v7930
      %7963 = vst.msk [vmem:[#allocation7 + $0x198] sm:$0xff] %vm7825, %v7931
      %7964 = vst.msk [vmem:[#allocation7 + $0x1b0] sm:$0xff] %vm7825, %v7932
      %7965 = vst.msk [vmem:[#allocation7 + $0x1c8] sm:$0xff] %vm7825, %v7933
      %7966 = vst.msk [vmem:[#allocation7 + $0x1e0] sm:$0xff] %vm7825, %v7934
      %7967 = vst.msk [vmem:[#allocation7 + $0x1f8] sm:$0xff] %vm7825, %v7935
      %7968 = vst.msk [vmem:[#allocation7 + $0x210] sm:$0xff] %vm7825, %v7936
      %7969 = vst.msk [vmem:[#allocation7 + $0x228] sm:$0xff] %vm7825, %v7937
      %7970 = vst.msk [vmem:[#allocation7 + $0x240] sm:$0xff] %vm7825, %v7938
      %7971 = vst.msk [vmem:[#allocation7 + $0x258] sm:$0xff] %vm7825, %v7939
      %7972 = vst.msk [vmem:[#allocation7 + $0x270] sm:$0xff] %vm7825, %v7940
      %7973 = vst.msk [vmem:[#allocation7 + $0x288] sm:$0xff] %vm7825, %v7941
      %7974 = vst.msk [vmem:[#allocation7 + $0x2a0] sm:$0xff] %vm7825, %v7942
      %7975 = vst.msk [vmem:[#allocation7 + $0x2b8] sm:$0xff] %vm7825, %v7943
      %7976 = vst.msk [vmem:[#allocation7 + $0x2d0] sm:$0xff] %vm7825, %v7944
      %7977 = vst.msk [vmem:[#allocation7 + $0x2e8] sm:$0xff] %vm7825, %v7945
      %v7978 = vld [vmem:[#allocation6 + $0x1] sm:$0xff]
      %v7979 = vld [vmem:[#allocation6 + $0x9] sm:$0xff]
      %v7980 = vld [vmem:[#allocation6 + $0x19] sm:$0xff]
      %v7981 = vld [vmem:[#allocation6 + $0x21] sm:$0xff]
      %v7982 = vld [vmem:[#allocation6 + $0x31] sm:$0xff]
      %v7983 = vld [vmem:[#allocation6 + $0x39] sm:$0xff]
      %v7984 = vld [vmem:[#allocation6 + $0x49] sm:$0xff]
      %v7985 = vld [vmem:[#allocation6 + $0x51] sm:$0xff]
      %v7986 = vld [vmem:[#allocation6 + $0x61] sm:$0xff]
      %v7987 = vld [vmem:[#allocation6 + $0x69] sm:$0xff]
      %v7988 = vld [vmem:[#allocation6 + $0x79] sm:$0xff]
      %v7989 = vld [vmem:[#allocation6 + $0x81] sm:$0xff]
      %v7990 = vld [vmem:[#allocation6 + $0x91] sm:$0xff]
      %v7991 = vld [vmem:[#allocation6 + $0x99] sm:$0xff]
      %v7992 = vld [vmem:[#allocation6 + $0xa9] sm:$0xff]
      %v7993 = vld [vmem:[#allocation6 + $0xb1] sm:$0xff]
      %v7994 = vld [vmem:[#allocation6 + $0xc1] sm:$0xff]
      %v7995 = vld [vmem:[#allocation6 + $0xc9] sm:$0xff]
      %v7996 = vld [vmem:[#allocation6 + $0xd9] sm:$0xff]
      %v7997 = vld [vmem:[#allocation6 + $0xe1] sm:$0xff]
      %v7998 = vld [vmem:[#allocation6 + $0xf1] sm:$0xff]
      %v7999 = vld [vmem:[#allocation6 + $0xf9] sm:$0xff]
      %v8000 = vld [vmem:[#allocation6 + $0x109] sm:$0xff]
      %v8001 = vld [vmem:[#allocation6 + $0x111] sm:$0xff]
      %v8002 = vld [vmem:[#allocation6 + $0x121] sm:$0xff]
      %v8003 = vld [vmem:[#allocation6 + $0x129] sm:$0xff]
      %v8004 = vld [vmem:[#allocation6 + $0x139] sm:$0xff]
      %v8005 = vld [vmem:[#allocation6 + $0x141] sm:$0xff]
      %v8006 = vld [vmem:[#allocation6 + $0x151] sm:$0xff]
      %v8007 = vld [vmem:[#allocation6 + $0x159] sm:$0xff]
      %v8008 = vld [vmem:[#allocation6 + $0x169] sm:$0xff]
      %v8009 = vld [vmem:[#allocation6 + $0x171] sm:$0xff]
      %8042 = vrot.lane.b32.xlu0 %v7978, 40
      %v8043 = vpop.permute.xlu0 %8042
      %8044 = vrot.lane.b32.xlu0 %v7979, 40
      %v8045 = vpop.permute.xlu0 %8044
      %8046 = vrot.lane.b32.xlu0 %v7980, 40
      %v8047 = vpop.permute.xlu0 %8046
      %8048 = vrot.lane.b32.xlu0 %v7981, 40
      %v8049 = vpop.permute.xlu0 %8048
      %8050 = vrot.lane.b32.xlu0 %v7982, 40
      %v8051 = vpop.permute.xlu0 %8050
      %8052 = vrot.lane.b32.xlu0 %v7983, 40
      %v8053 = vpop.permute.xlu0 %8052
      %8054 = vrot.lane.b32.xlu0 %v7984, 40
      %v8055 = vpop.permute.xlu0 %8054
      %8056 = vrot.lane.b32.xlu0 %v7985, 40
      %v8057 = vpop.permute.xlu0 %8056
      %8058 = vrot.lane.b32.xlu0 %v7986, 40
      %v8059 = vpop.permute.xlu0 %8058
      %8060 = vrot.lane.b32.xlu0 %v7987, 40
      %v8061 = vpop.permute.xlu0 %8060
      %8062 = vrot.lane.b32.xlu0 %v7988, 40
      %v8063 = vpop.permute.xlu0 %8062
      %8064 = vrot.lane.b32.xlu0 %v7989, 40
      %v8065 = vpop.permute.xlu0 %8064
      %8066 = vrot.lane.b32.xlu0 %v7990, 40
      %v8067 = vpop.permute.xlu0 %8066
      %8068 = vrot.lane.b32.xlu0 %v7991, 40
      %v8069 = vpop.permute.xlu0 %8068
      %8070 = vrot.lane.b32.xlu0 %v7992, 40
      %v8071 = vpop.permute.xlu0 %8070
      %8072 = vrot.lane.b32.xlu0 %v7993, 40
      %v8073 = vpop.permute.xlu0 %8072
      %8074 = vrot.lane.b32.xlu0 %v7994, 40
      %v8075 = vpop.permute.xlu0 %8074
      %8076 = vrot.lane.b32.xlu0 %v7995, 40
      %v8077 = vpop.permute.xlu0 %8076
      %8078 = vrot.lane.b32.xlu0 %v7996, 40
      %v8079 = vpop.permute.xlu0 %8078
      %8080 = vrot.lane.b32.xlu0 %v7997, 40
      %v8081 = vpop.permute.xlu0 %8080
      %8082 = vrot.lane.b32.xlu0 %v7998, 40
      %v8083 = vpop.permute.xlu0 %8082
      %8084 = vrot.lane.b32.xlu0 %v7999, 40
      %v8085 = vpop.permute.xlu0 %8084
      %8086 = vrot.lane.b32.xlu0 %v8000, 40
      %v8087 = vpop.permute.xlu0 %8086
      %8088 = vrot.lane.b32.xlu0 %v8001, 40
      %v8089 = vpop.permute.xlu0 %8088
      %8090 = vrot.lane.b32.xlu0 %v8002, 40
      %v8091 = vpop.permute.xlu0 %8090
      %8092 = vrot.lane.b32.xlu0 %v8003, 40
      %v8093 = vpop.permute.xlu0 %8092
      %8094 = vrot.lane.b32.xlu0 %v8004, 40
      %v8095 = vpop.permute.xlu0 %8094
      %8096 = vrot.lane.b32.xlu0 %v8005, 40
      %v8097 = vpop.permute.xlu0 %8096
      %8098 = vrot.lane.b32.xlu0 %v8006, 40
      %v8099 = vpop.permute.xlu0 %8098
      %8100 = vrot.lane.b32.xlu0 %v8007, 40
      %v8101 = vpop.permute.xlu0 %8100
      %8102 = vrot.lane.b32.xlu0 %v8008, 40
      %v8103 = vpop.permute.xlu0 %8102
      %8104 = vrot.lane.b32.xlu0 %v8009, 40
      %v8105 = vpop.permute.xlu0 %8104
      %vm8138 = vcmask 654656
      %8139 = vst.msk [vmem:[#allocation7] sm:$0xff] %vm8138, %v8043
      %8140 = vst.msk [vmem:[#allocation7 + $0x18] sm:$0xff] %vm8138, %v8045
      %8141 = vst.msk [vmem:[#allocation7 + $0x30] sm:$0xff] %vm8138, %v8047
      %8142 = vst.msk [vmem:[#allocation7 + $0x48] sm:$0xff] %vm8138, %v8049
      %8143 = vst.msk [vmem:[#allocation7 + $0x60] sm:$0xff] %vm8138, %v8051
      %8144 = vst.msk [vmem:[#allocation7 + $0x78] sm:$0xff] %vm8138, %v8053
      %8145 = vst.msk [vmem:[#allocation7 + $0x90] sm:$0xff] %vm8138, %v8055
      %8146 = vst.msk [vmem:[#allocation7 + $0xa8] sm:$0xff] %vm8138, %v8057
      %8147 = vst.msk [vmem:[#allocation7 + $0xc0] sm:$0xff] %vm8138, %v8059
      %8148 = vst.msk [vmem:[#allocation7 + $0xd8] sm:$0xff] %vm8138, %v8061
      %8149 = vst.msk [vmem:[#allocation7 + $0xf0] sm:$0xff] %vm8138, %v8063
      %8150 = vst.msk [vmem:[#allocation7 + $0x108] sm:$0xff] %vm8138, %v8065
      %8151 = vst.msk [vmem:[#allocation7 + $0x120] sm:$0xff] %vm8138, %v8067
      %8152 = vst.msk [vmem:[#allocation7 + $0x138] sm:$0xff] %vm8138, %v8069
      %8153 = vst.msk [vmem:[#allocation7 + $0x150] sm:$0xff] %vm8138, %v8071
      %8154 = vst.msk [vmem:[#allocation7 + $0x168] sm:$0xff] %vm8138, %v8073
      %8155 = vst.msk [vmem:[#allocation7 + $0x180] sm:$0xff] %vm8138, %v8075
      %8156 = vst.msk [vmem:[#allocation7 + $0x198] sm:$0xff] %vm8138, %v8077
      %8157 = vst.msk [vmem:[#allocation7 + $0x1b0] sm:$0xff] %vm8138, %v8079
      %8158 = vst.msk [vmem:[#allocation7 + $0x1c8] sm:$0xff] %vm8138, %v8081
      %8159 = vst.msk [vmem:[#allocation7 + $0x1e0] sm:$0xff] %vm8138, %v8083
      %8160 = vst.msk [vmem:[#allocation7 + $0x1f8] sm:$0xff] %vm8138, %v8085
      %8161 = vst.msk [vmem:[#allocation7 + $0x210] sm:$0xff] %vm8138, %v8087
      %8162 = vst.msk [vmem:[#allocation7 + $0x228] sm:$0xff] %vm8138, %v8089
      %8163 = vst.msk [vmem:[#allocation7 + $0x240] sm:$0xff] %vm8138, %v8091
      %8164 = vst.msk [vmem:[#allocation7 + $0x258] sm:$0xff] %vm8138, %v8093
      %8165 = vst.msk [vmem:[#allocation7 + $0x270] sm:$0xff] %vm8138, %v8095
      %8166 = vst.msk [vmem:[#allocation7 + $0x288] sm:$0xff] %vm8138, %v8097
      %8167 = vst.msk [vmem:[#allocation7 + $0x2a0] sm:$0xff] %vm8138, %v8099
      %8168 = vst.msk [vmem:[#allocation7 + $0x2b8] sm:$0xff] %vm8138, %v8101
      %8169 = vst.msk [vmem:[#allocation7 + $0x2d0] sm:$0xff] %vm8138, %v8103
      %8170 = vst.msk [vmem:[#allocation7 + $0x2e8] sm:$0xff] %vm8138, %v8105
      %v8171 = vld [vmem:[#allocation6 + $0x2] sm:$0xff]
      %v8172 = vld [vmem:[#allocation6 + $0xa] sm:$0xff]
      %v8173 = vld [vmem:[#allocation6 + $0x1a] sm:$0xff]
      %v8174 = vld [vmem:[#allocation6 + $0x22] sm:$0xff]
      %v8175 = vld [vmem:[#allocation6 + $0x32] sm:$0xff]
      %v8176 = vld [vmem:[#allocation6 + $0x3a] sm:$0xff]
      %v8177 = vld [vmem:[#allocation6 + $0x4a] sm:$0xff]
      %v8178 = vld [vmem:[#allocation6 + $0x52] sm:$0xff]
      %v8179 = vld [vmem:[#allocation6 + $0x62] sm:$0xff]
      %v8180 = vld [vmem:[#allocation6 + $0x6a] sm:$0xff]
      %v8181 = vld [vmem:[#allocation6 + $0x7a] sm:$0xff]
      %v8182 = vld [vmem:[#allocation6 + $0x82] sm:$0xff]
      %v8183 = vld [vmem:[#allocation6 + $0x92] sm:$0xff]
      %v8184 = vld [vmem:[#allocation6 + $0x9a] sm:$0xff]
      %v8185 = vld [vmem:[#allocation6 + $0xaa] sm:$0xff]
      %v8186 = vld [vmem:[#allocation6 + $0xb2] sm:$0xff]
      %v8187 = vld [vmem:[#allocation6 + $0xc2] sm:$0xff]
      %v8188 = vld [vmem:[#allocation6 + $0xca] sm:$0xff]
      %v8189 = vld [vmem:[#allocation6 + $0xda] sm:$0xff]
      %v8190 = vld [vmem:[#allocation6 + $0xe2] sm:$0xff]
      %v8191 = vld [vmem:[#allocation6 + $0xf2] sm:$0xff]
      %v8192 = vld [vmem:[#allocation6 + $0xfa] sm:$0xff]
      %v8193 = vld [vmem:[#allocation6 + $0x10a] sm:$0xff]
      %v8194 = vld [vmem:[#allocation6 + $0x112] sm:$0xff]
      %v8195 = vld [vmem:[#allocation6 + $0x122] sm:$0xff]
      %v8196 = vld [vmem:[#allocation6 + $0x12a] sm:$0xff]
      %v8197 = vld [vmem:[#allocation6 + $0x13a] sm:$0xff]
      %v8198 = vld [vmem:[#allocation6 + $0x142] sm:$0xff]
      %v8199 = vld [vmem:[#allocation6 + $0x152] sm:$0xff]
      %v8200 = vld [vmem:[#allocation6 + $0x15a] sm:$0xff]
      %v8201 = vld [vmem:[#allocation6 + $0x16a] sm:$0xff]
      %v8202 = vld [vmem:[#allocation6 + $0x172] sm:$0xff]
      %8235 = vrot.lane.b32.xlu0 %v8171, 80
      %v8236 = vpop.permute.xlu0 %8235
      %8237 = vrot.lane.b32.xlu0 %v8172, 80
      %v8238 = vpop.permute.xlu0 %8237
      %8239 = vrot.lane.b32.xlu0 %v8173, 80
      %v8240 = vpop.permute.xlu0 %8239
      %8241 = vrot.lane.b32.xlu0 %v8174, 80
      %v8242 = vpop.permute.xlu0 %8241
      %8243 = vrot.lane.b32.xlu0 %v8175, 80
      %v8244 = vpop.permute.xlu0 %8243
      %8245 = vrot.lane.b32.xlu0 %v8176, 80
      %v8246 = vpop.permute.xlu0 %8245
      %8247 = vrot.lane.b32.xlu0 %v8177, 80
      %v8248 = vpop.permute.xlu0 %8247
      %8249 = vrot.lane.b32.xlu0 %v8178, 80
      %v8250 = vpop.permute.xlu0 %8249
      %8251 = vrot.lane.b32.xlu0 %v8179, 80
      %v8252 = vpop.permute.xlu0 %8251
      %8253 = vrot.lane.b32.xlu0 %v8180, 80
      %v8254 = vpop.permute.xlu0 %8253
      %8255 = vrot.lane.b32.xlu0 %v8181, 80
      %v8256 = vpop.permute.xlu0 %8255
      %8257 = vrot.lane.b32.xlu0 %v8182, 80
      %v8258 = vpop.permute.xlu0 %8257
      %8259 = vrot.lane.b32.xlu0 %v8183, 80
      %v8260 = vpop.permute.xlu0 %8259
      %8261 = vrot.lane.b32.xlu0 %v8184, 80
      %v8262 = vpop.permute.xlu0 %8261
      %8263 = vrot.lane.b32.xlu0 %v8185, 80
      %v8264 = vpop.permute.xlu0 %8263
      %8265 = vrot.lane.b32.xlu0 %v8186, 80
      %v8266 = vpop.permute.xlu0 %8265
      %8267 = vrot.lane.b32.xlu0 %v8187, 80
      %v8268 = vpop.permute.xlu0 %8267
      %8269 = vrot.lane.b32.xlu0 %v8188, 80
      %v8270 = vpop.permute.xlu0 %8269
      %8271 = vrot.lane.b32.xlu0 %v8189, 80
      %v8272 = vpop.permute.xlu0 %8271
      %8273 = vrot.lane.b32.xlu0 %v8190, 80
      %v8274 = vpop.permute.xlu0 %8273
      %8275 = vrot.lane.b32.xlu0 %v8191, 80
      %v8276 = vpop.permute.xlu0 %8275
      %8277 = vrot.lane.b32.xlu0 %v8192, 80
      %v8278 = vpop.permute.xlu0 %8277
      %8279 = vrot.lane.b32.xlu0 %v8193, 80
      %v8280 = vpop.permute.xlu0 %8279
      %8281 = vrot.lane.b32.xlu0 %v8194, 80
      %v8282 = vpop.permute.xlu0 %8281
      %8283 = vrot.lane.b32.xlu0 %v8195, 80
      %v8284 = vpop.permute.xlu0 %8283
      %8285 = vrot.lane.b32.xlu0 %v8196, 80
      %v8286 = vpop.permute.xlu0 %8285
      %8287 = vrot.lane.b32.xlu0 %v8197, 80
      %v8288 = vpop.permute.xlu0 %8287
      %8289 = vrot.lane.b32.xlu0 %v8198, 80
      %v8290 = vpop.permute.xlu0 %8289
      %8291 = vrot.lane.b32.xlu0 %v8199, 80
      %v8292 = vpop.permute.xlu0 %8291
      %8293 = vrot.lane.b32.xlu0 %v8200, 80
      %v8294 = vpop.permute.xlu0 %8293
      %8295 = vrot.lane.b32.xlu0 %v8201, 80
      %v8296 = vpop.permute.xlu0 %8295
      %8297 = vrot.lane.b32.xlu0 %v8202, 80
      %v8298 = vpop.permute.xlu0 %8297
      %vm8331 = vcmask 982656
      %8332 = vst.msk [vmem:[#allocation7] sm:$0xff] %vm8331, %v8236
      %8333 = vst.msk [vmem:[#allocation7 + $0x18] sm:$0xff] %vm8331, %v8238
      %8334 = vst.msk [vmem:[#allocation7 + $0x30] sm:$0xff] %vm8331, %v8240
      %8335 = vst.msk [vmem:[#allocation7 + $0x48] sm:$0xff] %vm8331, %v8242
      %8336 = vst.msk [vmem:[#allocation7 + $0x60] sm:$0xff] %vm8331, %v8244
      %8337 = vst.msk [vmem:[#allocation7 + $0x78] sm:$0xff] %vm8331, %v8246
      %8338 = vst.msk [vmem:[#allocation7 + $0x90] sm:$0xff] %vm8331, %v8248
      %8339 = vst.msk [vmem:[#allocation7 + $0xa8] sm:$0xff] %vm8331, %v8250
      %8340 = vst.msk [vmem:[#allocation7 + $0xc0] sm:$0xff] %vm8331, %v8252
      %8341 = vst.msk [vmem:[#allocation7 + $0xd8] sm:$0xff] %vm8331, %v8254
      %8342 = vst.msk [vmem:[#allocation7 + $0xf0] sm:$0xff] %vm8331, %v8256
      %8343 = vst.msk [vmem:[#allocation7 + $0x108] sm:$0xff] %vm8331, %v8258
      %8344 = vst.msk [vmem:[#allocation7 + $0x120] sm:$0xff] %vm8331, %v8260
      %8345 = vst.msk [vmem:[#allocation7 + $0x138] sm:$0xff] %vm8331, %v8262
      %8346 = vst.msk [vmem:[#allocation7 + $0x150] sm:$0xff] %vm8331, %v8264
      %8347 = vst.msk [vmem:[#allocation7 + $0x168] sm:$0xff] %vm8331, %v8266
      %8348 = vst.msk [vmem:[#allocation7 + $0x180] sm:$0xff] %vm8331, %v8268
      %8349 = vst.msk [vmem:[#allocation7 + $0x198] sm:$0xff] %vm8331, %v8270
      %8350 = vst.msk [vmem:[#allocation7 + $0x1b0] sm:$0xff] %vm8331, %v8272
      %8351 = vst.msk [vmem:[#allocation7 + $0x1c8] sm:$0xff] %vm8331, %v8274
      %8352 = vst.msk [vmem:[#allocation7 + $0x1e0] sm:$0xff] %vm8331, %v8276
      %8353 = vst.msk [vmem:[#allocation7 + $0x1f8] sm:$0xff] %vm8331, %v8278
      %8354 = vst.msk [vmem:[#allocation7 + $0x210] sm:$0xff] %vm8331, %v8280
      %8355 = vst.msk [vmem:[#allocation7 + $0x228] sm:$0xff] %vm8331, %v8282
      %8356 = vst.msk [vmem:[#allocation7 + $0x240] sm:$0xff] %vm8331, %v8284
      %8357 = vst.msk [vmem:[#allocation7 + $0x258] sm:$0xff] %vm8331, %v8286
      %8358 = vst.msk [vmem:[#allocation7 + $0x270] sm:$0xff] %vm8331, %v8288
      %8359 = vst.msk [vmem:[#allocation7 + $0x288] sm:$0xff] %vm8331, %v8290
      %8360 = vst.msk [vmem:[#allocation7 + $0x2a0] sm:$0xff] %vm8331, %v8292
      %8361 = vst.msk [vmem:[#allocation7 + $0x2b8] sm:$0xff] %vm8331, %v8294
      %8362 = vst.msk [vmem:[#allocation7 + $0x2d0] sm:$0xff] %vm8331, %v8296
      %8363 = vst.msk [vmem:[#allocation7 + $0x2e8] sm:$0xff] %vm8331, %v8298
      %v8364 = vld [vmem:[%s7881] sm:$0xff]
      %v8365 = vld [vmem:[%s7881 + $0x8] sm:$0xff]
      %v8366 = vld [vmem:[%s7881 + $0x18] sm:$0xff]
      %v8367 = vld [vmem:[%s7881 + $0x20] sm:$0xff]
      %v8368 = vld [vmem:[%s7881 + $0x30] sm:$0xff]
      %v8369 = vld [vmem:[%s7881 + $0x38] sm:$0xff]
      %v8370 = vld [vmem:[%s7881 + $0x48] sm:$0xff]
      %v8371 = vld [vmem:[%s7881 + $0x50] sm:$0xff]
      %v8372 = vld [vmem:[%s7881 + $0x60] sm:$0xff]
      %v8373 = vld [vmem:[%s7881 + $0x68] sm:$0xff]
      %v8374 = vld [vmem:[%s7881 + $0x78] sm:$0xff]
      %v8375 = vld [vmem:[%s7881 + $0x80] sm:$0xff]
      %v8376 = vld [vmem:[%s7881 + $0x90] sm:$0xff]
      %v8377 = vld [vmem:[%s7881 + $0x98] sm:$0xff]
      %v8378 = vld [vmem:[%s7881 + $0xa8] sm:$0xff]
      %v8379 = vld [vmem:[%s7881 + $0xb0] sm:$0xff]
      %v8380 = vld [vmem:[%s7881 + $0xc0] sm:$0xff]
      %v8381 = vld [vmem:[%s7881 + $0xc8] sm:$0xff]
      %v8382 = vld [vmem:[%s7881 + $0xd8] sm:$0xff]
      %v8383 = vld [vmem:[%s7881 + $0xe0] sm:$0xff]
      %v8384 = vld [vmem:[%s7881 + $0xf0] sm:$0xff]
      %v8385 = vld [vmem:[%s7881 + $0xf8] sm:$0xff]
      %v8386 = vld [vmem:[%s7881 + $0x108] sm:$0xff]
      %v8387 = vld [vmem:[%s7881 + $0x110] sm:$0xff]
      %v8388 = vld [vmem:[%s7881 + $0x120] sm:$0xff]
      %v8389 = vld [vmem:[%s7881 + $0x128] sm:$0xff]
      %v8390 = vld [vmem:[%s7881 + $0x138] sm:$0xff]
      %v8391 = vld [vmem:[%s7881 + $0x140] sm:$0xff]
      %v8392 = vld [vmem:[%s7881 + $0x150] sm:$0xff]
      %v8393 = vld [vmem:[%s7881 + $0x158] sm:$0xff]
      %v8394 = vld [vmem:[%s7881 + $0x168] sm:$0xff]
      %v8395 = vld [vmem:[%s7881 + $0x170] sm:$0xff]
      %8428 = vrot.lane.b32.xlu0 %v8364, 120
      %v8429 = vpop.permute.xlu0 %8428
      %8430 = vrot.lane.b32.xlu0 %v8365, 120
      %v8431 = vpop.permute.xlu0 %8430
      %8432 = vrot.lane.b32.xlu0 %v8366, 120
      %v8433 = vpop.permute.xlu0 %8432
      %8434 = vrot.lane.b32.xlu0 %v8367, 120
      %v8435 = vpop.permute.xlu0 %8434
      %8436 = vrot.lane.b32.xlu0 %v8368, 120
      %v8437 = vpop.permute.xlu0 %8436
      %8438 = vrot.lane.b32.xlu0 %v8369, 120
      %v8439 = vpop.permute.xlu0 %8438
      %8440 = vrot.lane.b32.xlu0 %v8370, 120
      %v8441 = vpop.permute.xlu0 %8440
      %8442 = vrot.lane.b32.xlu0 %v8371, 120
      %v8443 = vpop.permute.xlu0 %8442
      %8444 = vrot.lane.b32.xlu0 %v8372, 120
      %v8445 = vpop.permute.xlu0 %8444
      %8446 = vrot.lane.b32.xlu0 %v8373, 120
      %v8447 = vpop.permute.xlu0 %8446
      %8448 = vrot.lane.b32.xlu0 %v8374, 120
      %v8449 = vpop.permute.xlu0 %8448
      %8450 = vrot.lane.b32.xlu0 %v8375, 120
      %v8451 = vpop.permute.xlu0 %8450
      %8452 = vrot.lane.b32.xlu0 %v8376, 120
      %v8453 = vpop.permute.xlu0 %8452
      %8454 = vrot.lane.b32.xlu0 %v8377, 120
      %v8455 = vpop.permute.xlu0 %8454
      %8456 = vrot.lane.b32.xlu0 %v8378, 120
      %v8457 = vpop.permute.xlu0 %8456
      %8458 = vrot.lane.b32.xlu0 %v8379, 120
      %v8459 = vpop.permute.xlu0 %8458
      %8460 = vrot.lane.b32.xlu0 %v8380, 120
      %v8461 = vpop.permute.xlu0 %8460
      %8462 = vrot.lane.b32.xlu0 %v8381, 120
      %v8463 = vpop.permute.xlu0 %8462
      %8464 = vrot.lane.b32.xlu0 %v8382, 120
      %v8465 = vpop.permute.xlu0 %8464
      %8466 = vrot.lane.b32.xlu0 %v8383, 120
      %v8467 = vpop.permute.xlu0 %8466
      %8468 = vrot.lane.b32.xlu0 %v8384, 120
      %v8469 = vpop.permute.xlu0 %8468
      %8470 = vrot.lane.b32.xlu0 %v8385, 120
      %v8471 = vpop.permute.xlu0 %8470
      %8472 = vrot.lane.b32.xlu0 %v8386, 120
      %v8473 = vpop.permute.xlu0 %8472
      %8474 = vrot.lane.b32.xlu0 %v8387, 120
      %v8475 = vpop.permute.xlu0 %8474
      %8476 = vrot.lane.b32.xlu0 %v8388, 120
      %v8477 = vpop.permute.xlu0 %8476
      %8478 = vrot.lane.b32.xlu0 %v8389, 120
      %v8479 = vpop.permute.xlu0 %8478
      %8480 = vrot.lane.b32.xlu0 %v8390, 120
      %v8481 = vpop.permute.xlu0 %8480
      %8482 = vrot.lane.b32.xlu0 %v8391, 120
      %v8483 = vpop.permute.xlu0 %8482
      %8484 = vrot.lane.b32.xlu0 %v8392, 120
      %v8485 = vpop.permute.xlu0 %8484
      %8486 = vrot.lane.b32.xlu0 %v8393, 120
      %v8487 = vpop.permute.xlu0 %8486
      %8488 = vrot.lane.b32.xlu0 %v8394, 120
      %v8489 = vpop.permute.xlu0 %8488
      %8490 = vrot.lane.b32.xlu0 %v8395, 120
      %v8491 = vpop.permute.xlu0 %8490
      %8524 = vst.msk [vmem:[#allocation7] sm:$0xff] %vm6858, %v8429
      %vm8525 = vcmask 261120
      %8526 = vst.msk [vmem:[#allocation7 + $0x8] sm:$0xff] %vm8525, %v8429
      %8527 = vst.msk [vmem:[#allocation7 + $0x18] sm:$0xff] %vm6858, %v8431
      %8528 = vst.msk [vmem:[#allocation7 + $0x20] sm:$0xff] %vm8525, %v8431
      %8529 = vst.msk [vmem:[#allocation7 + $0x30] sm:$0xff] %vm6858, %v8433
      %8530 = vst.msk [vmem:[#allocation7 + $0x38] sm:$0xff] %vm8525, %v8433
      %8531 = vst.msk [vmem:[#allocation7 + $0x48] sm:$0xff] %vm6858, %v8435
      %8532 = vst.msk [vmem:[#allocation7 + $0x50] sm:$0xff] %vm8525, %v8435
      %8533 = vst.msk [vmem:[#allocation7 + $0x60] sm:$0xff] %vm6858, %v8437
      %8534 = vst.msk [vmem:[#allocation7 + $0x68] sm:$0xff] %vm8525, %v8437
      %8535 = vst.msk [vmem:[#allocation7 + $0x78] sm:$0xff] %vm6858, %v8439
      %8536 = vst.msk [vmem:[#allocation7 + $0x80] sm:$0xff] %vm8525, %v8439
      %8537 = vst.msk [vmem:[#allocation7 + $0x90] sm:$0xff] %vm6858, %v8441
      %8538 = vst.msk [vmem:[#allocation7 + $0x98] sm:$0xff] %vm8525, %v8441
      %8539 = vst.msk [vmem:[#allocation7 + $0xa8] sm:$0xff] %vm6858, %v8443
      %8540 = vst.msk [vmem:[#allocation7 + $0xb0] sm:$0xff] %vm8525, %v8443
      %8541 = vst.msk [vmem:[#allocation7 + $0xc0] sm:$0xff] %vm6858, %v8445
      %8542 = vst.msk [vmem:[#allocation7 + $0xc8] sm:$0xff] %vm8525, %v8445
      %8543 = vst.msk [vmem:[#allocation7 + $0xd8] sm:$0xff] %vm6858, %v8447
      %8544 = vst.msk [vmem:[#allocation7 + $0xe0] sm:$0xff] %vm8525, %v8447
      %8545 = vst.msk [vmem:[#allocation7 + $0xf0] sm:$0xff] %vm6858, %v8449
      %8546 = vst.msk [vmem:[#allocation7 + $0xf8] sm:$0xff] %vm8525, %v8449
      %8547 = vst.msk [vmem:[#allocation7 + $0x108] sm:$0xff] %vm6858, %v8451
      %8548 = vst.msk [vmem:[#allocation7 + $0x110] sm:$0xff] %vm8525, %v8451
      %8549 = vst.msk [vmem:[#allocation7 + $0x120] sm:$0xff] %vm6858, %v8453
      %8550 = vst.msk [vmem:[#allocation7 + $0x128] sm:$0xff] %vm8525, %v8453
      %8551 = vst.msk [vmem:[#allocation7 + $0x138] sm:$0xff] %vm6858, %v8455
      %8552 = vst.msk [vmem:[#allocation7 + $0x140] sm:$0xff] %vm8525, %v8455
      %8553 = vst.msk [vmem:[#allocation7 + $0x150] sm:$0xff] %vm6858, %v8457
      %8554 = vst.msk [vmem:[#allocation7 + $0x158] sm:$0xff] %vm8525, %v8457
      %8555 = vst.msk [vmem:[#allocation7 + $0x168] sm:$0xff] %vm6858, %v8459
      %8556 = vst.msk [vmem:[#allocation7 + $0x170] sm:$0xff] %vm8525, %v8459
      %8557 = vst.msk [vmem:[#allocation7 + $0x180] sm:$0xff] %vm6858, %v8461
      %8558 = vst.msk [vmem:[#allocation7 + $0x188] sm:$0xff] %vm8525, %v8461
      %8559 = vst.msk [vmem:[#allocation7 + $0x198] sm:$0xff] %vm6858, %v8463
      %8560 = vst.msk [vmem:[#allocation7 + $0x1a0] sm:$0xff] %vm8525, %v8463
      %8561 = vst.msk [vmem:[#allocation7 + $0x1b0] sm:$0xff] %vm6858, %v8465
      %8562 = vst.msk [vmem:[#allocation7 + $0x1b8] sm:$0xff] %vm8525, %v8465
      %8563 = vst.msk [vmem:[#allocation7 + $0x1c8] sm:$0xff] %vm6858, %v8467
      %8564 = vst.msk [vmem:[#allocation7 + $0x1d0] sm:$0xff] %vm8525, %v8467
      %8565 = vst.msk [vmem:[#allocation7 + $0x1e0] sm:$0xff] %vm6858, %v8469
      %8566 = vst.msk [vmem:[#allocation7 + $0x1e8] sm:$0xff] %vm8525, %v8469
      %8567 = vst.msk [vmem:[#allocation7 + $0x1f8] sm:$0xff] %vm6858, %v8471
      %8568 = vst.msk [vmem:[#allocation7 + $0x200] sm:$0xff] %vm8525, %v8471
      %8569 = vst.msk [vmem:[#allocation7 + $0x210] sm:$0xff] %vm6858, %v8473
      %8570 = vst.msk [vmem:[#allocation7 + $0x218] sm:$0xff] %vm8525, %v8473
      %8571 = vst.msk [vmem:[#allocation7 + $0x228] sm:$0xff] %vm6858, %v8475
      %8572 = vst.msk [vmem:[#allocation7 + $0x230] sm:$0xff] %vm8525, %v8475
      %8573 = vst.msk [vmem:[#allocation7 + $0x240] sm:$0xff] %vm6858, %v8477
      %8574 = vst.msk [vmem:[#allocation7 + $0x248] sm:$0xff] %vm8525, %v8477
      %8575 = vst.msk [vmem:[#allocation7 + $0x258] sm:$0xff] %vm6858, %v8479
      %8576 = vst.msk [vmem:[#allocation7 + $0x260] sm:$0xff] %vm8525, %v8479
      %8577 = vst.msk [vmem:[#allocation7 + $0x270] sm:$0xff] %vm6858, %v8481
      %8578 = vst.msk [vmem:[#allocation7 + $0x278] sm:$0xff] %vm8525, %v8481
      %8579 = vst.msk [vmem:[#allocation7 + $0x288] sm:$0xff] %vm6858, %v8483
      %8580 = vst.msk [vmem:[#allocation7 + $0x290] sm:$0xff] %vm8525, %v8483
      %8581 = vst.msk [vmem:[#allocation7 + $0x2a0] sm:$0xff] %vm6858, %v8485
      %8582 = vst.msk [vmem:[#allocation7 + $0x2a8] sm:$0xff] %vm8525, %v8485
      %8583 = vst.msk [vmem:[#allocation7 + $0x2b8] sm:$0xff] %vm6858, %v8487
      %8584 = vst.msk [vmem:[#allocation7 + $0x2c0] sm:$0xff] %vm8525, %v8487
      %8585 = vst.msk [vmem:[#allocation7 + $0x2d0] sm:$0xff] %vm6858, %v8489
      %8586 = vst.msk [vmem:[#allocation7 + $0x2d8] sm:$0xff] %vm8525, %v8489
      %8587 = vst.msk [vmem:[#allocation7 + $0x2e8] sm:$0xff] %vm6858, %v8491
      %8588 = vst.msk [vmem:[#allocation7 + $0x2f0] sm:$0xff] %vm8525, %v8491
      %v8589 = vld [vmem:[%s7881 + $0x1] sm:$0xff]
      %v8590 = vld [vmem:[%s7881 + $0x9] sm:$0xff]
      %v8591 = vld [vmem:[%s7881 + $0x19] sm:$0xff]
      %v8592 = vld [vmem:[%s7881 + $0x21] sm:$0xff]
      %v8593 = vld [vmem:[%s7881 + $0x31] sm:$0xff]
      %v8594 = vld [vmem:[%s7881 + $0x39] sm:$0xff]
      %v8595 = vld [vmem:[%s7881 + $0x49] sm:$0xff]
      %v8596 = vld [vmem:[%s7881 + $0x51] sm:$0xff]
      %v8597 = vld [vmem:[%s7881 + $0x61] sm:$0xff]
      %v8598 = vld [vmem:[%s7881 + $0x69] sm:$0xff]
      %v8599 = vld [vmem:[%s7881 + $0x79] sm:$0xff]
      %v8600 = vld [vmem:[%s7881 + $0x81] sm:$0xff]
      %v8601 = vld [vmem:[%s7881 + $0x91] sm:$0xff]
      %v8602 = vld [vmem:[%s7881 + $0x99] sm:$0xff]
      %v8603 = vld [vmem:[%s7881 + $0xa9] sm:$0xff]
      %v8604 = vld [vmem:[%s7881 + $0xb1] sm:$0xff]
      %v8605 = vld [vmem:[%s7881 + $0xc1] sm:$0xff]
      %v8606 = vld [vmem:[%s7881 + $0xc9] sm:$0xff]
      %v8607 = vld [vmem:[%s7881 + $0xd9] sm:$0xff]
      %v8608 = vld [vmem:[%s7881 + $0xe1] sm:$0xff]
      %v8609 = vld [vmem:[%s7881 + $0xf1] sm:$0xff]
      %v8610 = vld [vmem:[%s7881 + $0xf9] sm:$0xff]
      %v8611 = vld [vmem:[%s7881 + $0x109] sm:$0xff]
      %v8612 = vld [vmem:[%s7881 + $0x111] sm:$0xff]
      %v8613 = vld [vmem:[%s7881 + $0x121] sm:$0xff]
      %v8614 = vld [vmem:[%s7881 + $0x129] sm:$0xff]
      %v8615 = vld [vmem:[%s7881 + $0x139] sm:$0xff]
      %v8616 = vld [vmem:[%s7881 + $0x141] sm:$0xff]
      %v8617 = vld [vmem:[%s7881 + $0x151] sm:$0xff]
      %v8618 = vld [vmem:[%s7881 + $0x159] sm:$0xff]
      %v8619 = vld [vmem:[%s7881 + $0x169] sm:$0xff]
      %v8620 = vld [vmem:[%s7881 + $0x171] sm:$0xff]
      %8653 = vrot.lane.b32.xlu0 %v8589, 32
      %v8654 = vpop.permute.xlu0 %8653
      %8655 = vrot.lane.b32.xlu0 %v8590, 32
      %v8656 = vpop.permute.xlu0 %8655
      %8657 = vrot.lane.b32.xlu0 %v8591, 32
      %v8658 = vpop.permute.xlu0 %8657
      %8659 = vrot.lane.b32.xlu0 %v8592, 32
      %v8660 = vpop.permute.xlu0 %8659
      %8661 = vrot.lane.b32.xlu0 %v8593, 32
      %v8662 = vpop.permute.xlu0 %8661
      %8663 = vrot.lane.b32.xlu0 %v8594, 32
      %v8664 = vpop.permute.xlu0 %8663
      %8665 = vrot.lane.b32.xlu0 %v8595, 32
      %v8666 = vpop.permute.xlu0 %8665
      %8667 = vrot.lane.b32.xlu0 %v8596, 32
      %v8668 = vpop.permute.xlu0 %8667
      %8669 = vrot.lane.b32.xlu0 %v8597, 32
      %v8670 = vpop.permute.xlu0 %8669
      %8671 = vrot.lane.b32.xlu0 %v8598, 32
      %v8672 = vpop.permute.xlu0 %8671
      %8673 = vrot.lane.b32.xlu0 %v8599, 32
      %v8674 = vpop.permute.xlu0 %8673
      %8675 = vrot.lane.b32.xlu0 %v8600, 32
      %v8676 = vpop.permute.xlu0 %8675
      %8677 = vrot.lane.b32.xlu0 %v8601, 32
      %v8678 = vpop.permute.xlu0 %8677
      %8679 = vrot.lane.b32.xlu0 %v8602, 32
      %v8680 = vpop.permute.xlu0 %8679
      %8681 = vrot.lane.b32.xlu0 %v8603, 32
      %v8682 = vpop.permute.xlu0 %8681
      %8683 = vrot.lane.b32.xlu0 %v8604, 32
      %v8684 = vpop.permute.xlu0 %8683
      %8685 = vrot.lane.b32.xlu0 %v8605, 32
      %v8686 = vpop.permute.xlu0 %8685
      %8687 = vrot.lane.b32.xlu0 %v8606, 32
      %v8688 = vpop.permute.xlu0 %8687
      %8689 = vrot.lane.b32.xlu0 %v8607, 32
      %v8690 = vpop.permute.xlu0 %8689
      %8691 = vrot.lane.b32.xlu0 %v8608, 32
      %v8692 = vpop.permute.xlu0 %8691
      %8693 = vrot.lane.b32.xlu0 %v8609, 32
      %v8694 = vpop.permute.xlu0 %8693
      %8695 = vrot.lane.b32.xlu0 %v8610, 32
      %v8696 = vpop.permute.xlu0 %8695
      %8697 = vrot.lane.b32.xlu0 %v8611, 32
      %v8698 = vpop.permute.xlu0 %8697
      %8699 = vrot.lane.b32.xlu0 %v8612, 32
      %v8700 = vpop.permute.xlu0 %8699
      %8701 = vrot.lane.b32.xlu0 %v8613, 32
      %v8702 = vpop.permute.xlu0 %8701
      %8703 = vrot.lane.b32.xlu0 %v8614, 32
      %v8704 = vpop.permute.xlu0 %8703
      %8705 = vrot.lane.b32.xlu0 %v8615, 32
      %v8706 = vpop.permute.xlu0 %8705
      %8707 = vrot.lane.b32.xlu0 %v8616, 32
      %v8708 = vpop.permute.xlu0 %8707
      %8709 = vrot.lane.b32.xlu0 %v8617, 32
      %v8710 = vpop.permute.xlu0 %8709
      %8711 = vrot.lane.b32.xlu0 %v8618, 32
      %v8712 = vpop.permute.xlu0 %8711
      %8713 = vrot.lane.b32.xlu0 %v8619, 32
      %v8714 = vpop.permute.xlu0 %8713
      %8715 = vrot.lane.b32.xlu0 %v8620, 32
      %v8716 = vpop.permute.xlu0 %8715
      %vm8749 = vcmask 589056
      %8750 = vst.msk [vmem:[#allocation7 + $0x8] sm:$0xff] %vm8749, %v8654
      %8751 = vst.msk [vmem:[#allocation7 + $0x20] sm:$0xff] %vm8749, %v8656
      %8752 = vst.msk [vmem:[#allocation7 + $0x38] sm:$0xff] %vm8749, %v8658
      %8753 = vst.msk [vmem:[#allocation7 + $0x50] sm:$0xff] %vm8749, %v8660
      %8754 = vst.msk [vmem:[#allocation7 + $0x68] sm:$0xff] %vm8749, %v8662
      %8755 = vst.msk [vmem:[#allocation7 + $0x80] sm:$0xff] %vm8749, %v8664
      %8756 = vst.msk [vmem:[#allocation7 + $0x98] sm:$0xff] %vm8749, %v8666
      %8757 = vst.msk [vmem:[#allocation7 + $0xb0] sm:$0xff] %vm8749, %v8668
      %8758 = vst.msk [vmem:[#allocation7 + $0xc8] sm:$0xff] %vm8749, %v8670
      %8759 = vst.msk [vmem:[#allocation7 + $0xe0] sm:$0xff] %vm8749, %v8672
      %8760 = vst.msk [vmem:[#allocation7 + $0xf8] sm:$0xff] %vm8749, %v8674
      %8761 = vst.msk [vmem:[#allocation7 + $0x110] sm:$0xff] %vm8749, %v8676
      %8762 = vst.msk [vmem:[#allocation7 + $0x128] sm:$0xff] %vm8749, %v8678
      %8763 = vst.msk [vmem:[#allocation7 + $0x140] sm:$0xff] %vm8749, %v8680
      %8764 = vst.msk [vmem:[#allocation7 + $0x158] sm:$0xff] %vm8749, %v8682
      %8765 = vst.msk [vmem:[#allocation7 + $0x170] sm:$0xff] %vm8749, %v8684
      %8766 = vst.msk [vmem:[#allocation7 + $0x188] sm:$0xff] %vm8749, %v8686
      %8767 = vst.msk [vmem:[#allocation7 + $0x1a0] sm:$0xff] %vm8749, %v8688
      %8768 = vst.msk [vmem:[#allocation7 + $0x1b8] sm:$0xff] %vm8749, %v8690
      %8769 = vst.msk [vmem:[#allocation7 + $0x1d0] sm:$0xff] %vm8749, %v8692
      %8770 = vst.msk [vmem:[#allocation7 + $0x1e8] sm:$0xff] %vm8749, %v8694
      %8771 = vst.msk [vmem:[#allocation7 + $0x200] sm:$0xff] %vm8749, %v8696
      %8772 = vst.msk [vmem:[#allocation7 + $0x218] sm:$0xff] %vm8749, %v8698
      %8773 = vst.msk [vmem:[#allocation7 + $0x230] sm:$0xff] %vm8749, %v8700
      %8774 = vst.msk [vmem:[#allocation7 + $0x248] sm:$0xff] %vm8749, %v8702
      %8775 = vst.msk [vmem:[#allocation7 + $0x260] sm:$0xff] %vm8749, %v8704
      %8776 = vst.msk [vmem:[#allocation7 + $0x278] sm:$0xff] %vm8749, %v8706
      %8777 = vst.msk [vmem:[#allocation7 + $0x290] sm:$0xff] %vm8749, %v8708
      %8778 = vst.msk [vmem:[#allocation7 + $0x2a8] sm:$0xff] %vm8749, %v8710
      %8779 = vst.msk [vmem:[#allocation7 + $0x2c0] sm:$0xff] %vm8749, %v8712
      %8780 = vst.msk [vmem:[#allocation7 + $0x2d8] sm:$0xff] %vm8749, %v8714
      %8781 = vst.msk [vmem:[#allocation7 + $0x2f0] sm:$0xff] %vm8749, %v8716
      %v8782 = vld [vmem:[%s7881 + $0x2] sm:$0xff]
      %v8783 = vld [vmem:[%s7881 + $0xa] sm:$0xff]
      %v8784 = vld [vmem:[%s7881 + $0x1a] sm:$0xff]
      %v8785 = vld [vmem:[%s7881 + $0x22] sm:$0xff]
      %v8786 = vld [vmem:[%s7881 + $0x32] sm:$0xff]
      %v8787 = vld [vmem:[%s7881 + $0x3a] sm:$0xff]
      %v8788 = vld [vmem:[%s7881 + $0x4a] sm:$0xff]
      %v8789 = vld [vmem:[%s7881 + $0x52] sm:$0xff]
      %v8790 = vld [vmem:[%s7881 + $0x62] sm:$0xff]
      %v8791 = vld [vmem:[%s7881 + $0x6a] sm:$0xff]
      %v8792 = vld [vmem:[%s7881 + $0x7a] sm:$0xff]
      %v8793 = vld [vmem:[%s7881 + $0x82] sm:$0xff]
      %v8794 = vld [vmem:[%s7881 + $0x92] sm:$0xff]
      %v8795 = vld [vmem:[%s7881 + $0x9a] sm:$0xff]
      %v8796 = vld [vmem:[%s7881 + $0xaa] sm:$0xff]
      %v8797 = vld [vmem:[%s7881 + $0xb2] sm:$0xff]
      %v8798 = vld [vmem:[%s7881 + $0xc2] sm:$0xff]
      %v8799 = vld [vmem:[%s7881 + $0xca] sm:$0xff]
      %v8800 = vld [vmem:[%s7881 + $0xda] sm:$0xff]
      %v8801 = vld [vmem:[%s7881 + $0xe2] sm:$0xff]
      %v8802 = vld [vmem:[%s7881 + $0xf2] sm:$0xff]
      %v8803 = vld [vmem:[%s7881 + $0xfa] sm:$0xff]
      %v8804 = vld [vmem:[%s7881 + $0x10a] sm:$0xff]
      %v8805 = vld [vmem:[%s7881 + $0x112] sm:$0xff]
      %v8806 = vld [vmem:[%s7881 + $0x122] sm:$0xff]
      %v8807 = vld [vmem:[%s7881 + $0x12a] sm:$0xff]
      %v8808 = vld [vmem:[%s7881 + $0x13a] sm:$0xff]
      %v8809 = vld [vmem:[%s7881 + $0x142] sm:$0xff]
      %v8810 = vld [vmem:[%s7881 + $0x152] sm:$0xff]
      %v8811 = vld [vmem:[%s7881 + $0x15a] sm:$0xff]
      %v8812 = vld [vmem:[%s7881 + $0x16a] sm:$0xff]
      %v8813 = vld [vmem:[%s7881 + $0x172] sm:$0xff]
      %8846 = vrot.lane.b32.xlu0 %v8782, 72
      %v8847 = vpop.permute.xlu0 %8846
      %8848 = vrot.lane.b32.xlu0 %v8783, 72
      %v8849 = vpop.permute.xlu0 %8848
      %8850 = vrot.lane.b32.xlu0 %v8784, 72
      %v8851 = vpop.permute.xlu0 %8850
      %8852 = vrot.lane.b32.xlu0 %v8785, 72
      %v8853 = vpop.permute.xlu0 %8852
      %8854 = vrot.lane.b32.xlu0 %v8786, 72
      %v8855 = vpop.permute.xlu0 %8854
      %8856 = vrot.lane.b32.xlu0 %v8787, 72
      %v8857 = vpop.permute.xlu0 %8856
      %8858 = vrot.lane.b32.xlu0 %v8788, 72
      %v8859 = vpop.permute.xlu0 %8858
      %8860 = vrot.lane.b32.xlu0 %v8789, 72
      %v8861 = vpop.permute.xlu0 %8860
      %8862 = vrot.lane.b32.xlu0 %v8790, 72
      %v8863 = vpop.permute.xlu0 %8862
      %8864 = vrot.lane.b32.xlu0 %v8791, 72
      %v8865 = vpop.permute.xlu0 %8864
      %8866 = vrot.lane.b32.xlu0 %v8792, 72
      %v8867 = vpop.permute.xlu0 %8866
      %8868 = vrot.lane.b32.xlu0 %v8793, 72
      %v8869 = vpop.permute.xlu0 %8868
      %8870 = vrot.lane.b32.xlu0 %v8794, 72
      %v8871 = vpop.permute.xlu0 %8870
      %8872 = vrot.lane.b32.xlu0 %v8795, 72
      %v8873 = vpop.permute.xlu0 %8872
      %8874 = vrot.lane.b32.xlu0 %v8796, 72
      %v8875 = vpop.permute.xlu0 %8874
      %8876 = vrot.lane.b32.xlu0 %v8797, 72
      %v8877 = vpop.permute.xlu0 %8876
      %8878 = vrot.lane.b32.xlu0 %v8798, 72
      %v8879 = vpop.permute.xlu0 %8878
      %8880 = vrot.lane.b32.xlu0 %v8799, 72
      %v8881 = vpop.permute.xlu0 %8880
      %8882 = vrot.lane.b32.xlu0 %v8800, 72
      %v8883 = vpop.permute.xlu0 %8882
      %8884 = vrot.lane.b32.xlu0 %v8801, 72
      %v8885 = vpop.permute.xlu0 %8884
      %8886 = vrot.lane.b32.xlu0 %v8802, 72
      %v8887 = vpop.permute.xlu0 %8886
      %8888 = vrot.lane.b32.xlu0 %v8803, 72
      %v8889 = vpop.permute.xlu0 %8888
      %8890 = vrot.lane.b32.xlu0 %v8804, 72
      %v8891 = vpop.permute.xlu0 %8890
      %8892 = vrot.lane.b32.xlu0 %v8805, 72
      %v8893 = vpop.permute.xlu0 %8892
      %8894 = vrot.lane.b32.xlu0 %v8806, 72
      %v8895 = vpop.permute.xlu0 %8894
      %8896 = vrot.lane.b32.xlu0 %v8807, 72
      %v8897 = vpop.permute.xlu0 %8896
      %8898 = vrot.lane.b32.xlu0 %v8808, 72
      %v8899 = vpop.permute.xlu0 %8898
      %8900 = vrot.lane.b32.xlu0 %v8809, 72
      %v8901 = vpop.permute.xlu0 %8900
      %8902 = vrot.lane.b32.xlu0 %v8810, 72
      %v8903 = vpop.permute.xlu0 %8902
      %8904 = vrot.lane.b32.xlu0 %v8811, 72
      %v8905 = vpop.permute.xlu0 %8904
      %8906 = vrot.lane.b32.xlu0 %v8812, 72
      %v8907 = vpop.permute.xlu0 %8906
      %8908 = vrot.lane.b32.xlu0 %v8813, 72
      %v8909 = vpop.permute.xlu0 %8908
      %vm8942 = vcmask 917056
      %8943 = vst.msk [vmem:[#allocation7 + $0x8] sm:$0xff] %vm8942, %v8847
      %8944 = vst.msk [vmem:[#allocation7 + $0x20] sm:$0xff] %vm8942, %v8849
      %8945 = vst.msk [vmem:[#allocation7 + $0x38] sm:$0xff] %vm8942, %v8851
      %8946 = vst.msk [vmem:[#allocation7 + $0x50] sm:$0xff] %vm8942, %v8853
      %8947 = vst.msk [vmem:[#allocation7 + $0x68] sm:$0xff] %vm8942, %v8855
      %8948 = vst.msk [vmem:[#allocation7 + $0x80] sm:$0xff] %vm8942, %v8857
      %8949 = vst.msk [vmem:[#allocation7 + $0x98] sm:$0xff] %vm8942, %v8859
      %8950 = vst.msk [vmem:[#allocation7 + $0xb0] sm:$0xff] %vm8942, %v8861
      %8951 = vst.msk [vmem:[#allocation7 + $0xc8] sm:$0xff] %vm8942, %v8863
      %8952 = vst.msk [vmem:[#allocation7 + $0xe0] sm:$0xff] %vm8942, %v8865
      %8953 = vst.msk [vmem:[#allocation7 + $0xf8] sm:$0xff] %vm8942, %v8867
      %8954 = vst.msk [vmem:[#allocation7 + $0x110] sm:$0xff] %vm8942, %v8869
      %8955 = vst.msk [vmem:[#allocation7 + $0x128] sm:$0xff] %vm8942, %v8871
      %8956 = vst.msk [vmem:[#allocation7 + $0x140] sm:$0xff] %vm8942, %v8873
      %8957 = vst.msk [vmem:[#allocation7 + $0x158] sm:$0xff] %vm8942, %v8875
      %8958 = vst.msk [vmem:[#allocation7 + $0x170] sm:$0xff] %vm8942, %v8877
      %8959 = vst.msk [vmem:[#allocation7 + $0x188] sm:$0xff] %vm8942, %v8879
      %8960 = vst.msk [vmem:[#allocation7 + $0x1a0] sm:$0xff] %vm8942, %v8881
      %8961 = vst.msk [vmem:[#allocation7 + $0x1b8] sm:$0xff] %vm8942, %v8883
      %8962 = vst.msk [vmem:[#allocation7 + $0x1d0] sm:$0xff] %vm8942, %v8885
      %8963 = vst.msk [vmem:[#allocation7 + $0x1e8] sm:$0xff] %vm8942, %v8887
      %8964 = vst.msk [vmem:[#allocation7 + $0x200] sm:$0xff] %vm8942, %v8889
      %8965 = vst.msk [vmem:[#allocation7 + $0x218] sm:$0xff] %vm8942, %v8891
      %8966 = vst.msk [vmem:[#allocation7 + $0x230] sm:$0xff] %vm8942, %v8893
      %8967 = vst.msk [vmem:[#allocation7 + $0x248] sm:$0xff] %vm8942, %v8895
      %8968 = vst.msk [vmem:[#allocation7 + $0x260] sm:$0xff] %vm8942, %v8897
      %8969 = vst.msk [vmem:[#allocation7 + $0x278] sm:$0xff] %vm8942, %v8899
      %8970 = vst.msk [vmem:[#allocation7 + $0x290] sm:$0xff] %vm8942, %v8901
      %8971 = vst.msk [vmem:[#allocation7 + $0x2a8] sm:$0xff] %vm8942, %v8903
      %8972 = vst.msk [vmem:[#allocation7 + $0x2c0] sm:$0xff] %vm8942, %v8905
      %8973 = vst.msk [vmem:[#allocation7 + $0x2d8] sm:$0xff] %vm8942, %v8907
      %8974 = vst.msk [vmem:[#allocation7 + $0x2f0] sm:$0xff] %vm8942, %v8909
      %s8975 = scalar_lea.vmem [#allocation6], 48
      %v8976 = vld [vmem:[%s8975] sm:$0xff]
      %v8977 = vld [vmem:[%s8975 + $0x8] sm:$0xff]
      %v8978 = vld [vmem:[%s8975 + $0x18] sm:$0xff]
      %v8979 = vld [vmem:[%s8975 + $0x20] sm:$0xff]
      %v8980 = vld [vmem:[%s8975 + $0x30] sm:$0xff]
      %v8981 = vld [vmem:[%s8975 + $0x38] sm:$0xff]
      %v8982 = vld [vmem:[%s8975 + $0x48] sm:$0xff]
      %v8983 = vld [vmem:[%s8975 + $0x50] sm:$0xff]
      %v8984 = vld [vmem:[%s8975 + $0x60] sm:$0xff]
      %v8985 = vld [vmem:[%s8975 + $0x68] sm:$0xff]
      %v8986 = vld [vmem:[%s8975 + $0x78] sm:$0xff]
      %v8987 = vld [vmem:[%s8975 + $0x80] sm:$0xff]
      %v8988 = vld [vmem:[%s8975 + $0x90] sm:$0xff]
      %v8989 = vld [vmem:[%s8975 + $0x98] sm:$0xff]
      %v8990 = vld [vmem:[%s8975 + $0xa8] sm:$0xff]
      %v8991 = vld [vmem:[%s8975 + $0xb0] sm:$0xff]
      %v8992 = vld [vmem:[%s8975 + $0xc0] sm:$0xff]
      %v8993 = vld [vmem:[%s8975 + $0xc8] sm:$0xff]
      %v8994 = vld [vmem:[%s8975 + $0xd8] sm:$0xff]
      %v8995 = vld [vmem:[%s8975 + $0xe0] sm:$0xff]
      %v8996 = vld [vmem:[%s8975 + $0xf0] sm:$0xff]
      %v8997 = vld [vmem:[%s8975 + $0xf8] sm:$0xff]
      %v8998 = vld [vmem:[%s8975 + $0x108] sm:$0xff]
      %v8999 = vld [vmem:[%s8975 + $0x110] sm:$0xff]
      %v9000 = vld [vmem:[%s8975 + $0x120] sm:$0xff]
      %v9001 = vld [vmem:[%s8975 + $0x128] sm:$0xff]
      %v9002 = vld [vmem:[%s8975 + $0x138] sm:$0xff]
      %v9003 = vld [vmem:[%s8975 + $0x140] sm:$0xff]
      %v9004 = vld [vmem:[%s8975 + $0x150] sm:$0xff]
      %v9005 = vld [vmem:[%s8975 + $0x158] sm:$0xff]
      %v9006 = vld [vmem:[%s8975 + $0x168] sm:$0xff]
      %v9007 = vld [vmem:[%s8975 + $0x170] sm:$0xff]
      %9040 = vrot.lane.b32.xlu0 %v8976, 112
      %v9041 = vpop.permute.xlu0 %9040
      %9042 = vrot.lane.b32.xlu0 %v8977, 112
      %v9043 = vpop.permute.xlu0 %9042
      %9044 = vrot.lane.b32.xlu0 %v8978, 112
      %v9045 = vpop.permute.xlu0 %9044
      %9046 = vrot.lane.b32.xlu0 %v8979, 112
      %v9047 = vpop.permute.xlu0 %9046
      %9048 = vrot.lane.b32.xlu0 %v8980, 112
      %v9049 = vpop.permute.xlu0 %9048
      %9050 = vrot.lane.b32.xlu0 %v8981, 112
      %v9051 = vpop.permute.xlu0 %9050
      %9052 = vrot.lane.b32.xlu0 %v8982, 112
      %v9053 = vpop.permute.xlu0 %9052
      %9054 = vrot.lane.b32.xlu0 %v8983, 112
      %v9055 = vpop.permute.xlu0 %9054
      %9056 = vrot.lane.b32.xlu0 %v8984, 112
      %v9057 = vpop.permute.xlu0 %9056
      %9058 = vrot.lane.b32.xlu0 %v8985, 112
      %v9059 = vpop.permute.xlu0 %9058
      %9060 = vrot.lane.b32.xlu0 %v8986, 112
      %v9061 = vpop.permute.xlu0 %9060
      %9062 = vrot.lane.b32.xlu0 %v8987, 112
      %v9063 = vpop.permute.xlu0 %9062
      %9064 = vrot.lane.b32.xlu0 %v8988, 112
      %v9065 = vpop.permute.xlu0 %9064
      %9066 = vrot.lane.b32.xlu0 %v8989, 112
      %v9067 = vpop.permute.xlu0 %9066
      %9068 = vrot.lane.b32.xlu0 %v8990, 112
      %v9069 = vpop.permute.xlu0 %9068
      %9070 = vrot.lane.b32.xlu0 %v8991, 112
      %v9071 = vpop.permute.xlu0 %9070
      %9072 = vrot.lane.b32.xlu0 %v8992, 112
      %v9073 = vpop.permute.xlu0 %9072
      %9074 = vrot.lane.b32.xlu0 %v8993, 112
      %v9075 = vpop.permute.xlu0 %9074
      %9076 = vrot.lane.b32.xlu0 %v8994, 112
      %v9077 = vpop.permute.xlu0 %9076
      %9078 = vrot.lane.b32.xlu0 %v8995, 112
      %v9079 = vpop.permute.xlu0 %9078
      %9080 = vrot.lane.b32.xlu0 %v8996, 112
      %v9081 = vpop.permute.xlu0 %9080
      %9082 = vrot.lane.b32.xlu0 %v8997, 112
      %v9083 = vpop.permute.xlu0 %9082
      %9084 = vrot.lane.b32.xlu0 %v8998, 112
      %v9085 = vpop.permute.xlu0 %9084
      %9086 = vrot.lane.b32.xlu0 %v8999, 112
      %v9087 = vpop.permute.xlu0 %9086
      %9088 = vrot.lane.b32.xlu0 %v9000, 112
      %v9089 = vpop.permute.xlu0 %9088
      %9090 = vrot.lane.b32.xlu0 %v9001, 112
      %v9091 = vpop.permute.xlu0 %9090
      %9092 = vrot.lane.b32.xlu0 %v9002, 112
      %v9093 = vpop.permute.xlu0 %9092
      %9094 = vrot.lane.b32.xlu0 %v9003, 112
      %v9095 = vpop.permute.xlu0 %9094
      %9096 = vrot.lane.b32.xlu0 %v9004, 112
      %v9097 = vpop.permute.xlu0 %9096
      %9098 = vrot.lane.b32.xlu0 %v9005, 112
      %v9099 = vpop.permute.xlu0 %9098
      %9100 = vrot.lane.b32.xlu0 %v9006, 112
      %v9101 = vpop.permute.xlu0 %9100
      %9102 = vrot.lane.b32.xlu0 %v9007, 112
      %v9103 = vpop.permute.xlu0 %9102
      %vm9136 = vcmask 1048448
      %9137 = vst.msk [vmem:[#allocation7 + $0x8] sm:$0xff] %vm9136, %v9041
      %vm9138 = vcmask 195584
      %9139 = vst.msk [vmem:[#allocation7 + $0x10] sm:$0xff] %vm9138, %v9041
      %9140 = vst.msk [vmem:[#allocation7 + $0x20] sm:$0xff] %vm9136, %v9043
      %9141 = vst.msk [vmem:[#allocation7 + $0x28] sm:$0xff] %vm9138, %v9043
      %9142 = vst.msk [vmem:[#allocation7 + $0x38] sm:$0xff] %vm9136, %v9045
      %9143 = vst.msk [vmem:[#allocation7 + $0x40] sm:$0xff] %vm9138, %v9045
      %9144 = vst.msk [vmem:[#allocation7 + $0x50] sm:$0xff] %vm9136, %v9047
      %9145 = vst.msk [vmem:[#allocation7 + $0x58] sm:$0xff] %vm9138, %v9047
      %9146 = vst.msk [vmem:[#allocation7 + $0x68] sm:$0xff] %vm9136, %v9049
      %9147 = vst.msk [vmem:[#allocation7 + $0x70] sm:$0xff] %vm9138, %v9049
      %9148 = vst.msk [vmem:[#allocation7 + $0x80] sm:$0xff] %vm9136, %v9051
      %9149 = vst.msk [vmem:[#allocation7 + $0x88] sm:$0xff] %vm9138, %v9051
      %9150 = vst.msk [vmem:[#allocation7 + $0x98] sm:$0xff] %vm9136, %v9053
      %9151 = vst.msk [vmem:[#allocation7 + $0xa0] sm:$0xff] %vm9138, %v9053
      %9152 = vst.msk [vmem:[#allocation7 + $0xb0] sm:$0xff] %vm9136, %v9055
      %9153 = vst.msk [vmem:[#allocation7 + $0xb8] sm:$0xff] %vm9138, %v9055
      %9154 = vst.msk [vmem:[#allocation7 + $0xc8] sm:$0xff] %vm9136, %v9057
      %9155 = vst.msk [vmem:[#allocation7 + $0xd0] sm:$0xff] %vm9138, %v9057
      %9156 = vst.msk [vmem:[#allocation7 + $0xe0] sm:$0xff] %vm9136, %v9059
      %9157 = vst.msk [vmem:[#allocation7 + $0xe8] sm:$0xff] %vm9138, %v9059
      %9158 = vst.msk [vmem:[#allocation7 + $0xf8] sm:$0xff] %vm9136, %v9061
      %9159 = vst.msk [vmem:[#allocation7 + $0x100] sm:$0xff] %vm9138, %v9061
      %9160 = vst.msk [vmem:[#allocation7 + $0x110] sm:$0xff] %vm9136, %v9063
      %9161 = vst.msk [vmem:[#allocation7 + $0x118] sm:$0xff] %vm9138, %v9063
      %9162 = vst.msk [vmem:[#allocation7 + $0x128] sm:$0xff] %vm9136, %v9065
      %9163 = vst.msk [vmem:[#allocation7 + $0x130] sm:$0xff] %vm9138, %v9065
      %9164 = vst.msk [vmem:[#allocation7 + $0x140] sm:$0xff] %vm9136, %v9067
      %9165 = vst.msk [vmem:[#allocation7 + $0x148] sm:$0xff] %vm9138, %v9067
      %9166 = vst.msk [vmem:[#allocation7 + $0x158] sm:$0xff] %vm9136, %v9069
      %9167 = vst.msk [vmem:[#allocation7 + $0x160] sm:$0xff] %vm9138, %v9069
      %9168 = vst.msk [vmem:[#allocation7 + $0x170] sm:$0xff] %vm9136, %v9071
      %9169 = vst.msk [vmem:[#allocation7 + $0x178] sm:$0xff] %vm9138, %v9071
      %9170 = vst.msk [vmem:[#allocation7 + $0x188] sm:$0xff] %vm9136, %v9073
      %9171 = vst.msk [vmem:[#allocation7 + $0x190] sm:$0xff] %vm9138, %v9073
      %9172 = vst.msk [vmem:[#allocation7 + $0x1a0] sm:$0xff] %vm9136, %v9075
      %9173 = vst.msk [vmem:[#allocation7 + $0x1a8] sm:$0xff] %vm9138, %v9075
      %9174 = vst.msk [vmem:[#allocation7 + $0x1b8] sm:$0xff] %vm9136, %v9077
      %9175 = vst.msk [vmem:[#allocation7 + $0x1c0] sm:$0xff] %vm9138, %v9077
      %9176 = vst.msk [vmem:[#allocation7 + $0x1d0] sm:$0xff] %vm9136, %v9079
      %9177 = vst.msk [vmem:[#allocation7 + $0x1d8] sm:$0xff] %vm9138, %v9079
      %9178 = vst.msk [vmem:[#allocation7 + $0x1e8] sm:$0xff] %vm9136, %v9081
      %9179 = vst.msk [vmem:[#allocation7 + $0x1f0] sm:$0xff] %vm9138, %v9081
      %9180 = vst.msk [vmem:[#allocation7 + $0x200] sm:$0xff] %vm9136, %v9083
      %9181 = vst.msk [vmem:[#allocation7 + $0x208] sm:$0xff] %vm9138, %v9083
      %9182 = vst.msk [vmem:[#allocation7 + $0x218] sm:$0xff] %vm9136, %v9085
      %9183 = vst.msk [vmem:[#allocation7 + $0x220] sm:$0xff] %vm9138, %v9085
      %9184 = vst.msk [vmem:[#allocation7 + $0x230] sm:$0xff] %vm9136, %v9087
      %9185 = vst.msk [vmem:[#allocation7 + $0x238] sm:$0xff] %vm9138, %v9087
      %9186 = vst.msk [vmem:[#allocation7 + $0x248] sm:$0xff] %vm9136, %v9089
      %9187 = vst.msk [vmem:[#allocation7 + $0x250] sm:$0xff] %vm9138, %v9089
      %9188 = vst.msk [vmem:[#allocation7 + $0x260] sm:$0xff] %vm9136, %v9091
      %9189 = vst.msk [vmem:[#allocation7 + $0x268] sm:$0xff] %vm9138, %v9091
      %9190 = vst.msk [vmem:[#allocation7 + $0x278] sm:$0xff] %vm9136, %v9093
      %9191 = vst.msk [vmem:[#allocation7 + $0x280] sm:$0xff] %vm9138, %v9093
      %9192 = vst.msk [vmem:[#allocation7 + $0x290] sm:$0xff] %vm9136, %v9095
      %9193 = vst.msk [vmem:[#allocation7 + $0x298] sm:$0xff] %vm9138, %v9095
      %9194 = vst.msk [vmem:[#allocation7 + $0x2a8] sm:$0xff] %vm9136, %v9097
      %9195 = vst.msk [vmem:[#allocation7 + $0x2b0] sm:$0xff] %vm9138, %v9097
      %9196 = vst.msk [vmem:[#allocation7 + $0x2c0] sm:$0xff] %vm9136, %v9099
      %9197 = vst.msk [vmem:[#allocation7 + $0x2c8] sm:$0xff] %vm9138, %v9099
      %9198 = vst.msk [vmem:[#allocation7 + $0x2d8] sm:$0xff] %vm9136, %v9101
      %9199 = vst.msk [vmem:[#allocation7 + $0x2e0] sm:$0xff] %vm9138, %v9101
      %9200 = vst.msk [vmem:[#allocation7 + $0x2f0] sm:$0xff] %vm9136, %v9103
      %9201 = vst.msk [vmem:[#allocation7 + $0x2f8] sm:$0xff] %vm9138, %v9103
      %v9202 = vld [vmem:[%s8975 + $0x1] sm:$0xff]
      %v9203 = vld [vmem:[%s8975 + $0x9] sm:$0xff]
      %v9204 = vld [vmem:[%s8975 + $0x19] sm:$0xff]
      %v9205 = vld [vmem:[%s8975 + $0x21] sm:$0xff]
      %v9206 = vld [vmem:[%s8975 + $0x31] sm:$0xff]
      %v9207 = vld [vmem:[%s8975 + $0x39] sm:$0xff]
      %v9208 = vld [vmem:[%s8975 + $0x49] sm:$0xff]
      %v9209 = vld [vmem:[%s8975 + $0x51] sm:$0xff]
      %v9210 = vld [vmem:[%s8975 + $0x61] sm:$0xff]
      %v9211 = vld [vmem:[%s8975 + $0x69] sm:$0xff]
      %v9212 = vld [vmem:[%s8975 + $0x79] sm:$0xff]
      %v9213 = vld [vmem:[%s8975 + $0x81] sm:$0xff]
      %v9214 = vld [vmem:[%s8975 + $0x91] sm:$0xff]
      %v9215 = vld [vmem:[%s8975 + $0x99] sm:$0xff]
      %v9216 = vld [vmem:[%s8975 + $0xa9] sm:$0xff]
      %v9217 = vld [vmem:[%s8975 + $0xb1] sm:$0xff]
      %v9218 = vld [vmem:[%s8975 + $0xc1] sm:$0xff]
      %v9219 = vld [vmem:[%s8975 + $0xc9] sm:$0xff]
      %v9220 = vld [vmem:[%s8975 + $0xd9] sm:$0xff]
      %v9221 = vld [vmem:[%s8975 + $0xe1] sm:$0xff]
      %v9222 = vld [vmem:[%s8975 + $0xf1] sm:$0xff]
      %v9223 = vld [vmem:[%s8975 + $0xf9] sm:$0xff]
      %v9224 = vld [vmem:[%s8975 + $0x109] sm:$0xff]
      %v9225 = vld [vmem:[%s8975 + $0x111] sm:$0xff]
      %v9226 = vld [vmem:[%s8975 + $0x121] sm:$0xff]
      %v9227 = vld [vmem:[%s8975 + $0x129] sm:$0xff]
      %v9228 = vld [vmem:[%s8975 + $0x139] sm:$0xff]
      %v9229 = vld [vmem:[%s8975 + $0x141] sm:$0xff]
      %v9230 = vld [vmem:[%s8975 + $0x151] sm:$0xff]
      %v9231 = vld [vmem:[%s8975 + $0x159] sm:$0xff]
      %v9232 = vld [vmem:[%s8975 + $0x169] sm:$0xff]
      %v9233 = vld [vmem:[%s8975 + $0x171] sm:$0xff]
      %9266 = vrot.lane.b32.xlu0 %v9202, 24
      %v9267 = vpop.permute.xlu0 %9266
      %9268 = vrot.lane.b32.xlu0 %v9203, 24
      %v9269 = vpop.permute.xlu0 %9268
      %9270 = vrot.lane.b32.xlu0 %v9204, 24
      %v9271 = vpop.permute.xlu0 %9270
      %9272 = vrot.lane.b32.xlu0 %v9205, 24
      %v9273 = vpop.permute.xlu0 %9272
      %9274 = vrot.lane.b32.xlu0 %v9206, 24
      %v9275 = vpop.permute.xlu0 %9274
      %9276 = vrot.lane.b32.xlu0 %v9207, 24
      %v9277 = vpop.permute.xlu0 %9276
      %9278 = vrot.lane.b32.xlu0 %v9208, 24
      %v9279 = vpop.permute.xlu0 %9278
      %9280 = vrot.lane.b32.xlu0 %v9209, 24
      %v9281 = vpop.permute.xlu0 %9280
      %9282 = vrot.lane.b32.xlu0 %v9210, 24
      %v9283 = vpop.permute.xlu0 %9282
      %9284 = vrot.lane.b32.xlu0 %v9211, 24
      %v9285 = vpop.permute.xlu0 %9284
      %9286 = vrot.lane.b32.xlu0 %v9212, 24
      %v9287 = vpop.permute.xlu0 %9286
      %9288 = vrot.lane.b32.xlu0 %v9213, 24
      %v9289 = vpop.permute.xlu0 %9288
      %9290 = vrot.lane.b32.xlu0 %v9214, 24
      %v9291 = vpop.permute.xlu0 %9290
      %9292 = vrot.lane.b32.xlu0 %v9215, 24
      %v9293 = vpop.permute.xlu0 %9292
      %9294 = vrot.lane.b32.xlu0 %v9216, 24
      %v9295 = vpop.permute.xlu0 %9294
      %9296 = vrot.lane.b32.xlu0 %v9217, 24
      %v9297 = vpop.permute.xlu0 %9296
      %9298 = vrot.lane.b32.xlu0 %v9218, 24
      %v9299 = vpop.permute.xlu0 %9298
      %9300 = vrot.lane.b32.xlu0 %v9219, 24
      %v9301 = vpop.permute.xlu0 %9300
      %9302 = vrot.lane.b32.xlu0 %v9220, 24
      %v9303 = vpop.permute.xlu0 %9302
      %9304 = vrot.lane.b32.xlu0 %v9221, 24
      %v9305 = vpop.permute.xlu0 %9304
      %9306 = vrot.lane.b32.xlu0 %v9222, 24
      %v9307 = vpop.permute.xlu0 %9306
      %9308 = vrot.lane.b32.xlu0 %v9223, 24
      %v9309 = vpop.permute.xlu0 %9308
      %9310 = vrot.lane.b32.xlu0 %v9224, 24
      %v9311 = vpop.permute.xlu0 %9310
      %9312 = vrot.lane.b32.xlu0 %v9225, 24
      %v9313 = vpop.permute.xlu0 %9312
      %9314 = vrot.lane.b32.xlu0 %v9226, 24
      %v9315 = vpop.permute.xlu0 %9314
      %9316 = vrot.lane.b32.xlu0 %v9227, 24
      %v9317 = vpop.permute.xlu0 %9316
      %9318 = vrot.lane.b32.xlu0 %v9228, 24
      %v9319 = vpop.permute.xlu0 %9318
      %9320 = vrot.lane.b32.xlu0 %v9229, 24
      %v9321 = vpop.permute.xlu0 %9320
      %9322 = vrot.lane.b32.xlu0 %v9230, 24
      %v9323 = vpop.permute.xlu0 %9322
      %9324 = vrot.lane.b32.xlu0 %v9231, 24
      %v9325 = vpop.permute.xlu0 %9324
      %9326 = vrot.lane.b32.xlu0 %v9232, 24
      %v9327 = vpop.permute.xlu0 %9326
      %9328 = vrot.lane.b32.xlu0 %v9233, 24
      %v9329 = vpop.permute.xlu0 %9328
      %vm9362 = vcmask 523456
      %9363 = vst.msk [vmem:[#allocation7 + $0x10] sm:$0xff] %vm9362, %v9267
      %9364 = vst.msk [vmem:[#allocation7 + $0x28] sm:$0xff] %vm9362, %v9269
      %9365 = vst.msk [vmem:[#allocation7 + $0x40] sm:$0xff] %vm9362, %v9271
      %9366 = vst.msk [vmem:[#allocation7 + $0x58] sm:$0xff] %vm9362, %v9273
      %9367 = vst.msk [vmem:[#allocation7 + $0x70] sm:$0xff] %vm9362, %v9275
      %9368 = vst.msk [vmem:[#allocation7 + $0x88] sm:$0xff] %vm9362, %v9277
      %9369 = vst.msk [vmem:[#allocation7 + $0xa0] sm:$0xff] %vm9362, %v9279
      %9370 = vst.msk [vmem:[#allocation7 + $0xb8] sm:$0xff] %vm9362, %v9281
      %9371 = vst.msk [vmem:[#allocation7 + $0xd0] sm:$0xff] %vm9362, %v9283
      %9372 = vst.msk [vmem:[#allocation7 + $0xe8] sm:$0xff] %vm9362, %v9285
      %9373 = vst.msk [vmem:[#allocation7 + $0x100] sm:$0xff] %vm9362, %v9287
      %9374 = vst.msk [vmem:[#allocation7 + $0x118] sm:$0xff] %vm9362, %v9289
      %9375 = vst.msk [vmem:[#allocation7 + $0x130] sm:$0xff] %vm9362, %v9291
      %9376 = vst.msk [vmem:[#allocation7 + $0x148] sm:$0xff] %vm9362, %v9293
      %9377 = vst.msk [vmem:[#allocation7 + $0x160] sm:$0xff] %vm9362, %v9295
      %9378 = vst.msk [vmem:[#allocation7 + $0x178] sm:$0xff] %vm9362, %v9297
      %9379 = vst.msk [vmem:[#allocation7 + $0x190] sm:$0xff] %vm9362, %v9299
      %9380 = vst.msk [vmem:[#allocation7 + $0x1a8] sm:$0xff] %vm9362, %v9301
      %9381 = vst.msk [vmem:[#allocation7 + $0x1c0] sm:$0xff] %vm9362, %v9303
      %9382 = vst.msk [vmem:[#allocation7 + $0x1d8] sm:$0xff] %vm9362, %v9305
      %9383 = vst.msk [vmem:[#allocation7 + $0x1f0] sm:$0xff] %vm9362, %v9307
      %9384 = vst.msk [vmem:[#allocation7 + $0x208] sm:$0xff] %vm9362, %v9309
      %9385 = vst.msk [vmem:[#allocation7 + $0x220] sm:$0xff] %vm9362, %v9311
      %9386 = vst.msk [vmem:[#allocation7 + $0x238] sm:$0xff] %vm9362, %v9313
      %9387 = vst.msk [vmem:[#allocation7 + $0x250] sm:$0xff] %vm9362, %v9315
      %9388 = vst.msk [vmem:[#allocation7 + $0x268] sm:$0xff] %vm9362, %v9317
      %9389 = vst.msk [vmem:[#allocation7 + $0x280] sm:$0xff] %vm9362, %v9319
      %9390 = vst.msk [vmem:[#allocation7 + $0x298] sm:$0xff] %vm9362, %v9321
      %9391 = vst.msk [vmem:[#allocation7 + $0x2b0] sm:$0xff] %vm9362, %v9323
      %9392 = vst.msk [vmem:[#allocation7 + $0x2c8] sm:$0xff] %vm9362, %v9325
      %9393 = vst.msk [vmem:[#allocation7 + $0x2e0] sm:$0xff] %vm9362, %v9327
      %9394 = vst.msk [vmem:[#allocation7 + $0x2f8] sm:$0xff] %vm9362, %v9329
      %v9395 = vld [vmem:[%s8975 + $0x2] sm:$0xff]
      %v9396 = vld [vmem:[%s8975 + $0xa] sm:$0xff]
      %v9397 = vld [vmem:[%s8975 + $0x1a] sm:$0xff]
      %v9398 = vld [vmem:[%s8975 + $0x22] sm:$0xff]
      %v9399 = vld [vmem:[%s8975 + $0x32] sm:$0xff]
      %v9400 = vld [vmem:[%s8975 + $0x3a] sm:$0xff]
      %v9401 = vld [vmem:[%s8975 + $0x4a] sm:$0xff]
      %v9402 = vld [vmem:[%s8975 + $0x52] sm:$0xff]
      %v9403 = vld [vmem:[%s8975 + $0x62] sm:$0xff]
      %v9404 = vld [vmem:[%s8975 + $0x6a] sm:$0xff]
      %v9405 = vld [vmem:[%s8975 + $0x7a] sm:$0xff]
      %v9406 = vld [vmem:[%s8975 + $0x82] sm:$0xff]
      %v9407 = vld [vmem:[%s8975 + $0x92] sm:$0xff]
      %v9408 = vld [vmem:[%s8975 + $0x9a] sm:$0xff]
      %v9409 = vld [vmem:[%s8975 + $0xaa] sm:$0xff]
      %v9410 = vld [vmem:[%s8975 + $0xb2] sm:$0xff]
      %v9411 = vld [vmem:[%s8975 + $0xc2] sm:$0xff]
      %v9412 = vld [vmem:[%s8975 + $0xca] sm:$0xff]
      %v9413 = vld [vmem:[%s8975 + $0xda] sm:$0xff]
      %v9414 = vld [vmem:[%s8975 + $0xe2] sm:$0xff]
      %v9415 = vld [vmem:[%s8975 + $0xf2] sm:$0xff]
      %v9416 = vld [vmem:[%s8975 + $0xfa] sm:$0xff]
      %v9417 = vld [vmem:[%s8975 + $0x10a] sm:$0xff]
      %v9418 = vld [vmem:[%s8975 + $0x112] sm:$0xff]
      %v9419 = vld [vmem:[%s8975 + $0x122] sm:$0xff]
      %v9420 = vld [vmem:[%s8975 + $0x12a] sm:$0xff]
      %v9421 = vld [vmem:[%s8975 + $0x13a] sm:$0xff]
      %v9422 = vld [vmem:[%s8975 + $0x142] sm:$0xff]
      %v9423 = vld [vmem:[%s8975 + $0x152] sm:$0xff]
      %v9424 = vld [vmem:[%s8975 + $0x15a] sm:$0xff]
      %v9425 = vld [vmem:[%s8975 + $0x16a] sm:$0xff]
      %v9426 = vld [vmem:[%s8975 + $0x172] sm:$0xff]
      %9459 = vrot.lane.b32.xlu0 %v9395, 64
      %v9460 = vpop.permute.xlu0 %9459
      %9461 = vrot.lane.b32.xlu0 %v9396, 64
      %v9462 = vpop.permute.xlu0 %9461
      %9463 = vrot.lane.b32.xlu0 %v9397, 64
      %v9464 = vpop.permute.xlu0 %9463
      %9465 = vrot.lane.b32.xlu0 %v9398, 64
      %v9466 = vpop.permute.xlu0 %9465
      %9467 = vrot.lane.b32.xlu0 %v9399, 64
      %v9468 = vpop.permute.xlu0 %9467
      %9469 = vrot.lane.b32.xlu0 %v9400, 64
      %v9470 = vpop.permute.xlu0 %9469
      %9471 = vrot.lane.b32.xlu0 %v9401, 64
      %v9472 = vpop.permute.xlu0 %9471
      %9473 = vrot.lane.b32.xlu0 %v9402, 64
      %v9474 = vpop.permute.xlu0 %9473
      %9475 = vrot.lane.b32.xlu0 %v9403, 64
      %v9476 = vpop.permute.xlu0 %9475
      %9477 = vrot.lane.b32.xlu0 %v9404, 64
      %v9478 = vpop.permute.xlu0 %9477
      %9479 = vrot.lane.b32.xlu0 %v9405, 64
      %v9480 = vpop.permute.xlu0 %9479
      %9481 = vrot.lane.b32.xlu0 %v9406, 64
      %v9482 = vpop.permute.xlu0 %9481
      %9483 = vrot.lane.b32.xlu0 %v9407, 64
      %v9484 = vpop.permute.xlu0 %9483
      %9485 = vrot.lane.b32.xlu0 %v9408, 64
      %v9486 = vpop.permute.xlu0 %9485
      %9487 = vrot.lane.b32.xlu0 %v9409, 64
      %v9488 = vpop.permute.xlu0 %9487
      %9489 = vrot.lane.b32.xlu0 %v9410, 64
      %v9490 = vpop.permute.xlu0 %9489
      %9491 = vrot.lane.b32.xlu0 %v9411, 64
      %v9492 = vpop.permute.xlu0 %9491
      %9493 = vrot.lane.b32.xlu0 %v9412, 64
      %v9494 = vpop.permute.xlu0 %9493
      %9495 = vrot.lane.b32.xlu0 %v9413, 64
      %v9496 = vpop.permute.xlu0 %9495
      %9497 = vrot.lane.b32.xlu0 %v9414, 64
      %v9498 = vpop.permute.xlu0 %9497
      %9499 = vrot.lane.b32.xlu0 %v9415, 64
      %v9500 = vpop.permute.xlu0 %9499
      %9501 = vrot.lane.b32.xlu0 %v9416, 64
      %v9502 = vpop.permute.xlu0 %9501
      %9503 = vrot.lane.b32.xlu0 %v9417, 64
      %v9504 = vpop.permute.xlu0 %9503
      %9505 = vrot.lane.b32.xlu0 %v9418, 64
      %v9506 = vpop.permute.xlu0 %9505
      %9507 = vrot.lane.b32.xlu0 %v9419, 64
      %v9508 = vpop.permute.xlu0 %9507
      %9509 = vrot.lane.b32.xlu0 %v9420, 64
      %v9510 = vpop.permute.xlu0 %9509
      %9511 = vrot.lane.b32.xlu0 %v9421, 64
      %v9512 = vpop.permute.xlu0 %9511
      %9513 = vrot.lane.b32.xlu0 %v9422, 64
      %v9514 = vpop.permute.xlu0 %9513
      %9515 = vrot.lane.b32.xlu0 %v9423, 64
      %v9516 = vpop.permute.xlu0 %9515
      %9517 = vrot.lane.b32.xlu0 %v9424, 64
      %v9518 = vpop.permute.xlu0 %9517
      %9519 = vrot.lane.b32.xlu0 %v9425, 64
      %v9520 = vpop.permute.xlu0 %9519
      %9521 = vrot.lane.b32.xlu0 %v9426, 64
      %v9522 = vpop.permute.xlu0 %9521
      %vm9555 = vcmask 851456
      %9556 = vst.msk [vmem:[#allocation7 + $0x10] sm:$0xff] %vm9555, %v9460
      %9557 = vst.msk [vmem:[#allocation7 + $0x28] sm:$0xff] %vm9555, %v9462
      %9558 = vst.msk [vmem:[#allocation7 + $0x40] sm:$0xff] %vm9555, %v9464
      %9559 = vst.msk [vmem:[#allocation7 + $0x58] sm:$0xff] %vm9555, %v9466
      %9560 = vst.msk [vmem:[#allocation7 + $0x70] sm:$0xff] %vm9555, %v9468
      %9561 = vst.msk [vmem:[#allocation7 + $0x88] sm:$0xff] %vm9555, %v9470
      %9562 = vst.msk [vmem:[#allocation7 + $0xa0] sm:$0xff] %vm9555, %v9472
      %9563 = vst.msk [vmem:[#allocation7 + $0xb8] sm:$0xff] %vm9555, %v9474
      %9564 = vst.msk [vmem:[#allocation7 + $0xd0] sm:$0xff] %vm9555, %v9476
      %9565 = vst.msk [vmem:[#allocation7 + $0xe8] sm:$0xff] %vm9555, %v9478
      %9566 = vst.msk [vmem:[#allocation7 + $0x100] sm:$0xff] %vm9555, %v9480
      %9567 = vst.msk [vmem:[#allocation7 + $0x118] sm:$0xff] %vm9555, %v9482
      %9568 = vst.msk [vmem:[#allocation7 + $0x130] sm:$0xff] %vm9555, %v9484
      %9569 = vst.msk [vmem:[#allocation7 + $0x148] sm:$0xff] %vm9555, %v9486
      %9570 = vst.msk [vmem:[#allocation7 + $0x160] sm:$0xff] %vm9555, %v9488
      %9571 = vst.msk [vmem:[#allocation7 + $0x178] sm:$0xff] %vm9555, %v9490
      %9572 = vst.msk [vmem:[#allocation7 + $0x190] sm:$0xff] %vm9555, %v9492
      %9573 = vst.msk [vmem:[#allocation7 + $0x1a8] sm:$0xff] %vm9555, %v9494
      %9574 = vst.msk [vmem:[#allocation7 + $0x1c0] sm:$0xff] %vm9555, %v9496
      %9575 = vst.msk [vmem:[#allocation7 + $0x1d8] sm:$0xff] %vm9555, %v9498
      %9576 = vst.msk [vmem:[#allocation7 + $0x1f0] sm:$0xff] %vm9555, %v9500
      %9577 = vst.msk [vmem:[#allocation7 + $0x208] sm:$0xff] %vm9555, %v9502
      %9578 = vst.msk [vmem:[#allocation7 + $0x220] sm:$0xff] %vm9555, %v9504
      %9579 = vst.msk [vmem:[#allocation7 + $0x238] sm:$0xff] %vm9555, %v9506
      %9580 = vst.msk [vmem:[#allocation7 + $0x250] sm:$0xff] %vm9555, %v9508
      %9581 = vst.msk [vmem:[#allocation7 + $0x268] sm:$0xff] %vm9555, %v9510
      %9582 = vst.msk [vmem:[#allocation7 + $0x280] sm:$0xff] %vm9555, %v9512
      %9583 = vst.msk [vmem:[#allocation7 + $0x298] sm:$0xff] %vm9555, %v9514
      %9584 = vst.msk [vmem:[#allocation7 + $0x2b0] sm:$0xff] %vm9555, %v9516
      %9585 = vst.msk [vmem:[#allocation7 + $0x2c8] sm:$0xff] %vm9555, %v9518
      %9586 = vst.msk [vmem:[#allocation7 + $0x2e0] sm:$0xff] %vm9555, %v9520
      %9587 = vst.msk [vmem:[#allocation7 + $0x2f8] sm:$0xff] %vm9555, %v9522
      %v9588 = vld [vmem:[#allocation7] sm:$0xff]
      %v9589 = vld [vmem:[#allocation7 + $0x8] sm:$0xff]
      %v9590 = vld [vmem:[#allocation7 + $0x10] sm:$0xff]
      %v9591 = vld [vmem:[#allocation7 + $0x18] sm:$0xff]
      %v9592 = vld [vmem:[#allocation7 + $0x20] sm:$0xff]
      %v9593 = vld [vmem:[#allocation7 + $0x28] sm:$0xff]
      %v9594 = vld [vmem:[#allocation7 + $0x30] sm:$0xff]
      %v9595 = vld [vmem:[#allocation7 + $0x38] sm:$0xff]
      %v9596 = vld [vmem:[#allocation7 + $0x40] sm:$0xff]
      %v9597 = vld [vmem:[#allocation7 + $0x48] sm:$0xff]
      %v9598 = vld [vmem:[#allocation7 + $0x50] sm:$0xff]
      %v9599 = vld [vmem:[#allocation7 + $0x58] sm:$0xff]
      %v9600 = vld [vmem:[#allocation7 + $0x60] sm:$0xff]
      %v9601 = vld [vmem:[#allocation7 + $0x68] sm:$0xff]
      %v9602 = vld [vmem:[#allocation7 + $0x70] sm:$0xff]
      %v9603 = vld [vmem:[#allocation7 + $0x78] sm:$0xff]
      %v9604 = vld [vmem:[#allocation7 + $0x80] sm:$0xff]
      %v9605 = vld [vmem:[#allocation7 + $0x88] sm:$0xff]
      %v9606 = vld [vmem:[#allocation7 + $0x90] sm:$0xff]
      %v9607 = vld [vmem:[#allocation7 + $0x98] sm:$0xff]
      %v9608 = vld [vmem:[#allocation7 + $0xa0] sm:$0xff]
      %v9609 = vld [vmem:[#allocation7 + $0xa8] sm:$0xff]
      %v9610 = vld [vmem:[#allocation7 + $0xb0] sm:$0xff]
      %v9611 = vld [vmem:[#allocation7 + $0xb8] sm:$0xff]
      %v9612 = vld [vmem:[#allocation7 + $0xc0] sm:$0xff]
      %v9613 = vld [vmem:[#allocation7 + $0xc8] sm:$0xff]
      %v9614 = vld [vmem:[#allocation7 + $0xd0] sm:$0xff]
      %v9615 = vld [vmem:[#allocation7 + $0xd8] sm:$0xff]
      %v9616 = vld [vmem:[#allocation7 + $0xe0] sm:$0xff]
      %v9617 = vld [vmem:[#allocation7 + $0xe8] sm:$0xff]
      %v9618 = vld [vmem:[#allocation7 + $0xf0] sm:$0xff]
      %v9619 = vld [vmem:[#allocation7 + $0xf8] sm:$0xff]
      %v9620 = vld [vmem:[#allocation7 + $0x100] sm:$0xff]
      %v9621 = vld [vmem:[#allocation7 + $0x108] sm:$0xff]
      %v9622 = vld [vmem:[#allocation7 + $0x110] sm:$0xff]
      %v9623 = vld [vmem:[#allocation7 + $0x118] sm:$0xff]
      %v9624 = vld [vmem:[#allocation7 + $0x120] sm:$0xff]
      %v9625 = vld [vmem:[#allocation7 + $0x128] sm:$0xff]
      %v9626 = vld [vmem:[#allocation7 + $0x130] sm:$0xff]
      %v9627 = vld [vmem:[#allocation7 + $0x138] sm:$0xff]
      %v9628 = vld [vmem:[#allocation7 + $0x140] sm:$0xff]
      %v9629 = vld [vmem:[#allocation7 + $0x148] sm:$0xff]
      %v9630 = vld [vmem:[#allocation7 + $0x150] sm:$0xff]
      %v9631 = vld [vmem:[#allocation7 + $0x158] sm:$0xff]
      %v9632 = vld [vmem:[#allocation7 + $0x160] sm:$0xff]
      %v9633 = vld [vmem:[#allocation7 + $0x168] sm:$0xff]
      %v9634 = vld [vmem:[#allocation7 + $0x170] sm:$0xff]
      %v9635 = vld [vmem:[#allocation7 + $0x178] sm:$0xff]
      %v9636 = vld [vmem:[#allocation7 + $0x180] sm:$0xff]
      %v9637 = vld [vmem:[#allocation7 + $0x188] sm:$0xff]
      %v9638 = vld [vmem:[#allocation7 + $0x190] sm:$0xff]
      %v9639 = vld [vmem:[#allocation7 + $0x198] sm:$0xff]
      %v9640 = vld [vmem:[#allocation7 + $0x1a0] sm:$0xff]
      %v9641 = vld [vmem:[#allocation7 + $0x1a8] sm:$0xff]
      %v9642 = vld [vmem:[#allocation7 + $0x1b0] sm:$0xff]
      %v9643 = vld [vmem:[#allocation7 + $0x1b8] sm:$0xff]
      %v9644 = vld [vmem:[#allocation7 + $0x1c0] sm:$0xff]
      %v9645 = vld [vmem:[#allocation7 + $0x1c8] sm:$0xff]
      %v9646 = vld [vmem:[#allocation7 + $0x1d0] sm:$0xff]
      %v9647 = vld [vmem:[#allocation7 + $0x1d8] sm:$0xff]
      %v9648 = vld [vmem:[#allocation7 + $0x1e0] sm:$0xff]
      %v9649 = vld [vmem:[#allocation7 + $0x1e8] sm:$0xff]
      %v9650 = vld [vmem:[#allocation7 + $0x1f0] sm:$0xff]
      %v9651 = vld [vmem:[#allocation7 + $0x1f8] sm:$0xff]
      %v9652 = vld [vmem:[#allocation7 + $0x200] sm:$0xff]
      %v9653 = vld [vmem:[#allocation7 + $0x208] sm:$0xff]
      %v9654 = vld [vmem:[#allocation7 + $0x210] sm:$0xff]
      %v9655 = vld [vmem:[#allocation7 + $0x218] sm:$0xff]
      %v9656 = vld [vmem:[#allocation7 + $0x220] sm:$0xff]
      %v9657 = vld [vmem:[#allocation7 + $0x228] sm:$0xff]
      %v9658 = vld [vmem:[#allocation7 + $0x230] sm:$0xff]
      %v9659 = vld [vmem:[#allocation7 + $0x238] sm:$0xff]
      %v9660 = vld [vmem:[#allocation7 + $0x240] sm:$0xff]
      %v9661 = vld [vmem:[#allocation7 + $0x248] sm:$0xff]
      %v9662 = vld [vmem:[#allocation7 + $0x250] sm:$0xff]
      %v9663 = vld [vmem:[#allocation7 + $0x258] sm:$0xff]
      %v9664 = vld [vmem:[#allocation7 + $0x260] sm:$0xff]
      %v9665 = vld [vmem:[#allocation7 + $0x268] sm:$0xff]
      %v9666 = vld [vmem:[#allocation7 + $0x270] sm:$0xff]
      %v9667 = vld [vmem:[#allocation7 + $0x278] sm:$0xff]
      %v9668 = vld [vmem:[#allocation7 + $0x280] sm:$0xff]
      %v9669 = vld [vmem:[#allocation7 + $0x288] sm:$0xff]
      %v9670 = vld [vmem:[#allocation7 + $0x290] sm:$0xff]
      %v9671 = vld [vmem:[#allocation7 + $0x298] sm:$0xff]
      %v9672 = vld [vmem:[#allocation7 + $0x2a0] sm:$0xff]
      %v9673 = vld [vmem:[#allocation7 + $0x2a8] sm:$0xff]
      %v9674 = vld [vmem:[#allocation7 + $0x2b0] sm:$0xff]
      %v9675 = vld [vmem:[#allocation7 + $0x2b8] sm:$0xff]
      %v9676 = vld [vmem:[#allocation7 + $0x2c0] sm:$0xff]
      %v9677 = vld [vmem:[#allocation7 + $0x2c8] sm:$0xff]
      %v9678 = vld [vmem:[#allocation7 + $0x2d0] sm:$0xff]
      %v9679 = vld [vmem:[#allocation7 + $0x2d8] sm:$0xff]
      %v9680 = vld [vmem:[#allocation7 + $0x2e0] sm:$0xff]
      %v9681 = vld [vmem:[#allocation7 + $0x2e8] sm:$0xff]
      %v9682 = vld [vmem:[#allocation7 + $0x2f0] sm:$0xff]
      %v9683 = vld [vmem:[#allocation7 + $0x2f8] sm:$0xff]
      %v9684 = vld [vmem:[%s5] sm:$0xff]
      %v9685 = vld [vmem:[%s5 + $0x8] sm:$0xff]
      %v9686 = vld [vmem:[%s5 + $0x10] sm:$0xff]
      %v9687 = vld [vmem:[%s5 + $0x18] sm:$0xff]
      %v9688 = vld [vmem:[%s5 + $0x20] sm:$0xff]
      %v9689 = vld [vmem:[%s5 + $0x28] sm:$0xff]
      %v9690 = vld [vmem:[%s5 + $0x30] sm:$0xff]
      %v9691 = vld [vmem:[%s5 + $0x38] sm:$0xff]
      %v9692 = vld [vmem:[%s5 + $0x40] sm:$0xff]
      %v9693 = vld [vmem:[%s5 + $0x48] sm:$0xff]
      %v9694 = vld [vmem:[%s5 + $0x50] sm:$0xff]
      %v9695 = vld [vmem:[%s5 + $0x58] sm:$0xff]
      %v9696 = vld [vmem:[%s5 + $0x60] sm:$0xff]
      %v9697 = vld [vmem:[%s5 + $0x68] sm:$0xff]
      %v9698 = vld [vmem:[%s5 + $0x70] sm:$0xff]
      %v9699 = vld [vmem:[%s5 + $0x78] sm:$0xff]
      %v9700 = vld [vmem:[%s5 + $0x80] sm:$0xff]
      %v9701 = vld [vmem:[%s5 + $0x88] sm:$0xff]
      %v9702 = vld [vmem:[%s5 + $0x90] sm:$0xff]
      %v9703 = vld [vmem:[%s5 + $0x98] sm:$0xff]
      %v9704 = vld [vmem:[%s5 + $0xa0] sm:$0xff]
      %v9705 = vld [vmem:[%s5 + $0xa8] sm:$0xff]
      %v9706 = vld [vmem:[%s5 + $0xb0] sm:$0xff]
      %v9707 = vld [vmem:[%s5 + $0xb8] sm:$0xff]
      %v9708 = vld [vmem:[%s5 + $0xc0] sm:$0xff]
      %v9709 = vld [vmem:[%s5 + $0xc8] sm:$0xff]
      %v9710 = vld [vmem:[%s5 + $0xd0] sm:$0xff]
      %v9711 = vld [vmem:[%s5 + $0xd8] sm:$0xff]
      %v9712 = vld [vmem:[%s5 + $0xe0] sm:$0xff]
      %v9713 = vld [vmem:[%s5 + $0xe8] sm:$0xff]
      %v9714 = vld [vmem:[%s5 + $0xf0] sm:$0xff]
      %v9715 = vld [vmem:[%s5 + $0xf8] sm:$0xff]
      %v9716 = vld [vmem:[%s5 + $0x100] sm:$0xff]
      %v9717 = vld [vmem:[%s5 + $0x108] sm:$0xff]
      %v9718 = vld [vmem:[%s5 + $0x110] sm:$0xff]
      %v9719 = vld [vmem:[%s5 + $0x118] sm:$0xff]
      %v9720 = vld [vmem:[%s5 + $0x120] sm:$0xff]
      %v9721 = vld [vmem:[%s5 + $0x128] sm:$0xff]
      %v9722 = vld [vmem:[%s5 + $0x130] sm:$0xff]
      %v9723 = vld [vmem:[%s5 + $0x138] sm:$0xff]
      %v9724 = vld [vmem:[%s5 + $0x140] sm:$0xff]
      %v9725 = vld [vmem:[%s5 + $0x148] sm:$0xff]
      %v9726 = vld [vmem:[%s5 + $0x150] sm:$0xff]
      %v9727 = vld [vmem:[%s5 + $0x158] sm:$0xff]
      %v9728 = vld [vmem:[%s5 + $0x160] sm:$0xff]
      %v9729 = vld [vmem:[%s6] sm:$0x1]
      %v9731 = vlaneseq
      %v9732 = vshrl.u32 %v9731, 7
      %v9733 = vsub.s32 0, %v9732
      %v9734 = vrot.slane %v9729, %v9733
      %vm9736 = vcmask 850944
      %v9738 = vsel %vm9736, %v9590, 0
      %v9741 = vsel %vm9736, %v9593, 0
      %v9744 = vsel %vm9736, %v9596, 0
      %v9747 = vsel %vm9736, %v9599, 0
      %v9750 = vsel %vm9736, %v9602, 0
      %v9753 = vsel %vm9736, %v9605, 0
      %v9756 = vsel %vm9736, %v9608, 0
      %v9759 = vsel %vm9736, %v9611, 0
      %v9762 = vsel %vm9736, %v9614, 0
      %v9765 = vsel %vm9736, %v9617, 0
      %v9768 = vsel %vm9736, %v9620, 0
      %v9771 = vsel %vm9736, %v9623, 0
      %v9774 = vsel %vm9736, %v9626, 0
      %v9777 = vsel %vm9736, %v9629, 0
      %v9780 = vsel %vm9736, %v9632, 0
      %v9783 = vsel %vm9736, %v9635, 0
      %v9786 = vsel %vm9736, %v9638, 0
      %v9789 = vsel %vm9736, %v9641, 0
      %v9792 = vsel %vm9736, %v9644, 0
      %v9795 = vsel %vm9736, %v9647, 0
      %v9798 = vsel %vm9736, %v9650, 0
      %v9801 = vsel %vm9736, %v9653, 0
      %v9804 = vsel %vm9736, %v9656, 0
      %v9807 = vsel %vm9736, %v9659, 0
      %v9810 = vsel %vm9736, %v9662, 0
      %v9813 = vsel %vm9736, %v9665, 0
      %v9816 = vsel %vm9736, %v9668, 0
      %v9819 = vsel %vm9736, %v9671, 0
      %v9822 = vsel %vm9736, %v9674, 0
      %v9825 = vsel %vm9736, %v9677, 0
      %v9828 = vsel %vm9736, %v9680, 0
      %v9831 = vsel %vm9736, %v9683, 0
      %9833 = vmatprep.subr.mxu0 0.0
      %9834 = vmatpush1.msra.mxu0 %v9684
      %9835 = vmatprep.subr.mxu0 0.0
      %9836 = vmatpush1.msra.mxu0 %v9685
      %9837 = vmatprep.subr.mxu0 0.0
      %9838 = vmatpush1.msra.mxu0 %v9686
      %9839 = vmatprep.subr.mxu0 0.0
      %9840 = vmatpush1.msra.mxu0 %v9687
      %9841 = vmatprep.subr.mxu0 0.0
      %9842 = vmatpush1.msra.mxu0 %v9688
      %9843 = vmatprep.subr.mxu0 0.0
      %9844 = vmatpush1.msra.mxu0 %v9689
      %9845 = vmatprep.subr.mxu0 0.0
      %9846 = vmatpush1.msra.mxu0 %v9690
      %9847 = vmatprep.subr.mxu0 0.0
      %9848 = vmatpush1.msra.mxu0 %v9691
      %9849 = vmatprep.subr.mxu0 0.0
      %9850 = vmatpush1.msra.mxu0 %v9692
      %9851 = vmatprep.subr.mxu0 0.0
      %9852 = vmatpush1.msra.mxu0 %v9693
      %9853 = vmatprep.subr.mxu0 0.0
      %9854 = vmatpush1.msra.mxu0 %v9694
      %9855 = vmatprep.subr.mxu0 0.0
      %9856 = vmatpush1.msra.mxu0 %v9695
      %9857 = vmatprep.subr.mxu0 0.0
      %9858 = vmatpush1.msra.mxu0 %v9696
      %9859 = vmatprep.subr.mxu0 0.0
      %9860 = vmatpush1.msra.mxu0 %v9697
      %9861 = vmatprep.subr.mxu0 0.0
      %9862 = vmatpush1.msra.mxu0 %v9698
      %9863 = vmatprep.subr.mxu0 0.0
      %9864 = vmatpush1.msra.mxu0 %v9699
      %9865 = vmatprep.subr.mxu0 0.0
      %9866 = vmatpush1.msra.mxu0 %v9700
      %9867 = vmatprep.subr.mxu0 0.0
      %9868 = vmatpush1.msra.mxu0 %v9701
      %9869 = vmatprep.subr.mxu0 0.0
      %9870 = vmatpush1.msra.mxu0 %v9702
      %9871 = vmatprep.subr.mxu0 0.0
      %9872 = vmatpush1.msra.mxu0 %v9703
      %9873 = vmatprep.subr.mxu0 0.0
      %9874 = vmatpush1.msra.mxu0 %v9704
      %9875 = vmatprep.subr.mxu0 0.0
      %9876 = vmatpush1.msra.mxu0 %v9705
      %9877 = vmatprep.subr.mxu0 0.0
      %9878 = vmatpush1.msra.mxu0 %v9706
      %9879 = vmatprep.subr.mxu0 0.0
      %9880 = vmatpush1.msra.mxu0 %v9707
      %9881 = vmatprep.subr.mxu0 0.0
      %9882 = vmatpush1.msra.mxu0 %v9708
      %9883 = vmatprep.subr.mxu0 0.0
      %9884 = vmatpush1.msra.mxu0 %v9709
      %9885 = vmatprep.subr.mxu0 0.0
      %9886 = vmatpush1.msra.mxu0 %v9710
      %9887 = vmatprep.subr.mxu0 0.0
      %9888 = vmatpush1.msra.mxu0 %v9711
      %9889 = vmatprep.subr.mxu0 0.0
      %9890 = vmatpush1.msra.mxu0 %v9712
      %9891 = vmatprep.subr.mxu0 0.0
      %9892 = vmatpush1.msra.mxu0 %v9713
      %9893 = vmatprep.subr.mxu0 0.0
      %9894 = vmatpush1.msra.mxu0 %v9714
      %9895 = vmatprep.subr.mxu0 0.0
      %9896 = vmatpush1.msra.mxu0 %v9715
      %9897 = vmatprep.mubr.f32.mxu0 %v9589
      %9898 = vmatmul.mubr.f32.gmra.mrb[0].mxu0 %v9588
      %v9899 = vpop.f32.mrb[0].mxu0
      %v9900 = vadd.f32 %v9734, %v9899
      %v9901 = vpop.f32.mrb[0].mxu0
      %9902 = vmatprep.mubr.f32.mxu0 %v9592
      %9903 = vmatmul.mubr.f32.gmra.mrb[0].mxu0 %v9591
      %v9904 = vpop.f32.mrb[0].mxu0
      %v9905 = vadd.f32 %v9734, %v9904
      %v9906 = vpop.f32.mrb[0].mxu0
      %9907 = vmatprep.mubr.f32.mxu0 %v9595
      %9908 = vmatmul.mubr.f32.gmra.mrb[0].mxu0 %v9594
      %v9909 = vpop.f32.mrb[0].mxu0
      %v9910 = vadd.f32 %v9734, %v9909
      %v9911 = vpop.f32.mrb[0].mxu0
      %9912 = vmatprep.mubr.f32.mxu0 %v9598
      %9913 = vmatmul.mubr.f32.gmra.mrb[0].mxu0 %v9597
      %v9914 = vpop.f32.mrb[0].mxu0
      %v9915 = vadd.f32 %v9734, %v9914
      %v9916 = vpop.f32.mrb[0].mxu0
      %9917 = vmatprep.mubr.f32.mxu0 %v9601
      %9918 = vmatmul.mubr.f32.gmra.mrb[0].mxu0 %v9600
      %v9919 = vpop.f32.mrb[0].mxu0
      %v9920 = vadd.f32 %v9734, %v9919
      %v9921 = vpop.f32.mrb[0].mxu0
      %9922 = vmatprep.mubr.f32.mxu0 %v9604
      %9923 = vmatmul.mubr.f32.gmra.mrb[0].mxu0 %v9603
      %v9924 = vpop.f32.mrb[0].mxu0
      %v9925 = vadd.f32 %v9734, %v9924
      %v9926 = vpop.f32.mrb[0].mxu0
      %9927 = vmatprep.mubr.f32.mxu0 %v9607
      %9928 = vmatmul.mubr.f32.gmra.mrb[0].mxu0 %v9606
      %v9929 = vpop.f32.mrb[0].mxu0
      %v9930 = vadd.f32 %v9734, %v9929
      %v9931 = vpop.f32.mrb[0].mxu0
      %9932 = vmatprep.mubr.f32.mxu0 %v9610
      %9933 = vmatmul.mubr.f32.gmra.mrb[0].mxu0 %v9609
      %v9934 = vpop.f32.mrb[0].mxu0
      %v9935 = vadd.f32 %v9734, %v9934
      %v9936 = vpop.f32.mrb[0].mxu0
      %9937 = vmatprep.mubr.f32.mxu0 %v9613
      %9938 = vmatmul.mubr.f32.gmra.mrb[0].mxu0 %v9612
      %v9939 = vpop.f32.mrb[0].mxu0
      %v9940 = vadd.f32 %v9734, %v9939
      %v9941 = vpop.f32.mrb[0].mxu0
      %9942 = vmatprep.mubr.f32.mxu0 %v9616
      %9943 = vmatmul.mubr.f32.gmra.mrb[0].mxu0 %v9615
      %v9944 = vpop.f32.mrb[0].mxu0
      %v9945 = vadd.f32 %v9734, %v9944
      %v9946 = vpop.f32.mrb[0].mxu0
      %9947 = vmatprep.mubr.f32.mxu0 %v9619
      %9948 = vmatmul.mubr.f32.gmra.mrb[0].mxu0 %v9618
      %v9949 = vpop.f32.mrb[0].mxu0
      %v9950 = vadd.f32 %v9734, %v9949
      %v9951 = vpop.f32.mrb[0].mxu0
      %9952 = vmatprep.mubr.f32.mxu0 %v9622
      %9953 = vmatmul.mubr.f32.gmra.mrb[0].mxu0 %v9621
      %v9954 = vpop.f32.mrb[0].mxu0
      %v9955 = vadd.f32 %v9734, %v9954
      %v9956 = vpop.f32.mrb[0].mxu0
      %9957 = vmatprep.mubr.f32.mxu0 %v9625
      %9958 = vmatmul.mubr.f32.gmra.mrb[0].mxu0 %v9624
      %v9959 = vpop.f32.mrb[0].mxu0
      %v9960 = vadd.f32 %v9734, %v9959
      %v9961 = vpop.f32.mrb[0].mxu0
      %9962 = vmatprep.mubr.f32.mxu0 %v9628
      %9963 = vmatmul.mubr.f32.gmra.mrb[0].mxu0 %v9627
      %v9964 = vpop.f32.mrb[0].mxu0
      %v9965 = vadd.f32 %v9734, %v9964
      %v9966 = vpop.f32.mrb[0].mxu0
      %9967 = vmatprep.mubr.f32.mxu0 %v9631
      %9968 = vmatmul.mubr.f32.gmra.mrb[0].mxu0 %v9630
      %v9969 = vpop.f32.mrb[0].mxu0
      %v9970 = vadd.f32 %v9734, %v9969
      %v9971 = vpop.f32.mrb[0].mxu0
      %9972 = vmatprep.mubr.f32.mxu0 %v9634
      %9973 = vmatmul.mubr.f32.gmra.mrb[0].mxu0 %v9633
      %v9974 = vpop.f32.mrb[0].mxu0
      %v9975 = vadd.f32 %v9734, %v9974
      %v9976 = vpop.f32.mrb[0].mxu0
      %9977 = vmatprep.mubr.f32.mxu0 %v9637
      %9978 = vmatmul.mubr.f32.gmra.mrb[0].mxu0 %v9636
      %v9979 = vpop.f32.mrb[0].mxu0
      %v9980 = vadd.f32 %v9734, %v9979
      %v9981 = vpop.f32.mrb[0].mxu0
      %9982 = vmatprep.mubr.f32.mxu0 %v9640
      %9983 = vmatmul.mubr.f32.gmra.mrb[0].mxu0 %v9639
      %v9984 = vpop.f32.mrb[0].mxu0
      %v9985 = vadd.f32 %v9734, %v9984
      %v9986 = vpop.f32.mrb[0].mxu0
      %9987 = vmatprep.mubr.f32.mxu0 %v9643
      %9988 = vmatmul.mubr.f32.gmra.mrb[0].mxu0 %v9642
      %v9989 = vpop.f32.mrb[0].mxu0
      %v9990 = vadd.f32 %v9734, %v9989
      %v9991 = vpop.f32.mrb[0].mxu0
      %9992 = vmatprep.mubr.f32.mxu0 %v9646
      %9993 = vmatmul.mubr.f32.gmra.mrb[0].mxu0 %v9645
      %v9994 = vpop.f32.mrb[0].mxu0
      %v9995 = vadd.f32 %v9734, %v9994
      %v9996 = vpop.f32.mrb[0].mxu0
      %9997 = vmatprep.mubr.f32.mxu0 %v9649
      %9998 = vmatmul.mubr.f32.gmra.mrb[0].mxu0 %v9648
      %v9999 = vpop.f32.mrb[0].mxu0
      %v10000 = vadd.f32 %v9734, %v9999
      %v10001 = vpop.f32.mrb[0].mxu0
      %10002 = vmatprep.mubr.f32.mxu0 %v9652
      %10003 = vmatmul.mubr.f32.gmra.mrb[0].mxu0 %v9651
      %v10004 = vpop.f32.mrb[0].mxu0
      %v10005 = vadd.f32 %v9734, %v10004
      %v10006 = vpop.f32.mrb[0].mxu0
      %10007 = vmatprep.mubr.f32.mxu0 %v9655
      %10008 = vmatmul.mubr.f32.gmra.mrb[0].mxu0 %v9654
      %v10009 = vpop.f32.mrb[0].mxu0
      %v10010 = vadd.f32 %v9734, %v10009
      %v10011 = vpop.f32.mrb[0].mxu0
      %10012 = vmatprep.mubr.f32.mxu0 %v9658
      %10013 = vmatmul.mubr.f32.gmra.mrb[0].mxu0 %v9657
      %v10014 = vpop.f32.mrb[0].mxu0
      %v10015 = vadd.f32 %v9734, %v10014
      %v10016 = vpop.f32.mrb[0].mxu0
      %10017 = vmatprep.mubr.f32.mxu0 %v9661
      %10018 = vmatmul.mubr.f32.gmra.mrb[0].mxu0 %v9660
      %v10019 = vpop.f32.mrb[0].mxu0
      %v10020 = vadd.f32 %v9734, %v10019
      %v10021 = vpop.f32.mrb[0].mxu0
      %10022 = vmatprep.mubr.f32.mxu0 %v9664
      %10023 = vmatmul.mubr.f32.gmra.mrb[0].mxu0 %v9663
      %v10024 = vpop.f32.mrb[0].mxu0
      %v10025 = vadd.f32 %v9734, %v10024
      %v10026 = vpop.f32.mrb[0].mxu0
      %10027 = vmatprep.mubr.f32.mxu0 %v9667
      %10028 = vmatmul.mubr.f32.gmra.mrb[0].mxu0 %v9666
      %v10029 = vpop.f32.mrb[0].mxu0
      %v10030 = vadd.f32 %v9734, %v10029
      %v10031 = vpop.f32.mrb[0].mxu0
      %10032 = vmatprep.mubr.f32.mxu0 %v9670
      %10033 = vmatmul.mubr.f32.gmra.mrb[0].mxu0 %v9669
      %v10034 = vpop.f32.mrb[0].mxu0
      %v10035 = vadd.f32 %v9734, %v10034
      %v10036 = vpop.f32.mrb[0].mxu0
      %10037 = vmatprep.mubr.f32.mxu0 %v9673
      %10038 = vmatmul.mubr.f32.gmra.mrb[0].mxu0 %v9672
      %v10039 = vpop.f32.mrb[0].mxu0
      %v10040 = vadd.f32 %v9734, %v10039
      %v10041 = vpop.f32.mrb[0].mxu0
      %10042 = vmatprep.mubr.f32.mxu0 %v9676
      %10043 = vmatmul.mubr.f32.gmra.mrb[0].mxu0 %v9675
      %v10044 = vpop.f32.mrb[0].mxu0
      %v10045 = vadd.f32 %v9734, %v10044
      %v10046 = vpop.f32.mrb[0].mxu0
      %10047 = vmatprep.mubr.f32.mxu0 %v9679
      %10048 = vmatmul.mubr.f32.gmra.mrb[0].mxu0 %v9678
      %v10049 = vpop.f32.mrb[0].mxu0
      %v10050 = vadd.f32 %v9734, %v10049
      %v10051 = vpop.f32.mrb[0].mxu0
      %10052 = vmatprep.mubr.f32.mxu0 %v9682
      %10053 = vmatmul.mubr.f32.gmra.mrb[0].mxu0 %v9681
      %v10054 = vpop.f32.mrb[0].mxu0
      %v10055 = vadd.f32 %v9734, %v10054
      %v10056 = vpop.f32.mrb[0].mxu0
      %10057 = vdwg.mxu0
      %10058 = vmatprep.subr.mxu0 0.0
      %10059 = vmatpush1.msra.mxu0 %v9716
      %10060 = vmatprep.subr.mxu0 0.0
      %10061 = vmatpush1.msra.mxu0 %v9717
      %10062 = vmatprep.subr.mxu0 0.0
      %10063 = vmatpush1.msra.mxu0 %v9718
      %10064 = vmatprep.subr.mxu0 0.0
      %10065 = vmatpush1.msra.mxu0 %v9719
      %10066 = vmatprep.subr.mxu0 0.0
      %10067 = vmatpush1.msra.mxu0 %v9720
      %10068 = vmatprep.subr.mxu0 0.0
      %10069 = vmatpush1.msra.mxu0 %v9721
      %10070 = vmatprep.subr.mxu0 0.0
      %10071 = vmatpush1.msra.mxu0 %v9722
      %10072 = vmatprep.subr.mxu0 0.0
      %10073 = vmatpush1.msra.mxu0 %v9723
      %10074 = vmatprep.subr.mxu0 0.0
      %10075 = vmatpush1.msra.mxu0 %v9724
      %10076 = vmatprep.subr.mxu0 0.0
      %10077 = vmatpush1.msra.mxu0 %v9725
      %10078 = vmatprep.subr.mxu0 0.0
      %10079 = vmatpush1.msra.mxu0 %v9726
      %10080 = vmatprep.subr.mxu0 0.0
      %10081 = vmatpush1.msra.mxu0 %v9727
      %10082 = vmatprep.subr.mxu0 0.0
      %10083 = vmatpush1.msra.mxu0 %v9728
      %10084 = vmatprep.subr.mxu0 0.0
      %10085 = vmatpush1.msra.mxu0 0.0
      %10086 = vmatprep.subr.mxu0 0.0
      %10087 = vmatpush1.msra.mxu0 0.0
      %10088 = vmatprep.subr.mxu0 0.0
      %10089 = vmatpush1.msra.mxu0 0.0
      %10090 = vmatprep.subr.mxu0 0.0
      %10091 = vmatpush1.msra.mxu0 0.0
      %10092 = vmatprep.subr.mxu0 0.0
      %10093 = vmatpush1.msra.mxu0 0.0
      %10094 = vmatprep.subr.mxu0 0.0
      %10095 = vmatpush1.msra.mxu0 0.0
      %10096 = vmatprep.subr.mxu0 0.0
      %10097 = vmatpush1.msra.mxu0 0.0
      %10098 = vmatprep.subr.mxu0 0.0
      %10099 = vmatpush1.msra.mxu0 0.0
      %10100 = vmatprep.subr.mxu0 0.0
      %10101 = vmatpush1.msra.mxu0 0.0
      %10102 = vmatprep.subr.mxu0 0.0
      %10103 = vmatpush1.msra.mxu0 0.0
      %10104 = vmatprep.subr.mxu0 0.0
      %10105 = vmatpush1.msra.mxu0 0.0
      %10106 = vmatprep.subr.mxu0 0.0
      %10107 = vmatpush1.msra.mxu0 0.0
      %10108 = vmatprep.subr.mxu0 0.0
      %10109 = vmatpush1.msra.mxu0 0.0
      %10110 = vmatprep.subr.mxu0 0.0
      %10111 = vmatpush1.msra.mxu0 0.0
      %10112 = vmatprep.subr.mxu0 0.0
      %10113 = vmatpush1.msra.mxu0 0.0
      %10114 = vmatprep.subr.mxu0 0.0
      %10115 = vmatpush1.msra.mxu0 0.0
      %10116 = vmatprep.subr.mxu0 0.0
      %10117 = vmatpush1.msra.mxu0 0.0
      %10118 = vmatprep.subr.mxu0 0.0
      %10119 = vmatpush1.msra.mxu0 0.0
      %10120 = vmatprep.subr.mxu0 0.0
      %10121 = vmatpush1.msra.mxu0 0.0
      %10122 = vmatprep.mubr.f32.mxu0 0.0
      %10123 = vmatmul.mubr.f32.gmra.mrb[0].mxu0 %v9738
      %v10124 = vpop.f32.mrb[0].mxu0
      %v10125 = vadd.f32 %v9900, %v10124
      %v10126 = vpop.f32.mrb[0].mxu0
      %10127 = vmatprep.mubr.f32.mxu0 0.0
      %10128 = vmatmul.mubr.f32.gmra.mrb[0].mxu0 %v9741
      %v10129 = vpop.f32.mrb[0].mxu0
      %v10130 = vadd.f32 %v9905, %v10129
      %v10131 = vpop.f32.mrb[0].mxu0
      %10132 = vmatprep.mubr.f32.mxu0 0.0
      %10133 = vmatmul.mubr.f32.gmra.mrb[0].mxu0 %v9744
      %v10134 = vpop.f32.mrb[0].mxu0
      %v10135 = vadd.f32 %v9910, %v10134
      %v10136 = vpop.f32.mrb[0].mxu0
      %10137 = vmatprep.mubr.f32.mxu0 0.0
      %10138 = vmatmul.mubr.f32.gmra.mrb[0].mxu0 %v9747
      %v10139 = vpop.f32.mrb[0].mxu0
      %v10140 = vadd.f32 %v9915, %v10139
      %v10141 = vpop.f32.mrb[0].mxu0
      %10142 = vmatprep.mubr.f32.mxu0 0.0
      %10143 = vmatmul.mubr.f32.gmra.mrb[0].mxu0 %v9750
      %v10144 = vpop.f32.mrb[0].mxu0
      %v10145 = vadd.f32 %v9920, %v10144
      %v10146 = vpop.f32.mrb[0].mxu0
      %10147 = vmatprep.mubr.f32.mxu0 0.0
      %10148 = vmatmul.mubr.f32.gmra.mrb[0].mxu0 %v9753
      %v10149 = vpop.f32.mrb[0].mxu0
      %v10150 = vadd.f32 %v9925, %v10149
      %v10151 = vpop.f32.mrb[0].mxu0
      %10152 = vmatprep.mubr.f32.mxu0 0.0
      %10153 = vmatmul.mubr.f32.gmra.mrb[0].mxu0 %v9756
      %v10154 = vpop.f32.mrb[0].mxu0
      %v10155 = vadd.f32 %v9930, %v10154
      %v10156 = vpop.f32.mrb[0].mxu0
      %10157 = vmatprep.mubr.f32.mxu0 0.0
      %10158 = vmatmul.mubr.f32.gmra.mrb[0].mxu0 %v9759
      %v10159 = vpop.f32.mrb[0].mxu0
      %v10160 = vadd.f32 %v9935, %v10159
      %v10161 = vpop.f32.mrb[0].mxu0
      %10162 = vmatprep.mubr.f32.mxu0 0.0
      %10163 = vmatmul.mubr.f32.gmra.mrb[0].mxu0 %v9762
      %v10164 = vpop.f32.mrb[0].mxu0
      %v10165 = vadd.f32 %v9940, %v10164
      %v10166 = vpop.f32.mrb[0].mxu0
      %10167 = vmatprep.mubr.f32.mxu0 0.0
      %10168 = vmatmul.mubr.f32.gmra.mrb[0].mxu0 %v9765
      %v10169 = vpop.f32.mrb[0].mxu0
      %v10170 = vadd.f32 %v9945, %v10169
      %v10171 = vpop.f32.mrb[0].mxu0
      %10172 = vmatprep.mubr.f32.mxu0 0.0
      %10173 = vmatmul.mubr.f32.gmra.mrb[0].mxu0 %v9768
      %v10174 = vpop.f32.mrb[0].mxu0
      %v10175 = vadd.f32 %v9950, %v10174
      %v10176 = vpop.f32.mrb[0].mxu0
      %10177 = vmatprep.mubr.f32.mxu0 0.0
      %10178 = vmatmul.mubr.f32.gmra.mrb[0].mxu0 %v9771
      %v10179 = vpop.f32.mrb[0].mxu0
      %v10180 = vadd.f32 %v9955, %v10179
      %v10181 = vpop.f32.mrb[0].mxu0
      %10182 = vmatprep.mubr.f32.mxu0 0.0
      %10183 = vmatmul.mubr.f32.gmra.mrb[0].mxu0 %v9774
      %v10184 = vpop.f32.mrb[0].mxu0
      %v10185 = vadd.f32 %v9960, %v10184
      %v10186 = vpop.f32.mrb[0].mxu0
      %10187 = vmatprep.mubr.f32.mxu0 0.0
      %10188 = vmatmul.mubr.f32.gmra.mrb[0].mxu0 %v9777
      %v10189 = vpop.f32.mrb[0].mxu0
      %v10190 = vadd.f32 %v9965, %v10189
      %v10191 = vpop.f32.mrb[0].mxu0
      %10192 = vmatprep.mubr.f32.mxu0 0.0
      %10193 = vmatmul.mubr.f32.gmra.mrb[0].mxu0 %v9780
      %v10194 = vpop.f32.mrb[0].mxu0
      %v10195 = vadd.f32 %v9970, %v10194
      %v10196 = vpop.f32.mrb[0].mxu0
      %10197 = vmatprep.mubr.f32.mxu0 0.0
      %10198 = vmatmul.mubr.f32.gmra.mrb[0].mxu0 %v9783
      %v10199 = vpop.f32.mrb[0].mxu0
      %v10200 = vadd.f32 %v9975, %v10199
      %v10201 = vpop.f32.mrb[0].mxu0
      %10202 = vmatprep.mubr.f32.mxu0 0.0
      %10203 = vmatmul.mubr.f32.gmra.mrb[0].mxu0 %v9786
      %v10204 = vpop.f32.mrb[0].mxu0
      %v10205 = vadd.f32 %v9980, %v10204
      %v10206 = vpop.f32.mrb[0].mxu0
      %10207 = vmatprep.mubr.f32.mxu0 0.0
      %10208 = vmatmul.mubr.f32.gmra.mrb[0].mxu0 %v9789
      %v10209 = vpop.f32.mrb[0].mxu0
      %v10210 = vadd.f32 %v9985, %v10209
      %v10211 = vpop.f32.mrb[0].mxu0
      %10212 = vmatprep.mubr.f32.mxu0 0.0
      %10213 = vmatmul.mubr.f32.gmra.mrb[0].mxu0 %v9792
      %v10214 = vpop.f32.mrb[0].mxu0
      %v10215 = vadd.f32 %v9990, %v10214
      %v10216 = vpop.f32.mrb[0].mxu0
      %10217 = vmatprep.mubr.f32.mxu0 0.0
      %10218 = vmatmul.mubr.f32.gmra.mrb[0].mxu0 %v9795
      %v10219 = vpop.f32.mrb[0].mxu0
      %v10220 = vadd.f32 %v9995, %v10219
      %v10221 = vpop.f32.mrb[0].mxu0
      %10222 = vmatprep.mubr.f32.mxu0 0.0
      %10223 = vmatmul.mubr.f32.gmra.mrb[0].mxu0 %v9798
      %v10224 = vpop.f32.mrb[0].mxu0
      %v10225 = vadd.f32 %v10000, %v10224
      %v10226 = vpop.f32.mrb[0].mxu0
      %10227 = vmatprep.mubr.f32.mxu0 0.0
      %10228 = vmatmul.mubr.f32.gmra.mrb[0].mxu0 %v9801
      %v10229 = vpop.f32.mrb[0].mxu0
      %v10230 = vadd.f32 %v10005, %v10229
      %v10231 = vpop.f32.mrb[0].mxu0
      %10232 = vmatprep.mubr.f32.mxu0 0.0
      %10233 = vmatmul.mubr.f32.gmra.mrb[0].mxu0 %v9804
      %v10234 = vpop.f32.mrb[0].mxu0
      %v10235 = vadd.f32 %v10010, %v10234
      %v10236 = vpop.f32.mrb[0].mxu0
      %10237 = vmatprep.mubr.f32.mxu0 0.0
      %10238 = vmatmul.mubr.f32.gmra.mrb[0].mxu0 %v9807
      %v10239 = vpop.f32.mrb[0].mxu0
      %v10240 = vadd.f32 %v10015, %v10239
      %v10241 = vpop.f32.mrb[0].mxu0
      %10242 = vmatprep.mubr.f32.mxu0 0.0
      %10243 = vmatmul.mubr.f32.gmra.mrb[0].mxu0 %v9810
      %v10244 = vpop.f32.mrb[0].mxu0
      %v10245 = vadd.f32 %v10020, %v10244
      %v10246 = vpop.f32.mrb[0].mxu0
      %10247 = vmatprep.mubr.f32.mxu0 0.0
      %10248 = vmatmul.mubr.f32.gmra.mrb[0].mxu0 %v9813
      %v10249 = vpop.f32.mrb[0].mxu0
      %v10250 = vadd.f32 %v10025, %v10249
      %v10251 = vpop.f32.mrb[0].mxu0
      %10252 = vmatprep.mubr.f32.mxu0 0.0
      %10253 = vmatmul.mubr.f32.gmra.mrb[0].mxu0 %v9816
      %v10254 = vpop.f32.mrb[0].mxu0
      %v10255 = vadd.f32 %v10030, %v10254
      %v10256 = vpop.f32.mrb[0].mxu0
      %10257 = vmatprep.mubr.f32.mxu0 0.0
      %10258 = vmatmul.mubr.f32.gmra.mrb[0].mxu0 %v9819
      %v10259 = vpop.f32.mrb[0].mxu0
      %v10260 = vadd.f32 %v10035, %v10259
      %v10261 = vpop.f32.mrb[0].mxu0
      %10262 = vmatprep.mubr.f32.mxu0 0.0
      %10263 = vmatmul.mubr.f32.gmra.mrb[0].mxu0 %v9822
      %v10264 = vpop.f32.mrb[0].mxu0
      %v10265 = vadd.f32 %v10040, %v10264
      %v10266 = vpop.f32.mrb[0].mxu0
      %10267 = vmatprep.mubr.f32.mxu0 0.0
      %10268 = vmatmul.mubr.f32.gmra.mrb[0].mxu0 %v9825
      %v10269 = vpop.f32.mrb[0].mxu0
      %v10270 = vadd.f32 %v10045, %v10269
      %v10271 = vpop.f32.mrb[0].mxu0
      %10272 = vmatprep.mubr.f32.mxu0 0.0
      %10273 = vmatmul.mubr.f32.gmra.mrb[0].mxu0 %v9828
      %v10274 = vpop.f32.mrb[0].mxu0
      %v10275 = vadd.f32 %v10050, %v10274
      %v10276 = vpop.f32.mrb[0].mxu0
      %10277 = vmatprep.mubr.f32.mxu0 0.0
      %10278 = vmatmul.mubr.f32.gmra.mrb[0].mxu0 %v9831
      %v10279 = vpop.f32.mrb[0].mxu0
      %v10280 = vadd.f32 %v10055, %v10279
      %v10281 = vpop.f32.mrb[0].mxu0
      %10282 = vdwg.mxu0
      %vm10283 = vcmask 64512
      %10284 = vst.msk [vmem:[%s278] sm:$0xff] %vm10283, %v10125
      %10285 = vst.msk [vmem:[%s278 + $0x8] sm:$0xff] %vm10283, %v10130
      %10286 = vst.msk [vmem:[%s278 + $0x10] sm:$0xff] %vm10283, %v10135
      %10287 = vst.msk [vmem:[%s278 + $0x18] sm:$0xff] %vm10283, %v10140
      %10288 = vst.msk [vmem:[%s278 + $0x20] sm:$0xff] %vm10283, %v10145
      %10289 = vst.msk [vmem:[%s278 + $0x28] sm:$0xff] %vm10283, %v10150
      %10290 = vst.msk [vmem:[%s278 + $0x30] sm:$0xff] %vm10283, %v10155
      %10291 = vst.msk [vmem:[%s278 + $0x38] sm:$0xff] %vm10283, %v10160
      %10292 = vst.msk [vmem:[%s278 + $0x40] sm:$0xff] %vm10283, %v10165
      %10293 = vst.msk [vmem:[%s278 + $0x48] sm:$0xff] %vm10283, %v10170
      %10294 = vst.msk [vmem:[%s278 + $0x50] sm:$0xff] %vm10283, %v10175
      %10295 = vst.msk [vmem:[%s278 + $0x58] sm:$0xff] %vm10283, %v10180
      %10296 = vst.msk [vmem:[%s278 + $0x60] sm:$0xff] %vm10283, %v10185
      %10297 = vst.msk [vmem:[%s278 + $0x68] sm:$0xff] %vm10283, %v10190
      %10298 = vst.msk [vmem:[%s278 + $0x70] sm:$0xff] %vm10283, %v10195
      %10299 = vst.msk [vmem:[%s278 + $0x78] sm:$0xff] %vm10283, %v10200
      %10300 = vst.msk [vmem:[%s278 + $0x80] sm:$0xff] %vm10283, %v10205
      %10301 = vst.msk [vmem:[%s278 + $0x88] sm:$0xff] %vm10283, %v10210
      %10302 = vst.msk [vmem:[%s278 + $0x90] sm:$0xff] %vm10283, %v10215
      %10303 = vst.msk [vmem:[%s278 + $0x98] sm:$0xff] %vm10283, %v10220
      %10304 = vst.msk [vmem:[%s278 + $0xa0] sm:$0xff] %vm10283, %v10225
      %10305 = vst.msk [vmem:[%s278 + $0xa8] sm:$0xff] %vm10283, %v10230
      %10306 = vst.msk [vmem:[%s278 + $0xb0] sm:$0xff] %vm10283, %v10235
      %10307 = vst.msk [vmem:[%s278 + $0xb8] sm:$0xff] %vm10283, %v10240
      %10308 = vst.msk [vmem:[%s278 + $0xc0] sm:$0xff] %vm10283, %v10245
      %10309 = vst.msk [vmem:[%s278 + $0xc8] sm:$0xff] %vm10283, %v10250
      %10310 = vst.msk [vmem:[%s278 + $0xd0] sm:$0xff] %vm10283, %v10255
      %10311 = vst.msk [vmem:[%s278 + $0xd8] sm:$0xff] %vm10283, %v10260
      %10312 = vst.msk [vmem:[%s278 + $0xe0] sm:$0xff] %vm10283, %v10265
      %10313 = vst.msk [vmem:[%s278 + $0xe8] sm:$0xff] %vm10283, %v10270
      %10314 = vst.msk [vmem:[%s278 + $0xf0] sm:$0xff] %vm10283, %v10275
      %10315 = vst.msk [vmem:[%s278 + $0xf8] sm:$0xff] %vm10283, %v10280
      %p10316 = scmp.lt.s32.totalorder %s18, 1
      %s10317 = scalar_select %p10316, %s18, 1
      %s10318 = smul.addr %s10317, 32
      %s10319 = smul.addr %s10318, 8
      %s10320 = scalar_lea.vmem %s7, %s10319
      // Predicated region
      $region49: #{down_feature_forward.1} parent=47 // pred_check
        %p10321 = pneg %p188
      $region50: #{down_feature_forward.1} parent=47 // pred_check_branch
        %10323 = sbr.rel (%p10321) target = $region52
      $region51: #{down_feature_forward.1} parent=47 // pred_region
        _
      $region52: #{down_feature_forward.1} parent=47 // pred_fallthru
        _
    $region48: #{down_feature_forward.1} parent=5 // pred_fallthru
      _
    %p10324 = scmp.le.s32.totalorder 2, %s13
    // Predicated region
    $region53: #{down_feature_forward.1} parent=5 // pred_check
      %p10325 = pneg %p10324
    $region54: #{down_feature_forward.1} parent=5 // pred_check_branch
      %10327 = sbr.rel (%p10325) target = $region56
    $region55: #{down_feature_forward.1} parent=5 // pred_region
      %s10328 = ssub.s32 %s13, 2
      // Predicated region
      $region57: #{down_feature_forward.1} parent=55 // pred_check
        %p10329 = pneg %p194
      $region58: #{down_feature_forward.1} parent=55 // pred_check_branch
        %10331 = sbr.rel (%p10329) target = $region60
      $region59: #{down_feature_forward.1} parent=55 // pred_region
        %p10332 = scmp.lt.s32.totalorder %s19, 1
        %s10333 = scalar_select %p10332, %s19, 1
        %s10334 = smul.addr %s10333, 32
        %s10335 = smul.addr %s10334, 8
        %s10336 = scalar_lea.vmem %s7, %s10335
      $region60: #{down_feature_forward.1} parent=55 // pred_fallthru
        _
    $region56: #{down_feature_forward.1} parent=5 // pred_fallthru
      _
  $region6: #{down_feature_forward.1} parent=0 // loop_footer
    %s17 = sadd.s32 1, %s13
  $region7: #{down_feature_forward.1} parent=0 // loop_footer_branch
    %12 = sbr.rel target = $region3
  $region8: #{down_feature_forward.1} parent=0 // loop_exit
    _

</llo_original>
